<compile_context>
chip_gen: v7x
topology: tpu7x:2x2x1
jax: 0.10.0
libtpu: 0.0.40
codegen_flags: <defaults>
</compile_context>

<pallas_src>
import functools

import jax
import jax.numpy as jnp
from jax.experimental import pallas as pl
from jax.experimental.pallas import tpu as pltpu


# ---------------------------------------------------------------------------
# helpers
# ---------------------------------------------------------------------------
def _round_up(n, m):
    return ((n + m - 1) // m) * m


def _choose_tk(k_pad, cap=4096):
    """Largest multiple of 128 that divides k_pad and is <= cap."""
    best = 128
    t = 128
    while t <= min(k_pad, cap):
        if k_pad % t == 0:
            best = t
        t += 128
    return best


# ---------------------------------------------------------------------------
# Fused matmul kernel:
#   out = [ relu?(x @ w + bias) * scale + shift ] * mask?
# grid = (N/tn, K/tk); K (reduction) is the last, "arbitrary" axis.
# The output block index ignores k, so o_ref is resident across the reduction
# and serves as the f32 accumulator (no scratch needed).
# ---------------------------------------------------------------------------
def _fused_matmul_kernel(*refs, apply_relu, has_mask):
    if has_mask:
        x_ref, w_ref, bst_ref, m_ref, o_ref = refs
    else:
        x_ref, w_ref, bst_ref, o_ref = refs
        m_ref = None

    k = pl.program_id(1)

    @pl.when(k == 0)
    def _():
        o_ref[...] = jnp.zeros_like(o_ref)

    o_ref[...] += jnp.dot(x_ref[...], w_ref[...],
                          preferred_element_type=jnp.float32)

    @pl.when(k == pl.num_programs(1) - 1)
    def _():
        bst = bst_ref[...]                       # (3, tn): bias / scale / shift
        y = o_ref[...] + bst[0:1, :]             # + conv / linear bias
        if apply_relu:
            y = jnp.maximum(y, 0.0)              # module does bn(relu(conv(x)))
        y = y * bst[1:2, :] + bst[2:3, :]        # folded eval-mode BatchNorm
        if has_mask:
            y = y * m_ref[...]                   # fused dropout (0 or 1/keep_p)
        o_ref[...] = y


def fused_matmul(x, w, bias, scale, shift, *, apply_relu, mask=None,
                 tk_cap=4096):
    """x: (M, K), w: (K, N) (cast to bf16), bias/scale/shift: (N,) f32.

    Returns f32 (M, N): epilogue(x @ w) with optional ReLU and dropout mask.
    """
    M, K = x.shape
    K2, N = w.shape
    assert K == K2

    # Row tile == padded M (8 for the batch-2 FC layers, full B*OH*OW for convs).
    M_pad = _round_up(max(M, 8), 8)
    tn = min(_round_up(N, 128), 1024)            # convs: 256 (full Cout); fc1: 1024
    N_pad = _round_up(N, tn)
    K_pad = _round_up(K, 128)
    tk = _choose_tk(K_pad, tk_cap)

    if x.dtype != jnp.bfloat16:
        x = x.astype(jnp.bfloat16)
    if w.dtype != jnp.bfloat16:
        w = w.astype(jnp.bfloat16)
    if (M_pad, K_pad) != (M, K):
        x = jnp.pad(x, ((0, M_pad - M), (0, K_pad - K)))
    if (K_pad, N_pad) != (K, N):
        w = jnp.pad(w, ((0, K_pad - K), (0, N_pad - N)))

    def pad_n(v):
        v = v.astype(jnp.float32)
        return jnp.pad(v, (0, N_pad - N)) if N_pad != N else v

    bst = jnp.stack([pad_n(bias), pad_n(scale), pad_n(shift)])   # (3, N_pad)

    in_specs = [
        pl.BlockSpec((M_pad, tk), lambda j, k: (0, k)),
        pl.BlockSpec((tk, tn), lambda j, k: (k, j)),
        pl.BlockSpec((3, tn), lambda j, k: (0, j)),
    ]
    operands = [x, w, bst]

    has_mask = mask is not None
    if has_mask:
        m = mask.astype(jnp.float32)
        if (M_pad, N_pad) != (M, N):
            m = jnp.pad(m, ((0, M_pad - M), (0, N_pad - N)))
        in_specs.append(pl.BlockSpec((M_pad, tn), lambda j, k: (0, j)))
        operands.append(m)

    grid = (N_pad // tn, K_pad // tk)
    out = pl.pallas_call(
        functools.partial(_fused_matmul_kernel,
                          apply_relu=apply_relu, has_mask=has_mask),
        out_shape=jax.ShapeDtypeStruct((M_pad, N_pad), jnp.float32),
        grid=grid,
        in_specs=in_specs,
        out_specs=pl.BlockSpec((M_pad, tn), lambda j, k: (0, j)),
        compiler_params=pltpu.CompilerParams(
            dimension_semantics=("parallel", "arbitrary"),
            vmem_limit_bytes=48 * 1024 * 1024,
        ),
    )(*operands)

    if (M_pad, N_pad) != (M, N):
        out = out[:M, :N]
    return out


# ---------------------------------------------------------------------------
# Conv layer = im2col (bf16 XLA glue) + fused Pallas matmul
# ---------------------------------------------------------------------------
def im2col_nhwc(x, ksize):
    B, H, W, C = x.shape
    OH, OW = H - ksize + 1, W - ksize + 1
    cols = []
    for kh in range(ksize):
        for kw in range(ksize):
            cols.append(x[:, kh:kh + OH, kw:kw + OW, :])
    patches = jnp.stack(cols, axis=3)                    # (B, OH, OW, K*K, C)
    return patches.reshape(B * OH * OW, ksize * ksize * C), (B, OH, OW)


def conv_relu_bn(x_nhwc, w_oihw, bias, bn_scale, bn_shift, ksize=5):
    # PyTorch weight layout (Cout, Cin, KH, KW) -> (KH*KW*Cin, Cout), matching
    # the (kh, kw, cin) flattening order of im2col.
    Cout, Cin, KH, KW = w_oihw.shape
    w2d = jnp.transpose(w_oihw, (2, 3, 1, 0)).reshape(KH * KW * Cin, Cout)
    patches, (B, OH, OW) = im2col_nhwc(x_nhwc, ksize)
    out = fused_matmul(patches, w2d, bias, bn_scale, bn_shift, apply_relu=True)
    # Next layer consumes bf16 (halves the im2col glue traffic).
    return out.reshape(B, OH, OW, Cout).astype(jnp.bfloat16)


# ---------------------------------------------------------------------------
# Deterministic synthetic parameters (shapes match SimpleNet.__init__).
# Matmul weights are stored in bf16; BN is folded to eval-mode scale/shift.
# ---------------------------------------------------------------------------
def init_params(key, num_channels, history_length, num_actions):
    ks = jax.random.split(key, 8)
    c_in = num_channels * history_length
    eps = 1e-5

    def conv_p(k, cin, cout, ksz):
        kw, kb = jax.random.split(k)
        bound = 1.0 / (cin * ksz * ksz) ** 0.5
        w = jax.random.uniform(kw, (cout, cin, ksz, ksz), jnp.float32, -bound, bound)
        b = jax.random.uniform(kb, (cout,), jnp.float32, -bound, bound)
        return w.astype(jnp.bfloat16), b

    def bn_p(k, c):
        k1, k2, k3, k4 = jax.random.split(k, 4)
        gamma = 1.0 + 0.1 * jax.random.normal(k1, (c,), jnp.float32)
        beta = 0.1 * jax.random.normal(k2, (c,), jnp.float32)
        mean = 0.1 * jax.random.normal(k3, (c,), jnp.float32)
        var = 1.0 + 0.1 * jnp.abs(jax.random.normal(k4, (c,), jnp.float32))
        scale = gamma / jnp.sqrt(var + eps)          # eval-mode BatchNorm folded
        shift = beta - mean * scale
        return scale, shift

    def lin_p(k, fin, fout):
        kw, kb = jax.random.split(k)
        bound = 1.0 / fin ** 0.5
        # stored as (fin, fout) == PyTorch weight.T, so forward is x @ w + b
        w = jax.random.uniform(kw, (fin, fout), jnp.float32, -bound, bound)
        b = jax.random.uniform(kb, (fout,), jnp.float32, -bound, bound)
        return w.astype(jnp.bfloat16), b

    return dict(
        conv1=conv_p(ks[0], c_in, 256, 5), bn1=bn_p(ks[1], 256),
        conv2=conv_p(ks[2], 256, 256, 5), bn2=bn_p(ks[3], 256),
        conv3=conv_p(ks[4], 256, 256, 5), bn3=bn_p(ks[5], 256),
        fc1=lin_p(ks[6], 256 * 20 * 20, 2048),
        fc2=lin_p(ks[7], 2048, num_actions),
    )


# ---------------------------------------------------------------------------
# Forward pass equivalent to SimpleNet.forward
#   x = bn(relu(conv(x))) x3 ; flatten ; dropout(relu(fc1(x))) ; fc2
# ---------------------------------------------------------------------------
def simple_net_forward(params, x_nchw, dropout_rng=None):
    x = jnp.transpose(x_nchw, (0, 2, 3, 1)).astype(jnp.bfloat16)   # NCHW -> NHWC

    w1, b1 = params["conv1"]; s1, t1 = params["bn1"]
    x = conv_relu_bn(x, w1, b1, s1, t1)                            # (B, 28, 28, 256)
    w2, b2 = params["conv2"]; s2, t2 = params["bn2"]
    x = conv_relu_bn(x, w2, b2, s2, t2)                            # (B, 24, 24, 256)
    w3, b3 = params["conv3"]; s3, t3 = params["bn3"]
    x = conv_relu_bn(x, w3, b3, s3, t3)                            # (B, 20, 20, 256)

    B = x.shape[0]
    # PyTorch flattens NCHW: (B, C, H, W) -> (B, C*H*W); restore that order.
    x = jnp.transpose(x, (0, 3, 1, 2)).reshape(B, -1)              # (B, 102400)

    wf1, bf1 = params["fc1"]
    N1 = wf1.shape[1]
    # TODO(synk): dropout mask cannot bit-match torch RNG; a JAX-PRNG mask
    # (p=0.5 inverted dropout) is fused into the fc1 matmul epilogue instead.
    if dropout_rng is None:
        dropout_rng = jax.random.PRNGKey(12345)
    keep = jax.random.bernoulli(dropout_rng, 0.5, (B, N1))
    mask = keep.astype(jnp.float32) * 2.0
    ones1 = jnp.ones((N1,), jnp.float32)
    zeros1 = jnp.zeros((N1,), jnp.float32)
    h = fused_matmul(x, wf1, bf1, ones1, zeros1, apply_relu=True, mask=mask)

    wf2, bf2 = params["fc2"]
    N2 = wf2.shape[1]
    return fused_matmul(h, wf2, bf2, jnp.ones((N2,), jnp.float32),
                        jnp.zeros((N2,), jnp.float32), apply_relu=False)


if __name__ == "__main__":
    key = jax.random.PRNGKey(0)
    kp, kx, kd = jax.random.split(key, 3)
    num_channels, history_length, num_actions = 3, 1, 9
    params = init_params(kp, num_channels, history_length, num_actions)

    # fc1 = Linear(256*20*20, .) forces 32x32 input spatial (three valid 5x5 convs).
    x = jax.random.normal(kx, (2, num_channels * history_length, 32, 32), jnp.float32)

    out = simple_net_forward(params, x, dropout_rng=kd)
    out = jax.block_until_ready(out)
    assert out.shape == (2, num_actions)
    print("KERNEL_OK")
</pallas_src>

<mosaic_0001>
module attributes {stable_mosaic.version = 11 : i64} {
  func.func @_fused_matmul_kernel(%arg0: i32, %arg1: i32, %arg2: memref<1568x128xbf16, #tpu.memory_space<vmem>>, %arg3: memref<128x256xbf16, #tpu.memory_space<vmem>>, %arg4: memref<3x256xf32, #tpu.memory_space<vmem>>, %arg5: memref<1568x256xf32, #tpu.memory_space<vmem>>) attributes {dimension_semantics = [#tpu.dimension_semantics<parallel>, #tpu.dimension_semantics<arbitrary>], iteration_bounds = array<i64: 1, 1>, scalar_prefetch = 0 : i64, scratch_operands = 0 : i64, tpu.core_type = #tpu.core_type<tc>, window_params = [{transform_indices = @transform_0, window_bounds = array<i64: 1568, 128>}, {transform_indices = @transform_1, window_bounds = array<i64: 128, 256>}, {transform_indices = @transform_2, window_bounds = array<i64: 3, 256>}, {transform_indices = @transform_3, window_bounds = array<i64: 1568, 256>}]} {
    %c0_i32 = arith.constant 0 : i32
    %0 = arith.cmpi eq, %arg1, %c0_i32 : i32
    %1 = arith.extui %0 : i1 to i32
    %c0_i32_0 = arith.constant 0 : i32
    %2 = arith.cmpi ne, %1, %c0_i32_0 : i32
    scf.if %2 {
      %cst_10 = arith.constant 0.000000e+00 : f32
      %12 = vector.broadcast %cst_10 : f32 to vector<1568x256xf32>
      %c0_11 = arith.constant 0 : index
      %c0_12 = arith.constant 0 : index
      %13 = vector.load %arg5[%c0_11, %c0_12] : memref<1568x256xf32, #tpu.memory_space<vmem>>, vector<1568x256xf32>
      tpu.vector_store %arg5[%c0_11, %c0_12], %12 {strides = array<i32>} : memref<1568x256xf32, #tpu.memory_space<vmem>>, vector<1568x256xf32>,
    } else {
    }
    %c0 = arith.constant 0 : index
    %c0_1 = arith.constant 0 : index
    %3 = vector.load %arg5[%c0, %c0_1] : memref<1568x256xf32, #tpu.memory_space<vmem>>, vector<1568x256xf32>
    %c0_2 = arith.constant 0 : index
    %c0_3 = arith.constant 0 : index
    %4 = vector.load %arg2[%c0_2, %c0_3] : memref<1568x128xbf16, #tpu.memory_space<vmem>>, vector<1568x128xbf16>
    %c0_4 = arith.constant 0 : index
    %c0_5 = arith.constant 0 : index
    %5 = vector.load %arg3[%c0_4, %c0_5] : memref<128x256xbf16, #tpu.memory_space<vmem>>, vector<128x256xbf16>
    %cst = arith.constant dense<0.000000e+00> : vector<1568x256xf32>
    %6 = tpu.matmul %4, %5, %cst {dimension_numbers = #tpu.dot_dimension_numbers<[1], [0], [0], [1], [0, 0, 1, 1], [], []>} : vector<1568x128xbf16>, vector<128x256xbf16>, vector<1568x256xf32> -> vector<1568x256xf32>
    %7 = arith.addf %3, %6 : vector<1568x256xf32>
    %c0_6 = arith.constant 0 : index
    %c0_7 = arith.constant 0 : index
    %8 = vector.load %arg5[%c0_6, %c0_7] : memref<1568x256xf32, #tpu.memory_space<vmem>>, vector<1568x256xf32>
    tpu.vector_store %arg5[%c0_6, %c0_7], %7 {strides = array<i32>} : memref<1568x256xf32, #tpu.memory_space<vmem>>, vector<1568x256xf32>,
    %c0_i32_8 = arith.constant 0 : i32
    %9 = arith.cmpi eq, %arg1, %c0_i32_8 : i32
    %10 = arith.extui %9 : i1 to i32
    %c0_i32_9 = arith.constant 0 : i32
    %11 = arith.cmpi ne, %10, %c0_i32_9 : i32
    scf.if %11 {
      %c0_10 = arith.constant 0 : index
      %c0_11 = arith.constant 0 : index
      %12 = vector.load %arg4[%c0_10, %c0_11] : memref<3x256xf32, #tpu.memory_space<vmem>>, vector<3x256xf32>
      %c0_12 = arith.constant 0 : index
      %c0_13 = arith.constant 0 : index
      %13 = vector.load %arg5[%c0_12, %c0_13] : memref<1568x256xf32, #tpu.memory_space<vmem>>, vector<1568x256xf32>
      %14 = vector.extract_strided_slice %12 {offsets = [0, 0], sizes = [1, 256], strides = [1, 1]} : vector<3x256xf32> to vector<1x256xf32>
      %15 = vector.broadcast %14 : vector<1x256xf32> to vector<1568x256xf32>
      %16 = arith.addf %13, %15 : vector<1568x256xf32>
      %cst_14 = arith.constant 0.000000e+00 : f32
      %17 = vector.broadcast %cst_14 : f32 to vector<1568x256xf32>
      %18 = arith.maximumf %16, %17 : vector<1568x256xf32>
      %19 = vector.extract_strided_slice %12 {offsets = [1, 0], sizes = [1, 256], strides = [1, 1]} : vector<3x256xf32> to vector<1x256xf32>
      %20 = vector.broadcast %19 : vector<1x256xf32> to vector<1568x256xf32>
      %21 = arith.mulf %18, %20 : vector<1568x256xf32>
      %22 = vector.extract_strided_slice %12 {offsets = [2, 0], sizes = [1, 256], strides = [1, 1]} : vector<3x256xf32> to vector<1x256xf32>
      %23 = vector.broadcast %22 : vector<1x256xf32> to vector<1568x256xf32>
      %24 = arith.addf %21, %23 : vector<1568x256xf32>
      %c0_15 = arith.constant 0 : index
      %c0_16 = arith.constant 0 : index
      %25 = vector.load %arg5[%c0_15, %c0_16] : memref<1568x256xf32, #tpu.memory_space<vmem>>, vector<1568x256xf32>
      tpu.vector_store %arg5[%c0_15, %c0_16], %24 {strides = array<i32>} : memref<1568x256xf32, #tpu.memory_space<vmem>>, vector<1568x256xf32>,
    } else {
    }
    return
  }
  func.func @transform_0(%arg0: i32, %arg1: i32) -> (i32, i32) {
    %c0_i32 = arith.constant 0 : i32
    %c0_i32_0 = arith.constant 0 : i32
    return %c0_i32, %arg1 : i32, i32
  }
  func.func @transform_1(%arg0: i32, %arg1: i32) -> (i32, i32) {
    %c0_i32 = arith.constant 0 : i32
    return %arg1, %arg0 : i32, i32
  }
  func.func @transform_2(%arg0: i32, %arg1: i32) -> (i32, i32) {
    %c0_i32 = arith.constant 0 : i32
    %c0_i32_0 = arith.constant 0 : i32
    return %c0_i32, %arg0 : i32, i32
  }
  func.func @transform_3(%arg0: i32, %arg1: i32) -> (i32, i32) {
    %c0_i32 = arith.constant 0 : i32
    %c0_i32_0 = arith.constant 0 : i32
    return %c0_i32, %arg0 : i32, i32
  }
}

</mosaic_0001>

<llo_original>
// kernel: tpu_custom_call.1
$region0: #{tpu_custom_call.1}
  #allocation0 [shape = 'u32[]', space=smem, size = 0x4, offset = 0x4, fixed_abs, tag = 'smem constant byte address 0x4 - core index']
  #allocation1 [shape = 'u32[144,128]{1,0:T(1,128)}', space=vmem, size = 0x12000, scoped, tag = 'internal scratch']
  %s0 = inlined_call_operand.hbm [shape: bf16[1568,128], index: 0, kind: input, shape index: {}]
  %s1 = inlined_call_operand.hbm [shape: bf16[128,256], index: 1, kind: input, shape index: {}]
  %s2 = inlined_call_operand.hbm [shape: f32[3,256], index: 2, kind: input, shape index: {}]
  %s3 = inlined_call_operand.hbm [shape: f32[1568,256], index: 3, kind: output, shape index: {}]
  %s4 = sld [smem:[#allocation0]]
  $region42: #{tpu_custom_call.1} parent=0
    _
  %s6 = ssub.s32 1, %s4
  %s7 = scalar_select 0, %s6, %s4
  $region1: #{tpu_custom_call.1} parent=0
    #allocation2 [shape = 'u8[401408]{0}', space=vmem, size = 0x62000, scoped, tag = 'input window, operand 0, single buffered']
    #allocation3 [shape = 's32[1]{0}', space=sflag, size = 0x4, scoped, tag = 'scoped memory for tpu_custom_call.1']
    #allocation4 [shape = 's32[1]{0}', space=sflag, size = 0x4, scoped, tag = 'scoped memory for tpu_custom_call.1']
    #allocation5 [shape = 'u8[65536]{0}', space=vmem, size = 0x10000, scoped, tag = 'input window, operand 1, single buffered']
    #allocation6 [shape = 's32[1]{0}', space=sflag, size = 0x4, scoped, tag = 'scoped memory for tpu_custom_call.1']
    #allocation7 [shape = 'u8[4096]{0}', space=vmem, size = 0x1000, scoped, tag = 'input window, operand 2, single buffered']
    #allocation8 [shape = 'u8[1605632]{0}', space=vmem, size = 0x188000, scoped, tag = 'output window, operand 0, single buffered']
    %8 = vsyncpa [#allocation3], 0
    %9 = vsyncpa [#allocation6], 0
    %10 = vsyncpa [#allocation4], 0
    // Predicated region
    $region2: #{tpu_custom_call.1} parent=1 // pred_check
      _
    $region3: #{tpu_custom_call.1} parent=1 // pred_check_branch
      %12 = sbr.rel (0) target = $region5
    $region4: #{tpu_custom_call.1} parent=1 // pred_region
      %s14 = ssub.s32 12544, 12544
      %15 = vsyncadd [#allocation3], %s14
      %s16 = sshll.u32 [#allocation2], 4
      %s17 = int_to_ptr.vmem [resolvable:$true] %s16
      %22 = dma.hbm_to_vmem [thread:$0]  %s0, 12544, %s17, [#allocation3], 64, 64, 4
    $region5: #{tpu_custom_call.1} parent=1 // pred_fallthru
      _
    // Predicated region
    $region6: #{tpu_custom_call.1} parent=1 // pred_check
      _
    $region7: #{tpu_custom_call.1} parent=1 // pred_check_branch
      %24 = sbr.rel (0) target = $region9
    $region8: #{tpu_custom_call.1} parent=1 // pred_region
      %s26 = ssub.s32 2048, 2048
      %27 = vsyncadd [#allocation6], %s26
      %s28 = sshll.u32 [#allocation5], 4
      %s29 = int_to_ptr.vmem [resolvable:$true] %s28
      %34 = dma.hbm_to_vmem [thread:$0]  %s1, 2048, %s29, [#allocation6], 128, 128, 8
    $region9: #{tpu_custom_call.1} parent=1 // pred_fallthru
      _
    // Predicated region
    $region10: #{tpu_custom_call.1} parent=1 // pred_check
      _
    $region11: #{tpu_custom_call.1} parent=1 // pred_check_branch
      %36 = sbr.rel (0) target = $region13
    $region12: #{tpu_custom_call.1} parent=1 // pred_region
      %s38 = ssub.s32 128, 128
      %39 = vsyncadd [#allocation6], %s38
      %s41 = sshll.u32 [#allocation7], 4
      %s42 = int_to_ptr.vmem [resolvable:$true] %s41
      %44 = dma.hbm_to_vmem [thread:$0]  %s2, 128, %s42, [#allocation6]
    $region13: #{tpu_custom_call.1} parent=1 // pred_fallthru
      _
    // Predicated region
    $region14: #{tpu_custom_call.1} parent=1 // pred_check
      _
    $region15: #{tpu_custom_call.1} parent=1 // pred_check_branch
      %46 = sbr.rel (0) target = $region17
    $region16: #{tpu_custom_call.1} parent=1 // pred_region
      %47 = dma.done [#allocation3], 12544
    $region17: #{tpu_custom_call.1} parent=1 // pred_fallthru
      _
    // Predicated region
    $region18: #{tpu_custom_call.1} parent=1 // pred_check
      _
    $region19: #{tpu_custom_call.1} parent=1 // pred_check_branch
      %49 = sbr.rel (0) target = $region21
    $region20: #{tpu_custom_call.1} parent=1 // pred_region
      %50 = dma.done [#allocation6], 2048
    $region21: #{tpu_custom_call.1} parent=1 // pred_fallthru
      _
    // Predicated region
    $region22: #{tpu_custom_call.1} parent=1 // pred_check
      _
    $region23: #{tpu_custom_call.1} parent=1 // pred_check_branch
      %52 = sbr.rel (0) target = $region25
    $region24: #{tpu_custom_call.1} parent=1 // pred_region
      %53 = dma.done [#allocation6], 128
    $region25: #{tpu_custom_call.1} parent=1 // pred_fallthru
      _
    %p55 = scmp.eq.s32.totalorder 0, 0
    // Predicated region
    $region26: #{tpu_custom_call.1} parent=1 // pred_check
      %p56 = pneg %p55
    $region27: #{tpu_custom_call.1} parent=1 // pred_check_branch
      %58 = sbr.rel (%p56) target = $region29
    $region28: #{tpu_custom_call.1} parent=1 // pred_region
      %59 = vst [vmem:[#allocation8] sm:$0xff] 0.0
      %60 = vst [vmem:[#allocation8 + $0x8] sm:$0xff] 0.0
      %61 = vst [vmem:[#allocation8 + $0x10] sm:$0xff] 0.0
      %62 = vst [vmem:[#allocation8 + $0x18] sm:$0xff] 0.0
      %63 = vst [vmem:[#allocation8 + $0x20] sm:$0xff] 0.0
      %64 = vst [vmem:[#allocation8 + $0x28] sm:$0xff] 0.0
      %65 = vst [vmem:[#allocation8 + $0x30] sm:$0xff] 0.0
      %66 = vst [vmem:[#allocation8 + $0x38] sm:$0xff] 0.0
      %67 = vst [vmem:[#allocation8 + $0x40] sm:$0xff] 0.0
      %68 = vst [vmem:[#allocation8 + $0x48] sm:$0xff] 0.0
      %69 = vst [vmem:[#allocation8 + $0x50] sm:$0xff] 0.0
      %70 = vst [vmem:[#allocation8 + $0x58] sm:$0xff] 0.0
      %71 = vst [vmem:[#allocation8 + $0x60] sm:$0xff] 0.0
      %72 = vst [vmem:[#allocation8 + $0x68] sm:$0xff] 0.0
      %73 = vst [vmem:[#allocation8 + $0x70] sm:$0xff] 0.0
      %74 = vst [vmem:[#allocation8 + $0x78] sm:$0xff] 0.0
      %75 = vst [vmem:[#allocation8 + $0x80] sm:$0xff] 0.0
      %76 = vst [vmem:[#allocation8 + $0x88] sm:$0xff] 0.0
      %77 = vst [vmem:[#allocation8 + $0x90] sm:$0xff] 0.0
      %78 = vst [vmem:[#allocation8 + $0x98] sm:$0xff] 0.0
      %79 = vst [vmem:[#allocation8 + $0xa0] sm:$0xff] 0.0
      %80 = vst [vmem:[#allocation8 + $0xa8] sm:$0xff] 0.0
      %81 = vst [vmem:[#allocation8 + $0xb0] sm:$0xff] 0.0
      %82 = vst [vmem:[#allocation8 + $0xb8] sm:$0xff] 0.0
      %83 = vst [vmem:[#allocation8 + $0xc0] sm:$0xff] 0.0
      %84 = vst [vmem:[#allocation8 + $0xc8] sm:$0xff] 0.0
      %85 = vst [vmem:[#allocation8 + $0xd0] sm:$0xff] 0.0
      %86 = vst [vmem:[#allocation8 + $0xd8] sm:$0xff] 0.0
      %87 = vst [vmem:[#allocation8 + $0xe0] sm:$0xff] 0.0
      %88 = vst [vmem:[#allocation8 + $0xe8] sm:$0xff] 0.0
      %89 = vst [vmem:[#allocation8 + $0xf0] sm:$0xff] 0.0
      %90 = vst [vmem:[#allocation8 + $0xf8] sm:$0xff] 0.0
      %91 = vst [vmem:[#allocation8 + $0x100] sm:$0xff] 0.0
      %92 = vst [vmem:[#allocation8 + $0x108] sm:$0xff] 0.0
      %93 = vst [vmem:[#allocation8 + $0x110] sm:$0xff] 0.0
      %94 = vst [vmem:[#allocation8 + $0x118] sm:$0xff] 0.0
      %95 = vst [vmem:[#allocation8 + $0x120] sm:$0xff] 0.0
      %96 = vst [vmem:[#allocation8 + $0x128] sm:$0xff] 0.0
      %97 = vst [vmem:[#allocation8 + $0x130] sm:$0xff] 0.0
      %98 = vst [vmem:[#allocation8 + $0x138] sm:$0xff] 0.0
      %99 = vst [vmem:[#allocation8 + $0x140] sm:$0xff] 0.0
      %100 = vst [vmem:[#allocation8 + $0x148] sm:$0xff] 0.0
      %101 = vst [vmem:[#allocation8 + $0x150] sm:$0xff] 0.0
      %102 = vst [vmem:[#allocation8 + $0x158] sm:$0xff] 0.0
      %103 = vst [vmem:[#allocation8 + $0x160] sm:$0xff] 0.0
      %104 = vst [vmem:[#allocation8 + $0x168] sm:$0xff] 0.0
      %105 = vst [vmem:[#allocation8 + $0x170] sm:$0xff] 0.0
      %106 = vst [vmem:[#allocation8 + $0x178] sm:$0xff] 0.0
      %107 = vst [vmem:[#allocation8 + $0x180] sm:$0xff] 0.0
      %108 = vst [vmem:[#allocation8 + $0x188] sm:$0xff] 0.0
      %109 = vst [vmem:[#allocation8 + $0x190] sm:$0xff] 0.0
      %110 = vst [vmem:[#allocation8 + $0x198] sm:$0xff] 0.0
      %111 = vst [vmem:[#allocation8 + $0x1a0] sm:$0xff] 0.0
      %112 = vst [vmem:[#allocation8 + $0x1a8] sm:$0xff] 0.0
      %113 = vst [vmem:[#allocation8 + $0x1b0] sm:$0xff] 0.0
      %114 = vst [vmem:[#allocation8 + $0x1b8] sm:$0xff] 0.0
      %115 = vst [vmem:[#allocation8 + $0x1c0] sm:$0xff] 0.0
      %116 = vst [vmem:[#allocation8 + $0x1c8] sm:$0xff] 0.0
      %117 = vst [vmem:[#allocation8 + $0x1d0] sm:$0xff] 0.0
      %118 = vst [vmem:[#allocation8 + $0x1d8] sm:$0xff] 0.0
      %119 = vst [vmem:[#allocation8 + $0x1e0] sm:$0xff] 0.0
      %120 = vst [vmem:[#allocation8 + $0x1e8] sm:$0xff] 0.0
      %121 = vst [vmem:[#allocation8 + $0x1f0] sm:$0xff] 0.0
      %122 = vst [vmem:[#allocation8 + $0x1f8] sm:$0xff] 0.0
      %123 = vst [vmem:[#allocation8 + $0x200] sm:$0xff] 0.0
      %124 = vst [vmem:[#allocation8 + $0x208] sm:$0xff] 0.0
      %125 = vst [vmem:[#allocation8 + $0x210] sm:$0xff] 0.0
      %126 = vst [vmem:[#allocation8 + $0x218] sm:$0xff] 0.0
      %127 = vst [vmem:[#allocation8 + $0x220] sm:$0xff] 0.0
      %128 = vst [vmem:[#allocation8 + $0x228] sm:$0xff] 0.0
      %129 = vst [vmem:[#allocation8 + $0x230] sm:$0xff] 0.0
      %130 = vst [vmem:[#allocation8 + $0x238] sm:$0xff] 0.0
      %131 = vst [vmem:[#allocation8 + $0x240] sm:$0xff] 0.0
      %132 = vst [vmem:[#allocation8 + $0x248] sm:$0xff] 0.0
      %133 = vst [vmem:[#allocation8 + $0x250] sm:$0xff] 0.0
      %134 = vst [vmem:[#allocation8 + $0x258] sm:$0xff] 0.0
      %135 = vst [vmem:[#allocation8 + $0x260] sm:$0xff] 0.0
      %136 = vst [vmem:[#allocation8 + $0x268] sm:$0xff] 0.0
      %137 = vst [vmem:[#allocation8 + $0x270] sm:$0xff] 0.0
      %138 = vst [vmem:[#allocation8 + $0x278] sm:$0xff] 0.0
      %139 = vst [vmem:[#allocation8 + $0x280] sm:$0xff] 0.0
      %140 = vst [vmem:[#allocation8 + $0x288] sm:$0xff] 0.0
      %141 = vst [vmem:[#allocation8 + $0x290] sm:$0xff] 0.0
      %142 = vst [vmem:[#allocation8 + $0x298] sm:$0xff] 0.0
      %143 = vst [vmem:[#allocation8 + $0x2a0] sm:$0xff] 0.0
      %144 = vst [vmem:[#allocation8 + $0x2a8] sm:$0xff] 0.0
      %145 = vst [vmem:[#allocation8 + $0x2b0] sm:$0xff] 0.0
      %146 = vst [vmem:[#allocation8 + $0x2b8] sm:$0xff] 0.0
      %147 = vst [vmem:[#allocation8 + $0x2c0] sm:$0xff] 0.0
      %148 = vst [vmem:[#allocation8 + $0x2c8] sm:$0xff] 0.0
      %149 = vst [vmem:[#allocation8 + $0x2d0] sm:$0xff] 0.0
      %150 = vst [vmem:[#allocation8 + $0x2d8] sm:$0xff] 0.0
      %151 = vst [vmem:[#allocation8 + $0x2e0] sm:$0xff] 0.0
      %152 = vst [vmem:[#allocation8 + $0x2e8] sm:$0xff] 0.0
      %153 = vst [vmem:[#allocation8 + $0x2f0] sm:$0xff] 0.0
      %154 = vst [vmem:[#allocation8 + $0x2f8] sm:$0xff] 0.0
      %155 = vst [vmem:[#allocation8 + $0x300] sm:$0xff] 0.0
      %156 = vst [vmem:[#allocation8 + $0x308] sm:$0xff] 0.0
      %157 = vst [vmem:[#allocation8 + $0x310] sm:$0xff] 0.0
      %158 = vst [vmem:[#allocation8 + $0x318] sm:$0xff] 0.0
      %159 = vst [vmem:[#allocation8 + $0x320] sm:$0xff] 0.0
      %160 = vst [vmem:[#allocation8 + $0x328] sm:$0xff] 0.0
      %161 = vst [vmem:[#allocation8 + $0x330] sm:$0xff] 0.0
      %162 = vst [vmem:[#allocation8 + $0x338] sm:$0xff] 0.0
      %163 = vst [vmem:[#allocation8 + $0x340] sm:$0xff] 0.0
      %164 = vst [vmem:[#allocation8 + $0x348] sm:$0xff] 0.0
      %165 = vst [vmem:[#allocation8 + $0x350] sm:$0xff] 0.0
      %166 = vst [vmem:[#allocation8 + $0x358] sm:$0xff] 0.0
      %167 = vst [vmem:[#allocation8 + $0x360] sm:$0xff] 0.0
      %168 = vst [vmem:[#allocation8 + $0x368] sm:$0xff] 0.0
      %169 = vst [vmem:[#allocation8 + $0x370] sm:$0xff] 0.0
      %170 = vst [vmem:[#allocation8 + $0x378] sm:$0xff] 0.0
      %171 = vst [vmem:[#allocation8 + $0x380] sm:$0xff] 0.0
      %172 = vst [vmem:[#allocation8 + $0x388] sm:$0xff] 0.0
      %173 = vst [vmem:[#allocation8 + $0x390] sm:$0xff] 0.0
      %174 = vst [vmem:[#allocation8 + $0x398] sm:$0xff] 0.0
      %175 = vst [vmem:[#allocation8 + $0x3a0] sm:$0xff] 0.0
      %176 = vst [vmem:[#allocation8 + $0x3a8] sm:$0xff] 0.0
      %177 = vst [vmem:[#allocation8 + $0x3b0] sm:$0xff] 0.0
      %178 = vst [vmem:[#allocation8 + $0x3b8] sm:$0xff] 0.0
      %179 = vst [vmem:[#allocation8 + $0x3c0] sm:$0xff] 0.0
      %180 = vst [vmem:[#allocation8 + $0x3c8] sm:$0xff] 0.0
      %181 = vst [vmem:[#allocation8 + $0x3d0] sm:$0xff] 0.0
      %182 = vst [vmem:[#allocation8 + $0x3d8] sm:$0xff] 0.0
      %183 = vst [vmem:[#allocation8 + $0x3e0] sm:$0xff] 0.0
      %184 = vst [vmem:[#allocation8 + $0x3e8] sm:$0xff] 0.0
      %185 = vst [vmem:[#allocation8 + $0x3f0] sm:$0xff] 0.0
      %186 = vst [vmem:[#allocation8 + $0x3f8] sm:$0xff] 0.0
      %187 = vst [vmem:[#allocation8 + $0x400] sm:$0xff] 0.0
      %188 = vst [vmem:[#allocation8 + $0x408] sm:$0xff] 0.0
      %189 = vst [vmem:[#allocation8 + $0x410] sm:$0xff] 0.0
      %190 = vst [vmem:[#allocation8 + $0x418] sm:$0xff] 0.0
      %191 = vst [vmem:[#allocation8 + $0x420] sm:$0xff] 0.0
      %192 = vst [vmem:[#allocation8 + $0x428] sm:$0xff] 0.0
      %193 = vst [vmem:[#allocation8 + $0x430] sm:$0xff] 0.0
      %194 = vst [vmem:[#allocation8 + $0x438] sm:$0xff] 0.0
      %195 = vst [vmem:[#allocation8 + $0x440] sm:$0xff] 0.0
      %196 = vst [vmem:[#allocation8 + $0x448] sm:$0xff] 0.0
      %197 = vst [vmem:[#allocation8 + $0x450] sm:$0xff] 0.0
      %198 = vst [vmem:[#allocation8 + $0x458] sm:$0xff] 0.0
      %199 = vst [vmem:[#allocation8 + $0x460] sm:$0xff] 0.0
      %200 = vst [vmem:[#allocation8 + $0x468] sm:$0xff] 0.0
      %201 = vst [vmem:[#allocation8 + $0x470] sm:$0xff] 0.0
      %202 = vst [vmem:[#allocation8 + $0x478] sm:$0xff] 0.0
      %203 = vst [vmem:[#allocation8 + $0x480] sm:$0xff] 0.0
      %204 = vst [vmem:[#allocation8 + $0x488] sm:$0xff] 0.0
      %205 = vst [vmem:[#allocation8 + $0x490] sm:$0xff] 0.0
      %206 = vst [vmem:[#allocation8 + $0x498] sm:$0xff] 0.0
      %207 = vst [vmem:[#allocation8 + $0x4a0] sm:$0xff] 0.0
      %208 = vst [vmem:[#allocation8 + $0x4a8] sm:$0xff] 0.0
      %209 = vst [vmem:[#allocation8 + $0x4b0] sm:$0xff] 0.0
      %210 = vst [vmem:[#allocation8 + $0x4b8] sm:$0xff] 0.0
      %211 = vst [vmem:[#allocation8 + $0x4c0] sm:$0xff] 0.0
      %212 = vst [vmem:[#allocation8 + $0x4c8] sm:$0xff] 0.0
      %213 = vst [vmem:[#allocation8 + $0x4d0] sm:$0xff] 0.0
      %214 = vst [vmem:[#allocation8 + $0x4d8] sm:$0xff] 0.0
      %215 = vst [vmem:[#allocation8 + $0x4e0] sm:$0xff] 0.0
      %216 = vst [vmem:[#allocation8 + $0x4e8] sm:$0xff] 0.0
      %217 = vst [vmem:[#allocation8 + $0x4f0] sm:$0xff] 0.0
      %218 = vst [vmem:[#allocation8 + $0x4f8] sm:$0xff] 0.0
      %219 = vst [vmem:[#allocation8 + $0x500] sm:$0xff] 0.0
      %220 = vst [vmem:[#allocation8 + $0x508] sm:$0xff] 0.0
      %221 = vst [vmem:[#allocation8 + $0x510] sm:$0xff] 0.0
      %222 = vst [vmem:[#allocation8 + $0x518] sm:$0xff] 0.0
      %223 = vst [vmem:[#allocation8 + $0x520] sm:$0xff] 0.0
      %224 = vst [vmem:[#allocation8 + $0x528] sm:$0xff] 0.0
      %225 = vst [vmem:[#allocation8 + $0x530] sm:$0xff] 0.0
      %226 = vst [vmem:[#allocation8 + $0x538] sm:$0xff] 0.0
      %227 = vst [vmem:[#allocation8 + $0x540] sm:$0xff] 0.0
      %228 = vst [vmem:[#allocation8 + $0x548] sm:$0xff] 0.0
      %229 = vst [vmem:[#allocation8 + $0x550] sm:$0xff] 0.0
      %230 = vst [vmem:[#allocation8 + $0x558] sm:$0xff] 0.0
      %231 = vst [vmem:[#allocation8 + $0x560] sm:$0xff] 0.0
      %232 = vst [vmem:[#allocation8 + $0x568] sm:$0xff] 0.0
      %233 = vst [vmem:[#allocation8 + $0x570] sm:$0xff] 0.0
      %234 = vst [vmem:[#allocation8 + $0x578] sm:$0xff] 0.0
      %235 = vst [vmem:[#allocation8 + $0x580] sm:$0xff] 0.0
      %236 = vst [vmem:[#allocation8 + $0x588] sm:$0xff] 0.0
      %237 = vst [vmem:[#allocation8 + $0x590] sm:$0xff] 0.0
      %238 = vst [vmem:[#allocation8 + $0x598] sm:$0xff] 0.0
      %239 = vst [vmem:[#allocation8 + $0x5a0] sm:$0xff] 0.0
      %240 = vst [vmem:[#allocation8 + $0x5a8] sm:$0xff] 0.0
      %241 = vst [vmem:[#allocation8 + $0x5b0] sm:$0xff] 0.0
      %242 = vst [vmem:[#allocation8 + $0x5b8] sm:$0xff] 0.0
      %243 = vst [vmem:[#allocation8 + $0x5c0] sm:$0xff] 0.0
      %244 = vst [vmem:[#allocation8 + $0x5c8] sm:$0xff] 0.0
      %245 = vst [vmem:[#allocation8 + $0x5d0] sm:$0xff] 0.0
      %246 = vst [vmem:[#allocation8 + $0x5d8] sm:$0xff] 0.0
      %247 = vst [vmem:[#allocation8 + $0x5e0] sm:$0xff] 0.0
      %248 = vst [vmem:[#allocation8 + $0x5e8] sm:$0xff] 0.0
      %249 = vst [vmem:[#allocation8 + $0x5f0] sm:$0xff] 0.0
      %250 = vst [vmem:[#allocation8 + $0x5f8] sm:$0xff] 0.0
      %251 = vst [vmem:[#allocation8 + $0x600] sm:$0xff] 0.0
      %252 = vst [vmem:[#allocation8 + $0x608] sm:$0xff] 0.0
      %253 = vst [vmem:[#allocation8 + $0x610] sm:$0xff] 0.0
      %254 = vst [vmem:[#allocation8 + $0x618] sm:$0xff] 0.0
      %255 = vst [vmem:[#allocation8 + $0x620] sm:$0xff] 0.0
      %256 = vst [vmem:[#allocation8 + $0x628] sm:$0xff] 0.0
      %257 = vst [vmem:[#allocation8 + $0x630] sm:$0xff] 0.0
      %258 = vst [vmem:[#allocation8 + $0x638] sm:$0xff] 0.0
      %259 = vst [vmem:[#allocation8 + $0x640] sm:$0xff] 0.0
      %260 = vst [vmem:[#allocation8 + $0x648] sm:$0xff] 0.0
      %261 = vst [vmem:[#allocation8 + $0x650] sm:$0xff] 0.0
      %262 = vst [vmem:[#allocation8 + $0x658] sm:$0xff] 0.0
      %263 = vst [vmem:[#allocation8 + $0x660] sm:$0xff] 0.0
      %264 = vst [vmem:[#allocation8 + $0x668] sm:$0xff] 0.0
      %265 = vst [vmem:[#allocation8 + $0x670] sm:$0xff] 0.0
      %266 = vst [vmem:[#allocation8 + $0x678] sm:$0xff] 0.0
      %267 = vst [vmem:[#allocation8 + $0x680] sm:$0xff] 0.0
      %268 = vst [vmem:[#allocation8 + $0x688] sm:$0xff] 0.0
      %269 = vst [vmem:[#allocation8 + $0x690] sm:$0xff] 0.0
      %270 = vst [vmem:[#allocation8 + $0x698] sm:$0xff] 0.0
      %271 = vst [vmem:[#allocation8 + $0x6a0] sm:$0xff] 0.0
      %272 = vst [vmem:[#allocation8 + $0x6a8] sm:$0xff] 0.0
      %273 = vst [vmem:[#allocation8 + $0x6b0] sm:$0xff] 0.0
      %274 = vst [vmem:[#allocation8 + $0x6b8] sm:$0xff] 0.0
      %275 = vst [vmem:[#allocation8 + $0x6c0] sm:$0xff] 0.0
      %276 = vst [vmem:[#allocation8 + $0x6c8] sm:$0xff] 0.0
      %277 = vst [vmem:[#allocation8 + $0x6d0] sm:$0xff] 0.0
      %278 = vst [vmem:[#allocation8 + $0x6d8] sm:$0xff] 0.0
      %279 = vst [vmem:[#allocation8 + $0x6e0] sm:$0xff] 0.0
      %280 = vst [vmem:[#allocation8 + $0x6e8] sm:$0xff] 0.0
      %281 = vst [vmem:[#allocation8 + $0x6f0] sm:$0xff] 0.0
      %282 = vst [vmem:[#allocation8 + $0x6f8] sm:$0xff] 0.0
      %283 = vst [vmem:[#allocation8 + $0x700] sm:$0xff] 0.0
      %284 = vst [vmem:[#allocation8 + $0x708] sm:$0xff] 0.0
      %285 = vst [vmem:[#allocation8 + $0x710] sm:$0xff] 0.0
      %286 = vst [vmem:[#allocation8 + $0x718] sm:$0xff] 0.0
      %287 = vst [vmem:[#allocation8 + $0x720] sm:$0xff] 0.0
      %288 = vst [vmem:[#allocation8 + $0x728] sm:$0xff] 0.0
      %289 = vst [vmem:[#allocation8 + $0x730] sm:$0xff] 0.0
      %290 = vst [vmem:[#allocation8 + $0x738] sm:$0xff] 0.0
      %291 = vst [vmem:[#allocation8 + $0x740] sm:$0xff] 0.0
      %292 = vst [vmem:[#allocation8 + $0x748] sm:$0xff] 0.0
      %293 = vst [vmem:[#allocation8 + $0x750] sm:$0xff] 0.0
      %294 = vst [vmem:[#allocation8 + $0x758] sm:$0xff] 0.0
      %295 = vst [vmem:[#allocation8 + $0x760] sm:$0xff] 0.0
      %296 = vst [vmem:[#allocation8 + $0x768] sm:$0xff] 0.0
      %297 = vst [vmem:[#allocation8 + $0x770] sm:$0xff] 0.0
      %298 = vst [vmem:[#allocation8 + $0x778] sm:$0xff] 0.0
      %299 = vst [vmem:[#allocation8 + $0x780] sm:$0xff] 0.0
      %300 = vst [vmem:[#allocation8 + $0x788] sm:$0xff] 0.0
      %301 = vst [vmem:[#allocation8 + $0x790] sm:$0xff] 0.0
      %302 = vst [vmem:[#allocation8 + $0x798] sm:$0xff] 0.0
      %303 = vst [vmem:[#allocation8 + $0x7a0] sm:$0xff] 0.0
      %304 = vst [vmem:[#allocation8 + $0x7a8] sm:$0xff] 0.0
      %305 = vst [vmem:[#allocation8 + $0x7b0] sm:$0xff] 0.0
      %306 = vst [vmem:[#allocation8 + $0x7b8] sm:$0xff] 0.0
      %307 = vst [vmem:[#allocation8 + $0x7c0] sm:$0xff] 0.0
      %308 = vst [vmem:[#allocation8 + $0x7c8] sm:$0xff] 0.0
      %309 = vst [vmem:[#allocation8 + $0x7d0] sm:$0xff] 0.0
      %310 = vst [vmem:[#allocation8 + $0x7d8] sm:$0xff] 0.0
      %311 = vst [vmem:[#allocation8 + $0x7e0] sm:$0xff] 0.0
      %312 = vst [vmem:[#allocation8 + $0x7e8] sm:$0xff] 0.0
      %313 = vst [vmem:[#allocation8 + $0x7f0] sm:$0xff] 0.0
      %314 = vst [vmem:[#allocation8 + $0x7f8] sm:$0xff] 0.0
      %315 = vst [vmem:[#allocation8 + $0x800] sm:$0xff] 0.0
      %316 = vst [vmem:[#allocation8 + $0x808] sm:$0xff] 0.0
      %317 = vst [vmem:[#allocation8 + $0x810] sm:$0xff] 0.0
      %318 = vst [vmem:[#allocation8 + $0x818] sm:$0xff] 0.0
      %319 = vst [vmem:[#allocation8 + $0x820] sm:$0xff] 0.0
      %320 = vst [vmem:[#allocation8 + $0x828] sm:$0xff] 0.0
      %321 = vst [vmem:[#allocation8 + $0x830] sm:$0xff] 0.0
      %322 = vst [vmem:[#allocation8 + $0x838] sm:$0xff] 0.0
      %323 = vst [vmem:[#allocation8 + $0x840] sm:$0xff] 0.0
      %324 = vst [vmem:[#allocation8 + $0x848] sm:$0xff] 0.0
      %325 = vst [vmem:[#allocation8 + $0x850] sm:$0xff] 0.0
      %326 = vst [vmem:[#allocation8 + $0x858] sm:$0xff] 0.0
      %327 = vst [vmem:[#allocation8 + $0x860] sm:$0xff] 0.0
      %328 = vst [vmem:[#allocation8 + $0x868] sm:$0xff] 0.0
      %329 = vst [vmem:[#allocation8 + $0x870] sm:$0xff] 0.0
      %330 = vst [vmem:[#allocation8 + $0x878] sm:$0xff] 0.0
      %331 = vst [vmem:[#allocation8 + $0x880] sm:$0xff] 0.0
      %332 = vst [vmem:[#allocation8 + $0x888] sm:$0xff] 0.0
      %333 = vst [vmem:[#allocation8 + $0x890] sm:$0xff] 0.0
      %334 = vst [vmem:[#allocation8 + $0x898] sm:$0xff] 0.0
      %335 = vst [vmem:[#allocation8 + $0x8a0] sm:$0xff] 0.0
      %336 = vst [vmem:[#allocation8 + $0x8a8] sm:$0xff] 0.0
      %337 = vst [vmem:[#allocation8 + $0x8b0] sm:$0xff] 0.0
      %338 = vst [vmem:[#allocation8 + $0x8b8] sm:$0xff] 0.0
      %339 = vst [vmem:[#allocation8 + $0x8c0] sm:$0xff] 0.0
      %340 = vst [vmem:[#allocation8 + $0x8c8] sm:$0xff] 0.0
      %341 = vst [vmem:[#allocation8 + $0x8d0] sm:$0xff] 0.0
      %342 = vst [vmem:[#allocation8 + $0x8d8] sm:$0xff] 0.0
      %343 = vst [vmem:[#allocation8 + $0x8e0] sm:$0xff] 0.0
      %344 = vst [vmem:[#allocation8 + $0x8e8] sm:$0xff] 0.0
      %345 = vst [vmem:[#allocation8 + $0x8f0] sm:$0xff] 0.0
      %346 = vst [vmem:[#allocation8 + $0x8f8] sm:$0xff] 0.0
      %347 = vst [vmem:[#allocation8 + $0x900] sm:$0xff] 0.0
      %348 = vst [vmem:[#allocation8 + $0x908] sm:$0xff] 0.0
      %349 = vst [vmem:[#allocation8 + $0x910] sm:$0xff] 0.0
      %350 = vst [vmem:[#allocation8 + $0x918] sm:$0xff] 0.0
      %351 = vst [vmem:[#allocation8 + $0x920] sm:$0xff] 0.0
      %352 = vst [vmem:[#allocation8 + $0x928] sm:$0xff] 0.0
      %353 = vst [vmem:[#allocation8 + $0x930] sm:$0xff] 0.0
      %354 = vst [vmem:[#allocation8 + $0x938] sm:$0xff] 0.0
      %355 = vst [vmem:[#allocation8 + $0x940] sm:$0xff] 0.0
      %356 = vst [vmem:[#allocation8 + $0x948] sm:$0xff] 0.0
      %357 = vst [vmem:[#allocation8 + $0x950] sm:$0xff] 0.0
      %358 = vst [vmem:[#allocation8 + $0x958] sm:$0xff] 0.0
      %359 = vst [vmem:[#allocation8 + $0x960] sm:$0xff] 0.0
      %360 = vst [vmem:[#allocation8 + $0x968] sm:$0xff] 0.0
      %361 = vst [vmem:[#allocation8 + $0x970] sm:$0xff] 0.0
      %362 = vst [vmem:[#allocation8 + $0x978] sm:$0xff] 0.0
      %363 = vst [vmem:[#allocation8 + $0x980] sm:$0xff] 0.0
      %364 = vst [vmem:[#allocation8 + $0x988] sm:$0xff] 0.0
      %365 = vst [vmem:[#allocation8 + $0x990] sm:$0xff] 0.0
      %366 = vst [vmem:[#allocation8 + $0x998] sm:$0xff] 0.0
      %367 = vst [vmem:[#allocation8 + $0x9a0] sm:$0xff] 0.0
      %368 = vst [vmem:[#allocation8 + $0x9a8] sm:$0xff] 0.0
      %369 = vst [vmem:[#allocation8 + $0x9b0] sm:$0xff] 0.0
      %370 = vst [vmem:[#allocation8 + $0x9b8] sm:$0xff] 0.0
      %371 = vst [vmem:[#allocation8 + $0x9c0] sm:$0xff] 0.0
      %372 = vst [vmem:[#allocation8 + $0x9c8] sm:$0xff] 0.0
      %373 = vst [vmem:[#allocation8 + $0x9d0] sm:$0xff] 0.0
      %374 = vst [vmem:[#allocation8 + $0x9d8] sm:$0xff] 0.0
      %375 = vst [vmem:[#allocation8 + $0x9e0] sm:$0xff] 0.0
      %376 = vst [vmem:[#allocation8 + $0x9e8] sm:$0xff] 0.0
      %377 = vst [vmem:[#allocation8 + $0x9f0] sm:$0xff] 0.0
      %378 = vst [vmem:[#allocation8 + $0x9f8] sm:$0xff] 0.0
      %379 = vst [vmem:[#allocation8 + $0xa00] sm:$0xff] 0.0
      %380 = vst [vmem:[#allocation8 + $0xa08] sm:$0xff] 0.0
      %381 = vst [vmem:[#allocation8 + $0xa10] sm:$0xff] 0.0
      %382 = vst [vmem:[#allocation8 + $0xa18] sm:$0xff] 0.0
      %383 = vst [vmem:[#allocation8 + $0xa20] sm:$0xff] 0.0
      %384 = vst [vmem:[#allocation8 + $0xa28] sm:$0xff] 0.0
      %385 = vst [vmem:[#allocation8 + $0xa30] sm:$0xff] 0.0
      %386 = vst [vmem:[#allocation8 + $0xa38] sm:$0xff] 0.0
      %387 = vst [vmem:[#allocation8 + $0xa40] sm:$0xff] 0.0
      %388 = vst [vmem:[#allocation8 + $0xa48] sm:$0xff] 0.0
      %389 = vst [vmem:[#allocation8 + $0xa50] sm:$0xff] 0.0
      %390 = vst [vmem:[#allocation8 + $0xa58] sm:$0xff] 0.0
      %391 = vst [vmem:[#allocation8 + $0xa60] sm:$0xff] 0.0
      %392 = vst [vmem:[#allocation8 + $0xa68] sm:$0xff] 0.0
      %393 = vst [vmem:[#allocation8 + $0xa70] sm:$0xff] 0.0
      %394 = vst [vmem:[#allocation8 + $0xa78] sm:$0xff] 0.0
      %395 = vst [vmem:[#allocation8 + $0xa80] sm:$0xff] 0.0
      %396 = vst [vmem:[#allocation8 + $0xa88] sm:$0xff] 0.0
      %397 = vst [vmem:[#allocation8 + $0xa90] sm:$0xff] 0.0
      %398 = vst [vmem:[#allocation8 + $0xa98] sm:$0xff] 0.0
      %399 = vst [vmem:[#allocation8 + $0xaa0] sm:$0xff] 0.0
      %400 = vst [vmem:[#allocation8 + $0xaa8] sm:$0xff] 0.0
      %401 = vst [vmem:[#allocation8 + $0xab0] sm:$0xff] 0.0
      %402 = vst [vmem:[#allocation8 + $0xab8] sm:$0xff] 0.0
      %403 = vst [vmem:[#allocation8 + $0xac0] sm:$0xff] 0.0
      %404 = vst [vmem:[#allocation8 + $0xac8] sm:$0xff] 0.0
      %405 = vst [vmem:[#allocation8 + $0xad0] sm:$0xff] 0.0
      %406 = vst [vmem:[#allocation8 + $0xad8] sm:$0xff] 0.0
      %407 = vst [vmem:[#allocation8 + $0xae0] sm:$0xff] 0.0
      %408 = vst [vmem:[#allocation8 + $0xae8] sm:$0xff] 0.0
      %409 = vst [vmem:[#allocation8 + $0xaf0] sm:$0xff] 0.0
      %410 = vst [vmem:[#allocation8 + $0xaf8] sm:$0xff] 0.0
      %411 = vst [vmem:[#allocation8 + $0xb00] sm:$0xff] 0.0
      %412 = vst [vmem:[#allocation8 + $0xb08] sm:$0xff] 0.0
      %413 = vst [vmem:[#allocation8 + $0xb10] sm:$0xff] 0.0
      %414 = vst [vmem:[#allocation8 + $0xb18] sm:$0xff] 0.0
      %415 = vst [vmem:[#allocation8 + $0xb20] sm:$0xff] 0.0
      %416 = vst [vmem:[#allocation8 + $0xb28] sm:$0xff] 0.0
      %417 = vst [vmem:[#allocation8 + $0xb30] sm:$0xff] 0.0
      %418 = vst [vmem:[#allocation8 + $0xb38] sm:$0xff] 0.0
      %419 = vst [vmem:[#allocation8 + $0xb40] sm:$0xff] 0.0
      %420 = vst [vmem:[#allocation8 + $0xb48] sm:$0xff] 0.0
      %421 = vst [vmem:[#allocation8 + $0xb50] sm:$0xff] 0.0
      %422 = vst [vmem:[#allocation8 + $0xb58] sm:$0xff] 0.0
      %423 = vst [vmem:[#allocation8 + $0xb60] sm:$0xff] 0.0
      %424 = vst [vmem:[#allocation8 + $0xb68] sm:$0xff] 0.0
      %425 = vst [vmem:[#allocation8 + $0xb70] sm:$0xff] 0.0
      %426 = vst [vmem:[#allocation8 + $0xb78] sm:$0xff] 0.0
      %427 = vst [vmem:[#allocation8 + $0xb80] sm:$0xff] 0.0
      %428 = vst [vmem:[#allocation8 + $0xb88] sm:$0xff] 0.0
      %429 = vst [vmem:[#allocation8 + $0xb90] sm:$0xff] 0.0
      %430 = vst [vmem:[#allocation8 + $0xb98] sm:$0xff] 0.0
      %431 = vst [vmem:[#allocation8 + $0xba0] sm:$0xff] 0.0
      %432 = vst [vmem:[#allocation8 + $0xba8] sm:$0xff] 0.0
      %433 = vst [vmem:[#allocation8 + $0xbb0] sm:$0xff] 0.0
      %434 = vst [vmem:[#allocation8 + $0xbb8] sm:$0xff] 0.0
      %435 = vst [vmem:[#allocation8 + $0xbc0] sm:$0xff] 0.0
      %436 = vst [vmem:[#allocation8 + $0xbc8] sm:$0xff] 0.0
      %437 = vst [vmem:[#allocation8 + $0xbd0] sm:$0xff] 0.0
      %438 = vst [vmem:[#allocation8 + $0xbd8] sm:$0xff] 0.0
      %439 = vst [vmem:[#allocation8 + $0xbe0] sm:$0xff] 0.0
      %440 = vst [vmem:[#allocation8 + $0xbe8] sm:$0xff] 0.0
      %441 = vst [vmem:[#allocation8 + $0xbf0] sm:$0xff] 0.0
      %442 = vst [vmem:[#allocation8 + $0xbf8] sm:$0xff] 0.0
      %443 = vst [vmem:[#allocation8 + $0xc00] sm:$0xff] 0.0
      %444 = vst [vmem:[#allocation8 + $0xc08] sm:$0xff] 0.0
      %445 = vst [vmem:[#allocation8 + $0xc10] sm:$0xff] 0.0
      %446 = vst [vmem:[#allocation8 + $0xc18] sm:$0xff] 0.0
      %447 = vst [vmem:[#allocation8 + $0xc20] sm:$0xff] 0.0
      %448 = vst [vmem:[#allocation8 + $0xc28] sm:$0xff] 0.0
      %449 = vst [vmem:[#allocation8 + $0xc30] sm:$0xff] 0.0
      %450 = vst [vmem:[#allocation8 + $0xc38] sm:$0xff] 0.0
    $region29: #{tpu_custom_call.1} parent=1 // pred_fallthru
      _
    %v451 = vld [vmem:[#allocation8] sm:$0xff]
    %v452 = vld [vmem:[#allocation8 + $0x8] sm:$0xff]
    %v453 = vld [vmem:[#allocation8 + $0x10] sm:$0xff]
    %v454 = vld [vmem:[#allocation8 + $0x18] sm:$0xff]
    %v455 = vld [vmem:[#allocation8 + $0x20] sm:$0xff]
    %v456 = vld [vmem:[#allocation8 + $0x28] sm:$0xff]
    %v457 = vld [vmem:[#allocation8 + $0x30] sm:$0xff]
    %v458 = vld [vmem:[#allocation8 + $0x38] sm:$0xff]
    %v459 = vld [vmem:[#allocation8 + $0x40] sm:$0xff]
    %v460 = vld [vmem:[#allocation8 + $0x48] sm:$0xff]
    %v461 = vld [vmem:[#allocation8 + $0x50] sm:$0xff]
    %v462 = vld [vmem:[#allocation8 + $0x58] sm:$0xff]
    %v463 = vld [vmem:[#allocation8 + $0x60] sm:$0xff]
    %v464 = vld [vmem:[#allocation8 + $0x68] sm:$0xff]
    %v465 = vld [vmem:[#allocation8 + $0x70] sm:$0xff]
    %v466 = vld [vmem:[#allocation8 + $0x78] sm:$0xff]
    %v467 = vld [vmem:[#allocation8 + $0x80] sm:$0xff]
    %v468 = vld [vmem:[#allocation8 + $0x88] sm:$0xff]
    %v469 = vld [vmem:[#allocation8 + $0x90] sm:$0xff]
    %v470 = vld [vmem:[#allocation8 + $0x98] sm:$0xff]
    %v471 = vld [vmem:[#allocation8 + $0xa0] sm:$0xff]
    %v472 = vld [vmem:[#allocation8 + $0xa8] sm:$0xff]
    %v473 = vld [vmem:[#allocation8 + $0xb0] sm:$0xff]
    %v474 = vld [vmem:[#allocation8 + $0xb8] sm:$0xff]
    %v475 = vld [vmem:[#allocation8 + $0xc0] sm:$0xff]
    %v476 = vld [vmem:[#allocation8 + $0xc8] sm:$0xff]
    %v477 = vld [vmem:[#allocation8 + $0xd0] sm:$0xff]
    %v478 = vld [vmem:[#allocation8 + $0xd8] sm:$0xff]
    %v479 = vld [vmem:[#allocation8 + $0xe0] sm:$0xff]
    %v480 = vld [vmem:[#allocation8 + $0xe8] sm:$0xff]
    %v481 = vld [vmem:[#allocation8 + $0xf0] sm:$0xff]
    %v482 = vld [vmem:[#allocation8 + $0xf8] sm:$0xff]
    %v483 = vld [vmem:[#allocation8 + $0x100] sm:$0xff]
    %v484 = vld [vmem:[#allocation8 + $0x108] sm:$0xff]
    %v485 = vld [vmem:[#allocation8 + $0x110] sm:$0xff]
    %v486 = vld [vmem:[#allocation8 + $0x118] sm:$0xff]
    %v487 = vld [vmem:[#allocation8 + $0x120] sm:$0xff]
    %v488 = vld [vmem:[#allocation8 + $0x128] sm:$0xff]
    %v489 = vld [vmem:[#allocation8 + $0x130] sm:$0xff]
    %v490 = vld [vmem:[#allocation8 + $0x138] sm:$0xff]
    %v491 = vld [vmem:[#allocation8 + $0x140] sm:$0xff]
    %v492 = vld [vmem:[#allocation8 + $0x148] sm:$0xff]
    %v493 = vld [vmem:[#allocation8 + $0x150] sm:$0xff]
    %v494 = vld [vmem:[#allocation8 + $0x158] sm:$0xff]
    %v495 = vld [vmem:[#allocation8 + $0x160] sm:$0xff]
    %v496 = vld [vmem:[#allocation8 + $0x168] sm:$0xff]
    %v497 = vld [vmem:[#allocation8 + $0x170] sm:$0xff]
    %v498 = vld [vmem:[#allocation8 + $0x178] sm:$0xff]
    %v499 = vld [vmem:[#allocation8 + $0x180] sm:$0xff]
    %v500 = vld [vmem:[#allocation8 + $0x188] sm:$0xff]
    %v501 = vld [vmem:[#allocation8 + $0x190] sm:$0xff]
    %v502 = vld [vmem:[#allocation8 + $0x198] sm:$0xff]
    %v503 = vld [vmem:[#allocation8 + $0x1a0] sm:$0xff]
    %v504 = vld [vmem:[#allocation8 + $0x1a8] sm:$0xff]
    %v505 = vld [vmem:[#allocation8 + $0x1b0] sm:$0xff]
    %v506 = vld [vmem:[#allocation8 + $0x1b8] sm:$0xff]
    %v507 = vld [vmem:[#allocation8 + $0x1c0] sm:$0xff]
    %v508 = vld [vmem:[#allocation8 + $0x1c8] sm:$0xff]
    %v509 = vld [vmem:[#allocation8 + $0x1d0] sm:$0xff]
    %v510 = vld [vmem:[#allocation8 + $0x1d8] sm:$0xff]
    %v511 = vld [vmem:[#allocation8 + $0x1e0] sm:$0xff]
    %v512 = vld [vmem:[#allocation8 + $0x1e8] sm:$0xff]
    %v513 = vld [vmem:[#allocation8 + $0x1f0] sm:$0xff]
    %v514 = vld [vmem:[#allocation8 + $0x1f8] sm:$0xff]
    %v515 = vld [vmem:[#allocation8 + $0x200] sm:$0xff]
    %v516 = vld [vmem:[#allocation8 + $0x208] sm:$0xff]
    %v517 = vld [vmem:[#allocation8 + $0x210] sm:$0xff]
    %v518 = vld [vmem:[#allocation8 + $0x218] sm:$0xff]
    %v519 = vld [vmem:[#allocation8 + $0x220] sm:$0xff]
    %v520 = vld [vmem:[#allocation8 + $0x228] sm:$0xff]
    %v521 = vld [vmem:[#allocation8 + $0x230] sm:$0xff]
    %v522 = vld [vmem:[#allocation8 + $0x238] sm:$0xff]
    %v523 = vld [vmem:[#allocation8 + $0x240] sm:$0xff]
    %v524 = vld [vmem:[#allocation8 + $0x248] sm:$0xff]
    %v525 = vld [vmem:[#allocation8 + $0x250] sm:$0xff]
    %v526 = vld [vmem:[#allocation8 + $0x258] sm:$0xff]
    %v527 = vld [vmem:[#allocation8 + $0x260] sm:$0xff]
    %v528 = vld [vmem:[#allocation8 + $0x268] sm:$0xff]
    %v529 = vld [vmem:[#allocation8 + $0x270] sm:$0xff]
    %v530 = vld [vmem:[#allocation8 + $0x278] sm:$0xff]
    %v531 = vld [vmem:[#allocation8 + $0x280] sm:$0xff]
    %v532 = vld [vmem:[#allocation8 + $0x288] sm:$0xff]
    %v533 = vld [vmem:[#allocation8 + $0x290] sm:$0xff]
    %v534 = vld [vmem:[#allocation8 + $0x298] sm:$0xff]
    %v535 = vld [vmem:[#allocation8 + $0x2a0] sm:$0xff]
    %v536 = vld [vmem:[#allocation8 + $0x2a8] sm:$0xff]
    %v537 = vld [vmem:[#allocation8 + $0x2b0] sm:$0xff]
    %v538 = vld [vmem:[#allocation8 + $0x2b8] sm:$0xff]
    %v539 = vld [vmem:[#allocation8 + $0x2c0] sm:$0xff]
    %v540 = vld [vmem:[#allocation8 + $0x2c8] sm:$0xff]
    %v541 = vld [vmem:[#allocation8 + $0x2d0] sm:$0xff]
    %v542 = vld [vmem:[#allocation8 + $0x2d8] sm:$0xff]
    %v543 = vld [vmem:[#allocation8 + $0x2e0] sm:$0xff]
    %v544 = vld [vmem:[#allocation8 + $0x2e8] sm:$0xff]
    %v545 = vld [vmem:[#allocation8 + $0x2f0] sm:$0xff]
    %v546 = vld [vmem:[#allocation8 + $0x2f8] sm:$0xff]
    %v547 = vld [vmem:[#allocation8 + $0x300] sm:$0xff]
    %v548 = vld [vmem:[#allocation8 + $0x308] sm:$0xff]
    %v549 = vld [vmem:[#allocation8 + $0x310] sm:$0xff]
    %v550 = vld [vmem:[#allocation8 + $0x318] sm:$0xff]
    %v551 = vld [vmem:[#allocation8 + $0x320] sm:$0xff]
    %v552 = vld [vmem:[#allocation8 + $0x328] sm:$0xff]
    %v553 = vld [vmem:[#allocation8 + $0x330] sm:$0xff]
    %v554 = vld [vmem:[#allocation8 + $0x338] sm:$0xff]
    %v555 = vld [vmem:[#allocation8 + $0x340] sm:$0xff]
    %v556 = vld [vmem:[#allocation8 + $0x348] sm:$0xff]
    %v557 = vld [vmem:[#allocation8 + $0x350] sm:$0xff]
    %v558 = vld [vmem:[#allocation8 + $0x358] sm:$0xff]
    %v559 = vld [vmem:[#allocation8 + $0x360] sm:$0xff]
    %v560 = vld [vmem:[#allocation8 + $0x368] sm:$0xff]
    %v561 = vld [vmem:[#allocation8 + $0x370] sm:$0xff]
    %v562 = vld [vmem:[#allocation8 + $0x378] sm:$0xff]
    %v563 = vld [vmem:[#allocation8 + $0x380] sm:$0xff]
    %v564 = vld [vmem:[#allocation8 + $0x388] sm:$0xff]
    %v565 = vld [vmem:[#allocation8 + $0x390] sm:$0xff]
    %v566 = vld [vmem:[#allocation8 + $0x398] sm:$0xff]
    %v567 = vld [vmem:[#allocation8 + $0x3a0] sm:$0xff]
    %v568 = vld [vmem:[#allocation8 + $0x3a8] sm:$0xff]
    %v569 = vld [vmem:[#allocation8 + $0x3b0] sm:$0xff]
    %v570 = vld [vmem:[#allocation8 + $0x3b8] sm:$0xff]
    %v571 = vld [vmem:[#allocation8 + $0x3c0] sm:$0xff]
    %v572 = vld [vmem:[#allocation8 + $0x3c8] sm:$0xff]
    %v573 = vld [vmem:[#allocation8 + $0x3d0] sm:$0xff]
    %v574 = vld [vmem:[#allocation8 + $0x3d8] sm:$0xff]
    %v575 = vld [vmem:[#allocation8 + $0x3e0] sm:$0xff]
    %v576 = vld [vmem:[#allocation8 + $0x3e8] sm:$0xff]
    %v577 = vld [vmem:[#allocation8 + $0x3f0] sm:$0xff]
    %v578 = vld [vmem:[#allocation8 + $0x3f8] sm:$0xff]
    %v579 = vld [vmem:[#allocation8 + $0x400] sm:$0xff]
    %v580 = vld [vmem:[#allocation8 + $0x408] sm:$0xff]
    %v581 = vld [vmem:[#allocation8 + $0x410] sm:$0xff]
    %v582 = vld [vmem:[#allocation8 + $0x418] sm:$0xff]
    %v583 = vld [vmem:[#allocation8 + $0x420] sm:$0xff]
    %v584 = vld [vmem:[#allocation8 + $0x428] sm:$0xff]
    %v585 = vld [vmem:[#allocation8 + $0x430] sm:$0xff]
    %v586 = vld [vmem:[#allocation8 + $0x438] sm:$0xff]
    %v587 = vld [vmem:[#allocation8 + $0x440] sm:$0xff]
    %v588 = vld [vmem:[#allocation8 + $0x448] sm:$0xff]
    %v589 = vld [vmem:[#allocation8 + $0x450] sm:$0xff]
    %v590 = vld [vmem:[#allocation8 + $0x458] sm:$0xff]
    %v591 = vld [vmem:[#allocation8 + $0x460] sm:$0xff]
    %v592 = vld [vmem:[#allocation8 + $0x468] sm:$0xff]
    %v593 = vld [vmem:[#allocation8 + $0x470] sm:$0xff]
    %v594 = vld [vmem:[#allocation8 + $0x478] sm:$0xff]
    %v595 = vld [vmem:[#allocation8 + $0x480] sm:$0xff]
    %v596 = vld [vmem:[#allocation8 + $0x488] sm:$0xff]
    %v597 = vld [vmem:[#allocation8 + $0x490] sm:$0xff]
    %v598 = vld [vmem:[#allocation8 + $0x498] sm:$0xff]
    %v599 = vld [vmem:[#allocation8 + $0x4a0] sm:$0xff]
    %v600 = vld [vmem:[#allocation8 + $0x4a8] sm:$0xff]
    %v601 = vld [vmem:[#allocation8 + $0x4b0] sm:$0xff]
    %v602 = vld [vmem:[#allocation8 + $0x4b8] sm:$0xff]
    %v603 = vld [vmem:[#allocation8 + $0x4c0] sm:$0xff]
    %v604 = vld [vmem:[#allocation8 + $0x4c8] sm:$0xff]
    %v605 = vld [vmem:[#allocation8 + $0x4d0] sm:$0xff]
    %v606 = vld [vmem:[#allocation8 + $0x4d8] sm:$0xff]
    %v607 = vld [vmem:[#allocation8 + $0x4e0] sm:$0xff]
    %v608 = vld [vmem:[#allocation8 + $0x4e8] sm:$0xff]
    %v609 = vld [vmem:[#allocation8 + $0x4f0] sm:$0xff]
    %v610 = vld [vmem:[#allocation8 + $0x4f8] sm:$0xff]
    %v611 = vld [vmem:[#allocation8 + $0x500] sm:$0xff]
    %v612 = vld [vmem:[#allocation8 + $0x508] sm:$0xff]
    %v613 = vld [vmem:[#allocation8 + $0x510] sm:$0xff]
    %v614 = vld [vmem:[#allocation8 + $0x518] sm:$0xff]
    %v615 = vld [vmem:[#allocation8 + $0x520] sm:$0xff]
    %v616 = vld [vmem:[#allocation8 + $0x528] sm:$0xff]
    %v617 = vld [vmem:[#allocation8 + $0x530] sm:$0xff]
    %v618 = vld [vmem:[#allocation8 + $0x538] sm:$0xff]
    %v619 = vld [vmem:[#allocation8 + $0x540] sm:$0xff]
    %v620 = vld [vmem:[#allocation8 + $0x548] sm:$0xff]
    %v621 = vld [vmem:[#allocation8 + $0x550] sm:$0xff]
    %v622 = vld [vmem:[#allocation8 + $0x558] sm:$0xff]
    %v623 = vld [vmem:[#allocation8 + $0x560] sm:$0xff]
    %v624 = vld [vmem:[#allocation8 + $0x568] sm:$0xff]
    %v625 = vld [vmem:[#allocation8 + $0x570] sm:$0xff]
    %v626 = vld [vmem:[#allocation8 + $0x578] sm:$0xff]
    %v627 = vld [vmem:[#allocation8 + $0x580] sm:$0xff]
    %v628 = vld [vmem:[#allocation8 + $0x588] sm:$0xff]
    %v629 = vld [vmem:[#allocation8 + $0x590] sm:$0xff]
    %v630 = vld [vmem:[#allocation8 + $0x598] sm:$0xff]
    %v631 = vld [vmem:[#allocation8 + $0x5a0] sm:$0xff]
    %v632 = vld [vmem:[#allocation8 + $0x5a8] sm:$0xff]
    %v633 = vld [vmem:[#allocation8 + $0x5b0] sm:$0xff]
    %v634 = vld [vmem:[#allocation8 + $0x5b8] sm:$0xff]
    %v635 = vld [vmem:[#allocation8 + $0x5c0] sm:$0xff]
    %v636 = vld [vmem:[#allocation8 + $0x5c8] sm:$0xff]
    %v637 = vld [vmem:[#allocation8 + $0x5d0] sm:$0xff]
    %v638 = vld [vmem:[#allocation8 + $0x5d8] sm:$0xff]
    %v639 = vld [vmem:[#allocation8 + $0x5e0] sm:$0xff]
    %v640 = vld [vmem:[#allocation8 + $0x5e8] sm:$0xff]
    %v641 = vld [vmem:[#allocation8 + $0x5f0] sm:$0xff]
    %v642 = vld [vmem:[#allocation8 + $0x5f8] sm:$0xff]
    %v643 = vld [vmem:[#allocation8 + $0x600] sm:$0xff]
    %v644 = vld [vmem:[#allocation8 + $0x608] sm:$0xff]
    %v645 = vld [vmem:[#allocation8 + $0x610] sm:$0xff]
    %v646 = vld [vmem:[#allocation8 + $0x618] sm:$0xff]
    %v647 = vld [vmem:[#allocation8 + $0x620] sm:$0xff]
    %v648 = vld [vmem:[#allocation8 + $0x628] sm:$0xff]
    %v649 = vld [vmem:[#allocation8 + $0x630] sm:$0xff]
    %v650 = vld [vmem:[#allocation8 + $0x638] sm:$0xff]
    %v651 = vld [vmem:[#allocation8 + $0x640] sm:$0xff]
    %v652 = vld [vmem:[#allocation8 + $0x648] sm:$0xff]
    %v653 = vld [vmem:[#allocation8 + $0x650] sm:$0xff]
    %v654 = vld [vmem:[#allocation8 + $0x658] sm:$0xff]
    %v655 = vld [vmem:[#allocation8 + $0x660] sm:$0xff]
    %v656 = vld [vmem:[#allocation8 + $0x668] sm:$0xff]
    %v657 = vld [vmem:[#allocation8 + $0x670] sm:$0xff]
    %v658 = vld [vmem:[#allocation8 + $0x678] sm:$0xff]
    %v659 = vld [vmem:[#allocation8 + $0x680] sm:$0xff]
    %v660 = vld [vmem:[#allocation8 + $0x688] sm:$0xff]
    %v661 = vld [vmem:[#allocation8 + $0x690] sm:$0xff]
    %v662 = vld [vmem:[#allocation8 + $0x698] sm:$0xff]
    %v663 = vld [vmem:[#allocation8 + $0x6a0] sm:$0xff]
    %v664 = vld [vmem:[#allocation8 + $0x6a8] sm:$0xff]
    %v665 = vld [vmem:[#allocation8 + $0x6b0] sm:$0xff]
    %v666 = vld [vmem:[#allocation8 + $0x6b8] sm:$0xff]
    %v667 = vld [vmem:[#allocation8 + $0x6c0] sm:$0xff]
    %v668 = vld [vmem:[#allocation8 + $0x6c8] sm:$0xff]
    %v669 = vld [vmem:[#allocation8 + $0x6d0] sm:$0xff]
    %v670 = vld [vmem:[#allocation8 + $0x6d8] sm:$0xff]
    %v671 = vld [vmem:[#allocation8 + $0x6e0] sm:$0xff]
    %v672 = vld [vmem:[#allocation8 + $0x6e8] sm:$0xff]
    %v673 = vld [vmem:[#allocation8 + $0x6f0] sm:$0xff]
    %v674 = vld [vmem:[#allocation8 + $0x6f8] sm:$0xff]
    %v675 = vld [vmem:[#allocation8 + $0x700] sm:$0xff]
    %v676 = vld [vmem:[#allocation8 + $0x708] sm:$0xff]
    %v677 = vld [vmem:[#allocation8 + $0x710] sm:$0xff]
    %v678 = vld [vmem:[#allocation8 + $0x718] sm:$0xff]
    %v679 = vld [vmem:[#allocation8 + $0x720] sm:$0xff]
    %v680 = vld [vmem:[#allocation8 + $0x728] sm:$0xff]
    %v681 = vld [vmem:[#allocation8 + $0x730] sm:$0xff]
    %v682 = vld [vmem:[#allocation8 + $0x738] sm:$0xff]
    %v683 = vld [vmem:[#allocation8 + $0x740] sm:$0xff]
    %v684 = vld [vmem:[#allocation8 + $0x748] sm:$0xff]
    %v685 = vld [vmem:[#allocation8 + $0x750] sm:$0xff]
    %v686 = vld [vmem:[#allocation8 + $0x758] sm:$0xff]
    %v687 = vld [vmem:[#allocation8 + $0x760] sm:$0xff]
    %v688 = vld [vmem:[#allocation8 + $0x768] sm:$0xff]
    %v689 = vld [vmem:[#allocation8 + $0x770] sm:$0xff]
    %v690 = vld [vmem:[#allocation8 + $0x778] sm:$0xff]
    %v691 = vld [vmem:[#allocation8 + $0x780] sm:$0xff]
    %v692 = vld [vmem:[#allocation8 + $0x788] sm:$0xff]
    %v693 = vld [vmem:[#allocation8 + $0x790] sm:$0xff]
    %v694 = vld [vmem:[#allocation8 + $0x798] sm:$0xff]
    %v695 = vld [vmem:[#allocation8 + $0x7a0] sm:$0xff]
    %v696 = vld [vmem:[#allocation8 + $0x7a8] sm:$0xff]
    %v697 = vld [vmem:[#allocation8 + $0x7b0] sm:$0xff]
    %v698 = vld [vmem:[#allocation8 + $0x7b8] sm:$0xff]
    %v699 = vld [vmem:[#allocation8 + $0x7c0] sm:$0xff]
    %v700 = vld [vmem:[#allocation8 + $0x7c8] sm:$0xff]
    %v701 = vld [vmem:[#allocation8 + $0x7d0] sm:$0xff]
    %v702 = vld [vmem:[#allocation8 + $0x7d8] sm:$0xff]
    %v703 = vld [vmem:[#allocation8 + $0x7e0] sm:$0xff]
    %v704 = vld [vmem:[#allocation8 + $0x7e8] sm:$0xff]
    %v705 = vld [vmem:[#allocation8 + $0x7f0] sm:$0xff]
    %v706 = vld [vmem:[#allocation8 + $0x7f8] sm:$0xff]
    %v707 = vld [vmem:[#allocation8 + $0x800] sm:$0xff]
    %v708 = vld [vmem:[#allocation8 + $0x808] sm:$0xff]
    %v709 = vld [vmem:[#allocation8 + $0x810] sm:$0xff]
    %v710 = vld [vmem:[#allocation8 + $0x818] sm:$0xff]
    %v711 = vld [vmem:[#allocation8 + $0x820] sm:$0xff]
    %v712 = vld [vmem:[#allocation8 + $0x828] sm:$0xff]
    %v713 = vld [vmem:[#allocation8 + $0x830] sm:$0xff]
    %v714 = vld [vmem:[#allocation8 + $0x838] sm:$0xff]
    %v715 = vld [vmem:[#allocation8 + $0x840] sm:$0xff]
    %v716 = vld [vmem:[#allocation8 + $0x848] sm:$0xff]
    %v717 = vld [vmem:[#allocation8 + $0x850] sm:$0xff]
    %v718 = vld [vmem:[#allocation8 + $0x858] sm:$0xff]
    %v719 = vld [vmem:[#allocation8 + $0x860] sm:$0xff]
    %v720 = vld [vmem:[#allocation8 + $0x868] sm:$0xff]
    %v721 = vld [vmem:[#allocation8 + $0x870] sm:$0xff]
    %v722 = vld [vmem:[#allocation8 + $0x878] sm:$0xff]
    %v723 = vld [vmem:[#allocation8 + $0x880] sm:$0xff]
    %v724 = vld [vmem:[#allocation8 + $0x888] sm:$0xff]
    %v725 = vld [vmem:[#allocation8 + $0x890] sm:$0xff]
    %v726 = vld [vmem:[#allocation8 + $0x898] sm:$0xff]
    %v727 = vld [vmem:[#allocation8 + $0x8a0] sm:$0xff]
    %v728 = vld [vmem:[#allocation8 + $0x8a8] sm:$0xff]
    %v729 = vld [vmem:[#allocation8 + $0x8b0] sm:$0xff]
    %v730 = vld [vmem:[#allocation8 + $0x8b8] sm:$0xff]
    %v731 = vld [vmem:[#allocation8 + $0x8c0] sm:$0xff]
    %v732 = vld [vmem:[#allocation8 + $0x8c8] sm:$0xff]
    %v733 = vld [vmem:[#allocation8 + $0x8d0] sm:$0xff]
    %v734 = vld [vmem:[#allocation8 + $0x8d8] sm:$0xff]
    %v735 = vld [vmem:[#allocation8 + $0x8e0] sm:$0xff]
    %v736 = vld [vmem:[#allocation8 + $0x8e8] sm:$0xff]
    %v737 = vld [vmem:[#allocation8 + $0x8f0] sm:$0xff]
    %v738 = vld [vmem:[#allocation8 + $0x8f8] sm:$0xff]
    %v739 = vld [vmem:[#allocation8 + $0x900] sm:$0xff]
    %v740 = vld [vmem:[#allocation8 + $0x908] sm:$0xff]
    %v741 = vld [vmem:[#allocation8 + $0x910] sm:$0xff]
    %v742 = vld [vmem:[#allocation8 + $0x918] sm:$0xff]
    %v743 = vld [vmem:[#allocation8 + $0x920] sm:$0xff]
    %v744 = vld [vmem:[#allocation8 + $0x928] sm:$0xff]
    %v745 = vld [vmem:[#allocation8 + $0x930] sm:$0xff]
    %v746 = vld [vmem:[#allocation8 + $0x938] sm:$0xff]
    %v747 = vld [vmem:[#allocation8 + $0x940] sm:$0xff]
    %v748 = vld [vmem:[#allocation8 + $0x948] sm:$0xff]
    %v749 = vld [vmem:[#allocation8 + $0x950] sm:$0xff]
    %v750 = vld [vmem:[#allocation8 + $0x958] sm:$0xff]
    %v751 = vld [vmem:[#allocation8 + $0x960] sm:$0xff]
    %v752 = vld [vmem:[#allocation8 + $0x968] sm:$0xff]
    %v753 = vld [vmem:[#allocation8 + $0x970] sm:$0xff]
    %v754 = vld [vmem:[#allocation8 + $0x978] sm:$0xff]
    %v755 = vld [vmem:[#allocation8 + $0x980] sm:$0xff]
    %v756 = vld [vmem:[#allocation8 + $0x988] sm:$0xff]
    %v757 = vld [vmem:[#allocation8 + $0x990] sm:$0xff]
    %v758 = vld [vmem:[#allocation8 + $0x998] sm:$0xff]
    %v759 = vld [vmem:[#allocation8 + $0x9a0] sm:$0xff]
    %v760 = vld [vmem:[#allocation8 + $0x9a8] sm:$0xff]
    %v761 = vld [vmem:[#allocation8 + $0x9b0] sm:$0xff]
    %v762 = vld [vmem:[#allocation8 + $0x9b8] sm:$0xff]
    %v763 = vld [vmem:[#allocation8 + $0x9c0] sm:$0xff]
    %v764 = vld [vmem:[#allocation8 + $0x9c8] sm:$0xff]
    %v765 = vld [vmem:[#allocation8 + $0x9d0] sm:$0xff]
    %v766 = vld [vmem:[#allocation8 + $0x9d8] sm:$0xff]
    %v767 = vld [vmem:[#allocation8 + $0x9e0] sm:$0xff]
    %v768 = vld [vmem:[#allocation8 + $0x9e8] sm:$0xff]
    %v769 = vld [vmem:[#allocation8 + $0x9f0] sm:$0xff]
    %v770 = vld [vmem:[#allocation8 + $0x9f8] sm:$0xff]
    %v771 = vld [vmem:[#allocation8 + $0xa00] sm:$0xff]
    %v772 = vld [vmem:[#allocation8 + $0xa08] sm:$0xff]
    %v773 = vld [vmem:[#allocation8 + $0xa10] sm:$0xff]
    %v774 = vld [vmem:[#allocation8 + $0xa18] sm:$0xff]
    %v775 = vld [vmem:[#allocation8 + $0xa20] sm:$0xff]
    %v776 = vld [vmem:[#allocation8 + $0xa28] sm:$0xff]
    %v777 = vld [vmem:[#allocation8 + $0xa30] sm:$0xff]
    %v778 = vld [vmem:[#allocation8 + $0xa38] sm:$0xff]
    %v779 = vld [vmem:[#allocation8 + $0xa40] sm:$0xff]
    %v780 = vld [vmem:[#allocation8 + $0xa48] sm:$0xff]
    %v781 = vld [vmem:[#allocation8 + $0xa50] sm:$0xff]
    %v782 = vld [vmem:[#allocation8 + $0xa58] sm:$0xff]
    %v783 = vld [vmem:[#allocation8 + $0xa60] sm:$0xff]
    %v784 = vld [vmem:[#allocation8 + $0xa68] sm:$0xff]
    %v785 = vld [vmem:[#allocation8 + $0xa70] sm:$0xff]
    %v786 = vld [vmem:[#allocation8 + $0xa78] sm:$0xff]
    %v787 = vld [vmem:[#allocation8 + $0xa80] sm:$0xff]
    %v788 = vld [vmem:[#allocation8 + $0xa88] sm:$0xff]
    %v789 = vld [vmem:[#allocation8 + $0xa90] sm:$0xff]
    %v790 = vld [vmem:[#allocation8 + $0xa98] sm:$0xff]
    %v791 = vld [vmem:[#allocation8 + $0xaa0] sm:$0xff]
    %v792 = vld [vmem:[#allocation8 + $0xaa8] sm:$0xff]
    %v793 = vld [vmem:[#allocation8 + $0xab0] sm:$0xff]
    %v794 = vld [vmem:[#allocation8 + $0xab8] sm:$0xff]
    %v795 = vld [vmem:[#allocation8 + $0xac0] sm:$0xff]
    %v796 = vld [vmem:[#allocation8 + $0xac8] sm:$0xff]
    %v797 = vld [vmem:[#allocation8 + $0xad0] sm:$0xff]
    %v798 = vld [vmem:[#allocation8 + $0xad8] sm:$0xff]
    %v799 = vld [vmem:[#allocation8 + $0xae0] sm:$0xff]
    %v800 = vld [vmem:[#allocation8 + $0xae8] sm:$0xff]
    %v801 = vld [vmem:[#allocation8 + $0xaf0] sm:$0xff]
    %v802 = vld [vmem:[#allocation8 + $0xaf8] sm:$0xff]
    %v803 = vld [vmem:[#allocation8 + $0xb00] sm:$0xff]
    %v804 = vld [vmem:[#allocation8 + $0xb08] sm:$0xff]
    %v805 = vld [vmem:[#allocation8 + $0xb10] sm:$0xff]
    %v806 = vld [vmem:[#allocation8 + $0xb18] sm:$0xff]
    %v807 = vld [vmem:[#allocation8 + $0xb20] sm:$0xff]
    %v808 = vld [vmem:[#allocation8 + $0xb28] sm:$0xff]
    %v809 = vld [vmem:[#allocation8 + $0xb30] sm:$0xff]
    %v810 = vld [vmem:[#allocation8 + $0xb38] sm:$0xff]
    %v811 = vld [vmem:[#allocation8 + $0xb40] sm:$0xff]
    %v812 = vld [vmem:[#allocation8 + $0xb48] sm:$0xff]
    %v813 = vld [vmem:[#allocation8 + $0xb50] sm:$0xff]
    %v814 = vld [vmem:[#allocation8 + $0xb58] sm:$0xff]
    %v815 = vld [vmem:[#allocation8 + $0xb60] sm:$0xff]
    %v816 = vld [vmem:[#allocation8 + $0xb68] sm:$0xff]
    %v817 = vld [vmem:[#allocation8 + $0xb70] sm:$0xff]
    %v818 = vld [vmem:[#allocation8 + $0xb78] sm:$0xff]
    %v819 = vld [vmem:[#allocation8 + $0xb80] sm:$0xff]
    %v820 = vld [vmem:[#allocation8 + $0xb88] sm:$0xff]
    %v821 = vld [vmem:[#allocation8 + $0xb90] sm:$0xff]
    %v822 = vld [vmem:[#allocation8 + $0xb98] sm:$0xff]
    %v823 = vld [vmem:[#allocation8 + $0xba0] sm:$0xff]
    %v824 = vld [vmem:[#allocation8 + $0xba8] sm:$0xff]
    %v825 = vld [vmem:[#allocation8 + $0xbb0] sm:$0xff]
    %v826 = vld [vmem:[#allocation8 + $0xbb8] sm:$0xff]
    %v827 = vld [vmem:[#allocation8 + $0xbc0] sm:$0xff]
    %v828 = vld [vmem:[#allocation8 + $0xbc8] sm:$0xff]
    %v829 = vld [vmem:[#allocation8 + $0xbd0] sm:$0xff]
    %v830 = vld [vmem:[#allocation8 + $0xbd8] sm:$0xff]
    %v831 = vld [vmem:[#allocation8 + $0xbe0] sm:$0xff]
    %v832 = vld [vmem:[#allocation8 + $0xbe8] sm:$0xff]
    %v833 = vld [vmem:[#allocation8 + $0xbf0] sm:$0xff]
    %v834 = vld [vmem:[#allocation8 + $0xbf8] sm:$0xff]
    %v835 = vld [vmem:[#allocation8 + $0xc00] sm:$0xff]
    %v836 = vld [vmem:[#allocation8 + $0xc08] sm:$0xff]
    %v837 = vld [vmem:[#allocation8 + $0xc10] sm:$0xff]
    %v838 = vld [vmem:[#allocation8 + $0xc18] sm:$0xff]
    %v839 = vld [vmem:[#allocation8 + $0xc20] sm:$0xff]
    %v840 = vld [vmem:[#allocation8 + $0xc28] sm:$0xff]
    %v841 = vld [vmem:[#allocation8 + $0xc30] sm:$0xff]
    %v842 = vld [vmem:[#allocation8 + $0xc38] sm:$0xff]
    %v843 = vld [vmem:[#allocation2] sm:$0xf]
    %v844 = vld [vmem:[#allocation2 + $0x4] sm:$0xf]
    %v845 = vld [vmem:[#allocation2 + $0x8] sm:$0xf]
    %v846 = vld [vmem:[#allocation2 + $0xc] sm:$0xf]
    %v847 = vld [vmem:[#allocation2 + $0x10] sm:$0xf]
    %v848 = vld [vmem:[#allocation2 + $0x14] sm:$0xf]
    %v849 = vld [vmem:[#allocation2 + $0x18] sm:$0xf]
    %v850 = vld [vmem:[#allocation2 + $0x1c] sm:$0xf]
    %v851 = vld [vmem:[#allocation2 + $0x20] sm:$0xf]
    %v852 = vld [vmem:[#allocation2 + $0x24] sm:$0xf]
    %v853 = vld [vmem:[#allocation2 + $0x28] sm:$0xf]
    %v854 = vld [vmem:[#allocation2 + $0x2c] sm:$0xf]
    %v855 = vld [vmem:[#allocation2 + $0x30] sm:$0xf]
    %v856 = vld [vmem:[#allocation2 + $0x34] sm:$0xf]
    %v857 = vld [vmem:[#allocation2 + $0x38] sm:$0xf]
    %v858 = vld [vmem:[#allocation2 + $0x3c] sm:$0xf]
    %v859 = vld [vmem:[#allocation2 + $0x40] sm:$0xf]
    %v860 = vld [vmem:[#allocation2 + $0x44] sm:$0xf]
    %v861 = vld [vmem:[#allocation2 + $0x48] sm:$0xf]
    %v862 = vld [vmem:[#allocation2 + $0x4c] sm:$0xf]
    %v863 = vld [vmem:[#allocation2 + $0x50] sm:$0xf]
    %v864 = vld [vmem:[#allocation2 + $0x54] sm:$0xf]
    %v865 = vld [vmem:[#allocation2 + $0x58] sm:$0xf]
    %v866 = vld [vmem:[#allocation2 + $0x5c] sm:$0xf]
    %v867 = vld [vmem:[#allocation2 + $0x60] sm:$0xf]
    %v868 = vld [vmem:[#allocation2 + $0x64] sm:$0xf]
    %v869 = vld [vmem:[#allocation2 + $0x68] sm:$0xf]
    %v870 = vld [vmem:[#allocation2 + $0x6c] sm:$0xf]
    %v871 = vld [vmem:[#allocation2 + $0x70] sm:$0xf]
    %v872 = vld [vmem:[#allocation2 + $0x74] sm:$0xf]
    %v873 = vld [vmem:[#allocation2 + $0x78] sm:$0xf]
    %v874 = vld [vmem:[#allocation2 + $0x7c] sm:$0xf]
    %v875 = vld [vmem:[#allocation2 + $0x80] sm:$0xf]
    %v876 = vld [vmem:[#allocation2 + $0x84] sm:$0xf]
    %v877 = vld [vmem:[#allocation2 + $0x88] sm:$0xf]
    %v878 = vld [vmem:[#allocation2 + $0x8c] sm:$0xf]
    %v879 = vld [vmem:[#allocation2 + $0x90] sm:$0xf]
    %v880 = vld [vmem:[#allocation2 + $0x94] sm:$0xf]
    %v881 = vld [vmem:[#allocation2 + $0x98] sm:$0xf]
    %v882 = vld [vmem:[#allocation2 + $0x9c] sm:$0xf]
    %v883 = vld [vmem:[#allocation2 + $0xa0] sm:$0xf]
    %v884 = vld [vmem:[#allocation2 + $0xa4] sm:$0xf]
    %v885 = vld [vmem:[#allocation2 + $0xa8] sm:$0xf]
    %v886 = vld [vmem:[#allocation2 + $0xac] sm:$0xf]
    %v887 = vld [vmem:[#allocation2 + $0xb0] sm:$0xf]
    %v888 = vld [vmem:[#allocation2 + $0xb4] sm:$0xf]
    %v889 = vld [vmem:[#allocation2 + $0xb8] sm:$0xf]
    %v890 = vld [vmem:[#allocation2 + $0xbc] sm:$0xf]
    %v891 = vld [vmem:[#allocation2 + $0xc0] sm:$0xf]
    %v892 = vld [vmem:[#allocation2 + $0xc4] sm:$0xf]
    %v893 = vld [vmem:[#allocation2 + $0xc8] sm:$0xf]
    %v894 = vld [vmem:[#allocation2 + $0xcc] sm:$0xf]
    %v895 = vld [vmem:[#allocation2 + $0xd0] sm:$0xf]
    %v896 = vld [vmem:[#allocation2 + $0xd4] sm:$0xf]
    %v897 = vld [vmem:[#allocation2 + $0xd8] sm:$0xf]
    %v898 = vld [vmem:[#allocation2 + $0xdc] sm:$0xf]
    %v899 = vld [vmem:[#allocation2 + $0xe0] sm:$0xf]
    %v900 = vld [vmem:[#allocation2 + $0xe4] sm:$0xf]
    %v901 = vld [vmem:[#allocation2 + $0xe8] sm:$0xf]
    %v902 = vld [vmem:[#allocation2 + $0xec] sm:$0xf]
    %v903 = vld [vmem:[#allocation2 + $0xf0] sm:$0xf]
    %v904 = vld [vmem:[#allocation2 + $0xf4] sm:$0xf]
    %v905 = vld [vmem:[#allocation2 + $0xf8] sm:$0xf]
    %v906 = vld [vmem:[#allocation2 + $0xfc] sm:$0xf]
    %v907 = vld [vmem:[#allocation2 + $0x100] sm:$0xf]
    %v908 = vld [vmem:[#allocation2 + $0x104] sm:$0xf]
    %v909 = vld [vmem:[#allocation2 + $0x108] sm:$0xf]
    %v910 = vld [vmem:[#allocation2 + $0x10c] sm:$0xf]
    %v911 = vld [vmem:[#allocation2 + $0x110] sm:$0xf]
    %v912 = vld [vmem:[#allocation2 + $0x114] sm:$0xf]
    %v913 = vld [vmem:[#allocation2 + $0x118] sm:$0xf]
    %v914 = vld [vmem:[#allocation2 + $0x11c] sm:$0xf]
    %v915 = vld [vmem:[#allocation2 + $0x120] sm:$0xf]
    %v916 = vld [vmem:[#allocation2 + $0x124] sm:$0xf]
    %v917 = vld [vmem:[#allocation2 + $0x128] sm:$0xf]
    %v918 = vld [vmem:[#allocation2 + $0x12c] sm:$0xf]
    %v919 = vld [vmem:[#allocation2 + $0x130] sm:$0xf]
    %v920 = vld [vmem:[#allocation2 + $0x134] sm:$0xf]
    %v921 = vld [vmem:[#allocation2 + $0x138] sm:$0xf]
    %v922 = vld [vmem:[#allocation2 + $0x13c] sm:$0xf]
    %v923 = vld [vmem:[#allocation2 + $0x140] sm:$0xf]
    %v924 = vld [vmem:[#allocation2 + $0x144] sm:$0xf]
    %v925 = vld [vmem:[#allocation2 + $0x148] sm:$0xf]
    %v926 = vld [vmem:[#allocation2 + $0x14c] sm:$0xf]
    %v927 = vld [vmem:[#allocation2 + $0x150] sm:$0xf]
    %v928 = vld [vmem:[#allocation2 + $0x154] sm:$0xf]
    %v929 = vld [vmem:[#allocation2 + $0x158] sm:$0xf]
    %v930 = vld [vmem:[#allocation2 + $0x15c] sm:$0xf]
    %v931 = vld [vmem:[#allocation2 + $0x160] sm:$0xf]
    %v932 = vld [vmem:[#allocation2 + $0x164] sm:$0xf]
    %v933 = vld [vmem:[#allocation2 + $0x168] sm:$0xf]
    %v934 = vld [vmem:[#allocation2 + $0x16c] sm:$0xf]
    %v935 = vld [vmem:[#allocation2 + $0x170] sm:$0xf]
    %v936 = vld [vmem:[#allocation2 + $0x174] sm:$0xf]
    %v937 = vld [vmem:[#allocation2 + $0x178] sm:$0xf]
    %v938 = vld [vmem:[#allocation2 + $0x17c] sm:$0xf]
    %v939 = vld [vmem:[#allocation2 + $0x180] sm:$0xf]
    %v940 = vld [vmem:[#allocation2 + $0x184] sm:$0xf]
    %v941 = vld [vmem:[#allocation2 + $0x188] sm:$0xf]
    %v942 = vld [vmem:[#allocation2 + $0x18c] sm:$0xf]
    %v943 = vld [vmem:[#allocation2 + $0x190] sm:$0xf]
    %v944 = vld [vmem:[#allocation2 + $0x194] sm:$0xf]
    %v945 = vld [vmem:[#allocation2 + $0x198] sm:$0xf]
    %v946 = vld [vmem:[#allocation2 + $0x19c] sm:$0xf]
    %v947 = vld [vmem:[#allocation2 + $0x1a0] sm:$0xf]
    %v948 = vld [vmem:[#allocation2 + $0x1a4] sm:$0xf]
    %v949 = vld [vmem:[#allocation2 + $0x1a8] sm:$0xf]
    %v950 = vld [vmem:[#allocation2 + $0x1ac] sm:$0xf]
    %v951 = vld [vmem:[#allocation2 + $0x1b0] sm:$0xf]
    %v952 = vld [vmem:[#allocation2 + $0x1b4] sm:$0xf]
    %v953 = vld [vmem:[#allocation2 + $0x1b8] sm:$0xf]
    %v954 = vld [vmem:[#allocation2 + $0x1bc] sm:$0xf]
    %v955 = vld [vmem:[#allocation2 + $0x1c0] sm:$0xf]
    %v956 = vld [vmem:[#allocation2 + $0x1c4] sm:$0xf]
    %v957 = vld [vmem:[#allocation2 + $0x1c8] sm:$0xf]
    %v958 = vld [vmem:[#allocation2 + $0x1cc] sm:$0xf]
    %v959 = vld [vmem:[#allocation2 + $0x1d0] sm:$0xf]
    %v960 = vld [vmem:[#allocation2 + $0x1d4] sm:$0xf]
    %v961 = vld [vmem:[#allocation2 + $0x1d8] sm:$0xf]
    %v962 = vld [vmem:[#allocation2 + $0x1dc] sm:$0xf]
    %v963 = vld [vmem:[#allocation2 + $0x1e0] sm:$0xf]
    %v964 = vld [vmem:[#allocation2 + $0x1e4] sm:$0xf]
    %v965 = vld [vmem:[#allocation2 + $0x1e8] sm:$0xf]
    %v966 = vld [vmem:[#allocation2 + $0x1ec] sm:$0xf]
    %v967 = vld [vmem:[#allocation2 + $0x1f0] sm:$0xf]
    %v968 = vld [vmem:[#allocation2 + $0x1f4] sm:$0xf]
    %v969 = vld [vmem:[#allocation2 + $0x1f8] sm:$0xf]
    %v970 = vld [vmem:[#allocation2 + $0x1fc] sm:$0xf]
    %v971 = vld [vmem:[#allocation2 + $0x200] sm:$0xf]
    %v972 = vld [vmem:[#allocation2 + $0x204] sm:$0xf]
    %v973 = vld [vmem:[#allocation2 + $0x208] sm:$0xf]
    %v974 = vld [vmem:[#allocation2 + $0x20c] sm:$0xf]
    %v975 = vld [vmem:[#allocation2 + $0x210] sm:$0xf]
    %v976 = vld [vmem:[#allocation2 + $0x214] sm:$0xf]
    %v977 = vld [vmem:[#allocation2 + $0x218] sm:$0xf]
    %v978 = vld [vmem:[#allocation2 + $0x21c] sm:$0xf]
    %v979 = vld [vmem:[#allocation2 + $0x220] sm:$0xf]
    %v980 = vld [vmem:[#allocation2 + $0x224] sm:$0xf]
    %v981 = vld [vmem:[#allocation2 + $0x228] sm:$0xf]
    %v982 = vld [vmem:[#allocation2 + $0x22c] sm:$0xf]
    %v983 = vld [vmem:[#allocation2 + $0x230] sm:$0xf]
    %v984 = vld [vmem:[#allocation2 + $0x234] sm:$0xf]
    %v985 = vld [vmem:[#allocation2 + $0x238] sm:$0xf]
    %v986 = vld [vmem:[#allocation2 + $0x23c] sm:$0xf]
    %v987 = vld [vmem:[#allocation2 + $0x240] sm:$0xf]
    %v988 = vld [vmem:[#allocation2 + $0x244] sm:$0xf]
    %v989 = vld [vmem:[#allocation2 + $0x248] sm:$0xf]
    %v990 = vld [vmem:[#allocation2 + $0x24c] sm:$0xf]
    %v991 = vld [vmem:[#allocation2 + $0x250] sm:$0xf]
    %v992 = vld [vmem:[#allocation2 + $0x254] sm:$0xf]
    %v993 = vld [vmem:[#allocation2 + $0x258] sm:$0xf]
    %v994 = vld [vmem:[#allocation2 + $0x25c] sm:$0xf]
    %v995 = vld [vmem:[#allocation2 + $0x260] sm:$0xf]
    %v996 = vld [vmem:[#allocation2 + $0x264] sm:$0xf]
    %v997 = vld [vmem:[#allocation2 + $0x268] sm:$0xf]
    %v998 = vld [vmem:[#allocation2 + $0x26c] sm:$0xf]
    %v999 = vld [vmem:[#allocation2 + $0x270] sm:$0xf]
    %v1000 = vld [vmem:[#allocation2 + $0x274] sm:$0xf]
    %v1001 = vld [vmem:[#allocation2 + $0x278] sm:$0xf]
    %v1002 = vld [vmem:[#allocation2 + $0x27c] sm:$0xf]
    %v1003 = vld [vmem:[#allocation2 + $0x280] sm:$0xf]
    %v1004 = vld [vmem:[#allocation2 + $0x284] sm:$0xf]
    %v1005 = vld [vmem:[#allocation2 + $0x288] sm:$0xf]
    %v1006 = vld [vmem:[#allocation2 + $0x28c] sm:$0xf]
    %v1007 = vld [vmem:[#allocation2 + $0x290] sm:$0xf]
    %v1008 = vld [vmem:[#allocation2 + $0x294] sm:$0xf]
    %v1009 = vld [vmem:[#allocation2 + $0x298] sm:$0xf]
    %v1010 = vld [vmem:[#allocation2 + $0x29c] sm:$0xf]
    %v1011 = vld [vmem:[#allocation2 + $0x2a0] sm:$0xf]
    %v1012 = vld [vmem:[#allocation2 + $0x2a4] sm:$0xf]
    %v1013 = vld [vmem:[#allocation2 + $0x2a8] sm:$0xf]
    %v1014 = vld [vmem:[#allocation2 + $0x2ac] sm:$0xf]
    %v1015 = vld [vmem:[#allocation2 + $0x2b0] sm:$0xf]
    %v1016 = vld [vmem:[#allocation2 + $0x2b4] sm:$0xf]
    %v1017 = vld [vmem:[#allocation2 + $0x2b8] sm:$0xf]
    %v1018 = vld [vmem:[#allocation2 + $0x2bc] sm:$0xf]
    %v1019 = vld [vmem:[#allocation2 + $0x2c0] sm:$0xf]
    %v1020 = vld [vmem:[#allocation2 + $0x2c4] sm:$0xf]
    %v1021 = vld [vmem:[#allocation2 + $0x2c8] sm:$0xf]
    %v1022 = vld [vmem:[#allocation2 + $0x2cc] sm:$0xf]
    %v1023 = vld [vmem:[#allocation2 + $0x2d0] sm:$0xf]
    %v1024 = vld [vmem:[#allocation2 + $0x2d4] sm:$0xf]
    %v1025 = vld [vmem:[#allocation2 + $0x2d8] sm:$0xf]
    %v1026 = vld [vmem:[#allocation2 + $0x2dc] sm:$0xf]
    %v1027 = vld [vmem:[#allocation2 + $0x2e0] sm:$0xf]
    %v1028 = vld [vmem:[#allocation2 + $0x2e4] sm:$0xf]
    %v1029 = vld [vmem:[#allocation2 + $0x2e8] sm:$0xf]
    %v1030 = vld [vmem:[#allocation2 + $0x2ec] sm:$0xf]
    %v1031 = vld [vmem:[#allocation2 + $0x2f0] sm:$0xf]
    %v1032 = vld [vmem:[#allocation2 + $0x2f4] sm:$0xf]
    %v1033 = vld [vmem:[#allocation2 + $0x2f8] sm:$0xf]
    %v1034 = vld [vmem:[#allocation2 + $0x2fc] sm:$0xf]
    %v1035 = vld [vmem:[#allocation2 + $0x300] sm:$0xf]
    %v1036 = vld [vmem:[#allocation2 + $0x304] sm:$0xf]
    %v1037 = vld [vmem:[#allocation2 + $0x308] sm:$0xf]
    %v1038 = vld [vmem:[#allocation2 + $0x30c] sm:$0xf]
    %v1039 = vld [vmem:[#allocation5] sm:$0xff]
    %v1040 = vld [vmem:[#allocation5 + $0x8] sm:$0xff]
    %v1041 = vld [vmem:[#allocation5 + $0x10] sm:$0xff]
    %v1042 = vld [vmem:[#allocation5 + $0x18] sm:$0xff]
    %v1043 = vld [vmem:[#allocation5 + $0x20] sm:$0xff]
    %v1044 = vld [vmem:[#allocation5 + $0x28] sm:$0xff]
    %v1045 = vld [vmem:[#allocation5 + $0x30] sm:$0xff]
    %v1046 = vld [vmem:[#allocation5 + $0x38] sm:$0xff]
    %v1047 = vld [vmem:[#allocation5 + $0x40] sm:$0xff]
    %v1048 = vld [vmem:[#allocation5 + $0x48] sm:$0xff]
    %v1049 = vld [vmem:[#allocation5 + $0x50] sm:$0xff]
    %v1050 = vld [vmem:[#allocation5 + $0x58] sm:$0xff]
    %v1051 = vld [vmem:[#allocation5 + $0x60] sm:$0xff]
    %v1052 = vld [vmem:[#allocation5 + $0x68] sm:$0xff]
    %v1053 = vld [vmem:[#allocation5 + $0x70] sm:$0xff]
    %v1054 = vld [vmem:[#allocation5 + $0x78] sm:$0xff]
    %v1251 = vunpack.c.l.b16 %v843
    %v1252 = vunpack.c.l.b16 %v844
    %v1253 = vunpack.c.l.b16 %v845
    %v1254 = vunpack.c.l.b16 %v846
    %v1255 = vunpack.c.l.b16 %v847
    %v1256 = vunpack.c.l.b16 %v848
    %v1257 = vunpack.c.l.b16 %v849
    %v1258 = vunpack.c.l.b16 %v850
    %v1259 = vunpack.c.l.b16 %v851
    %v1260 = vunpack.c.l.b16 %v852
    %v1261 = vunpack.c.l.b16 %v853
    %v1262 = vunpack.c.l.b16 %v854
    %v1263 = vunpack.c.l.b16 %v855
    %v1264 = vunpack.c.l.b16 %v856
    %v1265 = vunpack.c.l.b16 %v857
    %v1266 = vunpack.c.l.b16 %v858
    %v1267 = vunpack.c.l.b16 %v859
    %v1268 = vunpack.c.l.b16 %v860
    %v1269 = vunpack.c.l.b16 %v861
    %v1270 = vunpack.c.l.b16 %v862
    %v1271 = vunpack.c.l.b16 %v863
    %v1272 = vunpack.c.l.b16 %v864
    %v1273 = vunpack.c.l.b16 %v865
    %v1274 = vunpack.c.l.b16 %v866
    %v1275 = vunpack.c.l.b16 %v867
    %v1276 = vunpack.c.l.b16 %v868
    %v1277 = vunpack.c.l.b16 %v869
    %v1278 = vunpack.c.l.b16 %v870
    %v1279 = vunpack.c.l.b16 %v871
    %v1280 = vunpack.c.l.b16 %v872
    %v1281 = vunpack.c.l.b16 %v873
    %v1282 = vunpack.c.l.b16 %v874
    %v1283 = vunpack.c.l.b16 %v875
    %v1284 = vunpack.c.l.b16 %v876
    %v1285 = vunpack.c.l.b16 %v877
    %v1286 = vunpack.c.l.b16 %v878
    %v1287 = vunpack.c.l.b16 %v879
    %v1288 = vunpack.c.l.b16 %v880
    %v1289 = vunpack.c.l.b16 %v881
    %v1290 = vunpack.c.l.b16 %v882
    %v1291 = vunpack.c.l.b16 %v883
    %v1292 = vunpack.c.l.b16 %v884
    %v1293 = vunpack.c.l.b16 %v885
    %v1294 = vunpack.c.l.b16 %v886
    %v1295 = vunpack.c.l.b16 %v887
    %v1296 = vunpack.c.l.b16 %v888
    %v1297 = vunpack.c.l.b16 %v889
    %v1298 = vunpack.c.l.b16 %v890
    %v1299 = vunpack.c.l.b16 %v891
    %v1300 = vunpack.c.l.b16 %v892
    %v1301 = vunpack.c.l.b16 %v893
    %v1302 = vunpack.c.l.b16 %v894
    %v1303 = vunpack.c.l.b16 %v895
    %v1304 = vunpack.c.l.b16 %v896
    %v1305 = vunpack.c.l.b16 %v897
    %v1306 = vunpack.c.l.b16 %v898
    %v1307 = vunpack.c.l.b16 %v899
    %v1308 = vunpack.c.l.b16 %v900
    %v1309 = vunpack.c.l.b16 %v901
    %v1310 = vunpack.c.l.b16 %v902
    %v1311 = vunpack.c.l.b16 %v903
    %v1312 = vunpack.c.l.b16 %v904
    %v1313 = vunpack.c.l.b16 %v905
    %v1314 = vunpack.c.l.b16 %v906
    %v1315 = vunpack.c.l.b16 %v907
    %v1316 = vunpack.c.l.b16 %v908
    %v1317 = vunpack.c.l.b16 %v909
    %v1318 = vunpack.c.l.b16 %v910
    %v1319 = vunpack.c.l.b16 %v911
    %v1320 = vunpack.c.l.b16 %v912
    %v1321 = vunpack.c.l.b16 %v913
    %v1322 = vunpack.c.l.b16 %v914
    %v1323 = vunpack.c.l.b16 %v915
    %v1324 = vunpack.c.l.b16 %v916
    %v1325 = vunpack.c.l.b16 %v917
    %v1326 = vunpack.c.l.b16 %v918
    %v1327 = vunpack.c.l.b16 %v919
    %v1328 = vunpack.c.l.b16 %v920
    %v1329 = vunpack.c.l.b16 %v921
    %v1330 = vunpack.c.l.b16 %v922
    %v1331 = vunpack.c.l.b16 %v923
    %v1332 = vunpack.c.l.b16 %v924
    %v1333 = vunpack.c.l.b16 %v925
    %v1334 = vunpack.c.l.b16 %v926
    %v1335 = vunpack.c.l.b16 %v927
    %v1336 = vunpack.c.l.b16 %v928
    %v1337 = vunpack.c.l.b16 %v929
    %v1338 = vunpack.c.l.b16 %v930
    %v1339 = vunpack.c.l.b16 %v931
    %v1340 = vunpack.c.l.b16 %v932
    %v1341 = vunpack.c.l.b16 %v933
    %v1342 = vunpack.c.l.b16 %v934
    %v1343 = vunpack.c.l.b16 %v935
    %v1344 = vunpack.c.l.b16 %v936
    %v1345 = vunpack.c.l.b16 %v937
    %v1346 = vunpack.c.l.b16 %v938
    %v1347 = vunpack.c.l.b16 %v939
    %v1348 = vunpack.c.l.b16 %v940
    %v1349 = vunpack.c.l.b16 %v941
    %v1350 = vunpack.c.l.b16 %v942
    %v1351 = vunpack.c.l.b16 %v943
    %v1352 = vunpack.c.l.b16 %v944
    %v1353 = vunpack.c.l.b16 %v945
    %v1354 = vunpack.c.l.b16 %v946
    %v1355 = vunpack.c.l.b16 %v947
    %v1356 = vunpack.c.l.b16 %v948
    %v1357 = vunpack.c.l.b16 %v949
    %v1358 = vunpack.c.l.b16 %v950
    %v1359 = vunpack.c.l.b16 %v951
    %v1360 = vunpack.c.l.b16 %v952
    %v1361 = vunpack.c.l.b16 %v953
    %v1362 = vunpack.c.l.b16 %v954
    %v1363 = vunpack.c.l.b16 %v955
    %v1364 = vunpack.c.l.b16 %v956
    %v1365 = vunpack.c.l.b16 %v957
    %v1366 = vunpack.c.l.b16 %v958
    %v1367 = vunpack.c.l.b16 %v959
    %v1368 = vunpack.c.l.b16 %v960
    %v1369 = vunpack.c.l.b16 %v961
    %v1370 = vunpack.c.l.b16 %v962
    %v1371 = vunpack.c.l.b16 %v963
    %v1372 = vunpack.c.l.b16 %v964
    %v1373 = vunpack.c.l.b16 %v965
    %v1374 = vunpack.c.l.b16 %v966
    %v1375 = vunpack.c.l.b16 %v967
    %v1376 = vunpack.c.l.b16 %v968
    %v1377 = vunpack.c.l.b16 %v969
    %v1378 = vunpack.c.l.b16 %v970
    %v1379 = vunpack.c.l.b16 %v971
    %v1380 = vunpack.c.l.b16 %v972
    %v1381 = vunpack.c.l.b16 %v973
    %v1382 = vunpack.c.l.b16 %v974
    %v1383 = vunpack.c.l.b16 %v975
    %v1384 = vunpack.c.l.b16 %v976
    %v1385 = vunpack.c.l.b16 %v977
    %v1386 = vunpack.c.l.b16 %v978
    %v1387 = vunpack.c.l.b16 %v979
    %v1388 = vunpack.c.l.b16 %v980
    %v1389 = vunpack.c.l.b16 %v981
    %v1390 = vunpack.c.l.b16 %v982
    %v1391 = vunpack.c.l.b16 %v983
    %v1392 = vunpack.c.l.b16 %v984
    %v1393 = vunpack.c.l.b16 %v985
    %v1394 = vunpack.c.l.b16 %v986
    %v1395 = vunpack.c.l.b16 %v987
    %v1396 = vunpack.c.l.b16 %v988
    %v1397 = vunpack.c.l.b16 %v989
    %v1398 = vunpack.c.l.b16 %v990
    %v1399 = vunpack.c.l.b16 %v991
    %v1400 = vunpack.c.l.b16 %v992
    %v1401 = vunpack.c.l.b16 %v993
    %v1402 = vunpack.c.l.b16 %v994
    %v1403 = vunpack.c.l.b16 %v995
    %v1404 = vunpack.c.l.b16 %v996
    %v1405 = vunpack.c.l.b16 %v997
    %v1406 = vunpack.c.l.b16 %v998
    %v1407 = vunpack.c.l.b16 %v999
    %v1408 = vunpack.c.l.b16 %v1000
    %v1409 = vunpack.c.l.b16 %v1001
    %v1410 = vunpack.c.l.b16 %v1002
    %v1411 = vunpack.c.l.b16 %v1003
    %v1412 = vunpack.c.l.b16 %v1004
    %v1413 = vunpack.c.l.b16 %v1005
    %v1414 = vunpack.c.l.b16 %v1006
    %v1415 = vunpack.c.l.b16 %v1007
    %v1416 = vunpack.c.l.b16 %v1008
    %v1417 = vunpack.c.l.b16 %v1009
    %v1418 = vunpack.c.l.b16 %v1010
    %v1419 = vunpack.c.l.b16 %v1011
    %v1420 = vunpack.c.l.b16 %v1012
    %v1421 = vunpack.c.l.b16 %v1013
    %v1422 = vunpack.c.l.b16 %v1014
    %v1423 = vunpack.c.l.b16 %v1015
    %v1424 = vunpack.c.l.b16 %v1016
    %v1425 = vunpack.c.l.b16 %v1017
    %v1426 = vunpack.c.l.b16 %v1018
    %v1427 = vunpack.c.l.b16 %v1019
    %v1428 = vunpack.c.l.b16 %v1020
    %v1429 = vunpack.c.l.b16 %v1021
    %v1430 = vunpack.c.l.b16 %v1022
    %v1431 = vunpack.c.l.b16 %v1023
    %v1432 = vunpack.c.l.b16 %v1024
    %v1433 = vunpack.c.l.b16 %v1025
    %v1434 = vunpack.c.l.b16 %v1026
    %v1435 = vunpack.c.l.b16 %v1027
    %v1436 = vunpack.c.l.b16 %v1028
    %v1437 = vunpack.c.l.b16 %v1029
    %v1438 = vunpack.c.l.b16 %v1030
    %v1439 = vunpack.c.l.b16 %v1031
    %v1440 = vunpack.c.l.b16 %v1032
    %v1441 = vunpack.c.l.b16 %v1033
    %v1442 = vunpack.c.l.b16 %v1034
    %v1443 = vunpack.c.l.b16 %v1035
    %v1444 = vunpack.c.l.b16 %v1036
    %v1445 = vunpack.c.l.b16 %v1037
    %v1446 = vunpack.c.l.b16 %v1038
    %v1447 = vpack.c.b16 %v1252, %v1251
    %v1448 = vpack.c.b16 %v1254, %v1253
    %v1449 = vpack.c.b16 %v1256, %v1255
    %v1450 = vpack.c.b16 %v1258, %v1257
    %v1451 = vpack.c.b16 %v1260, %v1259
    %v1452 = vpack.c.b16 %v1262, %v1261
    %v1453 = vpack.c.b16 %v1264, %v1263
    %v1454 = vpack.c.b16 %v1266, %v1265
    %v1455 = vpack.c.b16 %v1268, %v1267
    %v1456 = vpack.c.b16 %v1270, %v1269
    %v1457 = vpack.c.b16 %v1272, %v1271
    %v1458 = vpack.c.b16 %v1274, %v1273
    %v1459 = vpack.c.b16 %v1276, %v1275
    %v1460 = vpack.c.b16 %v1278, %v1277
    %v1461 = vpack.c.b16 %v1280, %v1279
    %v1462 = vpack.c.b16 %v1282, %v1281
    %v1463 = vpack.c.b16 %v1284, %v1283
    %v1464 = vpack.c.b16 %v1286, %v1285
    %v1465 = vpack.c.b16 %v1288, %v1287
    %v1466 = vpack.c.b16 %v1290, %v1289
    %v1467 = vpack.c.b16 %v1292, %v1291
    %v1468 = vpack.c.b16 %v1294, %v1293
    %v1469 = vpack.c.b16 %v1296, %v1295
    %v1470 = vpack.c.b16 %v1298, %v1297
    %v1471 = vpack.c.b16 %v1300, %v1299
    %v1472 = vpack.c.b16 %v1302, %v1301
    %v1473 = vpack.c.b16 %v1304, %v1303
    %v1474 = vpack.c.b16 %v1306, %v1305
    %v1475 = vpack.c.b16 %v1308, %v1307
    %v1476 = vpack.c.b16 %v1310, %v1309
    %v1477 = vpack.c.b16 %v1312, %v1311
    %v1478 = vpack.c.b16 %v1314, %v1313
    %v1479 = vpack.c.b16 %v1316, %v1315
    %v1480 = vpack.c.b16 %v1318, %v1317
    %v1481 = vpack.c.b16 %v1320, %v1319
    %v1482 = vpack.c.b16 %v1322, %v1321
    %v1483 = vpack.c.b16 %v1324, %v1323
    %v1484 = vpack.c.b16 %v1326, %v1325
    %v1485 = vpack.c.b16 %v1328, %v1327
    %v1486 = vpack.c.b16 %v1330, %v1329
    %v1487 = vpack.c.b16 %v1332, %v1331
    %v1488 = vpack.c.b16 %v1334, %v1333
    %v1489 = vpack.c.b16 %v1336, %v1335
    %v1490 = vpack.c.b16 %v1338, %v1337
    %v1491 = vpack.c.b16 %v1340, %v1339
    %v1492 = vpack.c.b16 %v1342, %v1341
    %v1493 = vpack.c.b16 %v1344, %v1343
    %v1494 = vpack.c.b16 %v1346, %v1345
    %v1495 = vpack.c.b16 %v1348, %v1347
    %v1496 = vpack.c.b16 %v1350, %v1349
    %v1497 = vpack.c.b16 %v1352, %v1351
    %v1498 = vpack.c.b16 %v1354, %v1353
    %v1499 = vpack.c.b16 %v1356, %v1355
    %v1500 = vpack.c.b16 %v1358, %v1357
    %v1501 = vpack.c.b16 %v1360, %v1359
    %v1502 = vpack.c.b16 %v1362, %v1361
    %v1503 = vpack.c.b16 %v1364, %v1363
    %v1504 = vpack.c.b16 %v1366, %v1365
    %v1505 = vpack.c.b16 %v1368, %v1367
    %v1506 = vpack.c.b16 %v1370, %v1369
    %v1507 = vpack.c.b16 %v1372, %v1371
    %v1508 = vpack.c.b16 %v1374, %v1373
    %v1509 = vpack.c.b16 %v1376, %v1375
    %v1510 = vpack.c.b16 %v1378, %v1377
    %v1511 = vpack.c.b16 %v1380, %v1379
    %v1512 = vpack.c.b16 %v1382, %v1381
    %v1513 = vpack.c.b16 %v1384, %v1383
    %v1514 = vpack.c.b16 %v1386, %v1385
    %v1515 = vpack.c.b16 %v1388, %v1387
    %v1516 = vpack.c.b16 %v1390, %v1389
    %v1517 = vpack.c.b16 %v1392, %v1391
    %v1518 = vpack.c.b16 %v1394, %v1393
    %v1519 = vpack.c.b16 %v1396, %v1395
    %v1520 = vpack.c.b16 %v1398, %v1397
    %v1521 = vpack.c.b16 %v1400, %v1399
    %v1522 = vpack.c.b16 %v1402, %v1401
    %v1523 = vpack.c.b16 %v1404, %v1403
    %v1524 = vpack.c.b16 %v1406, %v1405
    %v1525 = vpack.c.b16 %v1408, %v1407
    %v1526 = vpack.c.b16 %v1410, %v1409
    %v1527 = vpack.c.b16 %v1412, %v1411
    %v1528 = vpack.c.b16 %v1414, %v1413
    %v1529 = vpack.c.b16 %v1416, %v1415
    %v1530 = vpack.c.b16 %v1418, %v1417
    %v1531 = vpack.c.b16 %v1420, %v1419
    %v1532 = vpack.c.b16 %v1422, %v1421
    %v1533 = vpack.c.b16 %v1424, %v1423
    %v1534 = vpack.c.b16 %v1426, %v1425
    %v1535 = vpack.c.b16 %v1428, %v1427
    %v1536 = vpack.c.b16 %v1430, %v1429
    %v1537 = vpack.c.b16 %v1432, %v1431
    %v1538 = vpack.c.b16 %v1434, %v1433
    %v1539 = vpack.c.b16 %v1436, %v1435
    %v1540 = vpack.c.b16 %v1438, %v1437
    %v1541 = vpack.c.b16 %v1440, %v1439
    %v1542 = vpack.c.b16 %v1442, %v1441
    %v1543 = vpack.c.b16 %v1444, %v1443
    %v1544 = vpack.c.b16 %v1446, %v1445
    %v1659 = vunpack.c.l.b16 %v1039
    %v1660 = vunpack.c.h.b16 %v1039
    %v1661 = vunpack.c.l.b16 %v1040
    %v1662 = vunpack.c.h.b16 %v1040
    %v1663 = vunpack.c.l.b16 %v1041
    %v1664 = vunpack.c.h.b16 %v1041
    %v1665 = vunpack.c.l.b16 %v1042
    %v1666 = vunpack.c.h.b16 %v1042
    %v1667 = vunpack.c.l.b16 %v1043
    %v1668 = vunpack.c.h.b16 %v1043
    %v1669 = vunpack.c.l.b16 %v1044
    %v1670 = vunpack.c.h.b16 %v1044
    %v1671 = vunpack.c.l.b16 %v1045
    %v1672 = vunpack.c.h.b16 %v1045
    %v1673 = vunpack.c.l.b16 %v1046
    %v1674 = vunpack.c.h.b16 %v1046
    %v1675 = vunpack.c.l.b16 %v1047
    %v1676 = vunpack.c.h.b16 %v1047
    %v1677 = vunpack.c.l.b16 %v1048
    %v1678 = vunpack.c.h.b16 %v1048
    %v1679 = vunpack.c.l.b16 %v1049
    %v1680 = vunpack.c.h.b16 %v1049
    %v1681 = vunpack.c.l.b16 %v1050
    %v1682 = vunpack.c.h.b16 %v1050
    %v1683 = vunpack.c.l.b16 %v1051
    %v1684 = vunpack.c.h.b16 %v1051
    %v1685 = vunpack.c.l.b16 %v1052
    %v1686 = vunpack.c.h.b16 %v1052
    %v1687 = vunpack.c.l.b16 %v1053
    %v1688 = vunpack.c.h.b16 %v1053
    %v1689 = vunpack.c.l.b16 %v1054
    %v1690 = vunpack.c.h.b16 %v1054
    %v1691 = vpack.c.b16 %v1661, %v1659
    %v1692 = vpack.c.b16 %v1662, %v1660
    %v1693 = vpack.c.b16 %v1665, %v1663
    %v1694 = vpack.c.b16 %v1666, %v1664
    %v1695 = vpack.c.b16 %v1669, %v1667
    %v1696 = vpack.c.b16 %v1670, %v1668
    %v1697 = vpack.c.b16 %v1673, %v1671
    %v1698 = vpack.c.b16 %v1674, %v1672
    %v1699 = vpack.c.b16 %v1677, %v1675
    %v1700 = vpack.c.b16 %v1678, %v1676
    %v1701 = vpack.c.b16 %v1681, %v1679
    %v1702 = vpack.c.b16 %v1682, %v1680
    %v1703 = vpack.c.b16 %v1685, %v1683
    %v1704 = vpack.c.b16 %v1686, %v1684
    %v1705 = vpack.c.b16 %v1689, %v1687
    %v1706 = vpack.c.b16 %v1690, %v1688
    %1723 = vmatprep.subr.bf16.mxu0 %v1692
    %1724 = vmatpush1.bf16.msra.mxu0 %v1691
    %1725 = vmatprep.subr.bf16.mxu0 %v1694
    %1726 = vmatpush1.bf16.msra.mxu0 %v1693
    %1727 = vmatprep.subr.bf16.mxu0 %v1696
    %1728 = vmatpush1.bf16.msra.mxu0 %v1695
    %1729 = vmatprep.subr.bf16.mxu0 %v1698
    %1730 = vmatpush1.bf16.msra.mxu0 %v1697
    %1731 = vmatprep.subr.bf16.mxu0 %v1700
    %1732 = vmatpush1.bf16.msra.mxu0 %v1699
    %1733 = vmatprep.subr.bf16.mxu0 %v1702
    %1734 = vmatpush1.bf16.msra.mxu0 %v1701
    %1735 = vmatprep.subr.bf16.mxu0 %v1704
    %1736 = vmatpush1.bf16.msra.mxu0 %v1703
    %1737 = vmatprep.subr.bf16.mxu0 %v1706
    %1738 = vmatpush1.bf16.msra.mxu0 %v1705
    %1739 = vmatprep.subr.bf16.mxu0 0
    %1740 = vmatpush1.bf16.msra.mxu0 0
    %1741 = vmatprep.subr.bf16.mxu0 0
    %1742 = vmatpush1.bf16.msra.mxu0 0
    %1743 = vmatprep.subr.bf16.mxu0 0
    %1744 = vmatpush1.bf16.msra.mxu0 0
    %1745 = vmatprep.subr.bf16.mxu0 0
    %1746 = vmatpush1.bf16.msra.mxu0 0
    %1747 = vmatprep.subr.bf16.mxu0 0
    %1748 = vmatpush1.bf16.msra.mxu0 0
    %1749 = vmatprep.subr.bf16.mxu0 0
    %1750 = vmatpush1.bf16.msra.mxu0 0
    %1751 = vmatprep.subr.bf16.mxu0 0
    %1752 = vmatpush1.bf16.msra.mxu0 0
    %1753 = vmatprep.subr.bf16.mxu0 0
    %1754 = vmatpush1.bf16.msra.mxu0 0
    %1755 = vmatprep.mubr.bf16.mxu0 0
    %1756 = vmatmul.mubr.bf16.gmra.mrb[0].mxu0 %v1447
    %v1757 = vpop.f32.mrb[0].mxu0
    %v1758 = vadd.f32 0.0, %v1757
    %v1759 = vpop.f32.mrb[0].mxu0
    %v1760 = vadd.f32 0.0, %v1759
    %v1761 = vpop.f32.mrb[0].mxu0
    %v1762 = vadd.f32 0.0, %v1761
    %v1763 = vpop.f32.mrb[0].mxu0
    %v1764 = vadd.f32 0.0, %v1763
    %1765 = vmatprep.mubr.bf16.mxu0 0
    %1766 = vmatmul.mubr.bf16.gmra.mrb[0].mxu0 %v1448
    %v1767 = vpop.f32.mrb[0].mxu0
    %v1768 = vadd.f32 0.0, %v1767
    %v1769 = vpop.f32.mrb[0].mxu0
    %v1770 = vadd.f32 0.0, %v1769
    %v1771 = vpop.f32.mrb[0].mxu0
    %v1772 = vadd.f32 0.0, %v1771
    %v1773 = vpop.f32.mrb[0].mxu0
    %v1774 = vadd.f32 0.0, %v1773
    %1775 = vmatprep.mubr.bf16.mxu0 0
    %1776 = vmatmul.mubr.bf16.gmra.mrb[0].mxu0 %v1449
    %v1777 = vpop.f32.mrb[0].mxu0
    %v1778 = vadd.f32 0.0, %v1777
    %v1779 = vpop.f32.mrb[0].mxu0
    %v1780 = vadd.f32 0.0, %v1779
    %v1781 = vpop.f32.mrb[0].mxu0
    %v1782 = vadd.f32 0.0, %v1781
    %v1783 = vpop.f32.mrb[0].mxu0
    %v1784 = vadd.f32 0.0, %v1783
    %1785 = vmatprep.mubr.bf16.mxu0 0
    %1786 = vmatmul.mubr.bf16.gmra.mrb[0].mxu0 %v1450
    %v1787 = vpop.f32.mrb[0].mxu0
    %v1788 = vadd.f32 0.0, %v1787
    %v1789 = vpop.f32.mrb[0].mxu0
    %v1790 = vadd.f32 0.0, %v1789
    %v1791 = vpop.f32.mrb[0].mxu0
    %v1792 = vadd.f32 0.0, %v1791
    %v1793 = vpop.f32.mrb[0].mxu0
    %v1794 = vadd.f32 0.0, %v1793
    %1795 = vmatprep.mubr.bf16.mxu0 0
    %1796 = vmatmul.mubr.bf16.gmra.mrb[0].mxu0 %v1451
    %v1797 = vpop.f32.mrb[0].mxu0
    %v1798 = vadd.f32 0.0, %v1797
    %v1799 = vpop.f32.mrb[0].mxu0
    %v1800 = vadd.f32 0.0, %v1799
    %v1801 = vpop.f32.mrb[0].mxu0
    %v1802 = vadd.f32 0.0, %v1801
    %v1803 = vpop.f32.mrb[0].mxu0
    %v1804 = vadd.f32 0.0, %v1803
    %1805 = vmatprep.mubr.bf16.mxu0 0
    %1806 = vmatmul.mubr.bf16.gmra.mrb[0].mxu0 %v1452
    %v1807 = vpop.f32.mrb[0].mxu0
    %v1808 = vadd.f32 0.0, %v1807
    %v1809 = vpop.f32.mrb[0].mxu0
    %v1810 = vadd.f32 0.0, %v1809
    %v1811 = vpop.f32.mrb[0].mxu0
    %v1812 = vadd.f32 0.0, %v1811
    %v1813 = vpop.f32.mrb[0].mxu0
    %v1814 = vadd.f32 0.0, %v1813
    %1815 = vmatprep.mubr.bf16.mxu0 0
    %1816 = vmatmul.mubr.bf16.gmra.mrb[0].mxu0 %v1453
    %v1817 = vpop.f32.mrb[0].mxu0
    %v1818 = vadd.f32 0.0, %v1817
    %v1819 = vpop.f32.mrb[0].mxu0
    %v1820 = vadd.f32 0.0, %v1819
    %v1821 = vpop.f32.mrb[0].mxu0
    %v1822 = vadd.f32 0.0, %v1821
    %v1823 = vpop.f32.mrb[0].mxu0
    %v1824 = vadd.f32 0.0, %v1823
    %1825 = vmatprep.mubr.bf16.mxu0 0
    %1826 = vmatmul.mubr.bf16.gmra.mrb[0].mxu0 %v1454
    %v1827 = vpop.f32.mrb[0].mxu0
    %v1828 = vadd.f32 0.0, %v1827
    %v1829 = vpop.f32.mrb[0].mxu0
    %v1830 = vadd.f32 0.0, %v1829
    %v1831 = vpop.f32.mrb[0].mxu0
    %v1832 = vadd.f32 0.0, %v1831
    %v1833 = vpop.f32.mrb[0].mxu0
    %v1834 = vadd.f32 0.0, %v1833
    %1835 = vmatprep.mubr.bf16.mxu0 0
    %1836 = vmatmul.mubr.bf16.gmra.mrb[0].mxu0 %v1455
    %v1837 = vpop.f32.mrb[0].mxu0
    %v1838 = vadd.f32 0.0, %v1837
    %v1839 = vpop.f32.mrb[0].mxu0
    %v1840 = vadd.f32 0.0, %v1839
    %v1841 = vpop.f32.mrb[0].mxu0
    %v1842 = vadd.f32 0.0, %v1841
    %v1843 = vpop.f32.mrb[0].mxu0
    %v1844 = vadd.f32 0.0, %v1843
    %1845 = vmatprep.mubr.bf16.mxu0 0
    %1846 = vmatmul.mubr.bf16.gmra.mrb[0].mxu0 %v1456
    %v1847 = vpop.f32.mrb[0].mxu0
    %v1848 = vadd.f32 0.0, %v1847
    %v1849 = vpop.f32.mrb[0].mxu0
    %v1850 = vadd.f32 0.0, %v1849
    %v1851 = vpop.f32.mrb[0].mxu0
    %v1852 = vadd.f32 0.0, %v1851
    %v1853 = vpop.f32.mrb[0].mxu0
    %v1854 = vadd.f32 0.0, %v1853
    %1855 = vmatprep.mubr.bf16.mxu0 0
    %1856 = vmatmul.mubr.bf16.gmra.mrb[0].mxu0 %v1457
    %v1857 = vpop.f32.mrb[0].mxu0
    %v1858 = vadd.f32 0.0, %v1857
    %v1859 = vpop.f32.mrb[0].mxu0
    %v1860 = vadd.f32 0.0, %v1859
    %v1861 = vpop.f32.mrb[0].mxu0
    %v1862 = vadd.f32 0.0, %v1861
    %v1863 = vpop.f32.mrb[0].mxu0
    %v1864 = vadd.f32 0.0, %v1863
    %1865 = vmatprep.mubr.bf16.mxu0 0
    %1866 = vmatmul.mubr.bf16.gmra.mrb[0].mxu0 %v1458
    %v1867 = vpop.f32.mrb[0].mxu0
    %v1868 = vadd.f32 0.0, %v1867
    %v1869 = vpop.f32.mrb[0].mxu0
    %v1870 = vadd.f32 0.0, %v1869
    %v1871 = vpop.f32.mrb[0].mxu0
    %v1872 = vadd.f32 0.0, %v1871
    %v1873 = vpop.f32.mrb[0].mxu0
    %v1874 = vadd.f32 0.0, %v1873
    %1875 = vmatprep.mubr.bf16.mxu0 0
    %1876 = vmatmul.mubr.bf16.gmra.mrb[0].mxu0 %v1459
    %v1877 = vpop.f32.mrb[0].mxu0
    %v1878 = vadd.f32 0.0, %v1877
    %v1879 = vpop.f32.mrb[0].mxu0
    %v1880 = vadd.f32 0.0, %v1879
    %v1881 = vpop.f32.mrb[0].mxu0
    %v1882 = vadd.f32 0.0, %v1881
    %v1883 = vpop.f32.mrb[0].mxu0
    %v1884 = vadd.f32 0.0, %v1883
    %1885 = vmatprep.mubr.bf16.mxu0 0
    %1886 = vmatmul.mubr.bf16.gmra.mrb[0].mxu0 %v1460
    %v1887 = vpop.f32.mrb[0].mxu0
    %v1888 = vadd.f32 0.0, %v1887
    %v1889 = vpop.f32.mrb[0].mxu0
    %v1890 = vadd.f32 0.0, %v1889
    %v1891 = vpop.f32.mrb[0].mxu0
    %v1892 = vadd.f32 0.0, %v1891
    %v1893 = vpop.f32.mrb[0].mxu0
    %v1894 = vadd.f32 0.0, %v1893
    %1895 = vmatprep.mubr.bf16.mxu0 0
    %1896 = vmatmul.mubr.bf16.gmra.mrb[0].mxu0 %v1461
    %v1897 = vpop.f32.mrb[0].mxu0
    %v1898 = vadd.f32 0.0, %v1897
    %v1899 = vpop.f32.mrb[0].mxu0
    %v1900 = vadd.f32 0.0, %v1899
    %v1901 = vpop.f32.mrb[0].mxu0
    %v1902 = vadd.f32 0.0, %v1901
    %v1903 = vpop.f32.mrb[0].mxu0
    %v1904 = vadd.f32 0.0, %v1903
    %1905 = vmatprep.mubr.bf16.mxu0 0
    %1906 = vmatmul.mubr.bf16.gmra.mrb[0].mxu0 %v1462
    %v1907 = vpop.f32.mrb[0].mxu0
    %v1908 = vadd.f32 0.0, %v1907
    %v1909 = vpop.f32.mrb[0].mxu0
    %v1910 = vadd.f32 0.0, %v1909
    %v1911 = vpop.f32.mrb[0].mxu0
    %v1912 = vadd.f32 0.0, %v1911
    %v1913 = vpop.f32.mrb[0].mxu0
    %v1914 = vadd.f32 0.0, %v1913
    %1915 = vmatprep.mubr.bf16.mxu0 0
    %1916 = vmatmul.mubr.bf16.gmra.mrb[0].mxu0 %v1463
    %v1917 = vpop.f32.mrb[0].mxu0
    %v1918 = vadd.f32 0.0, %v1917
    %v1919 = vpop.f32.mrb[0].mxu0
    %v1920 = vadd.f32 0.0, %v1919
    %v1921 = vpop.f32.mrb[0].mxu0
    %v1922 = vadd.f32 0.0, %v1921
    %v1923 = vpop.f32.mrb[0].mxu0
    %v1924 = vadd.f32 0.0, %v1923
    %1925 = vmatprep.mubr.bf16.mxu0 0
    %1926 = vmatmul.mubr.bf16.gmra.mrb[0].mxu0 %v1464
    %v1927 = vpop.f32.mrb[0].mxu0
    %v1928 = vadd.f32 0.0, %v1927
    %v1929 = vpop.f32.mrb[0].mxu0
    %v1930 = vadd.f32 0.0, %v1929
    %v1931 = vpop.f32.mrb[0].mxu0
    %v1932 = vadd.f32 0.0, %v1931
    %v1933 = vpop.f32.mrb[0].mxu0
    %v1934 = vadd.f32 0.0, %v1933
    %1935 = vmatprep.mubr.bf16.mxu0 0
    %1936 = vmatmul.mubr.bf16.gmra.mrb[0].mxu0 %v1465
    %v1937 = vpop.f32.mrb[0].mxu0
    %v1938 = vadd.f32 0.0, %v1937
    %v1939 = vpop.f32.mrb[0].mxu0
    %v1940 = vadd.f32 0.0, %v1939
    %v1941 = vpop.f32.mrb[0].mxu0
    %v1942 = vadd.f32 0.0, %v1941
    %v1943 = vpop.f32.mrb[0].mxu0
    %v1944 = vadd.f32 0.0, %v1943
    %1945 = vmatprep.mubr.bf16.mxu0 0
    %1946 = vmatmul.mubr.bf16.gmra.mrb[0].mxu0 %v1466
    %v1947 = vpop.f32.mrb[0].mxu0
    %v1948 = vadd.f32 0.0, %v1947
    %v1949 = vpop.f32.mrb[0].mxu0
    %v1950 = vadd.f32 0.0, %v1949
    %v1951 = vpop.f32.mrb[0].mxu0
    %v1952 = vadd.f32 0.0, %v1951
    %v1953 = vpop.f32.mrb[0].mxu0
    %v1954 = vadd.f32 0.0, %v1953
    %1955 = vmatprep.mubr.bf16.mxu0 0
    %1956 = vmatmul.mubr.bf16.gmra.mrb[0].mxu0 %v1467
    %v1957 = vpop.f32.mrb[0].mxu0
    %v1958 = vadd.f32 0.0, %v1957
    %v1959 = vpop.f32.mrb[0].mxu0
    %v1960 = vadd.f32 0.0, %v1959
    %v1961 = vpop.f32.mrb[0].mxu0
    %v1962 = vadd.f32 0.0, %v1961
    %v1963 = vpop.f32.mrb[0].mxu0
    %v1964 = vadd.f32 0.0, %v1963
    %1965 = vmatprep.mubr.bf16.mxu0 0
    %1966 = vmatmul.mubr.bf16.gmra.mrb[0].mxu0 %v1468
    %v1967 = vpop.f32.mrb[0].mxu0
    %v1968 = vadd.f32 0.0, %v1967
    %v1969 = vpop.f32.mrb[0].mxu0
    %v1970 = vadd.f32 0.0, %v1969
    %v1971 = vpop.f32.mrb[0].mxu0
    %v1972 = vadd.f32 0.0, %v1971
    %v1973 = vpop.f32.mrb[0].mxu0
    %v1974 = vadd.f32 0.0, %v1973
    %1975 = vmatprep.mubr.bf16.mxu0 0
    %1976 = vmatmul.mubr.bf16.gmra.mrb[0].mxu0 %v1469
    %v1977 = vpop.f32.mrb[0].mxu0
    %v1978 = vadd.f32 0.0, %v1977
    %v1979 = vpop.f32.mrb[0].mxu0
    %v1980 = vadd.f32 0.0, %v1979
    %v1981 = vpop.f32.mrb[0].mxu0
    %v1982 = vadd.f32 0.0, %v1981
    %v1983 = vpop.f32.mrb[0].mxu0
    %v1984 = vadd.f32 0.0, %v1983
    %1985 = vmatprep.mubr.bf16.mxu0 0
    %1986 = vmatmul.mubr.bf16.gmra.mrb[0].mxu0 %v1470
    %v1987 = vpop.f32.mrb[0].mxu0
    %v1988 = vadd.f32 0.0, %v1987
    %v1989 = vpop.f32.mrb[0].mxu0
    %v1990 = vadd.f32 0.0, %v1989
    %v1991 = vpop.f32.mrb[0].mxu0
    %v1992 = vadd.f32 0.0, %v1991
    %v1993 = vpop.f32.mrb[0].mxu0
    %v1994 = vadd.f32 0.0, %v1993
    %1995 = vmatprep.mubr.bf16.mxu0 0
    %1996 = vmatmul.mubr.bf16.gmra.mrb[0].mxu0 %v1471
    %v1997 = vpop.f32.mrb[0].mxu0
    %v1998 = vadd.f32 0.0, %v1997
    %v1999 = vpop.f32.mrb[0].mxu0
    %v2000 = vadd.f32 0.0, %v1999
    %v2001 = vpop.f32.mrb[0].mxu0
    %v2002 = vadd.f32 0.0, %v2001
    %v2003 = vpop.f32.mrb[0].mxu0
    %v2004 = vadd.f32 0.0, %v2003
    %2005 = vmatprep.mubr.bf16.mxu0 0
    %2006 = vmatmul.mubr.bf16.gmra.mrb[0].mxu0 %v1472
    %v2007 = vpop.f32.mrb[0].mxu0
    %v2008 = vadd.f32 0.0, %v2007
    %v2009 = vpop.f32.mrb[0].mxu0
    %v2010 = vadd.f32 0.0, %v2009
    %v2011 = vpop.f32.mrb[0].mxu0
    %v2012 = vadd.f32 0.0, %v2011
    %v2013 = vpop.f32.mrb[0].mxu0
    %v2014 = vadd.f32 0.0, %v2013
    %2015 = vmatprep.mubr.bf16.mxu0 0
    %2016 = vmatmul.mubr.bf16.gmra.mrb[0].mxu0 %v1473
    %v2017 = vpop.f32.mrb[0].mxu0
    %v2018 = vadd.f32 0.0, %v2017
    %v2019 = vpop.f32.mrb[0].mxu0
    %v2020 = vadd.f32 0.0, %v2019
    %v2021 = vpop.f32.mrb[0].mxu0
    %v2022 = vadd.f32 0.0, %v2021
    %v2023 = vpop.f32.mrb[0].mxu0
    %v2024 = vadd.f32 0.0, %v2023
    %2025 = vmatprep.mubr.bf16.mxu0 0
    %2026 = vmatmul.mubr.bf16.gmra.mrb[0].mxu0 %v1474
    %v2027 = vpop.f32.mrb[0].mxu0
    %v2028 = vadd.f32 0.0, %v2027
    %v2029 = vpop.f32.mrb[0].mxu0
    %v2030 = vadd.f32 0.0, %v2029
    %v2031 = vpop.f32.mrb[0].mxu0
    %v2032 = vadd.f32 0.0, %v2031
    %v2033 = vpop.f32.mrb[0].mxu0
    %v2034 = vadd.f32 0.0, %v2033
    %2035 = vmatprep.mubr.bf16.mxu0 0
    %2036 = vmatmul.mubr.bf16.gmra.mrb[0].mxu0 %v1475
    %v2037 = vpop.f32.mrb[0].mxu0
    %v2038 = vadd.f32 0.0, %v2037
    %v2039 = vpop.f32.mrb[0].mxu0
    %v2040 = vadd.f32 0.0, %v2039
    %v2041 = vpop.f32.mrb[0].mxu0
    %v2042 = vadd.f32 0.0, %v2041
    %v2043 = vpop.f32.mrb[0].mxu0
    %v2044 = vadd.f32 0.0, %v2043
    %2045 = vmatprep.mubr.bf16.mxu0 0
    %2046 = vmatmul.mubr.bf16.gmra.mrb[0].mxu0 %v1476
    %v2047 = vpop.f32.mrb[0].mxu0
    %v2048 = vadd.f32 0.0, %v2047
    %v2049 = vpop.f32.mrb[0].mxu0
    %v2050 = vadd.f32 0.0, %v2049
    %v2051 = vpop.f32.mrb[0].mxu0
    %v2052 = vadd.f32 0.0, %v2051
    %v2053 = vpop.f32.mrb[0].mxu0
    %v2054 = vadd.f32 0.0, %v2053
    %2055 = vmatprep.mubr.bf16.mxu0 0
    %2056 = vmatmul.mubr.bf16.gmra.mrb[0].mxu0 %v1477
    %v2057 = vpop.f32.mrb[0].mxu0
    %v2058 = vadd.f32 0.0, %v2057
    %v2059 = vpop.f32.mrb[0].mxu0
    %v2060 = vadd.f32 0.0, %v2059
    %v2061 = vpop.f32.mrb[0].mxu0
    %v2062 = vadd.f32 0.0, %v2061
    %v2063 = vpop.f32.mrb[0].mxu0
    %v2064 = vadd.f32 0.0, %v2063
    %2065 = vmatprep.mubr.bf16.mxu0 0
    %2066 = vmatmul.mubr.bf16.gmra.mrb[0].mxu0 %v1478
    %v2067 = vpop.f32.mrb[0].mxu0
    %v2068 = vadd.f32 0.0, %v2067
    %v2069 = vpop.f32.mrb[0].mxu0
    %v2070 = vadd.f32 0.0, %v2069
    %v2071 = vpop.f32.mrb[0].mxu0
    %v2072 = vadd.f32 0.0, %v2071
    %v2073 = vpop.f32.mrb[0].mxu0
    %v2074 = vadd.f32 0.0, %v2073
    %2075 = vmatprep.mubr.bf16.mxu0 0
    %2076 = vmatmul.mubr.bf16.gmra.mrb[0].mxu0 %v1479
    %v2077 = vpop.f32.mrb[0].mxu0
    %v2078 = vadd.f32 0.0, %v2077
    %v2079 = vpop.f32.mrb[0].mxu0
    %v2080 = vadd.f32 0.0, %v2079
    %v2081 = vpop.f32.mrb[0].mxu0
    %v2082 = vadd.f32 0.0, %v2081
    %v2083 = vpop.f32.mrb[0].mxu0
    %v2084 = vadd.f32 0.0, %v2083
    %2085 = vmatprep.mubr.bf16.mxu0 0
    %2086 = vmatmul.mubr.bf16.gmra.mrb[0].mxu0 %v1480
    %v2087 = vpop.f32.mrb[0].mxu0
    %v2088 = vadd.f32 0.0, %v2087
    %v2089 = vpop.f32.mrb[0].mxu0
    %v2090 = vadd.f32 0.0, %v2089
    %v2091 = vpop.f32.mrb[0].mxu0
    %v2092 = vadd.f32 0.0, %v2091
    %v2093 = vpop.f32.mrb[0].mxu0
    %v2094 = vadd.f32 0.0, %v2093
    %2095 = vmatprep.mubr.bf16.mxu0 0
    %2096 = vmatmul.mubr.bf16.gmra.mrb[0].mxu0 %v1481
    %v2097 = vpop.f32.mrb[0].mxu0
    %v2098 = vadd.f32 0.0, %v2097
    %v2099 = vpop.f32.mrb[0].mxu0
    %v2100 = vadd.f32 0.0, %v2099
    %v2101 = vpop.f32.mrb[0].mxu0
    %v2102 = vadd.f32 0.0, %v2101
    %v2103 = vpop.f32.mrb[0].mxu0
    %v2104 = vadd.f32 0.0, %v2103
    %2105 = vmatprep.mubr.bf16.mxu0 0
    %2106 = vmatmul.mubr.bf16.gmra.mrb[0].mxu0 %v1482
    %v2107 = vpop.f32.mrb[0].mxu0
    %v2108 = vadd.f32 0.0, %v2107
    %v2109 = vpop.f32.mrb[0].mxu0
    %v2110 = vadd.f32 0.0, %v2109
    %v2111 = vpop.f32.mrb[0].mxu0
    %v2112 = vadd.f32 0.0, %v2111
    %v2113 = vpop.f32.mrb[0].mxu0
    %v2114 = vadd.f32 0.0, %v2113
    %2115 = vmatprep.mubr.bf16.mxu0 0
    %2116 = vmatmul.mubr.bf16.gmra.mrb[0].mxu0 %v1483
    %v2117 = vpop.f32.mrb[0].mxu0
    %v2118 = vadd.f32 0.0, %v2117
    %v2119 = vpop.f32.mrb[0].mxu0
    %v2120 = vadd.f32 0.0, %v2119
    %v2121 = vpop.f32.mrb[0].mxu0
    %v2122 = vadd.f32 0.0, %v2121
    %v2123 = vpop.f32.mrb[0].mxu0
    %v2124 = vadd.f32 0.0, %v2123
    %2125 = vmatprep.mubr.bf16.mxu0 0
    %2126 = vmatmul.mubr.bf16.gmra.mrb[0].mxu0 %v1484
    %v2127 = vpop.f32.mrb[0].mxu0
    %v2128 = vadd.f32 0.0, %v2127
    %v2129 = vpop.f32.mrb[0].mxu0
    %v2130 = vadd.f32 0.0, %v2129
    %v2131 = vpop.f32.mrb[0].mxu0
    %v2132 = vadd.f32 0.0, %v2131
    %v2133 = vpop.f32.mrb[0].mxu0
    %v2134 = vadd.f32 0.0, %v2133
    %2135 = vmatprep.mubr.bf16.mxu0 0
    %2136 = vmatmul.mubr.bf16.gmra.mrb[0].mxu0 %v1485
    %v2137 = vpop.f32.mrb[0].mxu0
    %v2138 = vadd.f32 0.0, %v2137
    %v2139 = vpop.f32.mrb[0].mxu0
    %v2140 = vadd.f32 0.0, %v2139
    %v2141 = vpop.f32.mrb[0].mxu0
    %v2142 = vadd.f32 0.0, %v2141
    %v2143 = vpop.f32.mrb[0].mxu0
    %v2144 = vadd.f32 0.0, %v2143
    %2145 = vmatprep.mubr.bf16.mxu0 0
    %2146 = vmatmul.mubr.bf16.gmra.mrb[0].mxu0 %v1486
    %v2147 = vpop.f32.mrb[0].mxu0
    %v2148 = vadd.f32 0.0, %v2147
    %v2149 = vpop.f32.mrb[0].mxu0
    %v2150 = vadd.f32 0.0, %v2149
    %v2151 = vpop.f32.mrb[0].mxu0
    %v2152 = vadd.f32 0.0, %v2151
    %v2153 = vpop.f32.mrb[0].mxu0
    %v2154 = vadd.f32 0.0, %v2153
    %2155 = vmatprep.mubr.bf16.mxu0 0
    %2156 = vmatmul.mubr.bf16.gmra.mrb[0].mxu0 %v1487
    %v2157 = vpop.f32.mrb[0].mxu0
    %v2158 = vadd.f32 0.0, %v2157
    %v2159 = vpop.f32.mrb[0].mxu0
    %v2160 = vadd.f32 0.0, %v2159
    %v2161 = vpop.f32.mrb[0].mxu0
    %v2162 = vadd.f32 0.0, %v2161
    %v2163 = vpop.f32.mrb[0].mxu0
    %v2164 = vadd.f32 0.0, %v2163
    %2165 = vmatprep.mubr.bf16.mxu0 0
    %2166 = vmatmul.mubr.bf16.gmra.mrb[0].mxu0 %v1488
    %v2167 = vpop.f32.mrb[0].mxu0
    %v2168 = vadd.f32 0.0, %v2167
    %v2169 = vpop.f32.mrb[0].mxu0
    %v2170 = vadd.f32 0.0, %v2169
    %v2171 = vpop.f32.mrb[0].mxu0
    %v2172 = vadd.f32 0.0, %v2171
    %v2173 = vpop.f32.mrb[0].mxu0
    %v2174 = vadd.f32 0.0, %v2173
    %2175 = vmatprep.mubr.bf16.mxu0 0
    %2176 = vmatmul.mubr.bf16.gmra.mrb[0].mxu0 %v1489
    %v2177 = vpop.f32.mrb[0].mxu0
    %v2178 = vadd.f32 0.0, %v2177
    %v2179 = vpop.f32.mrb[0].mxu0
    %v2180 = vadd.f32 0.0, %v2179
    %v2181 = vpop.f32.mrb[0].mxu0
    %v2182 = vadd.f32 0.0, %v2181
    %v2183 = vpop.f32.mrb[0].mxu0
    %v2184 = vadd.f32 0.0, %v2183
    %2185 = vmatprep.mubr.bf16.mxu0 0
    %2186 = vmatmul.mubr.bf16.gmra.mrb[0].mxu0 %v1490
    %v2187 = vpop.f32.mrb[0].mxu0
    %v2188 = vadd.f32 0.0, %v2187
    %v2189 = vpop.f32.mrb[0].mxu0
    %v2190 = vadd.f32 0.0, %v2189
    %v2191 = vpop.f32.mrb[0].mxu0
    %v2192 = vadd.f32 0.0, %v2191
    %v2193 = vpop.f32.mrb[0].mxu0
    %v2194 = vadd.f32 0.0, %v2193
    %2195 = vmatprep.mubr.bf16.mxu0 0
    %2196 = vmatmul.mubr.bf16.gmra.mrb[0].mxu0 %v1491
    %v2197 = vpop.f32.mrb[0].mxu0
    %v2198 = vadd.f32 0.0, %v2197
    %v2199 = vpop.f32.mrb[0].mxu0
    %v2200 = vadd.f32 0.0, %v2199
    %v2201 = vpop.f32.mrb[0].mxu0
    %v2202 = vadd.f32 0.0, %v2201
    %v2203 = vpop.f32.mrb[0].mxu0
    %v2204 = vadd.f32 0.0, %v2203
    %2205 = vmatprep.mubr.bf16.mxu0 0
    %2206 = vmatmul.mubr.bf16.gmra.mrb[0].mxu0 %v1492
    %v2207 = vpop.f32.mrb[0].mxu0
    %v2208 = vadd.f32 0.0, %v2207
    %v2209 = vpop.f32.mrb[0].mxu0
    %v2210 = vadd.f32 0.0, %v2209
    %v2211 = vpop.f32.mrb[0].mxu0
    %v2212 = vadd.f32 0.0, %v2211
    %v2213 = vpop.f32.mrb[0].mxu0
    %v2214 = vadd.f32 0.0, %v2213
    %2215 = vmatprep.mubr.bf16.mxu0 0
    %2216 = vmatmul.mubr.bf16.gmra.mrb[0].mxu0 %v1493
    %v2217 = vpop.f32.mrb[0].mxu0
    %v2218 = vadd.f32 0.0, %v2217
    %v2219 = vpop.f32.mrb[0].mxu0
    %v2220 = vadd.f32 0.0, %v2219
    %v2221 = vpop.f32.mrb[0].mxu0
    %v2222 = vadd.f32 0.0, %v2221
    %v2223 = vpop.f32.mrb[0].mxu0
    %v2224 = vadd.f32 0.0, %v2223
    %2225 = vmatprep.mubr.bf16.mxu0 0
    %2226 = vmatmul.mubr.bf16.gmra.mrb[0].mxu0 %v1494
    %v2227 = vpop.f32.mrb[0].mxu0
    %v2228 = vadd.f32 0.0, %v2227
    %v2229 = vpop.f32.mrb[0].mxu0
    %v2230 = vadd.f32 0.0, %v2229
    %v2231 = vpop.f32.mrb[0].mxu0
    %v2232 = vadd.f32 0.0, %v2231
    %v2233 = vpop.f32.mrb[0].mxu0
    %v2234 = vadd.f32 0.0, %v2233
    %2235 = vmatprep.mubr.bf16.mxu0 0
    %2236 = vmatmul.mubr.bf16.gmra.mrb[0].mxu0 %v1495
    %v2237 = vpop.f32.mrb[0].mxu0
    %v2238 = vadd.f32 0.0, %v2237
    %v2239 = vpop.f32.mrb[0].mxu0
    %v2240 = vadd.f32 0.0, %v2239
    %v2241 = vpop.f32.mrb[0].mxu0
    %v2242 = vadd.f32 0.0, %v2241
    %v2243 = vpop.f32.mrb[0].mxu0
    %v2244 = vadd.f32 0.0, %v2243
    %2245 = vmatprep.mubr.bf16.mxu0 0
    %2246 = vmatmul.mubr.bf16.gmra.mrb[0].mxu0 %v1496
    %v2247 = vpop.f32.mrb[0].mxu0
    %v2248 = vadd.f32 0.0, %v2247
    %v2249 = vpop.f32.mrb[0].mxu0
    %v2250 = vadd.f32 0.0, %v2249
    %v2251 = vpop.f32.mrb[0].mxu0
    %v2252 = vadd.f32 0.0, %v2251
    %v2253 = vpop.f32.mrb[0].mxu0
    %v2254 = vadd.f32 0.0, %v2253
    %2255 = vmatprep.mubr.bf16.mxu0 0
    %2256 = vmatmul.mubr.bf16.gmra.mrb[0].mxu0 %v1497
    %v2257 = vpop.f32.mrb[0].mxu0
    %v2258 = vadd.f32 0.0, %v2257
    %v2259 = vpop.f32.mrb[0].mxu0
    %v2260 = vadd.f32 0.0, %v2259
    %v2261 = vpop.f32.mrb[0].mxu0
    %v2262 = vadd.f32 0.0, %v2261
    %v2263 = vpop.f32.mrb[0].mxu0
    %v2264 = vadd.f32 0.0, %v2263
    %2265 = vmatprep.mubr.bf16.mxu0 0
    %2266 = vmatmul.mubr.bf16.gmra.mrb[0].mxu0 %v1498
    %v2267 = vpop.f32.mrb[0].mxu0
    %v2268 = vadd.f32 0.0, %v2267
    %v2269 = vpop.f32.mrb[0].mxu0
    %v2270 = vadd.f32 0.0, %v2269
    %v2271 = vpop.f32.mrb[0].mxu0
    %v2272 = vadd.f32 0.0, %v2271
    %v2273 = vpop.f32.mrb[0].mxu0
    %v2274 = vadd.f32 0.0, %v2273
    %2275 = vmatprep.mubr.bf16.mxu0 0
    %2276 = vmatmul.mubr.bf16.gmra.mrb[0].mxu0 %v1499
    %v2277 = vpop.f32.mrb[0].mxu0
    %v2278 = vadd.f32 0.0, %v2277
    %v2279 = vpop.f32.mrb[0].mxu0
    %v2280 = vadd.f32 0.0, %v2279
    %v2281 = vpop.f32.mrb[0].mxu0
    %v2282 = vadd.f32 0.0, %v2281
    %v2283 = vpop.f32.mrb[0].mxu0
    %v2284 = vadd.f32 0.0, %v2283
    %2285 = vmatprep.mubr.bf16.mxu0 0
    %2286 = vmatmul.mubr.bf16.gmra.mrb[0].mxu0 %v1500
    %v2287 = vpop.f32.mrb[0].mxu0
    %v2288 = vadd.f32 0.0, %v2287
    %v2289 = vpop.f32.mrb[0].mxu0
    %v2290 = vadd.f32 0.0, %v2289
    %v2291 = vpop.f32.mrb[0].mxu0
    %v2292 = vadd.f32 0.0, %v2291
    %v2293 = vpop.f32.mrb[0].mxu0
    %v2294 = vadd.f32 0.0, %v2293
    %2295 = vmatprep.mubr.bf16.mxu0 0
    %2296 = vmatmul.mubr.bf16.gmra.mrb[0].mxu0 %v1501
    %v2297 = vpop.f32.mrb[0].mxu0
    %v2298 = vadd.f32 0.0, %v2297
    %v2299 = vpop.f32.mrb[0].mxu0
    %v2300 = vadd.f32 0.0, %v2299
    %v2301 = vpop.f32.mrb[0].mxu0
    %v2302 = vadd.f32 0.0, %v2301
    %v2303 = vpop.f32.mrb[0].mxu0
    %v2304 = vadd.f32 0.0, %v2303
    %2305 = vmatprep.mubr.bf16.mxu0 0
    %2306 = vmatmul.mubr.bf16.gmra.mrb[0].mxu0 %v1502
    %v2307 = vpop.f32.mrb[0].mxu0
    %v2308 = vadd.f32 0.0, %v2307
    %v2309 = vpop.f32.mrb[0].mxu0
    %v2310 = vadd.f32 0.0, %v2309
    %v2311 = vpop.f32.mrb[0].mxu0
    %v2312 = vadd.f32 0.0, %v2311
    %v2313 = vpop.f32.mrb[0].mxu0
    %v2314 = vadd.f32 0.0, %v2313
    %2315 = vmatprep.mubr.bf16.mxu0 0
    %2316 = vmatmul.mubr.bf16.gmra.mrb[0].mxu0 %v1503
    %v2317 = vpop.f32.mrb[0].mxu0
    %v2318 = vadd.f32 0.0, %v2317
    %v2319 = vpop.f32.mrb[0].mxu0
    %v2320 = vadd.f32 0.0, %v2319
    %v2321 = vpop.f32.mrb[0].mxu0
    %v2322 = vadd.f32 0.0, %v2321
    %v2323 = vpop.f32.mrb[0].mxu0
    %v2324 = vadd.f32 0.0, %v2323
    %2325 = vmatprep.mubr.bf16.mxu0 0
    %2326 = vmatmul.mubr.bf16.gmra.mrb[0].mxu0 %v1504
    %v2327 = vpop.f32.mrb[0].mxu0
    %v2328 = vadd.f32 0.0, %v2327
    %v2329 = vpop.f32.mrb[0].mxu0
    %v2330 = vadd.f32 0.0, %v2329
    %v2331 = vpop.f32.mrb[0].mxu0
    %v2332 = vadd.f32 0.0, %v2331
    %v2333 = vpop.f32.mrb[0].mxu0
    %v2334 = vadd.f32 0.0, %v2333
    %2335 = vmatprep.mubr.bf16.mxu0 0
    %2336 = vmatmul.mubr.bf16.gmra.mrb[0].mxu0 %v1505
    %v2337 = vpop.f32.mrb[0].mxu0
    %v2338 = vadd.f32 0.0, %v2337
    %v2339 = vpop.f32.mrb[0].mxu0
    %v2340 = vadd.f32 0.0, %v2339
    %v2341 = vpop.f32.mrb[0].mxu0
    %v2342 = vadd.f32 0.0, %v2341
    %v2343 = vpop.f32.mrb[0].mxu0
    %v2344 = vadd.f32 0.0, %v2343
    %2345 = vmatprep.mubr.bf16.mxu0 0
    %2346 = vmatmul.mubr.bf16.gmra.mrb[0].mxu0 %v1506
    %v2347 = vpop.f32.mrb[0].mxu0
    %v2348 = vadd.f32 0.0, %v2347
    %v2349 = vpop.f32.mrb[0].mxu0
    %v2350 = vadd.f32 0.0, %v2349
    %v2351 = vpop.f32.mrb[0].mxu0
    %v2352 = vadd.f32 0.0, %v2351
    %v2353 = vpop.f32.mrb[0].mxu0
    %v2354 = vadd.f32 0.0, %v2353
    %2355 = vmatprep.mubr.bf16.mxu0 0
    %2356 = vmatmul.mubr.bf16.gmra.mrb[0].mxu0 %v1507
    %v2357 = vpop.f32.mrb[0].mxu0
    %v2358 = vadd.f32 0.0, %v2357
    %v2359 = vpop.f32.mrb[0].mxu0
    %v2360 = vadd.f32 0.0, %v2359
    %v2361 = vpop.f32.mrb[0].mxu0
    %v2362 = vadd.f32 0.0, %v2361
    %v2363 = vpop.f32.mrb[0].mxu0
    %v2364 = vadd.f32 0.0, %v2363
    %2365 = vmatprep.mubr.bf16.mxu0 0
    %2366 = vmatmul.mubr.bf16.gmra.mrb[0].mxu0 %v1508
    %v2367 = vpop.f32.mrb[0].mxu0
    %v2368 = vadd.f32 0.0, %v2367
    %v2369 = vpop.f32.mrb[0].mxu0
    %v2370 = vadd.f32 0.0, %v2369
    %v2371 = vpop.f32.mrb[0].mxu0
    %v2372 = vadd.f32 0.0, %v2371
    %v2373 = vpop.f32.mrb[0].mxu0
    %v2374 = vadd.f32 0.0, %v2373
    %2375 = vmatprep.mubr.bf16.mxu0 0
    %2376 = vmatmul.mubr.bf16.gmra.mrb[0].mxu0 %v1509
    %v2377 = vpop.f32.mrb[0].mxu0
    %v2378 = vadd.f32 0.0, %v2377
    %v2379 = vpop.f32.mrb[0].mxu0
    %v2380 = vadd.f32 0.0, %v2379
    %v2381 = vpop.f32.mrb[0].mxu0
    %v2382 = vadd.f32 0.0, %v2381
    %v2383 = vpop.f32.mrb[0].mxu0
    %v2384 = vadd.f32 0.0, %v2383
    %2385 = vmatprep.mubr.bf16.mxu0 0
    %2386 = vmatmul.mubr.bf16.gmra.mrb[0].mxu0 %v1510
    %v2387 = vpop.f32.mrb[0].mxu0
    %v2388 = vadd.f32 0.0, %v2387
    %v2389 = vpop.f32.mrb[0].mxu0
    %v2390 = vadd.f32 0.0, %v2389
    %v2391 = vpop.f32.mrb[0].mxu0
    %v2392 = vadd.f32 0.0, %v2391
    %v2393 = vpop.f32.mrb[0].mxu0
    %v2394 = vadd.f32 0.0, %v2393
    %2395 = vmatprep.mubr.bf16.mxu0 0
    %2396 = vmatmul.mubr.bf16.gmra.mrb[0].mxu0 %v1511
    %v2397 = vpop.f32.mrb[0].mxu0
    %v2398 = vadd.f32 0.0, %v2397
    %v2399 = vpop.f32.mrb[0].mxu0
    %v2400 = vadd.f32 0.0, %v2399
    %v2401 = vpop.f32.mrb[0].mxu0
    %v2402 = vadd.f32 0.0, %v2401
    %v2403 = vpop.f32.mrb[0].mxu0
    %v2404 = vadd.f32 0.0, %v2403
    %2405 = vmatprep.mubr.bf16.mxu0 0
    %2406 = vmatmul.mubr.bf16.gmra.mrb[0].mxu0 %v1512
    %v2407 = vpop.f32.mrb[0].mxu0
    %v2408 = vadd.f32 0.0, %v2407
    %v2409 = vpop.f32.mrb[0].mxu0
    %v2410 = vadd.f32 0.0, %v2409
    %v2411 = vpop.f32.mrb[0].mxu0
    %v2412 = vadd.f32 0.0, %v2411
    %v2413 = vpop.f32.mrb[0].mxu0
    %v2414 = vadd.f32 0.0, %v2413
    %2415 = vmatprep.mubr.bf16.mxu0 0
    %2416 = vmatmul.mubr.bf16.gmra.mrb[0].mxu0 %v1513
    %v2417 = vpop.f32.mrb[0].mxu0
    %v2418 = vadd.f32 0.0, %v2417
    %v2419 = vpop.f32.mrb[0].mxu0
    %v2420 = vadd.f32 0.0, %v2419
    %v2421 = vpop.f32.mrb[0].mxu0
    %v2422 = vadd.f32 0.0, %v2421
    %v2423 = vpop.f32.mrb[0].mxu0
    %v2424 = vadd.f32 0.0, %v2423
    %2425 = vmatprep.mubr.bf16.mxu0 0
    %2426 = vmatmul.mubr.bf16.gmra.mrb[0].mxu0 %v1514
    %v2427 = vpop.f32.mrb[0].mxu0
    %v2428 = vadd.f32 0.0, %v2427
    %v2429 = vpop.f32.mrb[0].mxu0
    %v2430 = vadd.f32 0.0, %v2429
    %v2431 = vpop.f32.mrb[0].mxu0
    %v2432 = vadd.f32 0.0, %v2431
    %v2433 = vpop.f32.mrb[0].mxu0
    %v2434 = vadd.f32 0.0, %v2433
    %2435 = vmatprep.mubr.bf16.mxu0 0
    %2436 = vmatmul.mubr.bf16.gmra.mrb[0].mxu0 %v1515
    %v2437 = vpop.f32.mrb[0].mxu0
    %v2438 = vadd.f32 0.0, %v2437
    %v2439 = vpop.f32.mrb[0].mxu0
    %v2440 = vadd.f32 0.0, %v2439
    %v2441 = vpop.f32.mrb[0].mxu0
    %v2442 = vadd.f32 0.0, %v2441
    %v2443 = vpop.f32.mrb[0].mxu0
    %v2444 = vadd.f32 0.0, %v2443
    %2445 = vmatprep.mubr.bf16.mxu0 0
    %2446 = vmatmul.mubr.bf16.gmra.mrb[0].mxu0 %v1516
    %v2447 = vpop.f32.mrb[0].mxu0
    %v2448 = vadd.f32 0.0, %v2447
    %v2449 = vpop.f32.mrb[0].mxu0
    %v2450 = vadd.f32 0.0, %v2449
    %v2451 = vpop.f32.mrb[0].mxu0
    %v2452 = vadd.f32 0.0, %v2451
    %v2453 = vpop.f32.mrb[0].mxu0
    %v2454 = vadd.f32 0.0, %v2453
    %2455 = vmatprep.mubr.bf16.mxu0 0
    %2456 = vmatmul.mubr.bf16.gmra.mrb[0].mxu0 %v1517
    %v2457 = vpop.f32.mrb[0].mxu0
    %v2458 = vadd.f32 0.0, %v2457
    %v2459 = vpop.f32.mrb[0].mxu0
    %v2460 = vadd.f32 0.0, %v2459
    %v2461 = vpop.f32.mrb[0].mxu0
    %v2462 = vadd.f32 0.0, %v2461
    %v2463 = vpop.f32.mrb[0].mxu0
    %v2464 = vadd.f32 0.0, %v2463
    %2465 = vmatprep.mubr.bf16.mxu0 0
    %2466 = vmatmul.mubr.bf16.gmra.mrb[0].mxu0 %v1518
    %v2467 = vpop.f32.mrb[0].mxu0
    %v2468 = vadd.f32 0.0, %v2467
    %v2469 = vpop.f32.mrb[0].mxu0
    %v2470 = vadd.f32 0.0, %v2469
    %v2471 = vpop.f32.mrb[0].mxu0
    %v2472 = vadd.f32 0.0, %v2471
    %v2473 = vpop.f32.mrb[0].mxu0
    %v2474 = vadd.f32 0.0, %v2473
    %2475 = vmatprep.mubr.bf16.mxu0 0
    %2476 = vmatmul.mubr.bf16.gmra.mrb[0].mxu0 %v1519
    %v2477 = vpop.f32.mrb[0].mxu0
    %v2478 = vadd.f32 0.0, %v2477
    %v2479 = vpop.f32.mrb[0].mxu0
    %v2480 = vadd.f32 0.0, %v2479
    %v2481 = vpop.f32.mrb[0].mxu0
    %v2482 = vadd.f32 0.0, %v2481
    %v2483 = vpop.f32.mrb[0].mxu0
    %v2484 = vadd.f32 0.0, %v2483
    %2485 = vmatprep.mubr.bf16.mxu0 0
    %2486 = vmatmul.mubr.bf16.gmra.mrb[0].mxu0 %v1520
    %v2487 = vpop.f32.mrb[0].mxu0
    %v2488 = vadd.f32 0.0, %v2487
    %v2489 = vpop.f32.mrb[0].mxu0
    %v2490 = vadd.f32 0.0, %v2489
    %v2491 = vpop.f32.mrb[0].mxu0
    %v2492 = vadd.f32 0.0, %v2491
    %v2493 = vpop.f32.mrb[0].mxu0
    %v2494 = vadd.f32 0.0, %v2493
    %2495 = vmatprep.mubr.bf16.mxu0 0
    %2496 = vmatmul.mubr.bf16.gmra.mrb[0].mxu0 %v1521
    %v2497 = vpop.f32.mrb[0].mxu0
    %v2498 = vadd.f32 0.0, %v2497
    %v2499 = vpop.f32.mrb[0].mxu0
    %v2500 = vadd.f32 0.0, %v2499
    %v2501 = vpop.f32.mrb[0].mxu0
    %v2502 = vadd.f32 0.0, %v2501
    %v2503 = vpop.f32.mrb[0].mxu0
    %v2504 = vadd.f32 0.0, %v2503
    %2505 = vmatprep.mubr.bf16.mxu0 0
    %2506 = vmatmul.mubr.bf16.gmra.mrb[0].mxu0 %v1522
    %v2507 = vpop.f32.mrb[0].mxu0
    %v2508 = vadd.f32 0.0, %v2507
    %v2509 = vpop.f32.mrb[0].mxu0
    %v2510 = vadd.f32 0.0, %v2509
    %v2511 = vpop.f32.mrb[0].mxu0
    %v2512 = vadd.f32 0.0, %v2511
    %v2513 = vpop.f32.mrb[0].mxu0
    %v2514 = vadd.f32 0.0, %v2513
    %2515 = vmatprep.mubr.bf16.mxu0 0
    %2516 = vmatmul.mubr.bf16.gmra.mrb[0].mxu0 %v1523
    %v2517 = vpop.f32.mrb[0].mxu0
    %v2518 = vadd.f32 0.0, %v2517
    %v2519 = vpop.f32.mrb[0].mxu0
    %v2520 = vadd.f32 0.0, %v2519
    %v2521 = vpop.f32.mrb[0].mxu0
    %v2522 = vadd.f32 0.0, %v2521
    %v2523 = vpop.f32.mrb[0].mxu0
    %v2524 = vadd.f32 0.0, %v2523
    %2525 = vmatprep.mubr.bf16.mxu0 0
    %2526 = vmatmul.mubr.bf16.gmra.mrb[0].mxu0 %v1524
    %v2527 = vpop.f32.mrb[0].mxu0
    %v2528 = vadd.f32 0.0, %v2527
    %v2529 = vpop.f32.mrb[0].mxu0
    %v2530 = vadd.f32 0.0, %v2529
    %v2531 = vpop.f32.mrb[0].mxu0
    %v2532 = vadd.f32 0.0, %v2531
    %v2533 = vpop.f32.mrb[0].mxu0
    %v2534 = vadd.f32 0.0, %v2533
    %2535 = vmatprep.mubr.bf16.mxu0 0
    %2536 = vmatmul.mubr.bf16.gmra.mrb[0].mxu0 %v1525
    %v2537 = vpop.f32.mrb[0].mxu0
    %v2538 = vadd.f32 0.0, %v2537
    %v2539 = vpop.f32.mrb[0].mxu0
    %v2540 = vadd.f32 0.0, %v2539
    %v2541 = vpop.f32.mrb[0].mxu0
    %v2542 = vadd.f32 0.0, %v2541
    %v2543 = vpop.f32.mrb[0].mxu0
    %v2544 = vadd.f32 0.0, %v2543
    %2545 = vmatprep.mubr.bf16.mxu0 0
    %2546 = vmatmul.mubr.bf16.gmra.mrb[0].mxu0 %v1526
    %v2547 = vpop.f32.mrb[0].mxu0
    %v2548 = vadd.f32 0.0, %v2547
    %v2549 = vpop.f32.mrb[0].mxu0
    %v2550 = vadd.f32 0.0, %v2549
    %v2551 = vpop.f32.mrb[0].mxu0
    %v2552 = vadd.f32 0.0, %v2551
    %v2553 = vpop.f32.mrb[0].mxu0
    %v2554 = vadd.f32 0.0, %v2553
    %2555 = vmatprep.mubr.bf16.mxu0 0
    %2556 = vmatmul.mubr.bf16.gmra.mrb[0].mxu0 %v1527
    %v2557 = vpop.f32.mrb[0].mxu0
    %v2558 = vadd.f32 0.0, %v2557
    %v2559 = vpop.f32.mrb[0].mxu0
    %v2560 = vadd.f32 0.0, %v2559
    %v2561 = vpop.f32.mrb[0].mxu0
    %v2562 = vadd.f32 0.0, %v2561
    %v2563 = vpop.f32.mrb[0].mxu0
    %v2564 = vadd.f32 0.0, %v2563
    %2565 = vmatprep.mubr.bf16.mxu0 0
    %2566 = vmatmul.mubr.bf16.gmra.mrb[0].mxu0 %v1528
    %v2567 = vpop.f32.mrb[0].mxu0
    %v2568 = vadd.f32 0.0, %v2567
    %v2569 = vpop.f32.mrb[0].mxu0
    %v2570 = vadd.f32 0.0, %v2569
    %v2571 = vpop.f32.mrb[0].mxu0
    %v2572 = vadd.f32 0.0, %v2571
    %v2573 = vpop.f32.mrb[0].mxu0
    %v2574 = vadd.f32 0.0, %v2573
    %2575 = vmatprep.mubr.bf16.mxu0 0
    %2576 = vmatmul.mubr.bf16.gmra.mrb[0].mxu0 %v1529
    %v2577 = vpop.f32.mrb[0].mxu0
    %v2578 = vadd.f32 0.0, %v2577
    %v2579 = vpop.f32.mrb[0].mxu0
    %v2580 = vadd.f32 0.0, %v2579
    %v2581 = vpop.f32.mrb[0].mxu0
    %v2582 = vadd.f32 0.0, %v2581
    %v2583 = vpop.f32.mrb[0].mxu0
    %v2584 = vadd.f32 0.0, %v2583
    %2585 = vmatprep.mubr.bf16.mxu0 0
    %2586 = vmatmul.mubr.bf16.gmra.mrb[0].mxu0 %v1530
    %v2587 = vpop.f32.mrb[0].mxu0
    %v2588 = vadd.f32 0.0, %v2587
    %v2589 = vpop.f32.mrb[0].mxu0
    %v2590 = vadd.f32 0.0, %v2589
    %v2591 = vpop.f32.mrb[0].mxu0
    %v2592 = vadd.f32 0.0, %v2591
    %v2593 = vpop.f32.mrb[0].mxu0
    %v2594 = vadd.f32 0.0, %v2593
    %2595 = vmatprep.mubr.bf16.mxu0 0
    %2596 = vmatmul.mubr.bf16.gmra.mrb[0].mxu0 %v1531
    %v2597 = vpop.f32.mrb[0].mxu0
    %v2598 = vadd.f32 0.0, %v2597
    %v2599 = vpop.f32.mrb[0].mxu0
    %v2600 = vadd.f32 0.0, %v2599
    %v2601 = vpop.f32.mrb[0].mxu0
    %v2602 = vadd.f32 0.0, %v2601
    %v2603 = vpop.f32.mrb[0].mxu0
    %v2604 = vadd.f32 0.0, %v2603
    %2605 = vmatprep.mubr.bf16.mxu0 0
    %2606 = vmatmul.mubr.bf16.gmra.mrb[0].mxu0 %v1532
    %v2607 = vpop.f32.mrb[0].mxu0
    %v2608 = vadd.f32 0.0, %v2607
    %v2609 = vpop.f32.mrb[0].mxu0
    %v2610 = vadd.f32 0.0, %v2609
    %v2611 = vpop.f32.mrb[0].mxu0
    %v2612 = vadd.f32 0.0, %v2611
    %v2613 = vpop.f32.mrb[0].mxu0
    %v2614 = vadd.f32 0.0, %v2613
    %2615 = vmatprep.mubr.bf16.mxu0 0
    %2616 = vmatmul.mubr.bf16.gmra.mrb[0].mxu0 %v1533
    %v2617 = vpop.f32.mrb[0].mxu0
    %v2618 = vadd.f32 0.0, %v2617
    %v2619 = vpop.f32.mrb[0].mxu0
    %v2620 = vadd.f32 0.0, %v2619
    %v2621 = vpop.f32.mrb[0].mxu0
    %v2622 = vadd.f32 0.0, %v2621
    %v2623 = vpop.f32.mrb[0].mxu0
    %v2624 = vadd.f32 0.0, %v2623
    %2625 = vmatprep.mubr.bf16.mxu0 0
    %2626 = vmatmul.mubr.bf16.gmra.mrb[0].mxu0 %v1534
    %v2627 = vpop.f32.mrb[0].mxu0
    %v2628 = vadd.f32 0.0, %v2627
    %v2629 = vpop.f32.mrb[0].mxu0
    %v2630 = vadd.f32 0.0, %v2629
    %v2631 = vpop.f32.mrb[0].mxu0
    %v2632 = vadd.f32 0.0, %v2631
    %v2633 = vpop.f32.mrb[0].mxu0
    %v2634 = vadd.f32 0.0, %v2633
    %2635 = vmatprep.mubr.bf16.mxu0 0
    %2636 = vmatmul.mubr.bf16.gmra.mrb[0].mxu0 %v1535
    %v2637 = vpop.f32.mrb[0].mxu0
    %v2638 = vadd.f32 0.0, %v2637
    %v2639 = vpop.f32.mrb[0].mxu0
    %v2640 = vadd.f32 0.0, %v2639
    %v2641 = vpop.f32.mrb[0].mxu0
    %v2642 = vadd.f32 0.0, %v2641
    %v2643 = vpop.f32.mrb[0].mxu0
    %v2644 = vadd.f32 0.0, %v2643
    %2645 = vmatprep.mubr.bf16.mxu0 0
    %2646 = vmatmul.mubr.bf16.gmra.mrb[0].mxu0 %v1536
    %v2647 = vpop.f32.mrb[0].mxu0
    %v2648 = vadd.f32 0.0, %v2647
    %v2649 = vpop.f32.mrb[0].mxu0
    %v2650 = vadd.f32 0.0, %v2649
    %v2651 = vpop.f32.mrb[0].mxu0
    %v2652 = vadd.f32 0.0, %v2651
    %v2653 = vpop.f32.mrb[0].mxu0
    %v2654 = vadd.f32 0.0, %v2653
    %2655 = vmatprep.mubr.bf16.mxu0 0
    %2656 = vmatmul.mubr.bf16.gmra.mrb[0].mxu0 %v1537
    %v2657 = vpop.f32.mrb[0].mxu0
    %v2658 = vadd.f32 0.0, %v2657
    %v2659 = vpop.f32.mrb[0].mxu0
    %v2660 = vadd.f32 0.0, %v2659
    %v2661 = vpop.f32.mrb[0].mxu0
    %v2662 = vadd.f32 0.0, %v2661
    %v2663 = vpop.f32.mrb[0].mxu0
    %v2664 = vadd.f32 0.0, %v2663
    %2665 = vmatprep.mubr.bf16.mxu0 0
    %2666 = vmatmul.mubr.bf16.gmra.mrb[0].mxu0 %v1538
    %v2667 = vpop.f32.mrb[0].mxu0
    %v2668 = vadd.f32 0.0, %v2667
    %v2669 = vpop.f32.mrb[0].mxu0
    %v2670 = vadd.f32 0.0, %v2669
    %v2671 = vpop.f32.mrb[0].mxu0
    %v2672 = vadd.f32 0.0, %v2671
    %v2673 = vpop.f32.mrb[0].mxu0
    %v2674 = vadd.f32 0.0, %v2673
    %2675 = vmatprep.mubr.bf16.mxu0 0
    %2676 = vmatmul.mubr.bf16.gmra.mrb[0].mxu0 %v1539
    %v2677 = vpop.f32.mrb[0].mxu0
    %v2678 = vadd.f32 0.0, %v2677
    %v2679 = vpop.f32.mrb[0].mxu0
    %v2680 = vadd.f32 0.0, %v2679
    %v2681 = vpop.f32.mrb[0].mxu0
    %v2682 = vadd.f32 0.0, %v2681
    %v2683 = vpop.f32.mrb[0].mxu0
    %v2684 = vadd.f32 0.0, %v2683
    %2685 = vmatprep.mubr.bf16.mxu0 0
    %2686 = vmatmul.mubr.bf16.gmra.mrb[0].mxu0 %v1540
    %v2687 = vpop.f32.mrb[0].mxu0
    %v2688 = vadd.f32 0.0, %v2687
    %v2689 = vpop.f32.mrb[0].mxu0
    %v2690 = vadd.f32 0.0, %v2689
    %v2691 = vpop.f32.mrb[0].mxu0
    %v2692 = vadd.f32 0.0, %v2691
    %v2693 = vpop.f32.mrb[0].mxu0
    %v2694 = vadd.f32 0.0, %v2693
    %2695 = vmatprep.mubr.bf16.mxu0 0
    %2696 = vmatmul.mubr.bf16.gmra.mrb[0].mxu0 %v1541
    %v2697 = vpop.f32.mrb[0].mxu0
    %v2698 = vadd.f32 0.0, %v2697
    %v2699 = vpop.f32.mrb[0].mxu0
    %v2700 = vadd.f32 0.0, %v2699
    %v2701 = vpop.f32.mrb[0].mxu0
    %v2702 = vadd.f32 0.0, %v2701
    %v2703 = vpop.f32.mrb[0].mxu0
    %v2704 = vadd.f32 0.0, %v2703
    %2705 = vmatprep.mubr.bf16.mxu0 0
    %2706 = vmatmul.mubr.bf16.gmra.mrb[0].mxu0 %v1542
    %v2707 = vpop.f32.mrb[0].mxu0
    %v2708 = vadd.f32 0.0, %v2707
    %v2709 = vpop.f32.mrb[0].mxu0
    %v2710 = vadd.f32 0.0, %v2709
    %v2711 = vpop.f32.mrb[0].mxu0
    %v2712 = vadd.f32 0.0, %v2711
    %v2713 = vpop.f32.mrb[0].mxu0
    %v2714 = vadd.f32 0.0, %v2713
    %2715 = vmatprep.mubr.bf16.mxu0 0
    %2716 = vmatmul.mubr.bf16.gmra.mrb[0].mxu0 %v1543
    %v2717 = vpop.f32.mrb[0].mxu0
    %v2718 = vadd.f32 0.0, %v2717
    %v2719 = vpop.f32.mrb[0].mxu0
    %v2720 = vadd.f32 0.0, %v2719
    %v2721 = vpop.f32.mrb[0].mxu0
    %v2722 = vadd.f32 0.0, %v2721
    %v2723 = vpop.f32.mrb[0].mxu0
    %v2724 = vadd.f32 0.0, %v2723
    %2725 = vmatprep.mubr.bf16.mxu0 0
    %2726 = vmatmul.mubr.bf16.gmra.mrb[0].mxu0 %v1544
    %v2727 = vpop.f32.mrb[0].mxu0
    %v2728 = vadd.f32 0.0, %v2727
    %v2729 = vpop.f32.mrb[0].mxu0
    %v2730 = vadd.f32 0.0, %v2729
    %v2731 = vpop.f32.mrb[0].mxu0
    %v2732 = vadd.f32 0.0, %v2731
    %v2733 = vpop.f32.mrb[0].mxu0
    %v2734 = vadd.f32 0.0, %v2733
    %2735 = vdwg.mxu0
    %v2736 = vadd.f32 %v451, %v1758
    %v2737 = vadd.f32 %v452, %v1760
    %v2738 = vadd.f32 %v453, %v1762
    %v2739 = vadd.f32 %v454, %v1764
    %v2740 = vadd.f32 %v455, %v1768
    %v2741 = vadd.f32 %v456, %v1770
    %v2742 = vadd.f32 %v457, %v1772
    %v2743 = vadd.f32 %v458, %v1774
    %v2744 = vadd.f32 %v459, %v1778
    %v2745 = vadd.f32 %v460, %v1780
    %v2746 = vadd.f32 %v461, %v1782
    %v2747 = vadd.f32 %v462, %v1784
    %v2748 = vadd.f32 %v463, %v1788
    %v2749 = vadd.f32 %v464, %v1790
    %v2750 = vadd.f32 %v465, %v1792
    %v2751 = vadd.f32 %v466, %v1794
    %v2752 = vadd.f32 %v467, %v1798
    %v2753 = vadd.f32 %v468, %v1800
    %v2754 = vadd.f32 %v469, %v1802
    %v2755 = vadd.f32 %v470, %v1804
    %v2756 = vadd.f32 %v471, %v1808
    %v2757 = vadd.f32 %v472, %v1810
    %v2758 = vadd.f32 %v473, %v1812
    %v2759 = vadd.f32 %v474, %v1814
    %v2760 = vadd.f32 %v475, %v1818
    %v2761 = vadd.f32 %v476, %v1820
    %v2762 = vadd.f32 %v477, %v1822
    %v2763 = vadd.f32 %v478, %v1824
    %v2764 = vadd.f32 %v479, %v1828
    %v2765 = vadd.f32 %v480, %v1830
    %v2766 = vadd.f32 %v481, %v1832
    %v2767 = vadd.f32 %v482, %v1834
    %v2768 = vadd.f32 %v483, %v1838
    %v2769 = vadd.f32 %v484, %v1840
    %v2770 = vadd.f32 %v485, %v1842
    %v2771 = vadd.f32 %v486, %v1844
    %v2772 = vadd.f32 %v487, %v1848
    %v2773 = vadd.f32 %v488, %v1850
    %v2774 = vadd.f32 %v489, %v1852
    %v2775 = vadd.f32 %v490, %v1854
    %v2776 = vadd.f32 %v491, %v1858
    %v2777 = vadd.f32 %v492, %v1860
    %v2778 = vadd.f32 %v493, %v1862
    %v2779 = vadd.f32 %v494, %v1864
    %v2780 = vadd.f32 %v495, %v1868
    %v2781 = vadd.f32 %v496, %v1870
    %v2782 = vadd.f32 %v497, %v1872
    %v2783 = vadd.f32 %v498, %v1874
    %v2784 = vadd.f32 %v499, %v1878
    %v2785 = vadd.f32 %v500, %v1880
    %v2786 = vadd.f32 %v501, %v1882
    %v2787 = vadd.f32 %v502, %v1884
    %v2788 = vadd.f32 %v503, %v1888
    %v2789 = vadd.f32 %v504, %v1890
    %v2790 = vadd.f32 %v505, %v1892
    %v2791 = vadd.f32 %v506, %v1894
    %v2792 = vadd.f32 %v507, %v1898
    %v2793 = vadd.f32 %v508, %v1900
    %v2794 = vadd.f32 %v509, %v1902
    %v2795 = vadd.f32 %v510, %v1904
    %v2796 = vadd.f32 %v511, %v1908
    %v2797 = vadd.f32 %v512, %v1910
    %v2798 = vadd.f32 %v513, %v1912
    %v2799 = vadd.f32 %v514, %v1914
    %v2800 = vadd.f32 %v515, %v1918
    %v2801 = vadd.f32 %v516, %v1920
    %v2802 = vadd.f32 %v517, %v1922
    %v2803 = vadd.f32 %v518, %v1924
    %v2804 = vadd.f32 %v519, %v1928
    %v2805 = vadd.f32 %v520, %v1930
    %v2806 = vadd.f32 %v521, %v1932
    %v2807 = vadd.f32 %v522, %v1934
    %v2808 = vadd.f32 %v523, %v1938
    %v2809 = vadd.f32 %v524, %v1940
    %v2810 = vadd.f32 %v525, %v1942
    %v2811 = vadd.f32 %v526, %v1944
    %v2812 = vadd.f32 %v527, %v1948
    %v2813 = vadd.f32 %v528, %v1950
    %v2814 = vadd.f32 %v529, %v1952
    %v2815 = vadd.f32 %v530, %v1954
    %v2816 = vadd.f32 %v531, %v1958
    %v2817 = vadd.f32 %v532, %v1960
    %v2818 = vadd.f32 %v533, %v1962
    %v2819 = vadd.f32 %v534, %v1964
    %v2820 = vadd.f32 %v535, %v1968
    %v2821 = vadd.f32 %v536, %v1970
    %v2822 = vadd.f32 %v537, %v1972
    %v2823 = vadd.f32 %v538, %v1974
    %v2824 = vadd.f32 %v539, %v1978
    %v2825 = vadd.f32 %v540, %v1980
    %v2826 = vadd.f32 %v541, %v1982
    %v2827 = vadd.f32 %v542, %v1984
    %v2828 = vadd.f32 %v543, %v1988
    %v2829 = vadd.f32 %v544, %v1990
    %v2830 = vadd.f32 %v545, %v1992
    %v2831 = vadd.f32 %v546, %v1994
    %v2832 = vadd.f32 %v547, %v1998
    %v2833 = vadd.f32 %v548, %v2000
    %v2834 = vadd.f32 %v549, %v2002
    %v2835 = vadd.f32 %v550, %v2004
    %v2836 = vadd.f32 %v551, %v2008
    %v2837 = vadd.f32 %v552, %v2010
    %v2838 = vadd.f32 %v553, %v2012
    %v2839 = vadd.f32 %v554, %v2014
    %v2840 = vadd.f32 %v555, %v2018
    %v2841 = vadd.f32 %v556, %v2020
    %v2842 = vadd.f32 %v557, %v2022
    %v2843 = vadd.f32 %v558, %v2024
    %v2844 = vadd.f32 %v559, %v2028
    %v2845 = vadd.f32 %v560, %v2030
    %v2846 = vadd.f32 %v561, %v2032
    %v2847 = vadd.f32 %v562, %v2034
    %v2848 = vadd.f32 %v563, %v2038
    %v2849 = vadd.f32 %v564, %v2040
    %v2850 = vadd.f32 %v565, %v2042
    %v2851 = vadd.f32 %v566, %v2044
    %v2852 = vadd.f32 %v567, %v2048
    %v2853 = vadd.f32 %v568, %v2050
    %v2854 = vadd.f32 %v569, %v2052
    %v2855 = vadd.f32 %v570, %v2054
    %v2856 = vadd.f32 %v571, %v2058
    %v2857 = vadd.f32 %v572, %v2060
    %v2858 = vadd.f32 %v573, %v2062
    %v2859 = vadd.f32 %v574, %v2064
    %v2860 = vadd.f32 %v575, %v2068
    %v2861 = vadd.f32 %v576, %v2070
    %v2862 = vadd.f32 %v577, %v2072
    %v2863 = vadd.f32 %v578, %v2074
    %v2864 = vadd.f32 %v579, %v2078
    %v2865 = vadd.f32 %v580, %v2080
    %v2866 = vadd.f32 %v581, %v2082
    %v2867 = vadd.f32 %v582, %v2084
    %v2868 = vadd.f32 %v583, %v2088
    %v2869 = vadd.f32 %v584, %v2090
    %v2870 = vadd.f32 %v585, %v2092
    %v2871 = vadd.f32 %v586, %v2094
    %v2872 = vadd.f32 %v587, %v2098
    %v2873 = vadd.f32 %v588, %v2100
    %v2874 = vadd.f32 %v589, %v2102
    %v2875 = vadd.f32 %v590, %v2104
    %v2876 = vadd.f32 %v591, %v2108
    %v2877 = vadd.f32 %v592, %v2110
    %v2878 = vadd.f32 %v593, %v2112
    %v2879 = vadd.f32 %v594, %v2114
    %v2880 = vadd.f32 %v595, %v2118
    %v2881 = vadd.f32 %v596, %v2120
    %v2882 = vadd.f32 %v597, %v2122
    %v2883 = vadd.f32 %v598, %v2124
    %v2884 = vadd.f32 %v599, %v2128
    %v2885 = vadd.f32 %v600, %v2130
    %v2886 = vadd.f32 %v601, %v2132
    %v2887 = vadd.f32 %v602, %v2134
    %v2888 = vadd.f32 %v603, %v2138
    %v2889 = vadd.f32 %v604, %v2140
    %v2890 = vadd.f32 %v605, %v2142
    %v2891 = vadd.f32 %v606, %v2144
    %v2892 = vadd.f32 %v607, %v2148
    %v2893 = vadd.f32 %v608, %v2150
    %v2894 = vadd.f32 %v609, %v2152
    %v2895 = vadd.f32 %v610, %v2154
    %v2896 = vadd.f32 %v611, %v2158
    %v2897 = vadd.f32 %v612, %v2160
    %v2898 = vadd.f32 %v613, %v2162
    %v2899 = vadd.f32 %v614, %v2164
    %v2900 = vadd.f32 %v615, %v2168
    %v2901 = vadd.f32 %v616, %v2170
    %v2902 = vadd.f32 %v617, %v2172
    %v2903 = vadd.f32 %v618, %v2174
    %v2904 = vadd.f32 %v619, %v2178
    %v2905 = vadd.f32 %v620, %v2180
    %v2906 = vadd.f32 %v621, %v2182
    %v2907 = vadd.f32 %v622, %v2184
    %v2908 = vadd.f32 %v623, %v2188
    %v2909 = vadd.f32 %v624, %v2190
    %v2910 = vadd.f32 %v625, %v2192
    %v2911 = vadd.f32 %v626, %v2194
    %v2912 = vadd.f32 %v627, %v2198
    %v2913 = vadd.f32 %v628, %v2200
    %v2914 = vadd.f32 %v629, %v2202
    %v2915 = vadd.f32 %v630, %v2204
    %v2916 = vadd.f32 %v631, %v2208
    %v2917 = vadd.f32 %v632, %v2210
    %v2918 = vadd.f32 %v633, %v2212
    %v2919 = vadd.f32 %v634, %v2214
    %v2920 = vadd.f32 %v635, %v2218
    %v2921 = vadd.f32 %v636, %v2220
    %v2922 = vadd.f32 %v637, %v2222
    %v2923 = vadd.f32 %v638, %v2224
    %v2924 = vadd.f32 %v639, %v2228
    %v2925 = vadd.f32 %v640, %v2230
    %v2926 = vadd.f32 %v641, %v2232
    %v2927 = vadd.f32 %v642, %v2234
    %v2928 = vadd.f32 %v643, %v2238
    %v2929 = vadd.f32 %v644, %v2240
    %v2930 = vadd.f32 %v645, %v2242
    %v2931 = vadd.f32 %v646, %v2244
    %v2932 = vadd.f32 %v647, %v2248
    %v2933 = vadd.f32 %v648, %v2250
    %v2934 = vadd.f32 %v649, %v2252
    %v2935 = vadd.f32 %v650, %v2254
    %v2936 = vadd.f32 %v651, %v2258
    %v2937 = vadd.f32 %v652, %v2260
    %v2938 = vadd.f32 %v653, %v2262
    %v2939 = vadd.f32 %v654, %v2264
    %v2940 = vadd.f32 %v655, %v2268
    %v2941 = vadd.f32 %v656, %v2270
    %v2942 = vadd.f32 %v657, %v2272
    %v2943 = vadd.f32 %v658, %v2274
    %v2944 = vadd.f32 %v659, %v2278
    %v2945 = vadd.f32 %v660, %v2280
    %v2946 = vadd.f32 %v661, %v2282
    %v2947 = vadd.f32 %v662, %v2284
    %v2948 = vadd.f32 %v663, %v2288
    %v2949 = vadd.f32 %v664, %v2290
    %v2950 = vadd.f32 %v665, %v2292
    %v2951 = vadd.f32 %v666, %v2294
    %v2952 = vadd.f32 %v667, %v2298
    %v2953 = vadd.f32 %v668, %v2300
    %v2954 = vadd.f32 %v669, %v2302
    %v2955 = vadd.f32 %v670, %v2304
    %v2956 = vadd.f32 %v671, %v2308
    %v2957 = vadd.f32 %v672, %v2310
    %v2958 = vadd.f32 %v673, %v2312
    %v2959 = vadd.f32 %v674, %v2314
    %v2960 = vadd.f32 %v675, %v2318
    %v2961 = vadd.f32 %v676, %v2320
    %v2962 = vadd.f32 %v677, %v2322
    %v2963 = vadd.f32 %v678, %v2324
    %v2964 = vadd.f32 %v679, %v2328
    %v2965 = vadd.f32 %v680, %v2330
    %v2966 = vadd.f32 %v681, %v2332
    %v2967 = vadd.f32 %v682, %v2334
    %v2968 = vadd.f32 %v683, %v2338
    %v2969 = vadd.f32 %v684, %v2340
    %v2970 = vadd.f32 %v685, %v2342
    %v2971 = vadd.f32 %v686, %v2344
    %v2972 = vadd.f32 %v687, %v2348
    %v2973 = vadd.f32 %v688, %v2350
    %v2974 = vadd.f32 %v689, %v2352
    %v2975 = vadd.f32 %v690, %v2354
    %v2976 = vadd.f32 %v691, %v2358
    %v2977 = vadd.f32 %v692, %v2360
    %v2978 = vadd.f32 %v693, %v2362
    %v2979 = vadd.f32 %v694, %v2364
    %v2980 = vadd.f32 %v695, %v2368
    %v2981 = vadd.f32 %v696, %v2370
    %v2982 = vadd.f32 %v697, %v2372
    %v2983 = vadd.f32 %v698, %v2374
    %v2984 = vadd.f32 %v699, %v2378
    %v2985 = vadd.f32 %v700, %v2380
    %v2986 = vadd.f32 %v701, %v2382
    %v2987 = vadd.f32 %v702, %v2384
    %v2988 = vadd.f32 %v703, %v2388
    %v2989 = vadd.f32 %v704, %v2390
    %v2990 = vadd.f32 %v705, %v2392
    %v2991 = vadd.f32 %v706, %v2394
    %v2992 = vadd.f32 %v707, %v2398
    %v2993 = vadd.f32 %v708, %v2400
    %v2994 = vadd.f32 %v709, %v2402
    %v2995 = vadd.f32 %v710, %v2404
    %v2996 = vadd.f32 %v711, %v2408
    %v2997 = vadd.f32 %v712, %v2410
    %v2998 = vadd.f32 %v713, %v2412
    %v2999 = vadd.f32 %v714, %v2414
    %v3000 = vadd.f32 %v715, %v2418
    %v3001 = vadd.f32 %v716, %v2420
    %v3002 = vadd.f32 %v717, %v2422
    %v3003 = vadd.f32 %v718, %v2424
    %v3004 = vadd.f32 %v719, %v2428
    %v3005 = vadd.f32 %v720, %v2430
    %v3006 = vadd.f32 %v721, %v2432
    %v3007 = vadd.f32 %v722, %v2434
    %v3008 = vadd.f32 %v723, %v2438
    %v3009 = vadd.f32 %v724, %v2440
    %v3010 = vadd.f32 %v725, %v2442
    %v3011 = vadd.f32 %v726, %v2444
    %v3012 = vadd.f32 %v727, %v2448
    %v3013 = vadd.f32 %v728, %v2450
    %v3014 = vadd.f32 %v729, %v2452
    %v3015 = vadd.f32 %v730, %v2454
    %v3016 = vadd.f32 %v731, %v2458
    %v3017 = vadd.f32 %v732, %v2460
    %v3018 = vadd.f32 %v733, %v2462
    %v3019 = vadd.f32 %v734, %v2464
    %v3020 = vadd.f32 %v735, %v2468
    %v3021 = vadd.f32 %v736, %v2470
    %v3022 = vadd.f32 %v737, %v2472
    %v3023 = vadd.f32 %v738, %v2474
    %v3024 = vadd.f32 %v739, %v2478
    %v3025 = vadd.f32 %v740, %v2480
    %v3026 = vadd.f32 %v741, %v2482
    %v3027 = vadd.f32 %v742, %v2484
    %v3028 = vadd.f32 %v743, %v2488
    %v3029 = vadd.f32 %v744, %v2490
    %v3030 = vadd.f32 %v745, %v2492
    %v3031 = vadd.f32 %v746, %v2494
    %v3032 = vadd.f32 %v747, %v2498
    %v3033 = vadd.f32 %v748, %v2500
    %v3034 = vadd.f32 %v749, %v2502
    %v3035 = vadd.f32 %v750, %v2504
    %v3036 = vadd.f32 %v751, %v2508
    %v3037 = vadd.f32 %v752, %v2510
    %v3038 = vadd.f32 %v753, %v2512
    %v3039 = vadd.f32 %v754, %v2514
    %v3040 = vadd.f32 %v755, %v2518
    %v3041 = vadd.f32 %v756, %v2520
    %v3042 = vadd.f32 %v757, %v2522
    %v3043 = vadd.f32 %v758, %v2524
    %v3044 = vadd.f32 %v759, %v2528
    %v3045 = vadd.f32 %v760, %v2530
    %v3046 = vadd.f32 %v761, %v2532
    %v3047 = vadd.f32 %v762, %v2534
    %v3048 = vadd.f32 %v763, %v2538
    %v3049 = vadd.f32 %v764, %v2540
    %v3050 = vadd.f32 %v765, %v2542
    %v3051 = vadd.f32 %v766, %v2544
    %v3052 = vadd.f32 %v767, %v2548
    %v3053 = vadd.f32 %v768, %v2550
    %v3054 = vadd.f32 %v769, %v2552
    %v3055 = vadd.f32 %v770, %v2554
    %v3056 = vadd.f32 %v771, %v2558
    %v3057 = vadd.f32 %v772, %v2560
    %v3058 = vadd.f32 %v773, %v2562
    %v3059 = vadd.f32 %v774, %v2564
    %v3060 = vadd.f32 %v775, %v2568
    %v3061 = vadd.f32 %v776, %v2570
    %v3062 = vadd.f32 %v777, %v2572
    %v3063 = vadd.f32 %v778, %v2574
    %v3064 = vadd.f32 %v779, %v2578
    %v3065 = vadd.f32 %v780, %v2580
    %v3066 = vadd.f32 %v781, %v2582
    %v3067 = vadd.f32 %v782, %v2584
    %v3068 = vadd.f32 %v783, %v2588
    %v3069 = vadd.f32 %v784, %v2590
    %v3070 = vadd.f32 %v785, %v2592
    %v3071 = vadd.f32 %v786, %v2594
    %v3072 = vadd.f32 %v787, %v2598
    %v3073 = vadd.f32 %v788, %v2600
    %v3074 = vadd.f32 %v789, %v2602
    %v3075 = vadd.f32 %v790, %v2604
    %v3076 = vadd.f32 %v791, %v2608
    %v3077 = vadd.f32 %v792, %v2610
    %v3078 = vadd.f32 %v793, %v2612
    %v3079 = vadd.f32 %v794, %v2614
    %v3080 = vadd.f32 %v795, %v2618
    %v3081 = vadd.f32 %v796, %v2620
    %v3082 = vadd.f32 %v797, %v2622
    %v3083 = vadd.f32 %v798, %v2624
    %v3084 = vadd.f32 %v799, %v2628
    %v3085 = vadd.f32 %v800, %v2630
    %v3086 = vadd.f32 %v801, %v2632
    %v3087 = vadd.f32 %v802, %v2634
    %v3088 = vadd.f32 %v803, %v2638
    %v3089 = vadd.f32 %v804, %v2640
    %v3090 = vadd.f32 %v805, %v2642
    %v3091 = vadd.f32 %v806, %v2644
    %v3092 = vadd.f32 %v807, %v2648
    %v3093 = vadd.f32 %v808, %v2650
    %v3094 = vadd.f32 %v809, %v2652
    %v3095 = vadd.f32 %v810, %v2654
    %v3096 = vadd.f32 %v811, %v2658
    %v3097 = vadd.f32 %v812, %v2660
    %v3098 = vadd.f32 %v813, %v2662
    %v3099 = vadd.f32 %v814, %v2664
    %v3100 = vadd.f32 %v815, %v2668
    %v3101 = vadd.f32 %v816, %v2670
    %v3102 = vadd.f32 %v817, %v2672
    %v3103 = vadd.f32 %v818, %v2674
    %v3104 = vadd.f32 %v819, %v2678
    %v3105 = vadd.f32 %v820, %v2680
    %v3106 = vadd.f32 %v821, %v2682
    %v3107 = vadd.f32 %v822, %v2684
    %v3108 = vadd.f32 %v823, %v2688
    %v3109 = vadd.f32 %v824, %v2690
    %v3110 = vadd.f32 %v825, %v2692
    %v3111 = vadd.f32 %v826, %v2694
    %v3112 = vadd.f32 %v827, %v2698
    %v3113 = vadd.f32 %v828, %v2700
    %v3114 = vadd.f32 %v829, %v2702
    %v3115 = vadd.f32 %v830, %v2704
    %v3116 = vadd.f32 %v831, %v2708
    %v3117 = vadd.f32 %v832, %v2710
    %v3118 = vadd.f32 %v833, %v2712
    %v3119 = vadd.f32 %v834, %v2714
    %v3120 = vadd.f32 %v835, %v2718
    %v3121 = vadd.f32 %v836, %v2720
    %v3122 = vadd.f32 %v837, %v2722
    %v3123 = vadd.f32 %v838, %v2724
    %v3124 = vadd.f32 %v839, %v2728
    %v3125 = vadd.f32 %v840, %v2730
    %v3126 = vadd.f32 %v841, %v2732
    %v3127 = vadd.f32 %v842, %v2734
    %3128 = vst [vmem:[#allocation8] sm:$0xff] %v2736
    %3129 = vst [vmem:[#allocation8 + $0x8] sm:$0xff] %v2737
    %3130 = vst [vmem:[#allocation8 + $0x10] sm:$0xff] %v2738
    %3131 = vst [vmem:[#allocation8 + $0x18] sm:$0xff] %v2739
    %3132 = vst [vmem:[#allocation8 + $0x20] sm:$0xff] %v2740
    %3133 = vst [vmem:[#allocation8 + $0x28] sm:$0xff] %v2741
    %3134 = vst [vmem:[#allocation8 + $0x30] sm:$0xff] %v2742
    %3135 = vst [vmem:[#allocation8 + $0x38] sm:$0xff] %v2743
    %3136 = vst [vmem:[#allocation8 + $0x40] sm:$0xff] %v2744
    %3137 = vst [vmem:[#allocation8 + $0x48] sm:$0xff] %v2745
    %3138 = vst [vmem:[#allocation8 + $0x50] sm:$0xff] %v2746
    %3139 = vst [vmem:[#allocation8 + $0x58] sm:$0xff] %v2747
    %3140 = vst [vmem:[#allocation8 + $0x60] sm:$0xff] %v2748
    %3141 = vst [vmem:[#allocation8 + $0x68] sm:$0xff] %v2749
    %3142 = vst [vmem:[#allocation8 + $0x70] sm:$0xff] %v2750
    %3143 = vst [vmem:[#allocation8 + $0x78] sm:$0xff] %v2751
    %3144 = vst [vmem:[#allocation8 + $0x80] sm:$0xff] %v2752
    %3145 = vst [vmem:[#allocation8 + $0x88] sm:$0xff] %v2753
    %3146 = vst [vmem:[#allocation8 + $0x90] sm:$0xff] %v2754
    %3147 = vst [vmem:[#allocation8 + $0x98] sm:$0xff] %v2755
    %3148 = vst [vmem:[#allocation8 + $0xa0] sm:$0xff] %v2756
    %3149 = vst [vmem:[#allocation8 + $0xa8] sm:$0xff] %v2757
    %3150 = vst [vmem:[#allocation8 + $0xb0] sm:$0xff] %v2758
    %3151 = vst [vmem:[#allocation8 + $0xb8] sm:$0xff] %v2759
    %3152 = vst [vmem:[#allocation8 + $0xc0] sm:$0xff] %v2760
    %3153 = vst [vmem:[#allocation8 + $0xc8] sm:$0xff] %v2761
    %3154 = vst [vmem:[#allocation8 + $0xd0] sm:$0xff] %v2762
    %3155 = vst [vmem:[#allocation8 + $0xd8] sm:$0xff] %v2763
    %3156 = vst [vmem:[#allocation8 + $0xe0] sm:$0xff] %v2764
    %3157 = vst [vmem:[#allocation8 + $0xe8] sm:$0xff] %v2765
    %3158 = vst [vmem:[#allocation8 + $0xf0] sm:$0xff] %v2766
    %3159 = vst [vmem:[#allocation8 + $0xf8] sm:$0xff] %v2767
    %3160 = vst [vmem:[#allocation8 + $0x100] sm:$0xff] %v2768
    %3161 = vst [vmem:[#allocation8 + $0x108] sm:$0xff] %v2769
    %3162 = vst [vmem:[#allocation8 + $0x110] sm:$0xff] %v2770
    %3163 = vst [vmem:[#allocation8 + $0x118] sm:$0xff] %v2771
    %3164 = vst [vmem:[#allocation8 + $0x120] sm:$0xff] %v2772
    %3165 = vst [vmem:[#allocation8 + $0x128] sm:$0xff] %v2773
    %3166 = vst [vmem:[#allocation8 + $0x130] sm:$0xff] %v2774
    %3167 = vst [vmem:[#allocation8 + $0x138] sm:$0xff] %v2775
    %3168 = vst [vmem:[#allocation8 + $0x140] sm:$0xff] %v2776
    %3169 = vst [vmem:[#allocation8 + $0x148] sm:$0xff] %v2777
    %3170 = vst [vmem:[#allocation8 + $0x150] sm:$0xff] %v2778
    %3171 = vst [vmem:[#allocation8 + $0x158] sm:$0xff] %v2779
    %3172 = vst [vmem:[#allocation8 + $0x160] sm:$0xff] %v2780
    %3173 = vst [vmem:[#allocation8 + $0x168] sm:$0xff] %v2781
    %3174 = vst [vmem:[#allocation8 + $0x170] sm:$0xff] %v2782
    %3175 = vst [vmem:[#allocation8 + $0x178] sm:$0xff] %v2783
    %3176 = vst [vmem:[#allocation8 + $0x180] sm:$0xff] %v2784
    %3177 = vst [vmem:[#allocation8 + $0x188] sm:$0xff] %v2785
    %3178 = vst [vmem:[#allocation8 + $0x190] sm:$0xff] %v2786
    %3179 = vst [vmem:[#allocation8 + $0x198] sm:$0xff] %v2787
    %3180 = vst [vmem:[#allocation8 + $0x1a0] sm:$0xff] %v2788
    %3181 = vst [vmem:[#allocation8 + $0x1a8] sm:$0xff] %v2789
    %3182 = vst [vmem:[#allocation8 + $0x1b0] sm:$0xff] %v2790
    %3183 = vst [vmem:[#allocation8 + $0x1b8] sm:$0xff] %v2791
    %3184 = vst [vmem:[#allocation8 + $0x1c0] sm:$0xff] %v2792
    %3185 = vst [vmem:[#allocation8 + $0x1c8] sm:$0xff] %v2793
    %3186 = vst [vmem:[#allocation8 + $0x1d0] sm:$0xff] %v2794
    %3187 = vst [vmem:[#allocation8 + $0x1d8] sm:$0xff] %v2795
    %3188 = vst [vmem:[#allocation8 + $0x1e0] sm:$0xff] %v2796
    %3189 = vst [vmem:[#allocation8 + $0x1e8] sm:$0xff] %v2797
    %3190 = vst [vmem:[#allocation8 + $0x1f0] sm:$0xff] %v2798
    %3191 = vst [vmem:[#allocation8 + $0x1f8] sm:$0xff] %v2799
    %3192 = vst [vmem:[#allocation8 + $0x200] sm:$0xff] %v2800
    %3193 = vst [vmem:[#allocation8 + $0x208] sm:$0xff] %v2801
    %3194 = vst [vmem:[#allocation8 + $0x210] sm:$0xff] %v2802
    %3195 = vst [vmem:[#allocation8 + $0x218] sm:$0xff] %v2803
    %3196 = vst [vmem:[#allocation8 + $0x220] sm:$0xff] %v2804
    %3197 = vst [vmem:[#allocation8 + $0x228] sm:$0xff] %v2805
    %3198 = vst [vmem:[#allocation8 + $0x230] sm:$0xff] %v2806
    %3199 = vst [vmem:[#allocation8 + $0x238] sm:$0xff] %v2807
    %3200 = vst [vmem:[#allocation8 + $0x240] sm:$0xff] %v2808
    %3201 = vst [vmem:[#allocation8 + $0x248] sm:$0xff] %v2809
    %3202 = vst [vmem:[#allocation8 + $0x250] sm:$0xff] %v2810
    %3203 = vst [vmem:[#allocation8 + $0x258] sm:$0xff] %v2811
    %3204 = vst [vmem:[#allocation8 + $0x260] sm:$0xff] %v2812
    %3205 = vst [vmem:[#allocation8 + $0x268] sm:$0xff] %v2813
    %3206 = vst [vmem:[#allocation8 + $0x270] sm:$0xff] %v2814
    %3207 = vst [vmem:[#allocation8 + $0x278] sm:$0xff] %v2815
    %3208 = vst [vmem:[#allocation8 + $0x280] sm:$0xff] %v2816
    %3209 = vst [vmem:[#allocation8 + $0x288] sm:$0xff] %v2817
    %3210 = vst [vmem:[#allocation8 + $0x290] sm:$0xff] %v2818
    %3211 = vst [vmem:[#allocation8 + $0x298] sm:$0xff] %v2819
    %3212 = vst [vmem:[#allocation8 + $0x2a0] sm:$0xff] %v2820
    %3213 = vst [vmem:[#allocation8 + $0x2a8] sm:$0xff] %v2821
    %3214 = vst [vmem:[#allocation8 + $0x2b0] sm:$0xff] %v2822
    %3215 = vst [vmem:[#allocation8 + $0x2b8] sm:$0xff] %v2823
    %3216 = vst [vmem:[#allocation8 + $0x2c0] sm:$0xff] %v2824
    %3217 = vst [vmem:[#allocation8 + $0x2c8] sm:$0xff] %v2825
    %3218 = vst [vmem:[#allocation8 + $0x2d0] sm:$0xff] %v2826
    %3219 = vst [vmem:[#allocation8 + $0x2d8] sm:$0xff] %v2827
    %3220 = vst [vmem:[#allocation8 + $0x2e0] sm:$0xff] %v2828
    %3221 = vst [vmem:[#allocation8 + $0x2e8] sm:$0xff] %v2829
    %3222 = vst [vmem:[#allocation8 + $0x2f0] sm:$0xff] %v2830
    %3223 = vst [vmem:[#allocation8 + $0x2f8] sm:$0xff] %v2831
    %3224 = vst [vmem:[#allocation8 + $0x300] sm:$0xff] %v2832
    %3225 = vst [vmem:[#allocation8 + $0x308] sm:$0xff] %v2833
    %3226 = vst [vmem:[#allocation8 + $0x310] sm:$0xff] %v2834
    %3227 = vst [vmem:[#allocation8 + $0x318] sm:$0xff] %v2835
    %3228 = vst [vmem:[#allocation8 + $0x320] sm:$0xff] %v2836
    %3229 = vst [vmem:[#allocation8 + $0x328] sm:$0xff] %v2837
    %3230 = vst [vmem:[#allocation8 + $0x330] sm:$0xff] %v2838
    %3231 = vst [vmem:[#allocation8 + $0x338] sm:$0xff] %v2839
    %3232 = vst [vmem:[#allocation8 + $0x340] sm:$0xff] %v2840
    %3233 = vst [vmem:[#allocation8 + $0x348] sm:$0xff] %v2841
    %3234 = vst [vmem:[#allocation8 + $0x350] sm:$0xff] %v2842
    %3235 = vst [vmem:[#allocation8 + $0x358] sm:$0xff] %v2843
    %3236 = vst [vmem:[#allocation8 + $0x360] sm:$0xff] %v2844
    %3237 = vst [vmem:[#allocation8 + $0x368] sm:$0xff] %v2845
    %3238 = vst [vmem:[#allocation8 + $0x370] sm:$0xff] %v2846
    %3239 = vst [vmem:[#allocation8 + $0x378] sm:$0xff] %v2847
    %3240 = vst [vmem:[#allocation8 + $0x380] sm:$0xff] %v2848
    %3241 = vst [vmem:[#allocation8 + $0x388] sm:$0xff] %v2849
    %3242 = vst [vmem:[#allocation8 + $0x390] sm:$0xff] %v2850
    %3243 = vst [vmem:[#allocation8 + $0x398] sm:$0xff] %v2851
    %3244 = vst [vmem:[#allocation8 + $0x3a0] sm:$0xff] %v2852
    %3245 = vst [vmem:[#allocation8 + $0x3a8] sm:$0xff] %v2853
    %3246 = vst [vmem:[#allocation8 + $0x3b0] sm:$0xff] %v2854
    %3247 = vst [vmem:[#allocation8 + $0x3b8] sm:$0xff] %v2855
    %3248 = vst [vmem:[#allocation8 + $0x3c0] sm:$0xff] %v2856
    %3249 = vst [vmem:[#allocation8 + $0x3c8] sm:$0xff] %v2857
    %3250 = vst [vmem:[#allocation8 + $0x3d0] sm:$0xff] %v2858
    %3251 = vst [vmem:[#allocation8 + $0x3d8] sm:$0xff] %v2859
    %3252 = vst [vmem:[#allocation8 + $0x3e0] sm:$0xff] %v2860
    %3253 = vst [vmem:[#allocation8 + $0x3e8] sm:$0xff] %v2861
    %3254 = vst [vmem:[#allocation8 + $0x3f0] sm:$0xff] %v2862
    %3255 = vst [vmem:[#allocation8 + $0x3f8] sm:$0xff] %v2863
    %3256 = vst [vmem:[#allocation8 + $0x400] sm:$0xff] %v2864
    %3257 = vst [vmem:[#allocation8 + $0x408] sm:$0xff] %v2865
    %3258 = vst [vmem:[#allocation8 + $0x410] sm:$0xff] %v2866
    %3259 = vst [vmem:[#allocation8 + $0x418] sm:$0xff] %v2867
    %3260 = vst [vmem:[#allocation8 + $0x420] sm:$0xff] %v2868
    %3261 = vst [vmem:[#allocation8 + $0x428] sm:$0xff] %v2869
    %3262 = vst [vmem:[#allocation8 + $0x430] sm:$0xff] %v2870
    %3263 = vst [vmem:[#allocation8 + $0x438] sm:$0xff] %v2871
    %3264 = vst [vmem:[#allocation8 + $0x440] sm:$0xff] %v2872
    %3265 = vst [vmem:[#allocation8 + $0x448] sm:$0xff] %v2873
    %3266 = vst [vmem:[#allocation8 + $0x450] sm:$0xff] %v2874
    %3267 = vst [vmem:[#allocation8 + $0x458] sm:$0xff] %v2875
    %3268 = vst [vmem:[#allocation8 + $0x460] sm:$0xff] %v2876
    %3269 = vst [vmem:[#allocation8 + $0x468] sm:$0xff] %v2877
    %3270 = vst [vmem:[#allocation8 + $0x470] sm:$0xff] %v2878
    %3271 = vst [vmem:[#allocation8 + $0x478] sm:$0xff] %v2879
    %3272 = vst [vmem:[#allocation8 + $0x480] sm:$0xff] %v2880
    %3273 = vst [vmem:[#allocation8 + $0x488] sm:$0xff] %v2881
    %3274 = vst [vmem:[#allocation8 + $0x490] sm:$0xff] %v2882
    %3275 = vst [vmem:[#allocation8 + $0x498] sm:$0xff] %v2883
    %3276 = vst [vmem:[#allocation8 + $0x4a0] sm:$0xff] %v2884
    %3277 = vst [vmem:[#allocation8 + $0x4a8] sm:$0xff] %v2885
    %3278 = vst [vmem:[#allocation8 + $0x4b0] sm:$0xff] %v2886
    %3279 = vst [vmem:[#allocation8 + $0x4b8] sm:$0xff] %v2887
    %3280 = vst [vmem:[#allocation8 + $0x4c0] sm:$0xff] %v2888
    %3281 = vst [vmem:[#allocation8 + $0x4c8] sm:$0xff] %v2889
    %3282 = vst [vmem:[#allocation8 + $0x4d0] sm:$0xff] %v2890
    %3283 = vst [vmem:[#allocation8 + $0x4d8] sm:$0xff] %v2891
    %3284 = vst [vmem:[#allocation8 + $0x4e0] sm:$0xff] %v2892
    %3285 = vst [vmem:[#allocation8 + $0x4e8] sm:$0xff] %v2893
    %3286 = vst [vmem:[#allocation8 + $0x4f0] sm:$0xff] %v2894
    %3287 = vst [vmem:[#allocation8 + $0x4f8] sm:$0xff] %v2895
    %3288 = vst [vmem:[#allocation8 + $0x500] sm:$0xff] %v2896
    %3289 = vst [vmem:[#allocation8 + $0x508] sm:$0xff] %v2897
    %3290 = vst [vmem:[#allocation8 + $0x510] sm:$0xff] %v2898
    %3291 = vst [vmem:[#allocation8 + $0x518] sm:$0xff] %v2899
    %3292 = vst [vmem:[#allocation8 + $0x520] sm:$0xff] %v2900
    %3293 = vst [vmem:[#allocation8 + $0x528] sm:$0xff] %v2901
    %3294 = vst [vmem:[#allocation8 + $0x530] sm:$0xff] %v2902
    %3295 = vst [vmem:[#allocation8 + $0x538] sm:$0xff] %v2903
    %3296 = vst [vmem:[#allocation8 + $0x540] sm:$0xff] %v2904
    %3297 = vst [vmem:[#allocation8 + $0x548] sm:$0xff] %v2905
    %3298 = vst [vmem:[#allocation8 + $0x550] sm:$0xff] %v2906
    %3299 = vst [vmem:[#allocation8 + $0x558] sm:$0xff] %v2907
    %3300 = vst [vmem:[#allocation8 + $0x560] sm:$0xff] %v2908
    %3301 = vst [vmem:[#allocation8 + $0x568] sm:$0xff] %v2909
    %3302 = vst [vmem:[#allocation8 + $0x570] sm:$0xff] %v2910
    %3303 = vst [vmem:[#allocation8 + $0x578] sm:$0xff] %v2911
    %3304 = vst [vmem:[#allocation8 + $0x580] sm:$0xff] %v2912
    %3305 = vst [vmem:[#allocation8 + $0x588] sm:$0xff] %v2913
    %3306 = vst [vmem:[#allocation8 + $0x590] sm:$0xff] %v2914
    %3307 = vst [vmem:[#allocation8 + $0x598] sm:$0xff] %v2915
    %3308 = vst [vmem:[#allocation8 + $0x5a0] sm:$0xff] %v2916
    %3309 = vst [vmem:[#allocation8 + $0x5a8] sm:$0xff] %v2917
    %3310 = vst [vmem:[#allocation8 + $0x5b0] sm:$0xff] %v2918
    %3311 = vst [vmem:[#allocation8 + $0x5b8] sm:$0xff] %v2919
    %3312 = vst [vmem:[#allocation8 + $0x5c0] sm:$0xff] %v2920
    %3313 = vst [vmem:[#allocation8 + $0x5c8] sm:$0xff] %v2921
    %3314 = vst [vmem:[#allocation8 + $0x5d0] sm:$0xff] %v2922
    %3315 = vst [vmem:[#allocation8 + $0x5d8] sm:$0xff] %v2923
    %3316 = vst [vmem:[#allocation8 + $0x5e0] sm:$0xff] %v2924
    %3317 = vst [vmem:[#allocation8 + $0x5e8] sm:$0xff] %v2925
    %3318 = vst [vmem:[#allocation8 + $0x5f0] sm:$0xff] %v2926
    %3319 = vst [vmem:[#allocation8 + $0x5f8] sm:$0xff] %v2927
    %3320 = vst [vmem:[#allocation8 + $0x600] sm:$0xff] %v2928
    %3321 = vst [vmem:[#allocation8 + $0x608] sm:$0xff] %v2929
    %3322 = vst [vmem:[#allocation8 + $0x610] sm:$0xff] %v2930
    %3323 = vst [vmem:[#allocation8 + $0x618] sm:$0xff] %v2931
    %3324 = vst [vmem:[#allocation8 + $0x620] sm:$0xff] %v2932
    %3325 = vst [vmem:[#allocation8 + $0x628] sm:$0xff] %v2933
    %3326 = vst [vmem:[#allocation8 + $0x630] sm:$0xff] %v2934
    %3327 = vst [vmem:[#allocation8 + $0x638] sm:$0xff] %v2935
    %3328 = vst [vmem:[#allocation8 + $0x640] sm:$0xff] %v2936
    %3329 = vst [vmem:[#allocation8 + $0x648] sm:$0xff] %v2937
    %3330 = vst [vmem:[#allocation8 + $0x650] sm:$0xff] %v2938
    %3331 = vst [vmem:[#allocation8 + $0x658] sm:$0xff] %v2939
    %3332 = vst [vmem:[#allocation8 + $0x660] sm:$0xff] %v2940
    %3333 = vst [vmem:[#allocation8 + $0x668] sm:$0xff] %v2941
    %3334 = vst [vmem:[#allocation8 + $0x670] sm:$0xff] %v2942
    %3335 = vst [vmem:[#allocation8 + $0x678] sm:$0xff] %v2943
    %3336 = vst [vmem:[#allocation8 + $0x680] sm:$0xff] %v2944
    %3337 = vst [vmem:[#allocation8 + $0x688] sm:$0xff] %v2945
    %3338 = vst [vmem:[#allocation8 + $0x690] sm:$0xff] %v2946
    %3339 = vst [vmem:[#allocation8 + $0x698] sm:$0xff] %v2947
    %3340 = vst [vmem:[#allocation8 + $0x6a0] sm:$0xff] %v2948
    %3341 = vst [vmem:[#allocation8 + $0x6a8] sm:$0xff] %v2949
    %3342 = vst [vmem:[#allocation8 + $0x6b0] sm:$0xff] %v2950
    %3343 = vst [vmem:[#allocation8 + $0x6b8] sm:$0xff] %v2951
    %3344 = vst [vmem:[#allocation8 + $0x6c0] sm:$0xff] %v2952
    %3345 = vst [vmem:[#allocation8 + $0x6c8] sm:$0xff] %v2953
    %3346 = vst [vmem:[#allocation8 + $0x6d0] sm:$0xff] %v2954
    %3347 = vst [vmem:[#allocation8 + $0x6d8] sm:$0xff] %v2955
    %3348 = vst [vmem:[#allocation8 + $0x6e0] sm:$0xff] %v2956
    %3349 = vst [vmem:[#allocation8 + $0x6e8] sm:$0xff] %v2957
    %3350 = vst [vmem:[#allocation8 + $0x6f0] sm:$0xff] %v2958
    %3351 = vst [vmem:[#allocation8 + $0x6f8] sm:$0xff] %v2959
    %3352 = vst [vmem:[#allocation8 + $0x700] sm:$0xff] %v2960
    %3353 = vst [vmem:[#allocation8 + $0x708] sm:$0xff] %v2961
    %3354 = vst [vmem:[#allocation8 + $0x710] sm:$0xff] %v2962
    %3355 = vst [vmem:[#allocation8 + $0x718] sm:$0xff] %v2963
    %3356 = vst [vmem:[#allocation8 + $0x720] sm:$0xff] %v2964
    %3357 = vst [vmem:[#allocation8 + $0x728] sm:$0xff] %v2965
    %3358 = vst [vmem:[#allocation8 + $0x730] sm:$0xff] %v2966
    %3359 = vst [vmem:[#allocation8 + $0x738] sm:$0xff] %v2967
    %3360 = vst [vmem:[#allocation8 + $0x740] sm:$0xff] %v2968
    %3361 = vst [vmem:[#allocation8 + $0x748] sm:$0xff] %v2969
    %3362 = vst [vmem:[#allocation8 + $0x750] sm:$0xff] %v2970
    %3363 = vst [vmem:[#allocation8 + $0x758] sm:$0xff] %v2971
    %3364 = vst [vmem:[#allocation8 + $0x760] sm:$0xff] %v2972
    %3365 = vst [vmem:[#allocation8 + $0x768] sm:$0xff] %v2973
    %3366 = vst [vmem:[#allocation8 + $0x770] sm:$0xff] %v2974
    %3367 = vst [vmem:[#allocation8 + $0x778] sm:$0xff] %v2975
    %3368 = vst [vmem:[#allocation8 + $0x780] sm:$0xff] %v2976
    %3369 = vst [vmem:[#allocation8 + $0x788] sm:$0xff] %v2977
    %3370 = vst [vmem:[#allocation8 + $0x790] sm:$0xff] %v2978
    %3371 = vst [vmem:[#allocation8 + $0x798] sm:$0xff] %v2979
    %3372 = vst [vmem:[#allocation8 + $0x7a0] sm:$0xff] %v2980
    %3373 = vst [vmem:[#allocation8 + $0x7a8] sm:$0xff] %v2981
    %3374 = vst [vmem:[#allocation8 + $0x7b0] sm:$0xff] %v2982
    %3375 = vst [vmem:[#allocation8 + $0x7b8] sm:$0xff] %v2983
    %3376 = vst [vmem:[#allocation8 + $0x7c0] sm:$0xff] %v2984
    %3377 = vst [vmem:[#allocation8 + $0x7c8] sm:$0xff] %v2985
    %3378 = vst [vmem:[#allocation8 + $0x7d0] sm:$0xff] %v2986
    %3379 = vst [vmem:[#allocation8 + $0x7d8] sm:$0xff] %v2987
    %3380 = vst [vmem:[#allocation8 + $0x7e0] sm:$0xff] %v2988
    %3381 = vst [vmem:[#allocation8 + $0x7e8] sm:$0xff] %v2989
    %3382 = vst [vmem:[#allocation8 + $0x7f0] sm:$0xff] %v2990
    %3383 = vst [vmem:[#allocation8 + $0x7f8] sm:$0xff] %v2991
    %3384 = vst [vmem:[#allocation8 + $0x800] sm:$0xff] %v2992
    %3385 = vst [vmem:[#allocation8 + $0x808] sm:$0xff] %v2993
    %3386 = vst [vmem:[#allocation8 + $0x810] sm:$0xff] %v2994
    %3387 = vst [vmem:[#allocation8 + $0x818] sm:$0xff] %v2995
    %3388 = vst [vmem:[#allocation8 + $0x820] sm:$0xff] %v2996
    %3389 = vst [vmem:[#allocation8 + $0x828] sm:$0xff] %v2997
    %3390 = vst [vmem:[#allocation8 + $0x830] sm:$0xff] %v2998
    %3391 = vst [vmem:[#allocation8 + $0x838] sm:$0xff] %v2999
    %3392 = vst [vmem:[#allocation8 + $0x840] sm:$0xff] %v3000
    %3393 = vst [vmem:[#allocation8 + $0x848] sm:$0xff] %v3001
    %3394 = vst [vmem:[#allocation8 + $0x850] sm:$0xff] %v3002
    %3395 = vst [vmem:[#allocation8 + $0x858] sm:$0xff] %v3003
    %3396 = vst [vmem:[#allocation8 + $0x860] sm:$0xff] %v3004
    %3397 = vst [vmem:[#allocation8 + $0x868] sm:$0xff] %v3005
    %3398 = vst [vmem:[#allocation8 + $0x870] sm:$0xff] %v3006
    %3399 = vst [vmem:[#allocation8 + $0x878] sm:$0xff] %v3007
    %3400 = vst [vmem:[#allocation8 + $0x880] sm:$0xff] %v3008
    %3401 = vst [vmem:[#allocation8 + $0x888] sm:$0xff] %v3009
    %3402 = vst [vmem:[#allocation8 + $0x890] sm:$0xff] %v3010
    %3403 = vst [vmem:[#allocation8 + $0x898] sm:$0xff] %v3011
    %3404 = vst [vmem:[#allocation8 + $0x8a0] sm:$0xff] %v3012
    %3405 = vst [vmem:[#allocation8 + $0x8a8] sm:$0xff] %v3013
    %3406 = vst [vmem:[#allocation8 + $0x8b0] sm:$0xff] %v3014
    %3407 = vst [vmem:[#allocation8 + $0x8b8] sm:$0xff] %v3015
    %3408 = vst [vmem:[#allocation8 + $0x8c0] sm:$0xff] %v3016
    %3409 = vst [vmem:[#allocation8 + $0x8c8] sm:$0xff] %v3017
    %3410 = vst [vmem:[#allocation8 + $0x8d0] sm:$0xff] %v3018
    %3411 = vst [vmem:[#allocation8 + $0x8d8] sm:$0xff] %v3019
    %3412 = vst [vmem:[#allocation8 + $0x8e0] sm:$0xff] %v3020
    %3413 = vst [vmem:[#allocation8 + $0x8e8] sm:$0xff] %v3021
    %3414 = vst [vmem:[#allocation8 + $0x8f0] sm:$0xff] %v3022
    %3415 = vst [vmem:[#allocation8 + $0x8f8] sm:$0xff] %v3023
    %3416 = vst [vmem:[#allocation8 + $0x900] sm:$0xff] %v3024
    %3417 = vst [vmem:[#allocation8 + $0x908] sm:$0xff] %v3025
    %3418 = vst [vmem:[#allocation8 + $0x910] sm:$0xff] %v3026
    %3419 = vst [vmem:[#allocation8 + $0x918] sm:$0xff] %v3027
    %3420 = vst [vmem:[#allocation8 + $0x920] sm:$0xff] %v3028
    %3421 = vst [vmem:[#allocation8 + $0x928] sm:$0xff] %v3029
    %3422 = vst [vmem:[#allocation8 + $0x930] sm:$0xff] %v3030
    %3423 = vst [vmem:[#allocation8 + $0x938] sm:$0xff] %v3031
    %3424 = vst [vmem:[#allocation8 + $0x940] sm:$0xff] %v3032
    %3425 = vst [vmem:[#allocation8 + $0x948] sm:$0xff] %v3033
    %3426 = vst [vmem:[#allocation8 + $0x950] sm:$0xff] %v3034
    %3427 = vst [vmem:[#allocation8 + $0x958] sm:$0xff] %v3035
    %3428 = vst [vmem:[#allocation8 + $0x960] sm:$0xff] %v3036
    %3429 = vst [vmem:[#allocation8 + $0x968] sm:$0xff] %v3037
    %3430 = vst [vmem:[#allocation8 + $0x970] sm:$0xff] %v3038
    %3431 = vst [vmem:[#allocation8 + $0x978] sm:$0xff] %v3039
    %3432 = vst [vmem:[#allocation8 + $0x980] sm:$0xff] %v3040
    %3433 = vst [vmem:[#allocation8 + $0x988] sm:$0xff] %v3041
    %3434 = vst [vmem:[#allocation8 + $0x990] sm:$0xff] %v3042
    %3435 = vst [vmem:[#allocation8 + $0x998] sm:$0xff] %v3043
    %3436 = vst [vmem:[#allocation8 + $0x9a0] sm:$0xff] %v3044
    %3437 = vst [vmem:[#allocation8 + $0x9a8] sm:$0xff] %v3045
    %3438 = vst [vmem:[#allocation8 + $0x9b0] sm:$0xff] %v3046
    %3439 = vst [vmem:[#allocation8 + $0x9b8] sm:$0xff] %v3047
    %3440 = vst [vmem:[#allocation8 + $0x9c0] sm:$0xff] %v3048
    %3441 = vst [vmem:[#allocation8 + $0x9c8] sm:$0xff] %v3049
    %3442 = vst [vmem:[#allocation8 + $0x9d0] sm:$0xff] %v3050
    %3443 = vst [vmem:[#allocation8 + $0x9d8] sm:$0xff] %v3051
    %3444 = vst [vmem:[#allocation8 + $0x9e0] sm:$0xff] %v3052
    %3445 = vst [vmem:[#allocation8 + $0x9e8] sm:$0xff] %v3053
    %3446 = vst [vmem:[#allocation8 + $0x9f0] sm:$0xff] %v3054
    %3447 = vst [vmem:[#allocation8 + $0x9f8] sm:$0xff] %v3055
    %3448 = vst [vmem:[#allocation8 + $0xa00] sm:$0xff] %v3056
    %3449 = vst [vmem:[#allocation8 + $0xa08] sm:$0xff] %v3057
    %3450 = vst [vmem:[#allocation8 + $0xa10] sm:$0xff] %v3058
    %3451 = vst [vmem:[#allocation8 + $0xa18] sm:$0xff] %v3059
    %3452 = vst [vmem:[#allocation8 + $0xa20] sm:$0xff] %v3060
    %3453 = vst [vmem:[#allocation8 + $0xa28] sm:$0xff] %v3061
    %3454 = vst [vmem:[#allocation8 + $0xa30] sm:$0xff] %v3062
    %3455 = vst [vmem:[#allocation8 + $0xa38] sm:$0xff] %v3063
    %3456 = vst [vmem:[#allocation8 + $0xa40] sm:$0xff] %v3064
    %3457 = vst [vmem:[#allocation8 + $0xa48] sm:$0xff] %v3065
    %3458 = vst [vmem:[#allocation8 + $0xa50] sm:$0xff] %v3066
    %3459 = vst [vmem:[#allocation8 + $0xa58] sm:$0xff] %v3067
    %3460 = vst [vmem:[#allocation8 + $0xa60] sm:$0xff] %v3068
    %3461 = vst [vmem:[#allocation8 + $0xa68] sm:$0xff] %v3069
    %3462 = vst [vmem:[#allocation8 + $0xa70] sm:$0xff] %v3070
    %3463 = vst [vmem:[#allocation8 + $0xa78] sm:$0xff] %v3071
    %3464 = vst [vmem:[#allocation8 + $0xa80] sm:$0xff] %v3072
    %3465 = vst [vmem:[#allocation8 + $0xa88] sm:$0xff] %v3073
    %3466 = vst [vmem:[#allocation8 + $0xa90] sm:$0xff] %v3074
    %3467 = vst [vmem:[#allocation8 + $0xa98] sm:$0xff] %v3075
    %3468 = vst [vmem:[#allocation8 + $0xaa0] sm:$0xff] %v3076
    %3469 = vst [vmem:[#allocation8 + $0xaa8] sm:$0xff] %v3077
    %3470 = vst [vmem:[#allocation8 + $0xab0] sm:$0xff] %v3078
    %3471 = vst [vmem:[#allocation8 + $0xab8] sm:$0xff] %v3079
    %3472 = vst [vmem:[#allocation8 + $0xac0] sm:$0xff] %v3080
    %3473 = vst [vmem:[#allocation8 + $0xac8] sm:$0xff] %v3081
    %3474 = vst [vmem:[#allocation8 + $0xad0] sm:$0xff] %v3082
    %3475 = vst [vmem:[#allocation8 + $0xad8] sm:$0xff] %v3083
    %3476 = vst [vmem:[#allocation8 + $0xae0] sm:$0xff] %v3084
    %3477 = vst [vmem:[#allocation8 + $0xae8] sm:$0xff] %v3085
    %3478 = vst [vmem:[#allocation8 + $0xaf0] sm:$0xff] %v3086
    %3479 = vst [vmem:[#allocation8 + $0xaf8] sm:$0xff] %v3087
    %3480 = vst [vmem:[#allocation8 + $0xb00] sm:$0xff] %v3088
    %3481 = vst [vmem:[#allocation8 + $0xb08] sm:$0xff] %v3089
    %3482 = vst [vmem:[#allocation8 + $0xb10] sm:$0xff] %v3090
    %3483 = vst [vmem:[#allocation8 + $0xb18] sm:$0xff] %v3091
    %3484 = vst [vmem:[#allocation8 + $0xb20] sm:$0xff] %v3092
    %3485 = vst [vmem:[#allocation8 + $0xb28] sm:$0xff] %v3093
    %3486 = vst [vmem:[#allocation8 + $0xb30] sm:$0xff] %v3094
    %3487 = vst [vmem:[#allocation8 + $0xb38] sm:$0xff] %v3095
    %3488 = vst [vmem:[#allocation8 + $0xb40] sm:$0xff] %v3096
    %3489 = vst [vmem:[#allocation8 + $0xb48] sm:$0xff] %v3097
    %3490 = vst [vmem:[#allocation8 + $0xb50] sm:$0xff] %v3098
    %3491 = vst [vmem:[#allocation8 + $0xb58] sm:$0xff] %v3099
    %3492 = vst [vmem:[#allocation8 + $0xb60] sm:$0xff] %v3100
    %3493 = vst [vmem:[#allocation8 + $0xb68] sm:$0xff] %v3101
    %3494 = vst [vmem:[#allocation8 + $0xb70] sm:$0xff] %v3102
    %3495 = vst [vmem:[#allocation8 + $0xb78] sm:$0xff] %v3103
    %3496 = vst [vmem:[#allocation8 + $0xb80] sm:$0xff] %v3104
    %3497 = vst [vmem:[#allocation8 + $0xb88] sm:$0xff] %v3105
    %3498 = vst [vmem:[#allocation8 + $0xb90] sm:$0xff] %v3106
    %3499 = vst [vmem:[#allocation8 + $0xb98] sm:$0xff] %v3107
    %3500 = vst [vmem:[#allocation8 + $0xba0] sm:$0xff] %v3108
    %3501 = vst [vmem:[#allocation8 + $0xba8] sm:$0xff] %v3109
    %3502 = vst [vmem:[#allocation8 + $0xbb0] sm:$0xff] %v3110
    %3503 = vst [vmem:[#allocation8 + $0xbb8] sm:$0xff] %v3111
    %3504 = vst [vmem:[#allocation8 + $0xbc0] sm:$0xff] %v3112
    %3505 = vst [vmem:[#allocation8 + $0xbc8] sm:$0xff] %v3113
    %3506 = vst [vmem:[#allocation8 + $0xbd0] sm:$0xff] %v3114
    %3507 = vst [vmem:[#allocation8 + $0xbd8] sm:$0xff] %v3115
    %3508 = vst [vmem:[#allocation8 + $0xbe0] sm:$0xff] %v3116
    %3509 = vst [vmem:[#allocation8 + $0xbe8] sm:$0xff] %v3117
    %3510 = vst [vmem:[#allocation8 + $0xbf0] sm:$0xff] %v3118
    %3511 = vst [vmem:[#allocation8 + $0xbf8] sm:$0xff] %v3119
    %3512 = vst [vmem:[#allocation8 + $0xc00] sm:$0xff] %v3120
    %3513 = vst [vmem:[#allocation8 + $0xc08] sm:$0xff] %v3121
    %3514 = vst [vmem:[#allocation8 + $0xc10] sm:$0xff] %v3122
    %3515 = vst [vmem:[#allocation8 + $0xc18] sm:$0xff] %v3123
    %3516 = vst [vmem:[#allocation8 + $0xc20] sm:$0xff] %v3124
    %3517 = vst [vmem:[#allocation8 + $0xc28] sm:$0xff] %v3125
    %3518 = vst [vmem:[#allocation8 + $0xc30] sm:$0xff] %v3126
    %3519 = vst [vmem:[#allocation8 + $0xc38] sm:$0xff] %v3127
    // Predicated region
    $region30: #{tpu_custom_call.1} parent=1 // pred_check
      %p3520 = pneg %p55
    $region31: #{tpu_custom_call.1} parent=1 // pred_check_branch
      %3522 = sbr.rel (%p3520) target = $region33
    $region32: #{tpu_custom_call.1} parent=1 // pred_region
      %v3523 = vld [vmem:[#allocation7] sm:$0x77]
      %v3524 = vld [vmem:[#allocation8] sm:$0xff]
      %v3525 = vld [vmem:[#allocation8 + $0x8] sm:$0xff]
      %v3526 = vld [vmem:[#allocation8 + $0x10] sm:$0xff]
      %v3527 = vld [vmem:[#allocation8 + $0x18] sm:$0xff]
      %v3528 = vld [vmem:[#allocation8 + $0x20] sm:$0xff]
      %v3529 = vld [vmem:[#allocation8 + $0x28] sm:$0xff]
      %v3530 = vld [vmem:[#allocation8 + $0x30] sm:$0xff]
      %v3531 = vld [vmem:[#allocation8 + $0x38] sm:$0xff]
      %v3532 = vld [vmem:[#allocation8 + $0x40] sm:$0xff]
      %v3533 = vld [vmem:[#allocation8 + $0x48] sm:$0xff]
      %v3534 = vld [vmem:[#allocation8 + $0x50] sm:$0xff]
      %v3535 = vld [vmem:[#allocation8 + $0x58] sm:$0xff]
      %v3536 = vld [vmem:[#allocation8 + $0x60] sm:$0xff]
      %v3537 = vld [vmem:[#allocation8 + $0x68] sm:$0xff]
      %v3538 = vld [vmem:[#allocation8 + $0x70] sm:$0xff]
      %v3539 = vld [vmem:[#allocation8 + $0x78] sm:$0xff]
      %v3540 = vld [vmem:[#allocation8 + $0x80] sm:$0xff]
      %v3541 = vld [vmem:[#allocation8 + $0x88] sm:$0xff]
      %v3542 = vld [vmem:[#allocation8 + $0x90] sm:$0xff]
      %v3543 = vld [vmem:[#allocation8 + $0x98] sm:$0xff]
      %v3544 = vld [vmem:[#allocation8 + $0xa0] sm:$0xff]
      %v3545 = vld [vmem:[#allocation8 + $0xa8] sm:$0xff]
      %v3546 = vld [vmem:[#allocation8 + $0xb0] sm:$0xff]
      %v3547 = vld [vmem:[#allocation8 + $0xb8] sm:$0xff]
      %v3548 = vld [vmem:[#allocation8 + $0xc0] sm:$0xff]
      %v3549 = vld [vmem:[#allocation8 + $0xc8] sm:$0xff]
      %v3550 = vld [vmem:[#allocation8 + $0xd0] sm:$0xff]
      %v3551 = vld [vmem:[#allocation8 + $0xd8] sm:$0xff]
      %v3552 = vld [vmem:[#allocation8 + $0xe0] sm:$0xff]
      %v3553 = vld [vmem:[#allocation8 + $0xe8] sm:$0xff]
      %v3554 = vld [vmem:[#allocation8 + $0xf0] sm:$0xff]
      %v3555 = vld [vmem:[#allocation8 + $0xf8] sm:$0xff]
      %v3556 = vld [vmem:[#allocation8 + $0x100] sm:$0xff]
      %v3557 = vld [vmem:[#allocation8 + $0x108] sm:$0xff]
      %v3558 = vld [vmem:[#allocation8 + $0x110] sm:$0xff]
      %v3559 = vld [vmem:[#allocation8 + $0x118] sm:$0xff]
      %v3560 = vld [vmem:[#allocation8 + $0x120] sm:$0xff]
      %v3561 = vld [vmem:[#allocation8 + $0x128] sm:$0xff]
      %v3562 = vld [vmem:[#allocation8 + $0x130] sm:$0xff]
      %v3563 = vld [vmem:[#allocation8 + $0x138] sm:$0xff]
      %v3564 = vld [vmem:[#allocation8 + $0x140] sm:$0xff]
      %v3565 = vld [vmem:[#allocation8 + $0x148] sm:$0xff]
      %v3566 = vld [vmem:[#allocation8 + $0x150] sm:$0xff]
      %v3567 = vld [vmem:[#allocation8 + $0x158] sm:$0xff]
      %v3568 = vld [vmem:[#allocation8 + $0x160] sm:$0xff]
      %v3569 = vld [vmem:[#allocation8 + $0x168] sm:$0xff]
      %v3570 = vld [vmem:[#allocation8 + $0x170] sm:$0xff]
      %v3571 = vld [vmem:[#allocation8 + $0x178] sm:$0xff]
      %v3572 = vld [vmem:[#allocation8 + $0x180] sm:$0xff]
      %v3573 = vld [vmem:[#allocation8 + $0x188] sm:$0xff]
      %v3574 = vld [vmem:[#allocation8 + $0x190] sm:$0xff]
      %v3575 = vld [vmem:[#allocation8 + $0x198] sm:$0xff]
      %v3576 = vld [vmem:[#allocation8 + $0x1a0] sm:$0xff]
      %v3577 = vld [vmem:[#allocation8 + $0x1a8] sm:$0xff]
      %v3578 = vld [vmem:[#allocation8 + $0x1b0] sm:$0xff]
      %v3579 = vld [vmem:[#allocation8 + $0x1b8] sm:$0xff]
      %v3580 = vld [vmem:[#allocation8 + $0x1c0] sm:$0xff]
      %v3581 = vld [vmem:[#allocation8 + $0x1c8] sm:$0xff]
      %v3582 = vld [vmem:[#allocation8 + $0x1d0] sm:$0xff]
      %v3583 = vld [vmem:[#allocation8 + $0x1d8] sm:$0xff]
      %v3584 = vld [vmem:[#allocation8 + $0x1e0] sm:$0xff]
      %v3585 = vld [vmem:[#allocation8 + $0x1e8] sm:$0xff]
      %v3586 = vld [vmem:[#allocation8 + $0x1f0] sm:$0xff]
      %v3587 = vld [vmem:[#allocation8 + $0x1f8] sm:$0xff]
      %v3588 = vld [vmem:[#allocation8 + $0x200] sm:$0xff]
      %v3589 = vld [vmem:[#allocation8 + $0x208] sm:$0xff]
      %v3590 = vld [vmem:[#allocation8 + $0x210] sm:$0xff]
      %v3591 = vld [vmem:[#allocation8 + $0x218] sm:$0xff]
      %v3592 = vld [vmem:[#allocation8 + $0x220] sm:$0xff]
      %v3593 = vld [vmem:[#allocation8 + $0x228] sm:$0xff]
      %v3594 = vld [vmem:[#allocation8 + $0x230] sm:$0xff]
      %v3595 = vld [vmem:[#allocation8 + $0x238] sm:$0xff]
      %v3596 = vld [vmem:[#allocation8 + $0x240] sm:$0xff]
      %v3597 = vld [vmem:[#allocation8 + $0x248] sm:$0xff]
      %v3598 = vld [vmem:[#allocation8 + $0x250] sm:$0xff]
      %v3599 = vld [vmem:[#allocation8 + $0x258] sm:$0xff]
      %v3600 = vld [vmem:[#allocation8 + $0x260] sm:$0xff]
      %v3601 = vld [vmem:[#allocation8 + $0x268] sm:$0xff]
      %v3602 = vld [vmem:[#allocation8 + $0x270] sm:$0xff]
      %v3603 = vld [vmem:[#allocation8 + $0x278] sm:$0xff]
      %v3604 = vld [vmem:[#allocation8 + $0x280] sm:$0xff]
      %v3605 = vld [vmem:[#allocation8 + $0x288] sm:$0xff]
      %v3606 = vld [vmem:[#allocation8 + $0x290] sm:$0xff]
      %v3607 = vld [vmem:[#allocation8 + $0x298] sm:$0xff]
      %v3608 = vld [vmem:[#allocation8 + $0x2a0] sm:$0xff]
      %v3609 = vld [vmem:[#allocation8 + $0x2a8] sm:$0xff]
      %v3610 = vld [vmem:[#allocation8 + $0x2b0] sm:$0xff]
      %v3611 = vld [vmem:[#allocation8 + $0x2b8] sm:$0xff]
      %v3612 = vld [vmem:[#allocation8 + $0x2c0] sm:$0xff]
      %v3613 = vld [vmem:[#allocation8 + $0x2c8] sm:$0xff]
      %v3614 = vld [vmem:[#allocation8 + $0x2d0] sm:$0xff]
      %v3615 = vld [vmem:[#allocation8 + $0x2d8] sm:$0xff]
      %v3616 = vld [vmem:[#allocation8 + $0x2e0] sm:$0xff]
      %v3617 = vld [vmem:[#allocation8 + $0x2e8] sm:$0xff]
      %v3618 = vld [vmem:[#allocation8 + $0x2f0] sm:$0xff]
      %v3619 = vld [vmem:[#allocation8 + $0x2f8] sm:$0xff]
      %v3620 = vld [vmem:[#allocation8 + $0x300] sm:$0xff]
      %v3621 = vld [vmem:[#allocation8 + $0x308] sm:$0xff]
      %v3622 = vld [vmem:[#allocation8 + $0x310] sm:$0xff]
      %v3623 = vld [vmem:[#allocation8 + $0x318] sm:$0xff]
      %v3624 = vld [vmem:[#allocation8 + $0x320] sm:$0xff]
      %v3625 = vld [vmem:[#allocation8 + $0x328] sm:$0xff]
      %v3626 = vld [vmem:[#allocation8 + $0x330] sm:$0xff]
      %v3627 = vld [vmem:[#allocation8 + $0x338] sm:$0xff]
      %v3628 = vld [vmem:[#allocation8 + $0x340] sm:$0xff]
      %v3629 = vld [vmem:[#allocation8 + $0x348] sm:$0xff]
      %v3630 = vld [vmem:[#allocation8 + $0x350] sm:$0xff]
      %v3631 = vld [vmem:[#allocation8 + $0x358] sm:$0xff]
      %v3632 = vld [vmem:[#allocation8 + $0x360] sm:$0xff]
      %v3633 = vld [vmem:[#allocation8 + $0x368] sm:$0xff]
      %v3634 = vld [vmem:[#allocation8 + $0x370] sm:$0xff]
      %v3635 = vld [vmem:[#allocation8 + $0x378] sm:$0xff]
      %v3636 = vld [vmem:[#allocation8 + $0x380] sm:$0xff]
      %v3637 = vld [vmem:[#allocation8 + $0x388] sm:$0xff]
      %v3638 = vld [vmem:[#allocation8 + $0x390] sm:$0xff]
      %v3639 = vld [vmem:[#allocation8 + $0x398] sm:$0xff]
      %v3640 = vld [vmem:[#allocation8 + $0x3a0] sm:$0xff]
      %v3641 = vld [vmem:[#allocation8 + $0x3a8] sm:$0xff]
      %v3642 = vld [vmem:[#allocation8 + $0x3b0] sm:$0xff]
      %v3643 = vld [vmem:[#allocation8 + $0x3b8] sm:$0xff]
      %v3644 = vld [vmem:[#allocation8 + $0x3c0] sm:$0xff]
      %v3645 = vld [vmem:[#allocation8 + $0x3c8] sm:$0xff]
      %v3646 = vld [vmem:[#allocation8 + $0x3d0] sm:$0xff]
      %v3647 = vld [vmem:[#allocation8 + $0x3d8] sm:$0xff]
      %v3648 = vld [vmem:[#allocation8 + $0x3e0] sm:$0xff]
      %v3649 = vld [vmem:[#allocation8 + $0x3e8] sm:$0xff]
      %v3650 = vld [vmem:[#allocation8 + $0x3f0] sm:$0xff]
      %v3651 = vld [vmem:[#allocation8 + $0x3f8] sm:$0xff]
      %v3652 = vld [vmem:[#allocation8 + $0x400] sm:$0xff]
      %v3653 = vld [vmem:[#allocation8 + $0x408] sm:$0xff]
      %v3654 = vld [vmem:[#allocation8 + $0x410] sm:$0xff]
      %v3655 = vld [vmem:[#allocation8 + $0x418] sm:$0xff]
      %v3656 = vld [vmem:[#allocation8 + $0x420] sm:$0xff]
      %v3657 = vld [vmem:[#allocation8 + $0x428] sm:$0xff]
      %v3658 = vld [vmem:[#allocation8 + $0x430] sm:$0xff]
      %v3659 = vld [vmem:[#allocation8 + $0x438] sm:$0xff]
      %v3660 = vld [vmem:[#allocation8 + $0x440] sm:$0xff]
      %v3661 = vld [vmem:[#allocation8 + $0x448] sm:$0xff]
      %v3662 = vld [vmem:[#allocation8 + $0x450] sm:$0xff]
      %v3663 = vld [vmem:[#allocation8 + $0x458] sm:$0xff]
      %v3664 = vld [vmem:[#allocation8 + $0x460] sm:$0xff]
      %v3665 = vld [vmem:[#allocation8 + $0x468] sm:$0xff]
      %v3666 = vld [vmem:[#allocation8 + $0x470] sm:$0xff]
      %v3667 = vld [vmem:[#allocation8 + $0x478] sm:$0xff]
      %v3668 = vld [vmem:[#allocation8 + $0x480] sm:$0xff]
      %v3669 = vld [vmem:[#allocation8 + $0x488] sm:$0xff]
      %v3670 = vld [vmem:[#allocation8 + $0x490] sm:$0xff]
      %v3671 = vld [vmem:[#allocation8 + $0x498] sm:$0xff]
      %v3672 = vld [vmem:[#allocation8 + $0x4a0] sm:$0xff]
      %v3673 = vld [vmem:[#allocation8 + $0x4a8] sm:$0xff]
      %v3674 = vld [vmem:[#allocation8 + $0x4b0] sm:$0xff]
      %v3675 = vld [vmem:[#allocation8 + $0x4b8] sm:$0xff]
      %v3676 = vld [vmem:[#allocation8 + $0x4c0] sm:$0xff]
      %v3677 = vld [vmem:[#allocation8 + $0x4c8] sm:$0xff]
      %v3678 = vld [vmem:[#allocation8 + $0x4d0] sm:$0xff]
      %v3679 = vld [vmem:[#allocation8 + $0x4d8] sm:$0xff]
      %v3680 = vld [vmem:[#allocation8 + $0x4e0] sm:$0xff]
      %v3681 = vld [vmem:[#allocation8 + $0x4e8] sm:$0xff]
      %v3682 = vld [vmem:[#allocation8 + $0x4f0] sm:$0xff]
      %v3683 = vld [vmem:[#allocation8 + $0x4f8] sm:$0xff]
      %v3684 = vld [vmem:[#allocation8 + $0x500] sm:$0xff]
      %v3685 = vld [vmem:[#allocation8 + $0x508] sm:$0xff]
      %v3686 = vld [vmem:[#allocation8 + $0x510] sm:$0xff]
      %v3687 = vld [vmem:[#allocation8 + $0x518] sm:$0xff]
      %v3688 = vld [vmem:[#allocation8 + $0x520] sm:$0xff]
      %v3689 = vld [vmem:[#allocation8 + $0x528] sm:$0xff]
      %v3690 = vld [vmem:[#allocation8 + $0x530] sm:$0xff]
      %v3691 = vld [vmem:[#allocation8 + $0x538] sm:$0xff]
      %v3692 = vld [vmem:[#allocation8 + $0x540] sm:$0xff]
      %v3693 = vld [vmem:[#allocation8 + $0x548] sm:$0xff]
      %v3694 = vld [vmem:[#allocation8 + $0x550] sm:$0xff]
      %v3695 = vld [vmem:[#allocation8 + $0x558] sm:$0xff]
      %v3696 = vld [vmem:[#allocation8 + $0x560] sm:$0xff]
      %v3697 = vld [vmem:[#allocation8 + $0x568] sm:$0xff]
      %v3698 = vld [vmem:[#allocation8 + $0x570] sm:$0xff]
      %v3699 = vld [vmem:[#allocation8 + $0x578] sm:$0xff]
      %v3700 = vld [vmem:[#allocation8 + $0x580] sm:$0xff]
      %v3701 = vld [vmem:[#allocation8 + $0x588] sm:$0xff]
      %v3702 = vld [vmem:[#allocation8 + $0x590] sm:$0xff]
      %v3703 = vld [vmem:[#allocation8 + $0x598] sm:$0xff]
      %v3704 = vld [vmem:[#allocation8 + $0x5a0] sm:$0xff]
      %v3705 = vld [vmem:[#allocation8 + $0x5a8] sm:$0xff]
      %v3706 = vld [vmem:[#allocation8 + $0x5b0] sm:$0xff]
      %v3707 = vld [vmem:[#allocation8 + $0x5b8] sm:$0xff]
      %v3708 = vld [vmem:[#allocation8 + $0x5c0] sm:$0xff]
      %v3709 = vld [vmem:[#allocation8 + $0x5c8] sm:$0xff]
      %v3710 = vld [vmem:[#allocation8 + $0x5d0] sm:$0xff]
      %v3711 = vld [vmem:[#allocation8 + $0x5d8] sm:$0xff]
      %v3712 = vld [vmem:[#allocation8 + $0x5e0] sm:$0xff]
      %v3713 = vld [vmem:[#allocation8 + $0x5e8] sm:$0xff]
      %v3714 = vld [vmem:[#allocation8 + $0x5f0] sm:$0xff]
      %v3715 = vld [vmem:[#allocation8 + $0x5f8] sm:$0xff]
      %v3716 = vld [vmem:[#allocation8 + $0x600] sm:$0xff]
      %v3717 = vld [vmem:[#allocation8 + $0x608] sm:$0xff]
      %v3718 = vld [vmem:[#allocation8 + $0x610] sm:$0xff]
      %v3719 = vld [vmem:[#allocation8 + $0x618] sm:$0xff]
      %v3720 = vld [vmem:[#allocation8 + $0x620] sm:$0xff]
      %v3721 = vld [vmem:[#allocation8 + $0x628] sm:$0xff]
      %v3722 = vld [vmem:[#allocation8 + $0x630] sm:$0xff]
      %v3723 = vld [vmem:[#allocation8 + $0x638] sm:$0xff]
      %v3724 = vld [vmem:[#allocation8 + $0x640] sm:$0xff]
      %v3725 = vld [vmem:[#allocation8 + $0x648] sm:$0xff]
      %v3726 = vld [vmem:[#allocation8 + $0x650] sm:$0xff]
      %v3727 = vld [vmem:[#allocation8 + $0x658] sm:$0xff]
      %v3728 = vld [vmem:[#allocation8 + $0x660] sm:$0xff]
      %v3729 = vld [vmem:[#allocation8 + $0x668] sm:$0xff]
      %v3730 = vld [vmem:[#allocation8 + $0x670] sm:$0xff]
      %v3731 = vld [vmem:[#allocation8 + $0x678] sm:$0xff]
      %v3732 = vld [vmem:[#allocation8 + $0x680] sm:$0xff]
      %v3733 = vld [vmem:[#allocation8 + $0x688] sm:$0xff]
      %v3734 = vld [vmem:[#allocation8 + $0x690] sm:$0xff]
      %v3735 = vld [vmem:[#allocation8 + $0x698] sm:$0xff]
      %v3736 = vld [vmem:[#allocation8 + $0x6a0] sm:$0xff]
      %v3737 = vld [vmem:[#allocation8 + $0x6a8] sm:$0xff]
      %v3738 = vld [vmem:[#allocation8 + $0x6b0] sm:$0xff]
      %v3739 = vld [vmem:[#allocation8 + $0x6b8] sm:$0xff]
      %v3740 = vld [vmem:[#allocation8 + $0x6c0] sm:$0xff]
      %v3741 = vld [vmem:[#allocation8 + $0x6c8] sm:$0xff]
      %v3742 = vld [vmem:[#allocation8 + $0x6d0] sm:$0xff]
      %v3743 = vld [vmem:[#allocation8 + $0x6d8] sm:$0xff]
      %v3744 = vld [vmem:[#allocation8 + $0x6e0] sm:$0xff]
      %v3745 = vld [vmem:[#allocation8 + $0x6e8] sm:$0xff]
      %v3746 = vld [vmem:[#allocation8 + $0x6f0] sm:$0xff]
      %v3747 = vld [vmem:[#allocation8 + $0x6f8] sm:$0xff]
      %v3748 = vld [vmem:[#allocation8 + $0x700] sm:$0xff]
      %v3749 = vld [vmem:[#allocation8 + $0x708] sm:$0xff]
      %v3750 = vld [vmem:[#allocation8 + $0x710] sm:$0xff]
      %v3751 = vld [vmem:[#allocation8 + $0x718] sm:$0xff]
      %v3752 = vld [vmem:[#allocation8 + $0x720] sm:$0xff]
      %v3753 = vld [vmem:[#allocation8 + $0x728] sm:$0xff]
      %v3754 = vld [vmem:[#allocation8 + $0x730] sm:$0xff]
      %v3755 = vld [vmem:[#allocation8 + $0x738] sm:$0xff]
      %v3756 = vld [vmem:[#allocation8 + $0x740] sm:$0xff]
      %v3757 = vld [vmem:[#allocation8 + $0x748] sm:$0xff]
      %v3758 = vld [vmem:[#allocation8 + $0x750] sm:$0xff]
      %v3759 = vld [vmem:[#allocation8 + $0x758] sm:$0xff]
      %v3760 = vld [vmem:[#allocation8 + $0x760] sm:$0xff]
      %v3761 = vld [vmem:[#allocation8 + $0x768] sm:$0xff]
      %v3762 = vld [vmem:[#allocation8 + $0x770] sm:$0xff]
      %v3763 = vld [vmem:[#allocation8 + $0x778] sm:$0xff]
      %v3764 = vld [vmem:[#allocation8 + $0x780] sm:$0xff]
      %v3765 = vld [vmem:[#allocation8 + $0x788] sm:$0xff]
      %v3766 = vld [vmem:[#allocation8 + $0x790] sm:$0xff]
      %v3767 = vld [vmem:[#allocation8 + $0x798] sm:$0xff]
      %v3768 = vld [vmem:[#allocation8 + $0x7a0] sm:$0xff]
      %v3769 = vld [vmem:[#allocation8 + $0x7a8] sm:$0xff]
      %v3770 = vld [vmem:[#allocation8 + $0x7b0] sm:$0xff]
      %v3771 = vld [vmem:[#allocation8 + $0x7b8] sm:$0xff]
      %v3772 = vld [vmem:[#allocation8 + $0x7c0] sm:$0xff]
      %v3773 = vld [vmem:[#allocation8 + $0x7c8] sm:$0xff]
      %v3774 = vld [vmem:[#allocation8 + $0x7d0] sm:$0xff]
      %v3775 = vld [vmem:[#allocation8 + $0x7d8] sm:$0xff]
      %v3776 = vld [vmem:[#allocation8 + $0x7e0] sm:$0xff]
      %v3777 = vld [vmem:[#allocation8 + $0x7e8] sm:$0xff]
      %v3778 = vld [vmem:[#allocation8 + $0x7f0] sm:$0xff]
      %v3779 = vld [vmem:[#allocation8 + $0x7f8] sm:$0xff]
      %v3780 = vld [vmem:[#allocation8 + $0x800] sm:$0xff]
      %v3781 = vld [vmem:[#allocation8 + $0x808] sm:$0xff]
      %v3782 = vld [vmem:[#allocation8 + $0x810] sm:$0xff]
      %v3783 = vld [vmem:[#allocation8 + $0x818] sm:$0xff]
      %v3784 = vld [vmem:[#allocation8 + $0x820] sm:$0xff]
      %v3785 = vld [vmem:[#allocation8 + $0x828] sm:$0xff]
      %v3786 = vld [vmem:[#allocation8 + $0x830] sm:$0xff]
      %v3787 = vld [vmem:[#allocation8 + $0x838] sm:$0xff]
      %v3788 = vld [vmem:[#allocation8 + $0x840] sm:$0xff]
      %v3789 = vld [vmem:[#allocation8 + $0x848] sm:$0xff]
      %v3790 = vld [vmem:[#allocation8 + $0x850] sm:$0xff]
      %v3791 = vld [vmem:[#allocation8 + $0x858] sm:$0xff]
      %v3792 = vld [vmem:[#allocation8 + $0x860] sm:$0xff]
      %v3793 = vld [vmem:[#allocation8 + $0x868] sm:$0xff]
      %v3794 = vld [vmem:[#allocation8 + $0x870] sm:$0xff]
      %v3795 = vld [vmem:[#allocation8 + $0x878] sm:$0xff]
      %v3796 = vld [vmem:[#allocation8 + $0x880] sm:$0xff]
      %v3797 = vld [vmem:[#allocation8 + $0x888] sm:$0xff]
      %v3798 = vld [vmem:[#allocation8 + $0x890] sm:$0xff]
      %v3799 = vld [vmem:[#allocation8 + $0x898] sm:$0xff]
      %v3800 = vld [vmem:[#allocation8 + $0x8a0] sm:$0xff]
      %v3801 = vld [vmem:[#allocation8 + $0x8a8] sm:$0xff]
      %v3802 = vld [vmem:[#allocation8 + $0x8b0] sm:$0xff]
      %v3803 = vld [vmem:[#allocation8 + $0x8b8] sm:$0xff]
      %v3804 = vld [vmem:[#allocation8 + $0x8c0] sm:$0xff]
      %v3805 = vld [vmem:[#allocation8 + $0x8c8] sm:$0xff]
      %v3806 = vld [vmem:[#allocation8 + $0x8d0] sm:$0xff]
      %v3807 = vld [vmem:[#allocation8 + $0x8d8] sm:$0xff]
      %v3808 = vld [vmem:[#allocation8 + $0x8e0] sm:$0xff]
      %v3809 = vld [vmem:[#allocation8 + $0x8e8] sm:$0xff]
      %v3810 = vld [vmem:[#allocation8 + $0x8f0] sm:$0xff]
      %v3811 = vld [vmem:[#allocation8 + $0x8f8] sm:$0xff]
      %v3812 = vld [vmem:[#allocation8 + $0x900] sm:$0xff]
      %v3813 = vld [vmem:[#allocation8 + $0x908] sm:$0xff]
      %v3814 = vld [vmem:[#allocation8 + $0x910] sm:$0xff]
      %v3815 = vld [vmem:[#allocation8 + $0x918] sm:$0xff]
      %v3816 = vld [vmem:[#allocation8 + $0x920] sm:$0xff]
      %v3817 = vld [vmem:[#allocation8 + $0x928] sm:$0xff]
      %v3818 = vld [vmem:[#allocation8 + $0x930] sm:$0xff]
      %v3819 = vld [vmem:[#allocation8 + $0x938] sm:$0xff]
      %v3820 = vld [vmem:[#allocation8 + $0x940] sm:$0xff]
      %v3821 = vld [vmem:[#allocation8 + $0x948] sm:$0xff]
      %v3822 = vld [vmem:[#allocation8 + $0x950] sm:$0xff]
      %v3823 = vld [vmem:[#allocation8 + $0x958] sm:$0xff]
      %v3824 = vld [vmem:[#allocation8 + $0x960] sm:$0xff]
      %v3825 = vld [vmem:[#allocation8 + $0x968] sm:$0xff]
      %v3826 = vld [vmem:[#allocation8 + $0x970] sm:$0xff]
      %v3827 = vld [vmem:[#allocation8 + $0x978] sm:$0xff]
      %v3828 = vld [vmem:[#allocation8 + $0x980] sm:$0xff]
      %v3829 = vld [vmem:[#allocation8 + $0x988] sm:$0xff]
      %v3830 = vld [vmem:[#allocation8 + $0x990] sm:$0xff]
      %v3831 = vld [vmem:[#allocation8 + $0x998] sm:$0xff]
      %v3832 = vld [vmem:[#allocation8 + $0x9a0] sm:$0xff]
      %v3833 = vld [vmem:[#allocation8 + $0x9a8] sm:$0xff]
      %v3834 = vld [vmem:[#allocation8 + $0x9b0] sm:$0xff]
      %v3835 = vld [vmem:[#allocation8 + $0x9b8] sm:$0xff]
      %v3836 = vld [vmem:[#allocation8 + $0x9c0] sm:$0xff]
      %v3837 = vld [vmem:[#allocation8 + $0x9c8] sm:$0xff]
      %v3838 = vld [vmem:[#allocation8 + $0x9d0] sm:$0xff]
      %v3839 = vld [vmem:[#allocation8 + $0x9d8] sm:$0xff]
      %v3840 = vld [vmem:[#allocation8 + $0x9e0] sm:$0xff]
      %v3841 = vld [vmem:[#allocation8 + $0x9e8] sm:$0xff]
      %v3842 = vld [vmem:[#allocation8 + $0x9f0] sm:$0xff]
      %v3843 = vld [vmem:[#allocation8 + $0x9f8] sm:$0xff]
      %v3844 = vld [vmem:[#allocation8 + $0xa00] sm:$0xff]
      %v3845 = vld [vmem:[#allocation8 + $0xa08] sm:$0xff]
      %v3846 = vld [vmem:[#allocation8 + $0xa10] sm:$0xff]
      %v3847 = vld [vmem:[#allocation8 + $0xa18] sm:$0xff]
      %v3848 = vld [vmem:[#allocation8 + $0xa20] sm:$0xff]
      %v3849 = vld [vmem:[#allocation8 + $0xa28] sm:$0xff]
      %v3850 = vld [vmem:[#allocation8 + $0xa30] sm:$0xff]
      %v3851 = vld [vmem:[#allocation8 + $0xa38] sm:$0xff]
      %v3852 = vld [vmem:[#allocation8 + $0xa40] sm:$0xff]
      %v3853 = vld [vmem:[#allocation8 + $0xa48] sm:$0xff]
      %v3854 = vld [vmem:[#allocation8 + $0xa50] sm:$0xff]
      %v3855 = vld [vmem:[#allocation8 + $0xa58] sm:$0xff]
      %v3856 = vld [vmem:[#allocation8 + $0xa60] sm:$0xff]
      %v3857 = vld [vmem:[#allocation8 + $0xa68] sm:$0xff]
      %v3858 = vld [vmem:[#allocation8 + $0xa70] sm:$0xff]
      %v3859 = vld [vmem:[#allocation8 + $0xa78] sm:$0xff]
      %v3860 = vld [vmem:[#allocation8 + $0xa80] sm:$0xff]
      %v3861 = vld [vmem:[#allocation8 + $0xa88] sm:$0xff]
      %v3862 = vld [vmem:[#allocation8 + $0xa90] sm:$0xff]
      %v3863 = vld [vmem:[#allocation8 + $0xa98] sm:$0xff]
      %v3864 = vld [vmem:[#allocation8 + $0xaa0] sm:$0xff]
      %v3865 = vld [vmem:[#allocation8 + $0xaa8] sm:$0xff]
      %v3866 = vld [vmem:[#allocation8 + $0xab0] sm:$0xff]
      %v3867 = vld [vmem:[#allocation8 + $0xab8] sm:$0xff]
      %v3868 = vld [vmem:[#allocation8 + $0xac0] sm:$0xff]
      %v3869 = vld [vmem:[#allocation8 + $0xac8] sm:$0xff]
      %v3870 = vld [vmem:[#allocation8 + $0xad0] sm:$0xff]
      %v3871 = vld [vmem:[#allocation8 + $0xad8] sm:$0xff]
      %v3872 = vld [vmem:[#allocation8 + $0xae0] sm:$0xff]
      %v3873 = vld [vmem:[#allocation8 + $0xae8] sm:$0xff]
      %v3874 = vld [vmem:[#allocation8 + $0xaf0] sm:$0xff]
      %v3875 = vld [vmem:[#allocation8 + $0xaf8] sm:$0xff]
      %v3876 = vld [vmem:[#allocation8 + $0xb00] sm:$0xff]
      %v3877 = vld [vmem:[#allocation8 + $0xb08] sm:$0xff]
      %v3878 = vld [vmem:[#allocation8 + $0xb10] sm:$0xff]
      %v3879 = vld [vmem:[#allocation8 + $0xb18] sm:$0xff]
      %v3880 = vld [vmem:[#allocation8 + $0xb20] sm:$0xff]
      %v3881 = vld [vmem:[#allocation8 + $0xb28] sm:$0xff]
      %v3882 = vld [vmem:[#allocation8 + $0xb30] sm:$0xff]
      %v3883 = vld [vmem:[#allocation8 + $0xb38] sm:$0xff]
      %v3884 = vld [vmem:[#allocation8 + $0xb40] sm:$0xff]
      %v3885 = vld [vmem:[#allocation8 + $0xb48] sm:$0xff]
      %v3886 = vld [vmem:[#allocation8 + $0xb50] sm:$0xff]
      %v3887 = vld [vmem:[#allocation8 + $0xb58] sm:$0xff]
      %v3888 = vld [vmem:[#allocation8 + $0xb60] sm:$0xff]
      %v3889 = vld [vmem:[#allocation8 + $0xb68] sm:$0xff]
      %v3890 = vld [vmem:[#allocation8 + $0xb70] sm:$0xff]
      %v3891 = vld [vmem:[#allocation8 + $0xb78] sm:$0xff]
      %v3892 = vld [vmem:[#allocation8 + $0xb80] sm:$0xff]
      %v3893 = vld [vmem:[#allocation8 + $0xb88] sm:$0xff]
      %v3894 = vld [vmem:[#allocation8 + $0xb90] sm:$0xff]
      %v3895 = vld [vmem:[#allocation8 + $0xb98] sm:$0xff]
      %v3896 = vld [vmem:[#allocation8 + $0xba0] sm:$0xff]
      %v3897 = vld [vmem:[#allocation8 + $0xba8] sm:$0xff]
      %v3898 = vld [vmem:[#allocation8 + $0xbb0] sm:$0xff]
      %v3899 = vld [vmem:[#allocation8 + $0xbb8] sm:$0xff]
      %v3900 = vld [vmem:[#allocation8 + $0xbc0] sm:$0xff]
      %v3901 = vld [vmem:[#allocation8 + $0xbc8] sm:$0xff]
      %v3902 = vld [vmem:[#allocation8 + $0xbd0] sm:$0xff]
      %v3903 = vld [vmem:[#allocation8 + $0xbd8] sm:$0xff]
      %v3904 = vld [vmem:[#allocation8 + $0xbe0] sm:$0xff]
      %v3905 = vld [vmem:[#allocation8 + $0xbe8] sm:$0xff]
      %v3906 = vld [vmem:[#allocation8 + $0xbf0] sm:$0xff]
      %v3907 = vld [vmem:[#allocation8 + $0xbf8] sm:$0xff]
      %v3908 = vld [vmem:[#allocation8 + $0xc00] sm:$0xff]
      %v3909 = vld [vmem:[#allocation8 + $0xc08] sm:$0xff]
      %v3910 = vld [vmem:[#allocation8 + $0xc10] sm:$0xff]
      %v3911 = vld [vmem:[#allocation8 + $0xc18] sm:$0xff]
      %v3912 = vld [vmem:[#allocation8 + $0xc20] sm:$0xff]
      %v3913 = vld [vmem:[#allocation8 + $0xc28] sm:$0xff]
      %v3914 = vld [vmem:[#allocation8 + $0xc30] sm:$0xff]
      %v3915 = vld [vmem:[#allocation8 + $0xc38] sm:$0xff]
      %v3917 = vlaneseq
      %v3918 = vshrl.u32 %v3917, 7
      %v3919 = vsub.s32 0, %v3918
      %v3920 = vrot.slane %v3523, %v3919
      %v3921 = vlaneseq
      %v3922 = vshrl.u32 %v3921, 7
      %v3923 = vsub.s32 4, %v3922
      %v3924 = vrot.slane %v3523, %v3923
      %v3927 = vlaneseq
      %v3928 = vshrl.u32 %v3927, 7
      %v3929 = vsub.s32 0, %v3928
      %v3930 = vrot.slane %v3920, %v3929
      %v3931 = vlaneseq
      %v3932 = vshrl.u32 %v3931, 7
      %v3933 = vsub.s32 0, %v3932
      %v3934 = vrot.slane %v3924, %v3933
      %v3935 = vadd.f32 %v3524, %v3930
      %v3936 = vadd.f32 %v3525, %v3934
      %v3937 = vadd.f32 %v3526, %v3930
      %v3938 = vadd.f32 %v3527, %v3934
      %v3939 = vadd.f32 %v3528, %v3930
      %v3940 = vadd.f32 %v3529, %v3934
      %v3941 = vadd.f32 %v3530, %v3930
      %v3942 = vadd.f32 %v3531, %v3934
      %v3943 = vadd.f32 %v3532, %v3930
      %v3944 = vadd.f32 %v3533, %v3934
      %v3945 = vadd.f32 %v3534, %v3930
      %v3946 = vadd.f32 %v3535, %v3934
      %v3947 = vadd.f32 %v3536, %v3930
      %v3948 = vadd.f32 %v3537, %v3934
      %v3949 = vadd.f32 %v3538, %v3930
      %v3950 = vadd.f32 %v3539, %v3934
      %v3951 = vadd.f32 %v3540, %v3930
      %v3952 = vadd.f32 %v3541, %v3934
      %v3953 = vadd.f32 %v3542, %v3930
      %v3954 = vadd.f32 %v3543, %v3934
      %v3955 = vadd.f32 %v3544, %v3930
      %v3956 = vadd.f32 %v3545, %v3934
      %v3957 = vadd.f32 %v3546, %v3930
      %v3958 = vadd.f32 %v3547, %v3934
      %v3959 = vadd.f32 %v3548, %v3930
      %v3960 = vadd.f32 %v3549, %v3934
      %v3961 = vadd.f32 %v3550, %v3930
      %v3962 = vadd.f32 %v3551, %v3934
      %v3963 = vadd.f32 %v3552, %v3930
      %v3964 = vadd.f32 %v3553, %v3934
      %v3965 = vadd.f32 %v3554, %v3930
      %v3966 = vadd.f32 %v3555, %v3934
      %v3967 = vadd.f32 %v3556, %v3930
      %v3968 = vadd.f32 %v3557, %v3934
      %v3969 = vadd.f32 %v3558, %v3930
      %v3970 = vadd.f32 %v3559, %v3934
      %v3971 = vadd.f32 %v3560, %v3930
      %v3972 = vadd.f32 %v3561, %v3934
      %v3973 = vadd.f32 %v3562, %v3930
      %v3974 = vadd.f32 %v3563, %v3934
      %v3975 = vadd.f32 %v3564, %v3930
      %v3976 = vadd.f32 %v3565, %v3934
      %v3977 = vadd.f32 %v3566, %v3930
      %v3978 = vadd.f32 %v3567, %v3934
      %v3979 = vadd.f32 %v3568, %v3930
      %v3980 = vadd.f32 %v3569, %v3934
      %v3981 = vadd.f32 %v3570, %v3930
      %v3982 = vadd.f32 %v3571, %v3934
      %v3983 = vadd.f32 %v3572, %v3930
      %v3984 = vadd.f32 %v3573, %v3934
      %v3985 = vadd.f32 %v3574, %v3930
      %v3986 = vadd.f32 %v3575, %v3934
      %v3987 = vadd.f32 %v3576, %v3930
      %v3988 = vadd.f32 %v3577, %v3934
      %v3989 = vadd.f32 %v3578, %v3930
      %v3990 = vadd.f32 %v3579, %v3934
      %v3991 = vadd.f32 %v3580, %v3930
      %v3992 = vadd.f32 %v3581, %v3934
      %v3993 = vadd.f32 %v3582, %v3930
      %v3994 = vadd.f32 %v3583, %v3934
      %v3995 = vadd.f32 %v3584, %v3930
      %v3996 = vadd.f32 %v3585, %v3934
      %v3997 = vadd.f32 %v3586, %v3930
      %v3998 = vadd.f32 %v3587, %v3934
      %v3999 = vadd.f32 %v3588, %v3930
      %v4000 = vadd.f32 %v3589, %v3934
      %v4001 = vadd.f32 %v3590, %v3930
      %v4002 = vadd.f32 %v3591, %v3934
      %v4003 = vadd.f32 %v3592, %v3930
      %v4004 = vadd.f32 %v3593, %v3934
      %v4005 = vadd.f32 %v3594, %v3930
      %v4006 = vadd.f32 %v3595, %v3934
      %v4007 = vadd.f32 %v3596, %v3930
      %v4008 = vadd.f32 %v3597, %v3934
      %v4009 = vadd.f32 %v3598, %v3930
      %v4010 = vadd.f32 %v3599, %v3934
      %v4011 = vadd.f32 %v3600, %v3930
      %v4012 = vadd.f32 %v3601, %v3934
      %v4013 = vadd.f32 %v3602, %v3930
      %v4014 = vadd.f32 %v3603, %v3934
      %v4015 = vadd.f32 %v3604, %v3930
      %v4016 = vadd.f32 %v3605, %v3934
      %v4017 = vadd.f32 %v3606, %v3930
      %v4018 = vadd.f32 %v3607, %v3934
      %v4019 = vadd.f32 %v3608, %v3930
      %v4020 = vadd.f32 %v3609, %v3934
      %v4021 = vadd.f32 %v3610, %v3930
      %v4022 = vadd.f32 %v3611, %v3934
      %v4023 = vadd.f32 %v3612, %v3930
      %v4024 = vadd.f32 %v3613, %v3934
      %v4025 = vadd.f32 %v3614, %v3930
      %v4026 = vadd.f32 %v3615, %v3934
      %v4027 = vadd.f32 %v3616, %v3930
      %v4028 = vadd.f32 %v3617, %v3934
      %v4029 = vadd.f32 %v3618, %v3930
      %v4030 = vadd.f32 %v3619, %v3934
      %v4031 = vadd.f32 %v3620, %v3930
      %v4032 = vadd.f32 %v3621, %v3934
      %v4033 = vadd.f32 %v3622, %v3930
      %v4034 = vadd.f32 %v3623, %v3934
      %v4035 = vadd.f32 %v3624, %v3930
      %v4036 = vadd.f32 %v3625, %v3934
      %v4037 = vadd.f32 %v3626, %v3930
      %v4038 = vadd.f32 %v3627, %v3934
      %v4039 = vadd.f32 %v3628, %v3930
      %v4040 = vadd.f32 %v3629, %v3934
      %v4041 = vadd.f32 %v3630, %v3930
      %v4042 = vadd.f32 %v3631, %v3934
      %v4043 = vadd.f32 %v3632, %v3930
      %v4044 = vadd.f32 %v3633, %v3934
      %v4045 = vadd.f32 %v3634, %v3930
      %v4046 = vadd.f32 %v3635, %v3934
      %v4047 = vadd.f32 %v3636, %v3930
      %v4048 = vadd.f32 %v3637, %v3934
      %v4049 = vadd.f32 %v3638, %v3930
      %v4050 = vadd.f32 %v3639, %v3934
      %v4051 = vadd.f32 %v3640, %v3930
      %v4052 = vadd.f32 %v3641, %v3934
      %v4053 = vadd.f32 %v3642, %v3930
      %v4054 = vadd.f32 %v3643, %v3934
      %v4055 = vadd.f32 %v3644, %v3930
      %v4056 = vadd.f32 %v3645, %v3934
      %v4057 = vadd.f32 %v3646, %v3930
      %v4058 = vadd.f32 %v3647, %v3934
      %v4059 = vadd.f32 %v3648, %v3930
      %v4060 = vadd.f32 %v3649, %v3934
      %v4061 = vadd.f32 %v3650, %v3930
      %v4062 = vadd.f32 %v3651, %v3934
      %v4063 = vadd.f32 %v3652, %v3930
      %v4064 = vadd.f32 %v3653, %v3934
      %v4065 = vadd.f32 %v3654, %v3930
      %v4066 = vadd.f32 %v3655, %v3934
      %v4067 = vadd.f32 %v3656, %v3930
      %v4068 = vadd.f32 %v3657, %v3934
      %v4069 = vadd.f32 %v3658, %v3930
      %v4070 = vadd.f32 %v3659, %v3934
      %v4071 = vadd.f32 %v3660, %v3930
      %v4072 = vadd.f32 %v3661, %v3934
      %v4073 = vadd.f32 %v3662, %v3930
      %v4074 = vadd.f32 %v3663, %v3934
      %v4075 = vadd.f32 %v3664, %v3930
      %v4076 = vadd.f32 %v3665, %v3934
      %v4077 = vadd.f32 %v3666, %v3930
      %v4078 = vadd.f32 %v3667, %v3934
      %v4079 = vadd.f32 %v3668, %v3930
      %v4080 = vadd.f32 %v3669, %v3934
      %v4081 = vadd.f32 %v3670, %v3930
      %v4082 = vadd.f32 %v3671, %v3934
      %v4083 = vadd.f32 %v3672, %v3930
      %v4084 = vadd.f32 %v3673, %v3934
      %v4085 = vadd.f32 %v3674, %v3930
      %v4086 = vadd.f32 %v3675, %v3934
      %v4087 = vadd.f32 %v3676, %v3930
      %v4088 = vadd.f32 %v3677, %v3934
      %v4089 = vadd.f32 %v3678, %v3930
      %v4090 = vadd.f32 %v3679, %v3934
      %v4091 = vadd.f32 %v3680, %v3930
      %v4092 = vadd.f32 %v3681, %v3934
      %v4093 = vadd.f32 %v3682, %v3930
      %v4094 = vadd.f32 %v3683, %v3934
      %v4095 = vadd.f32 %v3684, %v3930
      %v4096 = vadd.f32 %v3685, %v3934
      %v4097 = vadd.f32 %v3686, %v3930
      %v4098 = vadd.f32 %v3687, %v3934
      %v4099 = vadd.f32 %v3688, %v3930
      %v4100 = vadd.f32 %v3689, %v3934
      %v4101 = vadd.f32 %v3690, %v3930
      %v4102 = vadd.f32 %v3691, %v3934
      %v4103 = vadd.f32 %v3692, %v3930
      %v4104 = vadd.f32 %v3693, %v3934
      %v4105 = vadd.f32 %v3694, %v3930
      %v4106 = vadd.f32 %v3695, %v3934
      %v4107 = vadd.f32 %v3696, %v3930
      %v4108 = vadd.f32 %v3697, %v3934
      %v4109 = vadd.f32 %v3698, %v3930
      %v4110 = vadd.f32 %v3699, %v3934
      %v4111 = vadd.f32 %v3700, %v3930
      %v4112 = vadd.f32 %v3701, %v3934
      %v4113 = vadd.f32 %v3702, %v3930
      %v4114 = vadd.f32 %v3703, %v3934
      %v4115 = vadd.f32 %v3704, %v3930
      %v4116 = vadd.f32 %v3705, %v3934
      %v4117 = vadd.f32 %v3706, %v3930
      %v4118 = vadd.f32 %v3707, %v3934
      %v4119 = vadd.f32 %v3708, %v3930
      %v4120 = vadd.f32 %v3709, %v3934
      %v4121 = vadd.f32 %v3710, %v3930
      %v4122 = vadd.f32 %v3711, %v3934
      %v4123 = vadd.f32 %v3712, %v3930
      %v4124 = vadd.f32 %v3713, %v3934
      %v4125 = vadd.f32 %v3714, %v3930
      %v4126 = vadd.f32 %v3715, %v3934
      %v4127 = vadd.f32 %v3716, %v3930
      %v4128 = vadd.f32 %v3717, %v3934
      %v4129 = vadd.f32 %v3718, %v3930
      %v4130 = vadd.f32 %v3719, %v3934
      %v4131 = vadd.f32 %v3720, %v3930
      %v4132 = vadd.f32 %v3721, %v3934
      %v4133 = vadd.f32 %v3722, %v3930
      %v4134 = vadd.f32 %v3723, %v3934
      %v4135 = vadd.f32 %v3724, %v3930
      %v4136 = vadd.f32 %v3725, %v3934
      %v4137 = vadd.f32 %v3726, %v3930
      %v4138 = vadd.f32 %v3727, %v3934
      %v4139 = vadd.f32 %v3728, %v3930
      %v4140 = vadd.f32 %v3729, %v3934
      %v4141 = vadd.f32 %v3730, %v3930
      %v4142 = vadd.f32 %v3731, %v3934
      %v4143 = vadd.f32 %v3732, %v3930
      %v4144 = vadd.f32 %v3733, %v3934
      %v4145 = vadd.f32 %v3734, %v3930
      %v4146 = vadd.f32 %v3735, %v3934
      %v4147 = vadd.f32 %v3736, %v3930
      %v4148 = vadd.f32 %v3737, %v3934
      %v4149 = vadd.f32 %v3738, %v3930
      %v4150 = vadd.f32 %v3739, %v3934
      %v4151 = vadd.f32 %v3740, %v3930
      %v4152 = vadd.f32 %v3741, %v3934
      %v4153 = vadd.f32 %v3742, %v3930
      %v4154 = vadd.f32 %v3743, %v3934
      %v4155 = vadd.f32 %v3744, %v3930
      %v4156 = vadd.f32 %v3745, %v3934
      %v4157 = vadd.f32 %v3746, %v3930
      %v4158 = vadd.f32 %v3747, %v3934
      %v4159 = vadd.f32 %v3748, %v3930
      %v4160 = vadd.f32 %v3749, %v3934
      %v4161 = vadd.f32 %v3750, %v3930
      %v4162 = vadd.f32 %v3751, %v3934
      %v4163 = vadd.f32 %v3752, %v3930
      %v4164 = vadd.f32 %v3753, %v3934
      %v4165 = vadd.f32 %v3754, %v3930
      %v4166 = vadd.f32 %v3755, %v3934
      %v4167 = vadd.f32 %v3756, %v3930
      %v4168 = vadd.f32 %v3757, %v3934
      %v4169 = vadd.f32 %v3758, %v3930
      %v4170 = vadd.f32 %v3759, %v3934
      %v4171 = vadd.f32 %v3760, %v3930
      %v4172 = vadd.f32 %v3761, %v3934
      %v4173 = vadd.f32 %v3762, %v3930
      %v4174 = vadd.f32 %v3763, %v3934
      %v4175 = vadd.f32 %v3764, %v3930
      %v4176 = vadd.f32 %v3765, %v3934
      %v4177 = vadd.f32 %v3766, %v3930
      %v4178 = vadd.f32 %v3767, %v3934
      %v4179 = vadd.f32 %v3768, %v3930
      %v4180 = vadd.f32 %v3769, %v3934
      %v4181 = vadd.f32 %v3770, %v3930
      %v4182 = vadd.f32 %v3771, %v3934
      %v4183 = vadd.f32 %v3772, %v3930
      %v4184 = vadd.f32 %v3773, %v3934
      %v4185 = vadd.f32 %v3774, %v3930
      %v4186 = vadd.f32 %v3775, %v3934
      %v4187 = vadd.f32 %v3776, %v3930
      %v4188 = vadd.f32 %v3777, %v3934
      %v4189 = vadd.f32 %v3778, %v3930
      %v4190 = vadd.f32 %v3779, %v3934
      %v4191 = vadd.f32 %v3780, %v3930
      %v4192 = vadd.f32 %v3781, %v3934
      %v4193 = vadd.f32 %v3782, %v3930
      %v4194 = vadd.f32 %v3783, %v3934
      %v4195 = vadd.f32 %v3784, %v3930
      %v4196 = vadd.f32 %v3785, %v3934
      %v4197 = vadd.f32 %v3786, %v3930
      %v4198 = vadd.f32 %v3787, %v3934
      %v4199 = vadd.f32 %v3788, %v3930
      %v4200 = vadd.f32 %v3789, %v3934
      %v4201 = vadd.f32 %v3790, %v3930
      %v4202 = vadd.f32 %v3791, %v3934
      %v4203 = vadd.f32 %v3792, %v3930
      %v4204 = vadd.f32 %v3793, %v3934
      %v4205 = vadd.f32 %v3794, %v3930
      %v4206 = vadd.f32 %v3795, %v3934
      %v4207 = vadd.f32 %v3796, %v3930
      %v4208 = vadd.f32 %v3797, %v3934
      %v4209 = vadd.f32 %v3798, %v3930
      %v4210 = vadd.f32 %v3799, %v3934
      %v4211 = vadd.f32 %v3800, %v3930
      %v4212 = vadd.f32 %v3801, %v3934
      %v4213 = vadd.f32 %v3802, %v3930
      %v4214 = vadd.f32 %v3803, %v3934
      %v4215 = vadd.f32 %v3804, %v3930
      %v4216 = vadd.f32 %v3805, %v3934
      %v4217 = vadd.f32 %v3806, %v3930
      %v4218 = vadd.f32 %v3807, %v3934
      %v4219 = vadd.f32 %v3808, %v3930
      %v4220 = vadd.f32 %v3809, %v3934
      %v4221 = vadd.f32 %v3810, %v3930
      %v4222 = vadd.f32 %v3811, %v3934
      %v4223 = vadd.f32 %v3812, %v3930
      %v4224 = vadd.f32 %v3813, %v3934
      %v4225 = vadd.f32 %v3814, %v3930
      %v4226 = vadd.f32 %v3815, %v3934
      %v4227 = vadd.f32 %v3816, %v3930
      %v4228 = vadd.f32 %v3817, %v3934
      %v4229 = vadd.f32 %v3818, %v3930
      %v4230 = vadd.f32 %v3819, %v3934
      %v4231 = vadd.f32 %v3820, %v3930
      %v4232 = vadd.f32 %v3821, %v3934
      %v4233 = vadd.f32 %v3822, %v3930
      %v4234 = vadd.f32 %v3823, %v3934
      %v4235 = vadd.f32 %v3824, %v3930
      %v4236 = vadd.f32 %v3825, %v3934
      %v4237 = vadd.f32 %v3826, %v3930
      %v4238 = vadd.f32 %v3827, %v3934
      %v4239 = vadd.f32 %v3828, %v3930
      %v4240 = vadd.f32 %v3829, %v3934
      %v4241 = vadd.f32 %v3830, %v3930
      %v4242 = vadd.f32 %v3831, %v3934
      %v4243 = vadd.f32 %v3832, %v3930
      %v4244 = vadd.f32 %v3833, %v3934
      %v4245 = vadd.f32 %v3834, %v3930
      %v4246 = vadd.f32 %v3835, %v3934
      %v4247 = vadd.f32 %v3836, %v3930
      %v4248 = vadd.f32 %v3837, %v3934
      %v4249 = vadd.f32 %v3838, %v3930
      %v4250 = vadd.f32 %v3839, %v3934
      %v4251 = vadd.f32 %v3840, %v3930
      %v4252 = vadd.f32 %v3841, %v3934
      %v4253 = vadd.f32 %v3842, %v3930
      %v4254 = vadd.f32 %v3843, %v3934
      %v4255 = vadd.f32 %v3844, %v3930
      %v4256 = vadd.f32 %v3845, %v3934
      %v4257 = vadd.f32 %v3846, %v3930
      %v4258 = vadd.f32 %v3847, %v3934
      %v4259 = vadd.f32 %v3848, %v3930
      %v4260 = vadd.f32 %v3849, %v3934
      %v4261 = vadd.f32 %v3850, %v3930
      %v4262 = vadd.f32 %v3851, %v3934
      %v4263 = vadd.f32 %v3852, %v3930
      %v4264 = vadd.f32 %v3853, %v3934
      %v4265 = vadd.f32 %v3854, %v3930
      %v4266 = vadd.f32 %v3855, %v3934
      %v4267 = vadd.f32 %v3856, %v3930
      %v4268 = vadd.f32 %v3857, %v3934
      %v4269 = vadd.f32 %v3858, %v3930
      %v4270 = vadd.f32 %v3859, %v3934
      %v4271 = vadd.f32 %v3860, %v3930
      %v4272 = vadd.f32 %v3861, %v3934
      %v4273 = vadd.f32 %v3862, %v3930
      %v4274 = vadd.f32 %v3863, %v3934
      %v4275 = vadd.f32 %v3864, %v3930
      %v4276 = vadd.f32 %v3865, %v3934
      %v4277 = vadd.f32 %v3866, %v3930
      %v4278 = vadd.f32 %v3867, %v3934
      %v4279 = vadd.f32 %v3868, %v3930
      %v4280 = vadd.f32 %v3869, %v3934
      %v4281 = vadd.f32 %v3870, %v3930
      %v4282 = vadd.f32 %v3871, %v3934
      %v4283 = vadd.f32 %v3872, %v3930
      %v4284 = vadd.f32 %v3873, %v3934
      %v4285 = vadd.f32 %v3874, %v3930
      %v4286 = vadd.f32 %v3875, %v3934
      %v4287 = vadd.f32 %v3876, %v3930
      %v4288 = vadd.f32 %v3877, %v3934
      %v4289 = vadd.f32 %v3878, %v3930
      %v4290 = vadd.f32 %v3879, %v3934
      %v4291 = vadd.f32 %v3880, %v3930
      %v4292 = vadd.f32 %v3881, %v3934
      %v4293 = vadd.f32 %v3882, %v3930
      %v4294 = vadd.f32 %v3883, %v3934
      %v4295 = vadd.f32 %v3884, %v3930
      %v4296 = vadd.f32 %v3885, %v3934
      %v4297 = vadd.f32 %v3886, %v3930
      %v4298 = vadd.f32 %v3887, %v3934
      %v4299 = vadd.f32 %v3888, %v3930
      %v4300 = vadd.f32 %v3889, %v3934
      %v4301 = vadd.f32 %v3890, %v3930
      %v4302 = vadd.f32 %v3891, %v3934
      %v4303 = vadd.f32 %v3892, %v3930
      %v4304 = vadd.f32 %v3893, %v3934
      %v4305 = vadd.f32 %v3894, %v3930
      %v4306 = vadd.f32 %v3895, %v3934
      %v4307 = vadd.f32 %v3896, %v3930
      %v4308 = vadd.f32 %v3897, %v3934
      %v4309 = vadd.f32 %v3898, %v3930
      %v4310 = vadd.f32 %v3899, %v3934
      %v4311 = vadd.f32 %v3900, %v3930
      %v4312 = vadd.f32 %v3901, %v3934
      %v4313 = vadd.f32 %v3902, %v3930
      %v4314 = vadd.f32 %v3903, %v3934
      %v4315 = vadd.f32 %v3904, %v3930
      %v4316 = vadd.f32 %v3905, %v3934
      %v4317 = vadd.f32 %v3906, %v3930
      %v4318 = vadd.f32 %v3907, %v3934
      %v4319 = vadd.f32 %v3908, %v3930
      %v4320 = vadd.f32 %v3909, %v3934
      %v4321 = vadd.f32 %v3910, %v3930
      %v4322 = vadd.f32 %v3911, %v3934
      %v4323 = vadd.f32 %v3912, %v3930
      %v4324 = vadd.f32 %v3913, %v3934
      %v4325 = vadd.f32 %v3914, %v3930
      %v4326 = vadd.f32 %v3915, %v3934
      %v4327 = vmax.f32 %v3935, 0.0
      %v4328 = vmax.f32 %v3936, 0.0
      %v4329 = vmax.f32 %v3937, 0.0
      %v4330 = vmax.f32 %v3938, 0.0
      %v4331 = vmax.f32 %v3939, 0.0
      %v4332 = vmax.f32 %v3940, 0.0
      %v4333 = vmax.f32 %v3941, 0.0
      %v4334 = vmax.f32 %v3942, 0.0
      %v4335 = vmax.f32 %v3943, 0.0
      %v4336 = vmax.f32 %v3944, 0.0
      %v4337 = vmax.f32 %v3945, 0.0
      %v4338 = vmax.f32 %v3946, 0.0
      %v4339 = vmax.f32 %v3947, 0.0
      %v4340 = vmax.f32 %v3948, 0.0
      %v4341 = vmax.f32 %v3949, 0.0
      %v4342 = vmax.f32 %v3950, 0.0
      %v4343 = vmax.f32 %v3951, 0.0
      %v4344 = vmax.f32 %v3952, 0.0
      %v4345 = vmax.f32 %v3953, 0.0
      %v4346 = vmax.f32 %v3954, 0.0
      %v4347 = vmax.f32 %v3955, 0.0
      %v4348 = vmax.f32 %v3956, 0.0
      %v4349 = vmax.f32 %v3957, 0.0
      %v4350 = vmax.f32 %v3958, 0.0
      %v4351 = vmax.f32 %v3959, 0.0
      %v4352 = vmax.f32 %v3960, 0.0
      %v4353 = vmax.f32 %v3961, 0.0
      %v4354 = vmax.f32 %v3962, 0.0
      %v4355 = vmax.f32 %v3963, 0.0
      %v4356 = vmax.f32 %v3964, 0.0
      %v4357 = vmax.f32 %v3965, 0.0
      %v4358 = vmax.f32 %v3966, 0.0
      %v4359 = vmax.f32 %v3967, 0.0
      %v4360 = vmax.f32 %v3968, 0.0
      %v4361 = vmax.f32 %v3969, 0.0
      %v4362 = vmax.f32 %v3970, 0.0
      %v4363 = vmax.f32 %v3971, 0.0
      %v4364 = vmax.f32 %v3972, 0.0
      %v4365 = vmax.f32 %v3973, 0.0
      %v4366 = vmax.f32 %v3974, 0.0
      %v4367 = vmax.f32 %v3975, 0.0
      %v4368 = vmax.f32 %v3976, 0.0
      %v4369 = vmax.f32 %v3977, 0.0
      %v4370 = vmax.f32 %v3978, 0.0
      %v4371 = vmax.f32 %v3979, 0.0
      %v4372 = vmax.f32 %v3980, 0.0
      %v4373 = vmax.f32 %v3981, 0.0
      %v4374 = vmax.f32 %v3982, 0.0
      %v4375 = vmax.f32 %v3983, 0.0
      %v4376 = vmax.f32 %v3984, 0.0
      %v4377 = vmax.f32 %v3985, 0.0
      %v4378 = vmax.f32 %v3986, 0.0
      %v4379 = vmax.f32 %v3987, 0.0
      %v4380 = vmax.f32 %v3988, 0.0
      %v4381 = vmax.f32 %v3989, 0.0
      %v4382 = vmax.f32 %v3990, 0.0
      %v4383 = vmax.f32 %v3991, 0.0
      %v4384 = vmax.f32 %v3992, 0.0
      %v4385 = vmax.f32 %v3993, 0.0
      %v4386 = vmax.f32 %v3994, 0.0
      %v4387 = vmax.f32 %v3995, 0.0
      %v4388 = vmax.f32 %v3996, 0.0
      %v4389 = vmax.f32 %v3997, 0.0
      %v4390 = vmax.f32 %v3998, 0.0
      %v4391 = vmax.f32 %v3999, 0.0
      %v4392 = vmax.f32 %v4000, 0.0
      %v4393 = vmax.f32 %v4001, 0.0
      %v4394 = vmax.f32 %v4002, 0.0
      %v4395 = vmax.f32 %v4003, 0.0
      %v4396 = vmax.f32 %v4004, 0.0
      %v4397 = vmax.f32 %v4005, 0.0
      %v4398 = vmax.f32 %v4006, 0.0
      %v4399 = vmax.f32 %v4007, 0.0
      %v4400 = vmax.f32 %v4008, 0.0
      %v4401 = vmax.f32 %v4009, 0.0
      %v4402 = vmax.f32 %v4010, 0.0
      %v4403 = vmax.f32 %v4011, 0.0
      %v4404 = vmax.f32 %v4012, 0.0
      %v4405 = vmax.f32 %v4013, 0.0
      %v4406 = vmax.f32 %v4014, 0.0
      %v4407 = vmax.f32 %v4015, 0.0
      %v4408 = vmax.f32 %v4016, 0.0
      %v4409 = vmax.f32 %v4017, 0.0
      %v4410 = vmax.f32 %v4018, 0.0
      %v4411 = vmax.f32 %v4019, 0.0
      %v4412 = vmax.f32 %v4020, 0.0
      %v4413 = vmax.f32 %v4021, 0.0
      %v4414 = vmax.f32 %v4022, 0.0
      %v4415 = vmax.f32 %v4023, 0.0
      %v4416 = vmax.f32 %v4024, 0.0
      %v4417 = vmax.f32 %v4025, 0.0
      %v4418 = vmax.f32 %v4026, 0.0
      %v4419 = vmax.f32 %v4027, 0.0
      %v4420 = vmax.f32 %v4028, 0.0
      %v4421 = vmax.f32 %v4029, 0.0
      %v4422 = vmax.f32 %v4030, 0.0
      %v4423 = vmax.f32 %v4031, 0.0
      %v4424 = vmax.f32 %v4032, 0.0
      %v4425 = vmax.f32 %v4033, 0.0
      %v4426 = vmax.f32 %v4034, 0.0
      %v4427 = vmax.f32 %v4035, 0.0
      %v4428 = vmax.f32 %v4036, 0.0
      %v4429 = vmax.f32 %v4037, 0.0
      %v4430 = vmax.f32 %v4038, 0.0
      %v4431 = vmax.f32 %v4039, 0.0
      %v4432 = vmax.f32 %v4040, 0.0
      %v4433 = vmax.f32 %v4041, 0.0
      %v4434 = vmax.f32 %v4042, 0.0
      %v4435 = vmax.f32 %v4043, 0.0
      %v4436 = vmax.f32 %v4044, 0.0
      %v4437 = vmax.f32 %v4045, 0.0
      %v4438 = vmax.f32 %v4046, 0.0
      %v4439 = vmax.f32 %v4047, 0.0
      %v4440 = vmax.f32 %v4048, 0.0
      %v4441 = vmax.f32 %v4049, 0.0
      %v4442 = vmax.f32 %v4050, 0.0
      %v4443 = vmax.f32 %v4051, 0.0
      %v4444 = vmax.f32 %v4052, 0.0
      %v4445 = vmax.f32 %v4053, 0.0
      %v4446 = vmax.f32 %v4054, 0.0
      %v4447 = vmax.f32 %v4055, 0.0
      %v4448 = vmax.f32 %v4056, 0.0
      %v4449 = vmax.f32 %v4057, 0.0
      %v4450 = vmax.f32 %v4058, 0.0
      %v4451 = vmax.f32 %v4059, 0.0
      %v4452 = vmax.f32 %v4060, 0.0
      %v4453 = vmax.f32 %v4061, 0.0
      %v4454 = vmax.f32 %v4062, 0.0
      %v4455 = vmax.f32 %v4063, 0.0
      %v4456 = vmax.f32 %v4064, 0.0
      %v4457 = vmax.f32 %v4065, 0.0
      %v4458 = vmax.f32 %v4066, 0.0
      %v4459 = vmax.f32 %v4067, 0.0
      %v4460 = vmax.f32 %v4068, 0.0
      %v4461 = vmax.f32 %v4069, 0.0
      %v4462 = vmax.f32 %v4070, 0.0
      %v4463 = vmax.f32 %v4071, 0.0
      %v4464 = vmax.f32 %v4072, 0.0
      %v4465 = vmax.f32 %v4073, 0.0
      %v4466 = vmax.f32 %v4074, 0.0
      %v4467 = vmax.f32 %v4075, 0.0
      %v4468 = vmax.f32 %v4076, 0.0
      %v4469 = vmax.f32 %v4077, 0.0
      %v4470 = vmax.f32 %v4078, 0.0
      %v4471 = vmax.f32 %v4079, 0.0
      %v4472 = vmax.f32 %v4080, 0.0
      %v4473 = vmax.f32 %v4081, 0.0
      %v4474 = vmax.f32 %v4082, 0.0
      %v4475 = vmax.f32 %v4083, 0.0
      %v4476 = vmax.f32 %v4084, 0.0
      %v4477 = vmax.f32 %v4085, 0.0
      %v4478 = vmax.f32 %v4086, 0.0
      %v4479 = vmax.f32 %v4087, 0.0
      %v4480 = vmax.f32 %v4088, 0.0
      %v4481 = vmax.f32 %v4089, 0.0
      %v4482 = vmax.f32 %v4090, 0.0
      %v4483 = vmax.f32 %v4091, 0.0
      %v4484 = vmax.f32 %v4092, 0.0
      %v4485 = vmax.f32 %v4093, 0.0
      %v4486 = vmax.f32 %v4094, 0.0
      %v4487 = vmax.f32 %v4095, 0.0
      %v4488 = vmax.f32 %v4096, 0.0
      %v4489 = vmax.f32 %v4097, 0.0
      %v4490 = vmax.f32 %v4098, 0.0
      %v4491 = vmax.f32 %v4099, 0.0
      %v4492 = vmax.f32 %v4100, 0.0
      %v4493 = vmax.f32 %v4101, 0.0
      %v4494 = vmax.f32 %v4102, 0.0
      %v4495 = vmax.f32 %v4103, 0.0
      %v4496 = vmax.f32 %v4104, 0.0
      %v4497 = vmax.f32 %v4105, 0.0
      %v4498 = vmax.f32 %v4106, 0.0
      %v4499 = vmax.f32 %v4107, 0.0
      %v4500 = vmax.f32 %v4108, 0.0
      %v4501 = vmax.f32 %v4109, 0.0
      %v4502 = vmax.f32 %v4110, 0.0
      %v4503 = vmax.f32 %v4111, 0.0
      %v4504 = vmax.f32 %v4112, 0.0
      %v4505 = vmax.f32 %v4113, 0.0
      %v4506 = vmax.f32 %v4114, 0.0
      %v4507 = vmax.f32 %v4115, 0.0
      %v4508 = vmax.f32 %v4116, 0.0
      %v4509 = vmax.f32 %v4117, 0.0
      %v4510 = vmax.f32 %v4118, 0.0
      %v4511 = vmax.f32 %v4119, 0.0
      %v4512 = vmax.f32 %v4120, 0.0
      %v4513 = vmax.f32 %v4121, 0.0
      %v4514 = vmax.f32 %v4122, 0.0
      %v4515 = vmax.f32 %v4123, 0.0
      %v4516 = vmax.f32 %v4124, 0.0
      %v4517 = vmax.f32 %v4125, 0.0
      %v4518 = vmax.f32 %v4126, 0.0
      %v4519 = vmax.f32 %v4127, 0.0
      %v4520 = vmax.f32 %v4128, 0.0
      %v4521 = vmax.f32 %v4129, 0.0
      %v4522 = vmax.f32 %v4130, 0.0
      %v4523 = vmax.f32 %v4131, 0.0
      %v4524 = vmax.f32 %v4132, 0.0
      %v4525 = vmax.f32 %v4133, 0.0
      %v4526 = vmax.f32 %v4134, 0.0
      %v4527 = vmax.f32 %v4135, 0.0
      %v4528 = vmax.f32 %v4136, 0.0
      %v4529 = vmax.f32 %v4137, 0.0
      %v4530 = vmax.f32 %v4138, 0.0
      %v4531 = vmax.f32 %v4139, 0.0
      %v4532 = vmax.f32 %v4140, 0.0
      %v4533 = vmax.f32 %v4141, 0.0
      %v4534 = vmax.f32 %v4142, 0.0
      %v4535 = vmax.f32 %v4143, 0.0
      %v4536 = vmax.f32 %v4144, 0.0
      %v4537 = vmax.f32 %v4145, 0.0
      %v4538 = vmax.f32 %v4146, 0.0
      %v4539 = vmax.f32 %v4147, 0.0
      %v4540 = vmax.f32 %v4148, 0.0
      %v4541 = vmax.f32 %v4149, 0.0
      %v4542 = vmax.f32 %v4150, 0.0
      %v4543 = vmax.f32 %v4151, 0.0
      %v4544 = vmax.f32 %v4152, 0.0
      %v4545 = vmax.f32 %v4153, 0.0
      %v4546 = vmax.f32 %v4154, 0.0
      %v4547 = vmax.f32 %v4155, 0.0
      %v4548 = vmax.f32 %v4156, 0.0
      %v4549 = vmax.f32 %v4157, 0.0
      %v4550 = vmax.f32 %v4158, 0.0
      %v4551 = vmax.f32 %v4159, 0.0
      %v4552 = vmax.f32 %v4160, 0.0
      %v4553 = vmax.f32 %v4161, 0.0
      %v4554 = vmax.f32 %v4162, 0.0
      %v4555 = vmax.f32 %v4163, 0.0
      %v4556 = vmax.f32 %v4164, 0.0
      %v4557 = vmax.f32 %v4165, 0.0
      %v4558 = vmax.f32 %v4166, 0.0
      %v4559 = vmax.f32 %v4167, 0.0
      %v4560 = vmax.f32 %v4168, 0.0
      %v4561 = vmax.f32 %v4169, 0.0
      %v4562 = vmax.f32 %v4170, 0.0
      %v4563 = vmax.f32 %v4171, 0.0
      %v4564 = vmax.f32 %v4172, 0.0
      %v4565 = vmax.f32 %v4173, 0.0
      %v4566 = vmax.f32 %v4174, 0.0
      %v4567 = vmax.f32 %v4175, 0.0
      %v4568 = vmax.f32 %v4176, 0.0
      %v4569 = vmax.f32 %v4177, 0.0
      %v4570 = vmax.f32 %v4178, 0.0
      %v4571 = vmax.f32 %v4179, 0.0
      %v4572 = vmax.f32 %v4180, 0.0
      %v4573 = vmax.f32 %v4181, 0.0
      %v4574 = vmax.f32 %v4182, 0.0
      %v4575 = vmax.f32 %v4183, 0.0
      %v4576 = vmax.f32 %v4184, 0.0
      %v4577 = vmax.f32 %v4185, 0.0
      %v4578 = vmax.f32 %v4186, 0.0
      %v4579 = vmax.f32 %v4187, 0.0
      %v4580 = vmax.f32 %v4188, 0.0
      %v4581 = vmax.f32 %v4189, 0.0
      %v4582 = vmax.f32 %v4190, 0.0
      %v4583 = vmax.f32 %v4191, 0.0
      %v4584 = vmax.f32 %v4192, 0.0
      %v4585 = vmax.f32 %v4193, 0.0
      %v4586 = vmax.f32 %v4194, 0.0
      %v4587 = vmax.f32 %v4195, 0.0
      %v4588 = vmax.f32 %v4196, 0.0
      %v4589 = vmax.f32 %v4197, 0.0
      %v4590 = vmax.f32 %v4198, 0.0
      %v4591 = vmax.f32 %v4199, 0.0
      %v4592 = vmax.f32 %v4200, 0.0
      %v4593 = vmax.f32 %v4201, 0.0
      %v4594 = vmax.f32 %v4202, 0.0
      %v4595 = vmax.f32 %v4203, 0.0
      %v4596 = vmax.f32 %v4204, 0.0
      %v4597 = vmax.f32 %v4205, 0.0
      %v4598 = vmax.f32 %v4206, 0.0
      %v4599 = vmax.f32 %v4207, 0.0
      %v4600 = vmax.f32 %v4208, 0.0
      %v4601 = vmax.f32 %v4209, 0.0
      %v4602 = vmax.f32 %v4210, 0.0
      %v4603 = vmax.f32 %v4211, 0.0
      %v4604 = vmax.f32 %v4212, 0.0
      %v4605 = vmax.f32 %v4213, 0.0
      %v4606 = vmax.f32 %v4214, 0.0
      %v4607 = vmax.f32 %v4215, 0.0
      %v4608 = vmax.f32 %v4216, 0.0
      %v4609 = vmax.f32 %v4217, 0.0
      %v4610 = vmax.f32 %v4218, 0.0
      %v4611 = vmax.f32 %v4219, 0.0
      %v4612 = vmax.f32 %v4220, 0.0
      %v4613 = vmax.f32 %v4221, 0.0
      %v4614 = vmax.f32 %v4222, 0.0
      %v4615 = vmax.f32 %v4223, 0.0
      %v4616 = vmax.f32 %v4224, 0.0
      %v4617 = vmax.f32 %v4225, 0.0
      %v4618 = vmax.f32 %v4226, 0.0
      %v4619 = vmax.f32 %v4227, 0.0
      %v4620 = vmax.f32 %v4228, 0.0
      %v4621 = vmax.f32 %v4229, 0.0
      %v4622 = vmax.f32 %v4230, 0.0
      %v4623 = vmax.f32 %v4231, 0.0
      %v4624 = vmax.f32 %v4232, 0.0
      %v4625 = vmax.f32 %v4233, 0.0
      %v4626 = vmax.f32 %v4234, 0.0
      %v4627 = vmax.f32 %v4235, 0.0
      %v4628 = vmax.f32 %v4236, 0.0
      %v4629 = vmax.f32 %v4237, 0.0
      %v4630 = vmax.f32 %v4238, 0.0
      %v4631 = vmax.f32 %v4239, 0.0
      %v4632 = vmax.f32 %v4240, 0.0
      %v4633 = vmax.f32 %v4241, 0.0
      %v4634 = vmax.f32 %v4242, 0.0
      %v4635 = vmax.f32 %v4243, 0.0
      %v4636 = vmax.f32 %v4244, 0.0
      %v4637 = vmax.f32 %v4245, 0.0
      %v4638 = vmax.f32 %v4246, 0.0
      %v4639 = vmax.f32 %v4247, 0.0
      %v4640 = vmax.f32 %v4248, 0.0
      %v4641 = vmax.f32 %v4249, 0.0
      %v4642 = vmax.f32 %v4250, 0.0
      %v4643 = vmax.f32 %v4251, 0.0
      %v4644 = vmax.f32 %v4252, 0.0
      %v4645 = vmax.f32 %v4253, 0.0
      %v4646 = vmax.f32 %v4254, 0.0
      %v4647 = vmax.f32 %v4255, 0.0
      %v4648 = vmax.f32 %v4256, 0.0
      %v4649 = vmax.f32 %v4257, 0.0
      %v4650 = vmax.f32 %v4258, 0.0
      %v4651 = vmax.f32 %v4259, 0.0
      %v4652 = vmax.f32 %v4260, 0.0
      %v4653 = vmax.f32 %v4261, 0.0
      %v4654 = vmax.f32 %v4262, 0.0
      %v4655 = vmax.f32 %v4263, 0.0
      %v4656 = vmax.f32 %v4264, 0.0
      %v4657 = vmax.f32 %v4265, 0.0
      %v4658 = vmax.f32 %v4266, 0.0
      %v4659 = vmax.f32 %v4267, 0.0
      %v4660 = vmax.f32 %v4268, 0.0
      %v4661 = vmax.f32 %v4269, 0.0
      %v4662 = vmax.f32 %v4270, 0.0
      %v4663 = vmax.f32 %v4271, 0.0
      %v4664 = vmax.f32 %v4272, 0.0
      %v4665 = vmax.f32 %v4273, 0.0
      %v4666 = vmax.f32 %v4274, 0.0
      %v4667 = vmax.f32 %v4275, 0.0
      %v4668 = vmax.f32 %v4276, 0.0
      %v4669 = vmax.f32 %v4277, 0.0
      %v4670 = vmax.f32 %v4278, 0.0
      %v4671 = vmax.f32 %v4279, 0.0
      %v4672 = vmax.f32 %v4280, 0.0
      %v4673 = vmax.f32 %v4281, 0.0
      %v4674 = vmax.f32 %v4282, 0.0
      %v4675 = vmax.f32 %v4283, 0.0
      %v4676 = vmax.f32 %v4284, 0.0
      %v4677 = vmax.f32 %v4285, 0.0
      %v4678 = vmax.f32 %v4286, 0.0
      %v4679 = vmax.f32 %v4287, 0.0
      %v4680 = vmax.f32 %v4288, 0.0
      %v4681 = vmax.f32 %v4289, 0.0
      %v4682 = vmax.f32 %v4290, 0.0
      %v4683 = vmax.f32 %v4291, 0.0
      %v4684 = vmax.f32 %v4292, 0.0
      %v4685 = vmax.f32 %v4293, 0.0
      %v4686 = vmax.f32 %v4294, 0.0
      %v4687 = vmax.f32 %v4295, 0.0
      %v4688 = vmax.f32 %v4296, 0.0
      %v4689 = vmax.f32 %v4297, 0.0
      %v4690 = vmax.f32 %v4298, 0.0
      %v4691 = vmax.f32 %v4299, 0.0
      %v4692 = vmax.f32 %v4300, 0.0
      %v4693 = vmax.f32 %v4301, 0.0
      %v4694 = vmax.f32 %v4302, 0.0
      %v4695 = vmax.f32 %v4303, 0.0
      %v4696 = vmax.f32 %v4304, 0.0
      %v4697 = vmax.f32 %v4305, 0.0
      %v4698 = vmax.f32 %v4306, 0.0
      %v4699 = vmax.f32 %v4307, 0.0
      %v4700 = vmax.f32 %v4308, 0.0
      %v4701 = vmax.f32 %v4309, 0.0
      %v4702 = vmax.f32 %v4310, 0.0
      %v4703 = vmax.f32 %v4311, 0.0
      %v4704 = vmax.f32 %v4312, 0.0
      %v4705 = vmax.f32 %v4313, 0.0
      %v4706 = vmax.f32 %v4314, 0.0
      %v4707 = vmax.f32 %v4315, 0.0
      %v4708 = vmax.f32 %v4316, 0.0
      %v4709 = vmax.f32 %v4317, 0.0
      %v4710 = vmax.f32 %v4318, 0.0
      %v4711 = vmax.f32 %v4319, 0.0
      %v4712 = vmax.f32 %v4320, 0.0
      %v4713 = vmax.f32 %v4321, 0.0
      %v4714 = vmax.f32 %v4322, 0.0
      %v4715 = vmax.f32 %v4323, 0.0
      %v4716 = vmax.f32 %v4324, 0.0
      %v4717 = vmax.f32 %v4325, 0.0
      %v4718 = vmax.f32 %v4326, 0.0
      %v4719 = vlaneseq
      %v4720 = vshrl.u32 %v4719, 7
      %v4721 = vsub.s32 1, %v4720
      %v4722 = vrot.slane %v3523, %v4721
      %v4723 = vlaneseq
      %v4724 = vshrl.u32 %v4723, 7
      %v4725 = vsub.s32 5, %v4724
      %v4726 = vrot.slane %v3523, %v4725
      %v4729 = vlaneseq
      %v4730 = vshrl.u32 %v4729, 7
      %v4731 = vsub.s32 1, %v4730
      %v4732 = vrot.slane %v4722, %v4731
      %v4733 = vlaneseq
      %v4734 = vshrl.u32 %v4733, 7
      %v4735 = vsub.s32 1, %v4734
      %v4736 = vrot.slane %v4726, %v4735
      %v4737 = vmul.f32 %v4327, %v4732
      %v4738 = vmul.f32 %v4328, %v4736
      %v4739 = vmul.f32 %v4329, %v4732
      %v4740 = vmul.f32 %v4330, %v4736
      %v4741 = vmul.f32 %v4331, %v4732
      %v4742 = vmul.f32 %v4332, %v4736
      %v4743 = vmul.f32 %v4333, %v4732
      %v4744 = vmul.f32 %v4334, %v4736
      %v4745 = vmul.f32 %v4335, %v4732
      %v4746 = vmul.f32 %v4336, %v4736
      %v4747 = vmul.f32 %v4337, %v4732
      %v4748 = vmul.f32 %v4338, %v4736
      %v4749 = vmul.f32 %v4339, %v4732
      %v4750 = vmul.f32 %v4340, %v4736
      %v4751 = vmul.f32 %v4341, %v4732
      %v4752 = vmul.f32 %v4342, %v4736
      %v4753 = vmul.f32 %v4343, %v4732
      %v4754 = vmul.f32 %v4344, %v4736
      %v4755 = vmul.f32 %v4345, %v4732
      %v4756 = vmul.f32 %v4346, %v4736
      %v4757 = vmul.f32 %v4347, %v4732
      %v4758 = vmul.f32 %v4348, %v4736
      %v4759 = vmul.f32 %v4349, %v4732
      %v4760 = vmul.f32 %v4350, %v4736
      %v4761 = vmul.f32 %v4351, %v4732
      %v4762 = vmul.f32 %v4352, %v4736
      %v4763 = vmul.f32 %v4353, %v4732
      %v4764 = vmul.f32 %v4354, %v4736
      %v4765 = vmul.f32 %v4355, %v4732
      %v4766 = vmul.f32 %v4356, %v4736
      %v4767 = vmul.f32 %v4357, %v4732
      %v4768 = vmul.f32 %v4358, %v4736
      %v4769 = vmul.f32 %v4359, %v4732
      %v4770 = vmul.f32 %v4360, %v4736
      %v4771 = vmul.f32 %v4361, %v4732
      %v4772 = vmul.f32 %v4362, %v4736
      %v4773 = vmul.f32 %v4363, %v4732
      %v4774 = vmul.f32 %v4364, %v4736
      %v4775 = vmul.f32 %v4365, %v4732
      %v4776 = vmul.f32 %v4366, %v4736
      %v4777 = vmul.f32 %v4367, %v4732
      %v4778 = vmul.f32 %v4368, %v4736
      %v4779 = vmul.f32 %v4369, %v4732
      %v4780 = vmul.f32 %v4370, %v4736
      %v4781 = vmul.f32 %v4371, %v4732
      %v4782 = vmul.f32 %v4372, %v4736
      %v4783 = vmul.f32 %v4373, %v4732
      %v4784 = vmul.f32 %v4374, %v4736
      %v4785 = vmul.f32 %v4375, %v4732
      %v4786 = vmul.f32 %v4376, %v4736
      %v4787 = vmul.f32 %v4377, %v4732
      %v4788 = vmul.f32 %v4378, %v4736
      %v4789 = vmul.f32 %v4379, %v4732
      %v4790 = vmul.f32 %v4380, %v4736
      %v4791 = vmul.f32 %v4381, %v4732
      %v4792 = vmul.f32 %v4382, %v4736
      %v4793 = vmul.f32 %v4383, %v4732
      %v4794 = vmul.f32 %v4384, %v4736
      %v4795 = vmul.f32 %v4385, %v4732
      %v4796 = vmul.f32 %v4386, %v4736
      %v4797 = vmul.f32 %v4387, %v4732
      %v4798 = vmul.f32 %v4388, %v4736
      %v4799 = vmul.f32 %v4389, %v4732
      %v4800 = vmul.f32 %v4390, %v4736
      %v4801 = vmul.f32 %v4391, %v4732
      %v4802 = vmul.f32 %v4392, %v4736
      %v4803 = vmul.f32 %v4393, %v4732
      %v4804 = vmul.f32 %v4394, %v4736
      %v4805 = vmul.f32 %v4395, %v4732
      %v4806 = vmul.f32 %v4396, %v4736
      %v4807 = vmul.f32 %v4397, %v4732
      %v4808 = vmul.f32 %v4398, %v4736
      %v4809 = vmul.f32 %v4399, %v4732
      %v4810 = vmul.f32 %v4400, %v4736
      %v4811 = vmul.f32 %v4401, %v4732
      %v4812 = vmul.f32 %v4402, %v4736
      %v4813 = vmul.f32 %v4403, %v4732
      %v4814 = vmul.f32 %v4404, %v4736
      %v4815 = vmul.f32 %v4405, %v4732
      %v4816 = vmul.f32 %v4406, %v4736
      %v4817 = vmul.f32 %v4407, %v4732
      %v4818 = vmul.f32 %v4408, %v4736
      %v4819 = vmul.f32 %v4409, %v4732
      %v4820 = vmul.f32 %v4410, %v4736
      %v4821 = vmul.f32 %v4411, %v4732
      %v4822 = vmul.f32 %v4412, %v4736
      %v4823 = vmul.f32 %v4413, %v4732
      %v4824 = vmul.f32 %v4414, %v4736
      %v4825 = vmul.f32 %v4415, %v4732
      %v4826 = vmul.f32 %v4416, %v4736
      %v4827 = vmul.f32 %v4417, %v4732
      %v4828 = vmul.f32 %v4418, %v4736
      %v4829 = vmul.f32 %v4419, %v4732
      %v4830 = vmul.f32 %v4420, %v4736
      %v4831 = vmul.f32 %v4421, %v4732
      %v4832 = vmul.f32 %v4422, %v4736
      %v4833 = vmul.f32 %v4423, %v4732
      %v4834 = vmul.f32 %v4424, %v4736
      %v4835 = vmul.f32 %v4425, %v4732
      %v4836 = vmul.f32 %v4426, %v4736
      %v4837 = vmul.f32 %v4427, %v4732
      %v4838 = vmul.f32 %v4428, %v4736
      %v4839 = vmul.f32 %v4429, %v4732
      %v4840 = vmul.f32 %v4430, %v4736
      %v4841 = vmul.f32 %v4431, %v4732
      %v4842 = vmul.f32 %v4432, %v4736
      %v4843 = vmul.f32 %v4433, %v4732
      %v4844 = vmul.f32 %v4434, %v4736
      %v4845 = vmul.f32 %v4435, %v4732
      %v4846 = vmul.f32 %v4436, %v4736
      %v4847 = vmul.f32 %v4437, %v4732
      %v4848 = vmul.f32 %v4438, %v4736
      %v4849 = vmul.f32 %v4439, %v4732
      %v4850 = vmul.f32 %v4440, %v4736
      %v4851 = vmul.f32 %v4441, %v4732
      %v4852 = vmul.f32 %v4442, %v4736
      %v4853 = vmul.f32 %v4443, %v4732
      %v4854 = vmul.f32 %v4444, %v4736
      %v4855 = vmul.f32 %v4445, %v4732
      %v4856 = vmul.f32 %v4446, %v4736
      %v4857 = vmul.f32 %v4447, %v4732
      %v4858 = vmul.f32 %v4448, %v4736
      %v4859 = vmul.f32 %v4449, %v4732
      %v4860 = vmul.f32 %v4450, %v4736
      %v4861 = vmul.f32 %v4451, %v4732
      %v4862 = vmul.f32 %v4452, %v4736
      %v4863 = vmul.f32 %v4453, %v4732
      %v4864 = vmul.f32 %v4454, %v4736
      %v4865 = vmul.f32 %v4455, %v4732
      %v4866 = vmul.f32 %v4456, %v4736
      %v4867 = vmul.f32 %v4457, %v4732
      %v4868 = vmul.f32 %v4458, %v4736
      %v4869 = vmul.f32 %v4459, %v4732
      %v4870 = vmul.f32 %v4460, %v4736
      %v4871 = vmul.f32 %v4461, %v4732
      %v4872 = vmul.f32 %v4462, %v4736
      %v4873 = vmul.f32 %v4463, %v4732
      %v4874 = vmul.f32 %v4464, %v4736
      %v4875 = vmul.f32 %v4465, %v4732
      %v4876 = vmul.f32 %v4466, %v4736
      %v4877 = vmul.f32 %v4467, %v4732
      %v4878 = vmul.f32 %v4468, %v4736
      %v4879 = vmul.f32 %v4469, %v4732
      %v4880 = vmul.f32 %v4470, %v4736
      %v4881 = vmul.f32 %v4471, %v4732
      %v4882 = vmul.f32 %v4472, %v4736
      %v4883 = vmul.f32 %v4473, %v4732
      %v4884 = vmul.f32 %v4474, %v4736
      %v4885 = vmul.f32 %v4475, %v4732
      %v4886 = vmul.f32 %v4476, %v4736
      %v4887 = vmul.f32 %v4477, %v4732
      %v4888 = vmul.f32 %v4478, %v4736
      %v4889 = vmul.f32 %v4479, %v4732
      %v4890 = vmul.f32 %v4480, %v4736
      %v4891 = vmul.f32 %v4481, %v4732
      %v4892 = vmul.f32 %v4482, %v4736
      %v4893 = vmul.f32 %v4483, %v4732
      %v4894 = vmul.f32 %v4484, %v4736
      %v4895 = vmul.f32 %v4485, %v4732
      %v4896 = vmul.f32 %v4486, %v4736
      %v4897 = vmul.f32 %v4487, %v4732
      %v4898 = vmul.f32 %v4488, %v4736
      %v4899 = vmul.f32 %v4489, %v4732
      %v4900 = vmul.f32 %v4490, %v4736
      %v4901 = vmul.f32 %v4491, %v4732
      %v4902 = vmul.f32 %v4492, %v4736
      %v4903 = vmul.f32 %v4493, %v4732
      %v4904 = vmul.f32 %v4494, %v4736
      %v4905 = vmul.f32 %v4495, %v4732
      %v4906 = vmul.f32 %v4496, %v4736
      %v4907 = vmul.f32 %v4497, %v4732
      %v4908 = vmul.f32 %v4498, %v4736
      %v4909 = vmul.f32 %v4499, %v4732
      %v4910 = vmul.f32 %v4500, %v4736
      %v4911 = vmul.f32 %v4501, %v4732
      %v4912 = vmul.f32 %v4502, %v4736
      %v4913 = vmul.f32 %v4503, %v4732
      %v4914 = vmul.f32 %v4504, %v4736
      %v4915 = vmul.f32 %v4505, %v4732
      %v4916 = vmul.f32 %v4506, %v4736
      %v4917 = vmul.f32 %v4507, %v4732
      %v4918 = vmul.f32 %v4508, %v4736
      %v4919 = vmul.f32 %v4509, %v4732
      %v4920 = vmul.f32 %v4510, %v4736
      %v4921 = vmul.f32 %v4511, %v4732
      %v4922 = vmul.f32 %v4512, %v4736
      %v4923 = vmul.f32 %v4513, %v4732
      %v4924 = vmul.f32 %v4514, %v4736
      %v4925 = vmul.f32 %v4515, %v4732
      %v4926 = vmul.f32 %v4516, %v4736
      %v4927 = vmul.f32 %v4517, %v4732
      %v4928 = vmul.f32 %v4518, %v4736
      %v4929 = vmul.f32 %v4519, %v4732
      %v4930 = vmul.f32 %v4520, %v4736
      %v4931 = vmul.f32 %v4521, %v4732
      %v4932 = vmul.f32 %v4522, %v4736
      %v4933 = vmul.f32 %v4523, %v4732
      %v4934 = vmul.f32 %v4524, %v4736
      %v4935 = vmul.f32 %v4525, %v4732
      %v4936 = vmul.f32 %v4526, %v4736
      %v4937 = vmul.f32 %v4527, %v4732
      %v4938 = vmul.f32 %v4528, %v4736
      %v4939 = vmul.f32 %v4529, %v4732
      %v4940 = vmul.f32 %v4530, %v4736
      %v4941 = vmul.f32 %v4531, %v4732
      %v4942 = vmul.f32 %v4532, %v4736
      %v4943 = vmul.f32 %v4533, %v4732
      %v4944 = vmul.f32 %v4534, %v4736
      %v4945 = vmul.f32 %v4535, %v4732
      %v4946 = vmul.f32 %v4536, %v4736
      %v4947 = vmul.f32 %v4537, %v4732
      %v4948 = vmul.f32 %v4538, %v4736
      %v4949 = vmul.f32 %v4539, %v4732
      %v4950 = vmul.f32 %v4540, %v4736
      %v4951 = vmul.f32 %v4541, %v4732
      %v4952 = vmul.f32 %v4542, %v4736
      %v4953 = vmul.f32 %v4543, %v4732
      %v4954 = vmul.f32 %v4544, %v4736
      %v4955 = vmul.f32 %v4545, %v4732
      %v4956 = vmul.f32 %v4546, %v4736
      %v4957 = vmul.f32 %v4547, %v4732
      %v4958 = vmul.f32 %v4548, %v4736
      %v4959 = vmul.f32 %v4549, %v4732
      %v4960 = vmul.f32 %v4550, %v4736
      %v4961 = vmul.f32 %v4551, %v4732
      %v4962 = vmul.f32 %v4552, %v4736
      %v4963 = vmul.f32 %v4553, %v4732
      %v4964 = vmul.f32 %v4554, %v4736
      %v4965 = vmul.f32 %v4555, %v4732
      %v4966 = vmul.f32 %v4556, %v4736
      %v4967 = vmul.f32 %v4557, %v4732
      %v4968 = vmul.f32 %v4558, %v4736
      %v4969 = vmul.f32 %v4559, %v4732
      %v4970 = vmul.f32 %v4560, %v4736
      %v4971 = vmul.f32 %v4561, %v4732
      %v4972 = vmul.f32 %v4562, %v4736
      %v4973 = vmul.f32 %v4563, %v4732
      %v4974 = vmul.f32 %v4564, %v4736
      %v4975 = vmul.f32 %v4565, %v4732
      %v4976 = vmul.f32 %v4566, %v4736
      %v4977 = vmul.f32 %v4567, %v4732
      %v4978 = vmul.f32 %v4568, %v4736
      %v4979 = vmul.f32 %v4569, %v4732
      %v4980 = vmul.f32 %v4570, %v4736
      %v4981 = vmul.f32 %v4571, %v4732
      %v4982 = vmul.f32 %v4572, %v4736
      %v4983 = vmul.f32 %v4573, %v4732
      %v4984 = vmul.f32 %v4574, %v4736
      %v4985 = vmul.f32 %v4575, %v4732
      %v4986 = vmul.f32 %v4576, %v4736
      %v4987 = vmul.f32 %v4577, %v4732
      %v4988 = vmul.f32 %v4578, %v4736
      %v4989 = vmul.f32 %v4579, %v4732
      %v4990 = vmul.f32 %v4580, %v4736
      %v4991 = vmul.f32 %v4581, %v4732
      %v4992 = vmul.f32 %v4582, %v4736
      %v4993 = vmul.f32 %v4583, %v4732
      %v4994 = vmul.f32 %v4584, %v4736
      %v4995 = vmul.f32 %v4585, %v4732
      %v4996 = vmul.f32 %v4586, %v4736
      %v4997 = vmul.f32 %v4587, %v4732
      %v4998 = vmul.f32 %v4588, %v4736
      %v4999 = vmul.f32 %v4589, %v4732
      %v5000 = vmul.f32 %v4590, %v4736
      %v5001 = vmul.f32 %v4591, %v4732
      %v5002 = vmul.f32 %v4592, %v4736
      %v5003 = vmul.f32 %v4593, %v4732
      %v5004 = vmul.f32 %v4594, %v4736
      %v5005 = vmul.f32 %v4595, %v4732
      %v5006 = vmul.f32 %v4596, %v4736
      %v5007 = vmul.f32 %v4597, %v4732
      %v5008 = vmul.f32 %v4598, %v4736
      %v5009 = vmul.f32 %v4599, %v4732
      %v5010 = vmul.f32 %v4600, %v4736
      %v5011 = vmul.f32 %v4601, %v4732
      %v5012 = vmul.f32 %v4602, %v4736
      %v5013 = vmul.f32 %v4603, %v4732
      %v5014 = vmul.f32 %v4604, %v4736
      %v5015 = vmul.f32 %v4605, %v4732
      %v5016 = vmul.f32 %v4606, %v4736
      %v5017 = vmul.f32 %v4607, %v4732
      %v5018 = vmul.f32 %v4608, %v4736
      %v5019 = vmul.f32 %v4609, %v4732
      %v5020 = vmul.f32 %v4610, %v4736
      %v5021 = vmul.f32 %v4611, %v4732
      %v5022 = vmul.f32 %v4612, %v4736
      %v5023 = vmul.f32 %v4613, %v4732
      %v5024 = vmul.f32 %v4614, %v4736
      %v5025 = vmul.f32 %v4615, %v4732
      %v5026 = vmul.f32 %v4616, %v4736
      %v5027 = vmul.f32 %v4617, %v4732
      %v5028 = vmul.f32 %v4618, %v4736
      %v5029 = vmul.f32 %v4619, %v4732
      %v5030 = vmul.f32 %v4620, %v4736
      %v5031 = vmul.f32 %v4621, %v4732
      %v5032 = vmul.f32 %v4622, %v4736
      %v5033 = vmul.f32 %v4623, %v4732
      %v5034 = vmul.f32 %v4624, %v4736
      %v5035 = vmul.f32 %v4625, %v4732
      %v5036 = vmul.f32 %v4626, %v4736
      %v5037 = vmul.f32 %v4627, %v4732
      %v5038 = vmul.f32 %v4628, %v4736
      %v5039 = vmul.f32 %v4629, %v4732
      %v5040 = vmul.f32 %v4630, %v4736
      %v5041 = vmul.f32 %v4631, %v4732
      %v5042 = vmul.f32 %v4632, %v4736
      %v5043 = vmul.f32 %v4633, %v4732
      %v5044 = vmul.f32 %v4634, %v4736
      %v5045 = vmul.f32 %v4635, %v4732
      %v5046 = vmul.f32 %v4636, %v4736
      %v5047 = vmul.f32 %v4637, %v4732
      %v5048 = vmul.f32 %v4638, %v4736
      %v5049 = vmul.f32 %v4639, %v4732
      %v5050 = vmul.f32 %v4640, %v4736
      %v5051 = vmul.f32 %v4641, %v4732
      %v5052 = vmul.f32 %v4642, %v4736
      %v5053 = vmul.f32 %v4643, %v4732
      %v5054 = vmul.f32 %v4644, %v4736
      %v5055 = vmul.f32 %v4645, %v4732
      %v5056 = vmul.f32 %v4646, %v4736
      %v5057 = vmul.f32 %v4647, %v4732
      %v5058 = vmul.f32 %v4648, %v4736
      %v5059 = vmul.f32 %v4649, %v4732
      %v5060 = vmul.f32 %v4650, %v4736
      %v5061 = vmul.f32 %v4651, %v4732
      %v5062 = vmul.f32 %v4652, %v4736
      %v5063 = vmul.f32 %v4653, %v4732
      %v5064 = vmul.f32 %v4654, %v4736
      %v5065 = vmul.f32 %v4655, %v4732
      %v5066 = vmul.f32 %v4656, %v4736
      %v5067 = vmul.f32 %v4657, %v4732
      %v5068 = vmul.f32 %v4658, %v4736
      %v5069 = vmul.f32 %v4659, %v4732
      %v5070 = vmul.f32 %v4660, %v4736
      %v5071 = vmul.f32 %v4661, %v4732
      %v5072 = vmul.f32 %v4662, %v4736
      %v5073 = vmul.f32 %v4663, %v4732
      %v5074 = vmul.f32 %v4664, %v4736
      %v5075 = vmul.f32 %v4665, %v4732
      %v5076 = vmul.f32 %v4666, %v4736
      %v5077 = vmul.f32 %v4667, %v4732
      %v5078 = vmul.f32 %v4668, %v4736
      %v5079 = vmul.f32 %v4669, %v4732
      %v5080 = vmul.f32 %v4670, %v4736
      %v5081 = vmul.f32 %v4671, %v4732
      %v5082 = vmul.f32 %v4672, %v4736
      %v5083 = vmul.f32 %v4673, %v4732
      %v5084 = vmul.f32 %v4674, %v4736
      %v5085 = vmul.f32 %v4675, %v4732
      %v5086 = vmul.f32 %v4676, %v4736
      %v5087 = vmul.f32 %v4677, %v4732
      %v5088 = vmul.f32 %v4678, %v4736
      %v5089 = vmul.f32 %v4679, %v4732
      %v5090 = vmul.f32 %v4680, %v4736
      %v5091 = vmul.f32 %v4681, %v4732
      %v5092 = vmul.f32 %v4682, %v4736
      %v5093 = vmul.f32 %v4683, %v4732
      %v5094 = vmul.f32 %v4684, %v4736
      %v5095 = vmul.f32 %v4685, %v4732
      %v5096 = vmul.f32 %v4686, %v4736
      %v5097 = vmul.f32 %v4687, %v4732
      %v5098 = vmul.f32 %v4688, %v4736
      %v5099 = vmul.f32 %v4689, %v4732
      %v5100 = vmul.f32 %v4690, %v4736
      %v5101 = vmul.f32 %v4691, %v4732
      %v5102 = vmul.f32 %v4692, %v4736
      %v5103 = vmul.f32 %v4693, %v4732
      %v5104 = vmul.f32 %v4694, %v4736
      %v5105 = vmul.f32 %v4695, %v4732
      %v5106 = vmul.f32 %v4696, %v4736
      %v5107 = vmul.f32 %v4697, %v4732
      %v5108 = vmul.f32 %v4698, %v4736
      %v5109 = vmul.f32 %v4699, %v4732
      %v5110 = vmul.f32 %v4700, %v4736
      %v5111 = vmul.f32 %v4701, %v4732
      %v5112 = vmul.f32 %v4702, %v4736
      %v5113 = vmul.f32 %v4703, %v4732
      %v5114 = vmul.f32 %v4704, %v4736
      %v5115 = vmul.f32 %v4705, %v4732
      %v5116 = vmul.f32 %v4706, %v4736
      %v5117 = vmul.f32 %v4707, %v4732
      %v5118 = vmul.f32 %v4708, %v4736
      %v5119 = vmul.f32 %v4709, %v4732
      %v5120 = vmul.f32 %v4710, %v4736
      %v5121 = vmul.f32 %v4711, %v4732
      %v5122 = vmul.f32 %v4712, %v4736
      %v5123 = vmul.f32 %v4713, %v4732
      %v5124 = vmul.f32 %v4714, %v4736
      %v5125 = vmul.f32 %v4715, %v4732
      %v5126 = vmul.f32 %v4716, %v4736
      %v5127 = vmul.f32 %v4717, %v4732
      %v5128 = vmul.f32 %v4718, %v4736
      %v5129 = vlaneseq
      %v5130 = vshrl.u32 %v5129, 7
      %v5131 = vsub.s32 2, %v5130
      %v5132 = vrot.slane %v3523, %v5131
      %v5133 = vlaneseq
      %v5134 = vshrl.u32 %v5133, 7
      %v5135 = vsub.s32 6, %v5134
      %v5136 = vrot.slane %v3523, %v5135
      %v5139 = vlaneseq
      %v5140 = vshrl.u32 %v5139, 7
      %v5141 = vsub.s32 2, %v5140
      %v5142 = vrot.slane %v5132, %v5141
      %v5143 = vlaneseq
      %v5144 = vshrl.u32 %v5143, 7
      %v5145 = vsub.s32 2, %v5144
      %v5146 = vrot.slane %v5136, %v5145
      %v5147 = vadd.f32 %v4737, %v5142
      %v5148 = vadd.f32 %v4738, %v5146
      %v5149 = vadd.f32 %v4739, %v5142
      %v5150 = vadd.f32 %v4740, %v5146
      %v5151 = vadd.f32 %v4741, %v5142
      %v5152 = vadd.f32 %v4742, %v5146
      %v5153 = vadd.f32 %v4743, %v5142
      %v5154 = vadd.f32 %v4744, %v5146
      %v5155 = vadd.f32 %v4745, %v5142
      %v5156 = vadd.f32 %v4746, %v5146
      %v5157 = vadd.f32 %v4747, %v5142
      %v5158 = vadd.f32 %v4748, %v5146
      %v5159 = vadd.f32 %v4749, %v5142
      %v5160 = vadd.f32 %v4750, %v5146
      %v5161 = vadd.f32 %v4751, %v5142
      %v5162 = vadd.f32 %v4752, %v5146
      %v5163 = vadd.f32 %v4753, %v5142
      %v5164 = vadd.f32 %v4754, %v5146
      %v5165 = vadd.f32 %v4755, %v5142
      %v5166 = vadd.f32 %v4756, %v5146
      %v5167 = vadd.f32 %v4757, %v5142
      %v5168 = vadd.f32 %v4758, %v5146
      %v5169 = vadd.f32 %v4759, %v5142
      %v5170 = vadd.f32 %v4760, %v5146
      %v5171 = vadd.f32 %v4761, %v5142
      %v5172 = vadd.f32 %v4762, %v5146
      %v5173 = vadd.f32 %v4763, %v5142
      %v5174 = vadd.f32 %v4764, %v5146
      %v5175 = vadd.f32 %v4765, %v5142
      %v5176 = vadd.f32 %v4766, %v5146
      %v5177 = vadd.f32 %v4767, %v5142
      %v5178 = vadd.f32 %v4768, %v5146
      %v5179 = vadd.f32 %v4769, %v5142
      %v5180 = vadd.f32 %v4770, %v5146
      %v5181 = vadd.f32 %v4771, %v5142
      %v5182 = vadd.f32 %v4772, %v5146
      %v5183 = vadd.f32 %v4773, %v5142
      %v5184 = vadd.f32 %v4774, %v5146
      %v5185 = vadd.f32 %v4775, %v5142
      %v5186 = vadd.f32 %v4776, %v5146
      %v5187 = vadd.f32 %v4777, %v5142
      %v5188 = vadd.f32 %v4778, %v5146
      %v5189 = vadd.f32 %v4779, %v5142
      %v5190 = vadd.f32 %v4780, %v5146
      %v5191 = vadd.f32 %v4781, %v5142
      %v5192 = vadd.f32 %v4782, %v5146
      %v5193 = vadd.f32 %v4783, %v5142
      %v5194 = vadd.f32 %v4784, %v5146
      %v5195 = vadd.f32 %v4785, %v5142
      %v5196 = vadd.f32 %v4786, %v5146
      %v5197 = vadd.f32 %v4787, %v5142
      %v5198 = vadd.f32 %v4788, %v5146
      %v5199 = vadd.f32 %v4789, %v5142
      %v5200 = vadd.f32 %v4790, %v5146
      %v5201 = vadd.f32 %v4791, %v5142
      %v5202 = vadd.f32 %v4792, %v5146
      %v5203 = vadd.f32 %v4793, %v5142
      %v5204 = vadd.f32 %v4794, %v5146
      %v5205 = vadd.f32 %v4795, %v5142
      %v5206 = vadd.f32 %v4796, %v5146
      %v5207 = vadd.f32 %v4797, %v5142
      %v5208 = vadd.f32 %v4798, %v5146
      %v5209 = vadd.f32 %v4799, %v5142
      %v5210 = vadd.f32 %v4800, %v5146
      %v5211 = vadd.f32 %v4801, %v5142
      %v5212 = vadd.f32 %v4802, %v5146
      %v5213 = vadd.f32 %v4803, %v5142
      %v5214 = vadd.f32 %v4804, %v5146
      %v5215 = vadd.f32 %v4805, %v5142
      %v5216 = vadd.f32 %v4806, %v5146
      %v5217 = vadd.f32 %v4807, %v5142
      %v5218 = vadd.f32 %v4808, %v5146
      %v5219 = vadd.f32 %v4809, %v5142
      %v5220 = vadd.f32 %v4810, %v5146
      %v5221 = vadd.f32 %v4811, %v5142
      %v5222 = vadd.f32 %v4812, %v5146
      %v5223 = vadd.f32 %v4813, %v5142
      %v5224 = vadd.f32 %v4814, %v5146
      %v5225 = vadd.f32 %v4815, %v5142
      %v5226 = vadd.f32 %v4816, %v5146
      %v5227 = vadd.f32 %v4817, %v5142
      %v5228 = vadd.f32 %v4818, %v5146
      %v5229 = vadd.f32 %v4819, %v5142
      %v5230 = vadd.f32 %v4820, %v5146
      %v5231 = vadd.f32 %v4821, %v5142
      %v5232 = vadd.f32 %v4822, %v5146
      %v5233 = vadd.f32 %v4823, %v5142
      %v5234 = vadd.f32 %v4824, %v5146
      %v5235 = vadd.f32 %v4825, %v5142
      %v5236 = vadd.f32 %v4826, %v5146
      %v5237 = vadd.f32 %v4827, %v5142
      %v5238 = vadd.f32 %v4828, %v5146
      %v5239 = vadd.f32 %v4829, %v5142
      %v5240 = vadd.f32 %v4830, %v5146
      %v5241 = vadd.f32 %v4831, %v5142
      %v5242 = vadd.f32 %v4832, %v5146
      %v5243 = vadd.f32 %v4833, %v5142
      %v5244 = vadd.f32 %v4834, %v5146
      %v5245 = vadd.f32 %v4835, %v5142
      %v5246 = vadd.f32 %v4836, %v5146
      %v5247 = vadd.f32 %v4837, %v5142
      %v5248 = vadd.f32 %v4838, %v5146
      %v5249 = vadd.f32 %v4839, %v5142
      %v5250 = vadd.f32 %v4840, %v5146
      %v5251 = vadd.f32 %v4841, %v5142
      %v5252 = vadd.f32 %v4842, %v5146
      %v5253 = vadd.f32 %v4843, %v5142
      %v5254 = vadd.f32 %v4844, %v5146
      %v5255 = vadd.f32 %v4845, %v5142
      %v5256 = vadd.f32 %v4846, %v5146
      %v5257 = vadd.f32 %v4847, %v5142
      %v5258 = vadd.f32 %v4848, %v5146
      %v5259 = vadd.f32 %v4849, %v5142
      %v5260 = vadd.f32 %v4850, %v5146
      %v5261 = vadd.f32 %v4851, %v5142
      %v5262 = vadd.f32 %v4852, %v5146
      %v5263 = vadd.f32 %v4853, %v5142
      %v5264 = vadd.f32 %v4854, %v5146
      %v5265 = vadd.f32 %v4855, %v5142
      %v5266 = vadd.f32 %v4856, %v5146
      %v5267 = vadd.f32 %v4857, %v5142
      %v5268 = vadd.f32 %v4858, %v5146
      %v5269 = vadd.f32 %v4859, %v5142
      %v5270 = vadd.f32 %v4860, %v5146
      %v5271 = vadd.f32 %v4861, %v5142
      %v5272 = vadd.f32 %v4862, %v5146
      %v5273 = vadd.f32 %v4863, %v5142
      %v5274 = vadd.f32 %v4864, %v5146
      %v5275 = vadd.f32 %v4865, %v5142
      %v5276 = vadd.f32 %v4866, %v5146
      %v5277 = vadd.f32 %v4867, %v5142
      %v5278 = vadd.f32 %v4868, %v5146
      %v5279 = vadd.f32 %v4869, %v5142
      %v5280 = vadd.f32 %v4870, %v5146
      %v5281 = vadd.f32 %v4871, %v5142
      %v5282 = vadd.f32 %v4872, %v5146
      %v5283 = vadd.f32 %v4873, %v5142
      %v5284 = vadd.f32 %v4874, %v5146
      %v5285 = vadd.f32 %v4875, %v5142
      %v5286 = vadd.f32 %v4876, %v5146
      %v5287 = vadd.f32 %v4877, %v5142
      %v5288 = vadd.f32 %v4878, %v5146
      %v5289 = vadd.f32 %v4879, %v5142
      %v5290 = vadd.f32 %v4880, %v5146
      %v5291 = vadd.f32 %v4881, %v5142
      %v5292 = vadd.f32 %v4882, %v5146
      %v5293 = vadd.f32 %v4883, %v5142
      %v5294 = vadd.f32 %v4884, %v5146
      %v5295 = vadd.f32 %v4885, %v5142
      %v5296 = vadd.f32 %v4886, %v5146
      %v5297 = vadd.f32 %v4887, %v5142
      %v5298 = vadd.f32 %v4888, %v5146
      %v5299 = vadd.f32 %v4889, %v5142
      %v5300 = vadd.f32 %v4890, %v5146
      %v5301 = vadd.f32 %v4891, %v5142
      %v5302 = vadd.f32 %v4892, %v5146
      %v5303 = vadd.f32 %v4893, %v5142
      %v5304 = vadd.f32 %v4894, %v5146
      %v5305 = vadd.f32 %v4895, %v5142
      %v5306 = vadd.f32 %v4896, %v5146
      %v5307 = vadd.f32 %v4897, %v5142
      %v5308 = vadd.f32 %v4898, %v5146
      %v5309 = vadd.f32 %v4899, %v5142
      %v5310 = vadd.f32 %v4900, %v5146
      %v5311 = vadd.f32 %v4901, %v5142
      %v5312 = vadd.f32 %v4902, %v5146
      %v5313 = vadd.f32 %v4903, %v5142
      %v5314 = vadd.f32 %v4904, %v5146
      %v5315 = vadd.f32 %v4905, %v5142
      %v5316 = vadd.f32 %v4906, %v5146
      %v5317 = vadd.f32 %v4907, %v5142
      %v5318 = vadd.f32 %v4908, %v5146
      %v5319 = vadd.f32 %v4909, %v5142
      %v5320 = vadd.f32 %v4910, %v5146
      %v5321 = vadd.f32 %v4911, %v5142
      %v5322 = vadd.f32 %v4912, %v5146
      %v5323 = vadd.f32 %v4913, %v5142
      %v5324 = vadd.f32 %v4914, %v5146
      %v5325 = vadd.f32 %v4915, %v5142
      %v5326 = vadd.f32 %v4916, %v5146
      %v5327 = vadd.f32 %v4917, %v5142
      %v5328 = vadd.f32 %v4918, %v5146
      %v5329 = vadd.f32 %v4919, %v5142
      %v5330 = vadd.f32 %v4920, %v5146
      %v5331 = vadd.f32 %v4921, %v5142
      %v5332 = vadd.f32 %v4922, %v5146
      %v5333 = vadd.f32 %v4923, %v5142
      %v5334 = vadd.f32 %v4924, %v5146
      %v5335 = vadd.f32 %v4925, %v5142
      %v5336 = vadd.f32 %v4926, %v5146
      %v5337 = vadd.f32 %v4927, %v5142
      %v5338 = vadd.f32 %v4928, %v5146
      %v5339 = vadd.f32 %v4929, %v5142
      %v5340 = vadd.f32 %v4930, %v5146
      %v5341 = vadd.f32 %v4931, %v5142
      %v5342 = vadd.f32 %v4932, %v5146
      %v5343 = vadd.f32 %v4933, %v5142
      %v5344 = vadd.f32 %v4934, %v5146
      %v5345 = vadd.f32 %v4935, %v5142
      %v5346 = vadd.f32 %v4936, %v5146
      %v5347 = vadd.f32 %v4937, %v5142
      %v5348 = vadd.f32 %v4938, %v5146
      %v5349 = vadd.f32 %v4939, %v5142
      %v5350 = vadd.f32 %v4940, %v5146
      %v5351 = vadd.f32 %v4941, %v5142
      %v5352 = vadd.f32 %v4942, %v5146
      %v5353 = vadd.f32 %v4943, %v5142
      %v5354 = vadd.f32 %v4944, %v5146
      %v5355 = vadd.f32 %v4945, %v5142
      %v5356 = vadd.f32 %v4946, %v5146
      %v5357 = vadd.f32 %v4947, %v5142
      %v5358 = vadd.f32 %v4948, %v5146
      %v5359 = vadd.f32 %v4949, %v5142
      %v5360 = vadd.f32 %v4950, %v5146
      %v5361 = vadd.f32 %v4951, %v5142
      %v5362 = vadd.f32 %v4952, %v5146
      %v5363 = vadd.f32 %v4953, %v5142
      %v5364 = vadd.f32 %v4954, %v5146
      %v5365 = vadd.f32 %v4955, %v5142
      %v5366 = vadd.f32 %v4956, %v5146
      %v5367 = vadd.f32 %v4957, %v5142
      %v5368 = vadd.f32 %v4958, %v5146
      %v5369 = vadd.f32 %v4959, %v5142
      %v5370 = vadd.f32 %v4960, %v5146
      %v5371 = vadd.f32 %v4961, %v5142
      %v5372 = vadd.f32 %v4962, %v5146
      %v5373 = vadd.f32 %v4963, %v5142
      %v5374 = vadd.f32 %v4964, %v5146
      %v5375 = vadd.f32 %v4965, %v5142
      %v5376 = vadd.f32 %v4966, %v5146
      %v5377 = vadd.f32 %v4967, %v5142
      %v5378 = vadd.f32 %v4968, %v5146
      %v5379 = vadd.f32 %v4969, %v5142
      %v5380 = vadd.f32 %v4970, %v5146
      %v5381 = vadd.f32 %v4971, %v5142
      %v5382 = vadd.f32 %v4972, %v5146
      %v5383 = vadd.f32 %v4973, %v5142
      %v5384 = vadd.f32 %v4974, %v5146
      %v5385 = vadd.f32 %v4975, %v5142
      %v5386 = vadd.f32 %v4976, %v5146
      %v5387 = vadd.f32 %v4977, %v5142
      %v5388 = vadd.f32 %v4978, %v5146
      %v5389 = vadd.f32 %v4979, %v5142
      %v5390 = vadd.f32 %v4980, %v5146
      %v5391 = vadd.f32 %v4981, %v5142
      %v5392 = vadd.f32 %v4982, %v5146
      %v5393 = vadd.f32 %v4983, %v5142
      %v5394 = vadd.f32 %v4984, %v5146
      %v5395 = vadd.f32 %v4985, %v5142
      %v5396 = vadd.f32 %v4986, %v5146
      %v5397 = vadd.f32 %v4987, %v5142
      %v5398 = vadd.f32 %v4988, %v5146
      %v5399 = vadd.f32 %v4989, %v5142
      %v5400 = vadd.f32 %v4990, %v5146
      %v5401 = vadd.f32 %v4991, %v5142
      %v5402 = vadd.f32 %v4992, %v5146
      %v5403 = vadd.f32 %v4993, %v5142
      %v5404 = vadd.f32 %v4994, %v5146
      %v5405 = vadd.f32 %v4995, %v5142
      %v5406 = vadd.f32 %v4996, %v5146
      %v5407 = vadd.f32 %v4997, %v5142
      %v5408 = vadd.f32 %v4998, %v5146
      %v5409 = vadd.f32 %v4999, %v5142
      %v5410 = vadd.f32 %v5000, %v5146
      %v5411 = vadd.f32 %v5001, %v5142
      %v5412 = vadd.f32 %v5002, %v5146
      %v5413 = vadd.f32 %v5003, %v5142
      %v5414 = vadd.f32 %v5004, %v5146
      %v5415 = vadd.f32 %v5005, %v5142
      %v5416 = vadd.f32 %v5006, %v5146
      %v5417 = vadd.f32 %v5007, %v5142
      %v5418 = vadd.f32 %v5008, %v5146
      %v5419 = vadd.f32 %v5009, %v5142
      %v5420 = vadd.f32 %v5010, %v5146
      %v5421 = vadd.f32 %v5011, %v5142
      %v5422 = vadd.f32 %v5012, %v5146
      %v5423 = vadd.f32 %v5013, %v5142
      %v5424 = vadd.f32 %v5014, %v5146
      %v5425 = vadd.f32 %v5015, %v5142
      %v5426 = vadd.f32 %v5016, %v5146
      %v5427 = vadd.f32 %v5017, %v5142
      %v5428 = vadd.f32 %v5018, %v5146
      %v5429 = vadd.f32 %v5019, %v5142
      %v5430 = vadd.f32 %v5020, %v5146
      %v5431 = vadd.f32 %v5021, %v5142
      %v5432 = vadd.f32 %v5022, %v5146
      %v5433 = vadd.f32 %v5023, %v5142
      %v5434 = vadd.f32 %v5024, %v5146
      %v5435 = vadd.f32 %v5025, %v5142
      %v5436 = vadd.f32 %v5026, %v5146
      %v5437 = vadd.f32 %v5027, %v5142
      %v5438 = vadd.f32 %v5028, %v5146
      %v5439 = vadd.f32 %v5029, %v5142
      %v5440 = vadd.f32 %v5030, %v5146
      %v5441 = vadd.f32 %v5031, %v5142
      %v5442 = vadd.f32 %v5032, %v5146
      %v5443 = vadd.f32 %v5033, %v5142
      %v5444 = vadd.f32 %v5034, %v5146
      %v5445 = vadd.f32 %v5035, %v5142
      %v5446 = vadd.f32 %v5036, %v5146
      %v5447 = vadd.f32 %v5037, %v5142
      %v5448 = vadd.f32 %v5038, %v5146
      %v5449 = vadd.f32 %v5039, %v5142
      %v5450 = vadd.f32 %v5040, %v5146
      %v5451 = vadd.f32 %v5041, %v5142
      %v5452 = vadd.f32 %v5042, %v5146
      %v5453 = vadd.f32 %v5043, %v5142
      %v5454 = vadd.f32 %v5044, %v5146
      %v5455 = vadd.f32 %v5045, %v5142
      %v5456 = vadd.f32 %v5046, %v5146
      %v5457 = vadd.f32 %v5047, %v5142
      %v5458 = vadd.f32 %v5048, %v5146
      %v5459 = vadd.f32 %v5049, %v5142
      %v5460 = vadd.f32 %v5050, %v5146
      %v5461 = vadd.f32 %v5051, %v5142
      %v5462 = vadd.f32 %v5052, %v5146
      %v5463 = vadd.f32 %v5053, %v5142
      %v5464 = vadd.f32 %v5054, %v5146
      %v5465 = vadd.f32 %v5055, %v5142
      %v5466 = vadd.f32 %v5056, %v5146
      %v5467 = vadd.f32 %v5057, %v5142
      %v5468 = vadd.f32 %v5058, %v5146
      %v5469 = vadd.f32 %v5059, %v5142
      %v5470 = vadd.f32 %v5060, %v5146
      %v5471 = vadd.f32 %v5061, %v5142
      %v5472 = vadd.f32 %v5062, %v5146
      %v5473 = vadd.f32 %v5063, %v5142
      %v5474 = vadd.f32 %v5064, %v5146
      %v5475 = vadd.f32 %v5065, %v5142
      %v5476 = vadd.f32 %v5066, %v5146
      %v5477 = vadd.f32 %v5067, %v5142
      %v5478 = vadd.f32 %v5068, %v5146
      %v5479 = vadd.f32 %v5069, %v5142
      %v5480 = vadd.f32 %v5070, %v5146
      %v5481 = vadd.f32 %v5071, %v5142
      %v5482 = vadd.f32 %v5072, %v5146
      %v5483 = vadd.f32 %v5073, %v5142
      %v5484 = vadd.f32 %v5074, %v5146
      %v5485 = vadd.f32 %v5075, %v5142
      %v5486 = vadd.f32 %v5076, %v5146
      %v5487 = vadd.f32 %v5077, %v5142
      %v5488 = vadd.f32 %v5078, %v5146
      %v5489 = vadd.f32 %v5079, %v5142
      %v5490 = vadd.f32 %v5080, %v5146
      %v5491 = vadd.f32 %v5081, %v5142
      %v5492 = vadd.f32 %v5082, %v5146
      %v5493 = vadd.f32 %v5083, %v5142
      %v5494 = vadd.f32 %v5084, %v5146
      %v5495 = vadd.f32 %v5085, %v5142
      %v5496 = vadd.f32 %v5086, %v5146
      %v5497 = vadd.f32 %v5087, %v5142
      %v5498 = vadd.f32 %v5088, %v5146
      %v5499 = vadd.f32 %v5089, %v5142
      %v5500 = vadd.f32 %v5090, %v5146
      %v5501 = vadd.f32 %v5091, %v5142
      %v5502 = vadd.f32 %v5092, %v5146
      %v5503 = vadd.f32 %v5093, %v5142
      %v5504 = vadd.f32 %v5094, %v5146
      %v5505 = vadd.f32 %v5095, %v5142
      %v5506 = vadd.f32 %v5096, %v5146
      %v5507 = vadd.f32 %v5097, %v5142
      %v5508 = vadd.f32 %v5098, %v5146
      %v5509 = vadd.f32 %v5099, %v5142
      %v5510 = vadd.f32 %v5100, %v5146
      %v5511 = vadd.f32 %v5101, %v5142
      %v5512 = vadd.f32 %v5102, %v5146
      %v5513 = vadd.f32 %v5103, %v5142
      %v5514 = vadd.f32 %v5104, %v5146
      %v5515 = vadd.f32 %v5105, %v5142
      %v5516 = vadd.f32 %v5106, %v5146
      %v5517 = vadd.f32 %v5107, %v5142
      %v5518 = vadd.f32 %v5108, %v5146
      %v5519 = vadd.f32 %v5109, %v5142
      %v5520 = vadd.f32 %v5110, %v5146
      %v5521 = vadd.f32 %v5111, %v5142
      %v5522 = vadd.f32 %v5112, %v5146
      %v5523 = vadd.f32 %v5113, %v5142
      %v5524 = vadd.f32 %v5114, %v5146
      %v5525 = vadd.f32 %v5115, %v5142
      %v5526 = vadd.f32 %v5116, %v5146
      %v5527 = vadd.f32 %v5117, %v5142
      %v5528 = vadd.f32 %v5118, %v5146
      %v5529 = vadd.f32 %v5119, %v5142
      %v5530 = vadd.f32 %v5120, %v5146
      %v5531 = vadd.f32 %v5121, %v5142
      %v5532 = vadd.f32 %v5122, %v5146
      %v5533 = vadd.f32 %v5123, %v5142
      %v5534 = vadd.f32 %v5124, %v5146
      %v5535 = vadd.f32 %v5125, %v5142
      %v5536 = vadd.f32 %v5126, %v5146
      %v5537 = vadd.f32 %v5127, %v5142
      %v5538 = vadd.f32 %v5128, %v5146
      %5539 = vst [vmem:[#allocation8] sm:$0xff] %v5147
      %5540 = vst [vmem:[#allocation8 + $0x8] sm:$0xff] %v5148
      %5541 = vst [vmem:[#allocation8 + $0x10] sm:$0xff] %v5149
      %5542 = vst [vmem:[#allocation8 + $0x18] sm:$0xff] %v5150
      %5543 = vst [vmem:[#allocation8 + $0x20] sm:$0xff] %v5151
      %5544 = vst [vmem:[#allocation8 + $0x28] sm:$0xff] %v5152
      %5545 = vst [vmem:[#allocation8 + $0x30] sm:$0xff] %v5153
      %5546 = vst [vmem:[#allocation8 + $0x38] sm:$0xff] %v5154
      %5547 = vst [vmem:[#allocation8 + $0x40] sm:$0xff] %v5155
      %5548 = vst [vmem:[#allocation8 + $0x48] sm:$0xff] %v5156
      %5549 = vst [vmem:[#allocation8 + $0x50] sm:$0xff] %v5157
      %5550 = vst [vmem:[#allocation8 + $0x58] sm:$0xff] %v5158
      %5551 = vst [vmem:[#allocation8 + $0x60] sm:$0xff] %v5159
      %5552 = vst [vmem:[#allocation8 + $0x68] sm:$0xff] %v5160
      %5553 = vst [vmem:[#allocation8 + $0x70] sm:$0xff] %v5161
      %5554 = vst [vmem:[#allocation8 + $0x78] sm:$0xff] %v5162
      %5555 = vst [vmem:[#allocation8 + $0x80] sm:$0xff] %v5163
      %5556 = vst [vmem:[#allocation8 + $0x88] sm:$0xff] %v5164
      %5557 = vst [vmem:[#allocation8 + $0x90] sm:$0xff] %v5165
      %5558 = vst [vmem:[#allocation8 + $0x98] sm:$0xff] %v5166
      %5559 = vst [vmem:[#allocation8 + $0xa0] sm:$0xff] %v5167
      %5560 = vst [vmem:[#allocation8 + $0xa8] sm:$0xff] %v5168
      %5561 = vst [vmem:[#allocation8 + $0xb0] sm:$0xff] %v5169
      %5562 = vst [vmem:[#allocation8 + $0xb8] sm:$0xff] %v5170
      %5563 = vst [vmem:[#allocation8 + $0xc0] sm:$0xff] %v5171
      %5564 = vst [vmem:[#allocation8 + $0xc8] sm:$0xff] %v5172
      %5565 = vst [vmem:[#allocation8 + $0xd0] sm:$0xff] %v5173
      %5566 = vst [vmem:[#allocation8 + $0xd8] sm:$0xff] %v5174
      %5567 = vst [vmem:[#allocation8 + $0xe0] sm:$0xff] %v5175
      %5568 = vst [vmem:[#allocation8 + $0xe8] sm:$0xff] %v5176
      %5569 = vst [vmem:[#allocation8 + $0xf0] sm:$0xff] %v5177
      %5570 = vst [vmem:[#allocation8 + $0xf8] sm:$0xff] %v5178
      %5571 = vst [vmem:[#allocation8 + $0x100] sm:$0xff] %v5179
      %5572 = vst [vmem:[#allocation8 + $0x108] sm:$0xff] %v5180
      %5573 = vst [vmem:[#allocation8 + $0x110] sm:$0xff] %v5181
      %5574 = vst [vmem:[#allocation8 + $0x118] sm:$0xff] %v5182
      %5575 = vst [vmem:[#allocation8 + $0x120] sm:$0xff] %v5183
      %5576 = vst [vmem:[#allocation8 + $0x128] sm:$0xff] %v5184
      %5577 = vst [vmem:[#allocation8 + $0x130] sm:$0xff] %v5185
      %5578 = vst [vmem:[#allocation8 + $0x138] sm:$0xff] %v5186
      %5579 = vst [vmem:[#allocation8 + $0x140] sm:$0xff] %v5187
      %5580 = vst [vmem:[#allocation8 + $0x148] sm:$0xff] %v5188
      %5581 = vst [vmem:[#allocation8 + $0x150] sm:$0xff] %v5189
      %5582 = vst [vmem:[#allocation8 + $0x158] sm:$0xff] %v5190
      %5583 = vst [vmem:[#allocation8 + $0x160] sm:$0xff] %v5191
      %5584 = vst [vmem:[#allocation8 + $0x168] sm:$0xff] %v5192
      %5585 = vst [vmem:[#allocation8 + $0x170] sm:$0xff] %v5193
      %5586 = vst [vmem:[#allocation8 + $0x178] sm:$0xff] %v5194
      %5587 = vst [vmem:[#allocation8 + $0x180] sm:$0xff] %v5195
      %5588 = vst [vmem:[#allocation8 + $0x188] sm:$0xff] %v5196
      %5589 = vst [vmem:[#allocation8 + $0x190] sm:$0xff] %v5197
      %5590 = vst [vmem:[#allocation8 + $0x198] sm:$0xff] %v5198
      %5591 = vst [vmem:[#allocation8 + $0x1a0] sm:$0xff] %v5199
      %5592 = vst [vmem:[#allocation8 + $0x1a8] sm:$0xff] %v5200
      %5593 = vst [vmem:[#allocation8 + $0x1b0] sm:$0xff] %v5201
      %5594 = vst [vmem:[#allocation8 + $0x1b8] sm:$0xff] %v5202
      %5595 = vst [vmem:[#allocation8 + $0x1c0] sm:$0xff] %v5203
      %5596 = vst [vmem:[#allocation8 + $0x1c8] sm:$0xff] %v5204
      %5597 = vst [vmem:[#allocation8 + $0x1d0] sm:$0xff] %v5205
      %5598 = vst [vmem:[#allocation8 + $0x1d8] sm:$0xff] %v5206
      %5599 = vst [vmem:[#allocation8 + $0x1e0] sm:$0xff] %v5207
      %5600 = vst [vmem:[#allocation8 + $0x1e8] sm:$0xff] %v5208
      %5601 = vst [vmem:[#allocation8 + $0x1f0] sm:$0xff] %v5209
      %5602 = vst [vmem:[#allocation8 + $0x1f8] sm:$0xff] %v5210
      %5603 = vst [vmem:[#allocation8 + $0x200] sm:$0xff] %v5211
      %5604 = vst [vmem:[#allocation8 + $0x208] sm:$0xff] %v5212
      %5605 = vst [vmem:[#allocation8 + $0x210] sm:$0xff] %v5213
      %5606 = vst [vmem:[#allocation8 + $0x218] sm:$0xff] %v5214
      %5607 = vst [vmem:[#allocation8 + $0x220] sm:$0xff] %v5215
      %5608 = vst [vmem:[#allocation8 + $0x228] sm:$0xff] %v5216
      %5609 = vst [vmem:[#allocation8 + $0x230] sm:$0xff] %v5217
      %5610 = vst [vmem:[#allocation8 + $0x238] sm:$0xff] %v5218
      %5611 = vst [vmem:[#allocation8 + $0x240] sm:$0xff] %v5219
      %5612 = vst [vmem:[#allocation8 + $0x248] sm:$0xff] %v5220
      %5613 = vst [vmem:[#allocation8 + $0x250] sm:$0xff] %v5221
      %5614 = vst [vmem:[#allocation8 + $0x258] sm:$0xff] %v5222
      %5615 = vst [vmem:[#allocation8 + $0x260] sm:$0xff] %v5223
      %5616 = vst [vmem:[#allocation8 + $0x268] sm:$0xff] %v5224
      %5617 = vst [vmem:[#allocation8 + $0x270] sm:$0xff] %v5225
      %5618 = vst [vmem:[#allocation8 + $0x278] sm:$0xff] %v5226
      %5619 = vst [vmem:[#allocation8 + $0x280] sm:$0xff] %v5227
      %5620 = vst [vmem:[#allocation8 + $0x288] sm:$0xff] %v5228
      %5621 = vst [vmem:[#allocation8 + $0x290] sm:$0xff] %v5229
      %5622 = vst [vmem:[#allocation8 + $0x298] sm:$0xff] %v5230
      %5623 = vst [vmem:[#allocation8 + $0x2a0] sm:$0xff] %v5231
      %5624 = vst [vmem:[#allocation8 + $0x2a8] sm:$0xff] %v5232
      %5625 = vst [vmem:[#allocation8 + $0x2b0] sm:$0xff] %v5233
      %5626 = vst [vmem:[#allocation8 + $0x2b8] sm:$0xff] %v5234
      %5627 = vst [vmem:[#allocation8 + $0x2c0] sm:$0xff] %v5235
      %5628 = vst [vmem:[#allocation8 + $0x2c8] sm:$0xff] %v5236
      %5629 = vst [vmem:[#allocation8 + $0x2d0] sm:$0xff] %v5237
      %5630 = vst [vmem:[#allocation8 + $0x2d8] sm:$0xff] %v5238
      %5631 = vst [vmem:[#allocation8 + $0x2e0] sm:$0xff] %v5239
      %5632 = vst [vmem:[#allocation8 + $0x2e8] sm:$0xff] %v5240
      %5633 = vst [vmem:[#allocation8 + $0x2f0] sm:$0xff] %v5241
      %5634 = vst [vmem:[#allocation8 + $0x2f8] sm:$0xff] %v5242
      %5635 = vst [vmem:[#allocation8 + $0x300] sm:$0xff] %v5243
      %5636 = vst [vmem:[#allocation8 + $0x308] sm:$0xff] %v5244
      %5637 = vst [vmem:[#allocation8 + $0x310] sm:$0xff] %v5245
      %5638 = vst [vmem:[#allocation8 + $0x318] sm:$0xff] %v5246
      %5639 = vst [vmem:[#allocation8 + $0x320] sm:$0xff] %v5247
      %5640 = vst [vmem:[#allocation8 + $0x328] sm:$0xff] %v5248
      %5641 = vst [vmem:[#allocation8 + $0x330] sm:$0xff] %v5249
      %5642 = vst [vmem:[#allocation8 + $0x338] sm:$0xff] %v5250
      %5643 = vst [vmem:[#allocation8 + $0x340] sm:$0xff] %v5251
      %5644 = vst [vmem:[#allocation8 + $0x348] sm:$0xff] %v5252
      %5645 = vst [vmem:[#allocation8 + $0x350] sm:$0xff] %v5253
      %5646 = vst [vmem:[#allocation8 + $0x358] sm:$0xff] %v5254
      %5647 = vst [vmem:[#allocation8 + $0x360] sm:$0xff] %v5255
      %5648 = vst [vmem:[#allocation8 + $0x368] sm:$0xff] %v5256
      %5649 = vst [vmem:[#allocation8 + $0x370] sm:$0xff] %v5257
      %5650 = vst [vmem:[#allocation8 + $0x378] sm:$0xff] %v5258
      %5651 = vst [vmem:[#allocation8 + $0x380] sm:$0xff] %v5259
      %5652 = vst [vmem:[#allocation8 + $0x388] sm:$0xff] %v5260
      %5653 = vst [vmem:[#allocation8 + $0x390] sm:$0xff] %v5261
      %5654 = vst [vmem:[#allocation8 + $0x398] sm:$0xff] %v5262
      %5655 = vst [vmem:[#allocation8 + $0x3a0] sm:$0xff] %v5263
      %5656 = vst [vmem:[#allocation8 + $0x3a8] sm:$0xff] %v5264
      %5657 = vst [vmem:[#allocation8 + $0x3b0] sm:$0xff] %v5265
      %5658 = vst [vmem:[#allocation8 + $0x3b8] sm:$0xff] %v5266
      %5659 = vst [vmem:[#allocation8 + $0x3c0] sm:$0xff] %v5267
      %5660 = vst [vmem:[#allocation8 + $0x3c8] sm:$0xff] %v5268
      %5661 = vst [vmem:[#allocation8 + $0x3d0] sm:$0xff] %v5269
      %5662 = vst [vmem:[#allocation8 + $0x3d8] sm:$0xff] %v5270
      %5663 = vst [vmem:[#allocation8 + $0x3e0] sm:$0xff] %v5271
      %5664 = vst [vmem:[#allocation8 + $0x3e8] sm:$0xff] %v5272
      %5665 = vst [vmem:[#allocation8 + $0x3f0] sm:$0xff] %v5273
      %5666 = vst [vmem:[#allocation8 + $0x3f8] sm:$0xff] %v5274
      %5667 = vst [vmem:[#allocation8 + $0x400] sm:$0xff] %v5275
      %5668 = vst [vmem:[#allocation8 + $0x408] sm:$0xff] %v5276
      %5669 = vst [vmem:[#allocation8 + $0x410] sm:$0xff] %v5277
      %5670 = vst [vmem:[#allocation8 + $0x418] sm:$0xff] %v5278
      %5671 = vst [vmem:[#allocation8 + $0x420] sm:$0xff] %v5279
      %5672 = vst [vmem:[#allocation8 + $0x428] sm:$0xff] %v5280
      %5673 = vst [vmem:[#allocation8 + $0x430] sm:$0xff] %v5281
      %5674 = vst [vmem:[#allocation8 + $0x438] sm:$0xff] %v5282
      %5675 = vst [vmem:[#allocation8 + $0x440] sm:$0xff] %v5283
      %5676 = vst [vmem:[#allocation8 + $0x448] sm:$0xff] %v5284
      %5677 = vst [vmem:[#allocation8 + $0x450] sm:$0xff] %v5285
      %5678 = vst [vmem:[#allocation8 + $0x458] sm:$0xff] %v5286
      %5679 = vst [vmem:[#allocation8 + $0x460] sm:$0xff] %v5287
      %5680 = vst [vmem:[#allocation8 + $0x468] sm:$0xff] %v5288
      %5681 = vst [vmem:[#allocation8 + $0x470] sm:$0xff] %v5289
      %5682 = vst [vmem:[#allocation8 + $0x478] sm:$0xff] %v5290
      %5683 = vst [vmem:[#allocation8 + $0x480] sm:$0xff] %v5291
      %5684 = vst [vmem:[#allocation8 + $0x488] sm:$0xff] %v5292
      %5685 = vst [vmem:[#allocation8 + $0x490] sm:$0xff] %v5293
      %5686 = vst [vmem:[#allocation8 + $0x498] sm:$0xff] %v5294
      %5687 = vst [vmem:[#allocation8 + $0x4a0] sm:$0xff] %v5295
      %5688 = vst [vmem:[#allocation8 + $0x4a8] sm:$0xff] %v5296
      %5689 = vst [vmem:[#allocation8 + $0x4b0] sm:$0xff] %v5297
      %5690 = vst [vmem:[#allocation8 + $0x4b8] sm:$0xff] %v5298
      %5691 = vst [vmem:[#allocation8 + $0x4c0] sm:$0xff] %v5299
      %5692 = vst [vmem:[#allocation8 + $0x4c8] sm:$0xff] %v5300
      %5693 = vst [vmem:[#allocation8 + $0x4d0] sm:$0xff] %v5301
      %5694 = vst [vmem:[#allocation8 + $0x4d8] sm:$0xff] %v5302
      %5695 = vst [vmem:[#allocation8 + $0x4e0] sm:$0xff] %v5303
      %5696 = vst [vmem:[#allocation8 + $0x4e8] sm:$0xff] %v5304
      %5697 = vst [vmem:[#allocation8 + $0x4f0] sm:$0xff] %v5305
      %5698 = vst [vmem:[#allocation8 + $0x4f8] sm:$0xff] %v5306
      %5699 = vst [vmem:[#allocation8 + $0x500] sm:$0xff] %v5307
      %5700 = vst [vmem:[#allocation8 + $0x508] sm:$0xff] %v5308
      %5701 = vst [vmem:[#allocation8 + $0x510] sm:$0xff] %v5309
      %5702 = vst [vmem:[#allocation8 + $0x518] sm:$0xff] %v5310
      %5703 = vst [vmem:[#allocation8 + $0x520] sm:$0xff] %v5311
      %5704 = vst [vmem:[#allocation8 + $0x528] sm:$0xff] %v5312
      %5705 = vst [vmem:[#allocation8 + $0x530] sm:$0xff] %v5313
      %5706 = vst [vmem:[#allocation8 + $0x538] sm:$0xff] %v5314
      %5707 = vst [vmem:[#allocation8 + $0x540] sm:$0xff] %v5315
      %5708 = vst [vmem:[#allocation8 + $0x548] sm:$0xff] %v5316
      %5709 = vst [vmem:[#allocation8 + $0x550] sm:$0xff] %v5317
      %5710 = vst [vmem:[#allocation8 + $0x558] sm:$0xff] %v5318
      %5711 = vst [vmem:[#allocation8 + $0x560] sm:$0xff] %v5319
      %5712 = vst [vmem:[#allocation8 + $0x568] sm:$0xff] %v5320
      %5713 = vst [vmem:[#allocation8 + $0x570] sm:$0xff] %v5321
      %5714 = vst [vmem:[#allocation8 + $0x578] sm:$0xff] %v5322
      %5715 = vst [vmem:[#allocation8 + $0x580] sm:$0xff] %v5323
      %5716 = vst [vmem:[#allocation8 + $0x588] sm:$0xff] %v5324
      %5717 = vst [vmem:[#allocation8 + $0x590] sm:$0xff] %v5325
      %5718 = vst [vmem:[#allocation8 + $0x598] sm:$0xff] %v5326
      %5719 = vst [vmem:[#allocation8 + $0x5a0] sm:$0xff] %v5327
      %5720 = vst [vmem:[#allocation8 + $0x5a8] sm:$0xff] %v5328
      %5721 = vst [vmem:[#allocation8 + $0x5b0] sm:$0xff] %v5329
      %5722 = vst [vmem:[#allocation8 + $0x5b8] sm:$0xff] %v5330
      %5723 = vst [vmem:[#allocation8 + $0x5c0] sm:$0xff] %v5331
      %5724 = vst [vmem:[#allocation8 + $0x5c8] sm:$0xff] %v5332
      %5725 = vst [vmem:[#allocation8 + $0x5d0] sm:$0xff] %v5333
      %5726 = vst [vmem:[#allocation8 + $0x5d8] sm:$0xff] %v5334
      %5727 = vst [vmem:[#allocation8 + $0x5e0] sm:$0xff] %v5335
      %5728 = vst [vmem:[#allocation8 + $0x5e8] sm:$0xff] %v5336
      %5729 = vst [vmem:[#allocation8 + $0x5f0] sm:$0xff] %v5337
      %5730 = vst [vmem:[#allocation8 + $0x5f8] sm:$0xff] %v5338
      %5731 = vst [vmem:[#allocation8 + $0x600] sm:$0xff] %v5339
      %5732 = vst [vmem:[#allocation8 + $0x608] sm:$0xff] %v5340
      %5733 = vst [vmem:[#allocation8 + $0x610] sm:$0xff] %v5341
      %5734 = vst [vmem:[#allocation8 + $0x618] sm:$0xff] %v5342
      %5735 = vst [vmem:[#allocation8 + $0x620] sm:$0xff] %v5343
      %5736 = vst [vmem:[#allocation8 + $0x628] sm:$0xff] %v5344
      %5737 = vst [vmem:[#allocation8 + $0x630] sm:$0xff] %v5345
      %5738 = vst [vmem:[#allocation8 + $0x638] sm:$0xff] %v5346
      %5739 = vst [vmem:[#allocation8 + $0x640] sm:$0xff] %v5347
      %5740 = vst [vmem:[#allocation8 + $0x648] sm:$0xff] %v5348
      %5741 = vst [vmem:[#allocation8 + $0x650] sm:$0xff] %v5349
      %5742 = vst [vmem:[#allocation8 + $0x658] sm:$0xff] %v5350
      %5743 = vst [vmem:[#allocation8 + $0x660] sm:$0xff] %v5351
      %5744 = vst [vmem:[#allocation8 + $0x668] sm:$0xff] %v5352
      %5745 = vst [vmem:[#allocation8 + $0x670] sm:$0xff] %v5353
      %5746 = vst [vmem:[#allocation8 + $0x678] sm:$0xff] %v5354
      %5747 = vst [vmem:[#allocation8 + $0x680] sm:$0xff] %v5355
      %5748 = vst [vmem:[#allocation8 + $0x688] sm:$0xff] %v5356
      %5749 = vst [vmem:[#allocation8 + $0x690] sm:$0xff] %v5357
      %5750 = vst [vmem:[#allocation8 + $0x698] sm:$0xff] %v5358
      %5751 = vst [vmem:[#allocation8 + $0x6a0] sm:$0xff] %v5359
      %5752 = vst [vmem:[#allocation8 + $0x6a8] sm:$0xff] %v5360
      %5753 = vst [vmem:[#allocation8 + $0x6b0] sm:$0xff] %v5361
      %5754 = vst [vmem:[#allocation8 + $0x6b8] sm:$0xff] %v5362
      %5755 = vst [vmem:[#allocation8 + $0x6c0] sm:$0xff] %v5363
      %5756 = vst [vmem:[#allocation8 + $0x6c8] sm:$0xff] %v5364
      %5757 = vst [vmem:[#allocation8 + $0x6d0] sm:$0xff] %v5365
      %5758 = vst [vmem:[#allocation8 + $0x6d8] sm:$0xff] %v5366
      %5759 = vst [vmem:[#allocation8 + $0x6e0] sm:$0xff] %v5367
      %5760 = vst [vmem:[#allocation8 + $0x6e8] sm:$0xff] %v5368
      %5761 = vst [vmem:[#allocation8 + $0x6f0] sm:$0xff] %v5369
      %5762 = vst [vmem:[#allocation8 + $0x6f8] sm:$0xff] %v5370
      %5763 = vst [vmem:[#allocation8 + $0x700] sm:$0xff] %v5371
      %5764 = vst [vmem:[#allocation8 + $0x708] sm:$0xff] %v5372
      %5765 = vst [vmem:[#allocation8 + $0x710] sm:$0xff] %v5373
      %5766 = vst [vmem:[#allocation8 + $0x718] sm:$0xff] %v5374
      %5767 = vst [vmem:[#allocation8 + $0x720] sm:$0xff] %v5375
      %5768 = vst [vmem:[#allocation8 + $0x728] sm:$0xff] %v5376
      %5769 = vst [vmem:[#allocation8 + $0x730] sm:$0xff] %v5377
      %5770 = vst [vmem:[#allocation8 + $0x738] sm:$0xff] %v5378
      %5771 = vst [vmem:[#allocation8 + $0x740] sm:$0xff] %v5379
      %5772 = vst [vmem:[#allocation8 + $0x748] sm:$0xff] %v5380
      %5773 = vst [vmem:[#allocation8 + $0x750] sm:$0xff] %v5381
      %5774 = vst [vmem:[#allocation8 + $0x758] sm:$0xff] %v5382
      %5775 = vst [vmem:[#allocation8 + $0x760] sm:$0xff] %v5383
      %5776 = vst [vmem:[#allocation8 + $0x768] sm:$0xff] %v5384
      %5777 = vst [vmem:[#allocation8 + $0x770] sm:$0xff] %v5385
      %5778 = vst [vmem:[#allocation8 + $0x778] sm:$0xff] %v5386
      %5779 = vst [vmem:[#allocation8 + $0x780] sm:$0xff] %v5387
      %5780 = vst [vmem:[#allocation8 + $0x788] sm:$0xff] %v5388
      %5781 = vst [vmem:[#allocation8 + $0x790] sm:$0xff] %v5389
      %5782 = vst [vmem:[#allocation8 + $0x798] sm:$0xff] %v5390
      %5783 = vst [vmem:[#allocation8 + $0x7a0] sm:$0xff] %v5391
      %5784 = vst [vmem:[#allocation8 + $0x7a8] sm:$0xff] %v5392
      %5785 = vst [vmem:[#allocation8 + $0x7b0] sm:$0xff] %v5393
      %5786 = vst [vmem:[#allocation8 + $0x7b8] sm:$0xff] %v5394
      %5787 = vst [vmem:[#allocation8 + $0x7c0] sm:$0xff] %v5395
      %5788 = vst [vmem:[#allocation8 + $0x7c8] sm:$0xff] %v5396
      %5789 = vst [vmem:[#allocation8 + $0x7d0] sm:$0xff] %v5397
      %5790 = vst [vmem:[#allocation8 + $0x7d8] sm:$0xff] %v5398
      %5791 = vst [vmem:[#allocation8 + $0x7e0] sm:$0xff] %v5399
      %5792 = vst [vmem:[#allocation8 + $0x7e8] sm:$0xff] %v5400
      %5793 = vst [vmem:[#allocation8 + $0x7f0] sm:$0xff] %v5401
      %5794 = vst [vmem:[#allocation8 + $0x7f8] sm:$0xff] %v5402
      %5795 = vst [vmem:[#allocation8 + $0x800] sm:$0xff] %v5403
      %5796 = vst [vmem:[#allocation8 + $0x808] sm:$0xff] %v5404
      %5797 = vst [vmem:[#allocation8 + $0x810] sm:$0xff] %v5405
      %5798 = vst [vmem:[#allocation8 + $0x818] sm:$0xff] %v5406
      %5799 = vst [vmem:[#allocation8 + $0x820] sm:$0xff] %v5407
      %5800 = vst [vmem:[#allocation8 + $0x828] sm:$0xff] %v5408
      %5801 = vst [vmem:[#allocation8 + $0x830] sm:$0xff] %v5409
      %5802 = vst [vmem:[#allocation8 + $0x838] sm:$0xff] %v5410
      %5803 = vst [vmem:[#allocation8 + $0x840] sm:$0xff] %v5411
      %5804 = vst [vmem:[#allocation8 + $0x848] sm:$0xff] %v5412
      %5805 = vst [vmem:[#allocation8 + $0x850] sm:$0xff] %v5413
      %5806 = vst [vmem:[#allocation8 + $0x858] sm:$0xff] %v5414
      %5807 = vst [vmem:[#allocation8 + $0x860] sm:$0xff] %v5415
      %5808 = vst [vmem:[#allocation8 + $0x868] sm:$0xff] %v5416
      %5809 = vst [vmem:[#allocation8 + $0x870] sm:$0xff] %v5417
      %5810 = vst [vmem:[#allocation8 + $0x878] sm:$0xff] %v5418
      %5811 = vst [vmem:[#allocation8 + $0x880] sm:$0xff] %v5419
      %5812 = vst [vmem:[#allocation8 + $0x888] sm:$0xff] %v5420
      %5813 = vst [vmem:[#allocation8 + $0x890] sm:$0xff] %v5421
      %5814 = vst [vmem:[#allocation8 + $0x898] sm:$0xff] %v5422
      %5815 = vst [vmem:[#allocation8 + $0x8a0] sm:$0xff] %v5423
      %5816 = vst [vmem:[#allocation8 + $0x8a8] sm:$0xff] %v5424
      %5817 = vst [vmem:[#allocation8 + $0x8b0] sm:$0xff] %v5425
      %5818 = vst [vmem:[#allocation8 + $0x8b8] sm:$0xff] %v5426
      %5819 = vst [vmem:[#allocation8 + $0x8c0] sm:$0xff] %v5427
      %5820 = vst [vmem:[#allocation8 + $0x8c8] sm:$0xff] %v5428
      %5821 = vst [vmem:[#allocation8 + $0x8d0] sm:$0xff] %v5429
      %5822 = vst [vmem:[#allocation8 + $0x8d8] sm:$0xff] %v5430
      %5823 = vst [vmem:[#allocation8 + $0x8e0] sm:$0xff] %v5431
      %5824 = vst [vmem:[#allocation8 + $0x8e8] sm:$0xff] %v5432
      %5825 = vst [vmem:[#allocation8 + $0x8f0] sm:$0xff] %v5433
      %5826 = vst [vmem:[#allocation8 + $0x8f8] sm:$0xff] %v5434
      %5827 = vst [vmem:[#allocation8 + $0x900] sm:$0xff] %v5435
      %5828 = vst [vmem:[#allocation8 + $0x908] sm:$0xff] %v5436
      %5829 = vst [vmem:[#allocation8 + $0x910] sm:$0xff] %v5437
      %5830 = vst [vmem:[#allocation8 + $0x918] sm:$0xff] %v5438
      %5831 = vst [vmem:[#allocation8 + $0x920] sm:$0xff] %v5439
      %5832 = vst [vmem:[#allocation8 + $0x928] sm:$0xff] %v5440
      %5833 = vst [vmem:[#allocation8 + $0x930] sm:$0xff] %v5441
      %5834 = vst [vmem:[#allocation8 + $0x938] sm:$0xff] %v5442
      %5835 = vst [vmem:[#allocation8 + $0x940] sm:$0xff] %v5443
      %5836 = vst [vmem:[#allocation8 + $0x948] sm:$0xff] %v5444
      %5837 = vst [vmem:[#allocation8 + $0x950] sm:$0xff] %v5445
      %5838 = vst [vmem:[#allocation8 + $0x958] sm:$0xff] %v5446
      %5839 = vst [vmem:[#allocation8 + $0x960] sm:$0xff] %v5447
      %5840 = vst [vmem:[#allocation8 + $0x968] sm:$0xff] %v5448
      %5841 = vst [vmem:[#allocation8 + $0x970] sm:$0xff] %v5449
      %5842 = vst [vmem:[#allocation8 + $0x978] sm:$0xff] %v5450
      %5843 = vst [vmem:[#allocation8 + $0x980] sm:$0xff] %v5451
      %5844 = vst [vmem:[#allocation8 + $0x988] sm:$0xff] %v5452
      %5845 = vst [vmem:[#allocation8 + $0x990] sm:$0xff] %v5453
      %5846 = vst [vmem:[#allocation8 + $0x998] sm:$0xff] %v5454
      %5847 = vst [vmem:[#allocation8 + $0x9a0] sm:$0xff] %v5455
      %5848 = vst [vmem:[#allocation8 + $0x9a8] sm:$0xff] %v5456
      %5849 = vst [vmem:[#allocation8 + $0x9b0] sm:$0xff] %v5457
      %5850 = vst [vmem:[#allocation8 + $0x9b8] sm:$0xff] %v5458
      %5851 = vst [vmem:[#allocation8 + $0x9c0] sm:$0xff] %v5459
      %5852 = vst [vmem:[#allocation8 + $0x9c8] sm:$0xff] %v5460
      %5853 = vst [vmem:[#allocation8 + $0x9d0] sm:$0xff] %v5461
      %5854 = vst [vmem:[#allocation8 + $0x9d8] sm:$0xff] %v5462
      %5855 = vst [vmem:[#allocation8 + $0x9e0] sm:$0xff] %v5463
      %5856 = vst [vmem:[#allocation8 + $0x9e8] sm:$0xff] %v5464
      %5857 = vst [vmem:[#allocation8 + $0x9f0] sm:$0xff] %v5465
      %5858 = vst [vmem:[#allocation8 + $0x9f8] sm:$0xff] %v5466
      %5859 = vst [vmem:[#allocation8 + $0xa00] sm:$0xff] %v5467
      %5860 = vst [vmem:[#allocation8 + $0xa08] sm:$0xff] %v5468
      %5861 = vst [vmem:[#allocation8 + $0xa10] sm:$0xff] %v5469
      %5862 = vst [vmem:[#allocation8 + $0xa18] sm:$0xff] %v5470
      %5863 = vst [vmem:[#allocation8 + $0xa20] sm:$0xff] %v5471
      %5864 = vst [vmem:[#allocation8 + $0xa28] sm:$0xff] %v5472
      %5865 = vst [vmem:[#allocation8 + $0xa30] sm:$0xff] %v5473
      %5866 = vst [vmem:[#allocation8 + $0xa38] sm:$0xff] %v5474
      %5867 = vst [vmem:[#allocation8 + $0xa40] sm:$0xff] %v5475
      %5868 = vst [vmem:[#allocation8 + $0xa48] sm:$0xff] %v5476
      %5869 = vst [vmem:[#allocation8 + $0xa50] sm:$0xff] %v5477
      %5870 = vst [vmem:[#allocation8 + $0xa58] sm:$0xff] %v5478
      %5871 = vst [vmem:[#allocation8 + $0xa60] sm:$0xff] %v5479
      %5872 = vst [vmem:[#allocation8 + $0xa68] sm:$0xff] %v5480
      %5873 = vst [vmem:[#allocation8 + $0xa70] sm:$0xff] %v5481
      %5874 = vst [vmem:[#allocation8 + $0xa78] sm:$0xff] %v5482
      %5875 = vst [vmem:[#allocation8 + $0xa80] sm:$0xff] %v5483
      %5876 = vst [vmem:[#allocation8 + $0xa88] sm:$0xff] %v5484
      %5877 = vst [vmem:[#allocation8 + $0xa90] sm:$0xff] %v5485
      %5878 = vst [vmem:[#allocation8 + $0xa98] sm:$0xff] %v5486
      %5879 = vst [vmem:[#allocation8 + $0xaa0] sm:$0xff] %v5487
      %5880 = vst [vmem:[#allocation8 + $0xaa8] sm:$0xff] %v5488
      %5881 = vst [vmem:[#allocation8 + $0xab0] sm:$0xff] %v5489
      %5882 = vst [vmem:[#allocation8 + $0xab8] sm:$0xff] %v5490
      %5883 = vst [vmem:[#allocation8 + $0xac0] sm:$0xff] %v5491
      %5884 = vst [vmem:[#allocation8 + $0xac8] sm:$0xff] %v5492
      %5885 = vst [vmem:[#allocation8 + $0xad0] sm:$0xff] %v5493
      %5886 = vst [vmem:[#allocation8 + $0xad8] sm:$0xff] %v5494
      %5887 = vst [vmem:[#allocation8 + $0xae0] sm:$0xff] %v5495
      %5888 = vst [vmem:[#allocation8 + $0xae8] sm:$0xff] %v5496
      %5889 = vst [vmem:[#allocation8 + $0xaf0] sm:$0xff] %v5497
      %5890 = vst [vmem:[#allocation8 + $0xaf8] sm:$0xff] %v5498
      %5891 = vst [vmem:[#allocation8 + $0xb00] sm:$0xff] %v5499
      %5892 = vst [vmem:[#allocation8 + $0xb08] sm:$0xff] %v5500
      %5893 = vst [vmem:[#allocation8 + $0xb10] sm:$0xff] %v5501
      %5894 = vst [vmem:[#allocation8 + $0xb18] sm:$0xff] %v5502
      %5895 = vst [vmem:[#allocation8 + $0xb20] sm:$0xff] %v5503
      %5896 = vst [vmem:[#allocation8 + $0xb28] sm:$0xff] %v5504
      %5897 = vst [vmem:[#allocation8 + $0xb30] sm:$0xff] %v5505
      %5898 = vst [vmem:[#allocation8 + $0xb38] sm:$0xff] %v5506
      %5899 = vst [vmem:[#allocation8 + $0xb40] sm:$0xff] %v5507
      %5900 = vst [vmem:[#allocation8 + $0xb48] sm:$0xff] %v5508
      %5901 = vst [vmem:[#allocation8 + $0xb50] sm:$0xff] %v5509
      %5902 = vst [vmem:[#allocation8 + $0xb58] sm:$0xff] %v5510
      %5903 = vst [vmem:[#allocation8 + $0xb60] sm:$0xff] %v5511
      %5904 = vst [vmem:[#allocation8 + $0xb68] sm:$0xff] %v5512
      %5905 = vst [vmem:[#allocation8 + $0xb70] sm:$0xff] %v5513
      %5906 = vst [vmem:[#allocation8 + $0xb78] sm:$0xff] %v5514
      %5907 = vst [vmem:[#allocation8 + $0xb80] sm:$0xff] %v5515
      %5908 = vst [vmem:[#allocation8 + $0xb88] sm:$0xff] %v5516
      %5909 = vst [vmem:[#allocation8 + $0xb90] sm:$0xff] %v5517
      %5910 = vst [vmem:[#allocation8 + $0xb98] sm:$0xff] %v5518
      %5911 = vst [vmem:[#allocation8 + $0xba0] sm:$0xff] %v5519
      %5912 = vst [vmem:[#allocation8 + $0xba8] sm:$0xff] %v5520
      %5913 = vst [vmem:[#allocation8 + $0xbb0] sm:$0xff] %v5521
      %5914 = vst [vmem:[#allocation8 + $0xbb8] sm:$0xff] %v5522
      %5915 = vst [vmem:[#allocation8 + $0xbc0] sm:$0xff] %v5523
      %5916 = vst [vmem:[#allocation8 + $0xbc8] sm:$0xff] %v5524
      %5917 = vst [vmem:[#allocation8 + $0xbd0] sm:$0xff] %v5525
      %5918 = vst [vmem:[#allocation8 + $0xbd8] sm:$0xff] %v5526
      %5919 = vst [vmem:[#allocation8 + $0xbe0] sm:$0xff] %v5527
      %5920 = vst [vmem:[#allocation8 + $0xbe8] sm:$0xff] %v5528
      %5921 = vst [vmem:[#allocation8 + $0xbf0] sm:$0xff] %v5529
      %5922 = vst [vmem:[#allocation8 + $0xbf8] sm:$0xff] %v5530
      %5923 = vst [vmem:[#allocation8 + $0xc00] sm:$0xff] %v5531
      %5924 = vst [vmem:[#allocation8 + $0xc08] sm:$0xff] %v5532
      %5925 = vst [vmem:[#allocation8 + $0xc10] sm:$0xff] %v5533
      %5926 = vst [vmem:[#allocation8 + $0xc18] sm:$0xff] %v5534
      %5927 = vst [vmem:[#allocation8 + $0xc20] sm:$0xff] %v5535
      %5928 = vst [vmem:[#allocation8 + $0xc28] sm:$0xff] %v5536
      %5929 = vst [vmem:[#allocation8 + $0xc30] sm:$0xff] %v5537
      %5930 = vst [vmem:[#allocation8 + $0xc38] sm:$0xff] %v5538
    $region33: #{tpu_custom_call.1} parent=1 // pred_fallthru
      _
    // Predicated region
    $region34: #{tpu_custom_call.1} parent=1 // pred_check
      _
    $region35: #{tpu_custom_call.1} parent=1 // pred_check_branch
      %5932 = sbr.rel (0) target = $region37
    $region36: #{tpu_custom_call.1} parent=1 // pred_region
      %s5934 = ssub.s32 50176, 50176
      %5935 = vsyncadd [#allocation4], %s5934
      %s5936 = sshll.u32 [#allocation8], 4
      %s5937 = int_to_ptr.vmem [resolvable:$true] %s5936
      %5942 = dma.vmem_to_hbm [thread:$0]  %s5937, 50176, %s3, [#allocation4], 256, 256, 16
    $region37: #{tpu_custom_call.1} parent=1 // pred_fallthru
      _
    // Predicated region
    $region38: #{tpu_custom_call.1} parent=1 // pred_check
      _
    $region39: #{tpu_custom_call.1} parent=1 // pred_check_branch
      %5944 = sbr.rel (0) target = $region41
    $region40: #{tpu_custom_call.1} parent=1 // pred_region
      %5945 = dma.done [#allocation4], 50176
    $region41: #{tpu_custom_call.1} parent=1 // pred_fallthru
      _
    %5946 = vsyncpa [#allocation3], 1
    %5947 = vsyncpa [#allocation6], 1
    %5948 = vsyncpa [#allocation4], 1

</llo_original>
